<compile_context>
chip_gen: v5e
topology: v5e:2x2
jax: 0.10.0
libtpu: 0.0.40
codegen_flags: <defaults>
</compile_context>

<pallas_src>
import functools

import jax
import jax.numpy as jnp
import numpy as np
from jax.experimental import pallas as pl
from jax.experimental.pallas import tpu as pltpu


# --------------------------------------------------------------------------
# VMEM budget (generation aware: v7x has 64 MiB / TC, v5e/v6e have 128 MiB)
# --------------------------------------------------------------------------

_VMEM_LIMIT_CACHE = None


def _vmem_limit_bytes():
    global _VMEM_LIMIT_CACHE
    if _VMEM_LIMIT_CACHE is None:
        try:
            cap = int(pltpu.get_tpu_info().vmem_capacity_bytes)
        except Exception:                     # conservative fallback, valid on every gen
            cap = 64 * 1024 * 1024
        _VMEM_LIMIT_CACHE = int(min(cap * 3 // 4, 96 * 1024 * 1024))
    return _VMEM_LIMIT_CACHE


def _round_up(x, m):
    return (x + m - 1) // m * m


# --------------------------------------------------------------------------
# Pallas kernels
# --------------------------------------------------------------------------

def _matmul_bias_relu_kernel(x_ref, w_ref, b_ref, o_ref):
    acc = jnp.dot(x_ref[...], w_ref[...], preferred_element_type=jnp.float32)
    o_ref[...] = jnp.maximum(acc + b_ref[...], 0.0).astype(o_ref.dtype)


def matmul_bias_relu(x, w, b, out_dtype=jnp.bfloat16, tile_m=512):
    """relu(x @ w + b).  x:(M,K) bf16 (tiled over M), w:(K,N) bf16, b:(1,N) f32.

    M axis is a "parallel" grid (pipelined DMA + megacore sharding); the weight
    and bias BlockSpecs use a constant index_map so they are DMA'd once and stay
    VMEM-resident across M tiles.
    """
    M, K = x.shape
    N = w.shape[1]
    tm = min(tile_m, _round_up(M, 16))
    m_pad = _round_up(M, tm)
    if m_pad != M:
        x = jnp.pad(x, ((0, m_pad - M), (0, 0)))
    out = pl.pallas_call(
        _matmul_bias_relu_kernel,
        out_shape=jax.ShapeDtypeStruct((m_pad, N), out_dtype),
        grid=(m_pad // tm,),
        in_specs=[pl.BlockSpec((tm, K), lambda i: (i, 0)),
                  pl.BlockSpec((K, N), lambda i: (0, 0)),
                  pl.BlockSpec((1, N), lambda i: (0, 0))],
        out_specs=pl.BlockSpec((tm, N), lambda i: (i, 0)),
        compiler_params=pltpu.CompilerParams(
            dimension_semantics=("parallel",),
            vmem_limit_bytes=_vmem_limit_bytes()),
    )(x, w, b)
    return out[:M] if m_pad != M else out


def _dueling_head_kernel(x_ref, w1_ref, b1_ref, w2_ref, b2_ref, q_ref, *, num_actions):
    # h = relu(x @ [wa1 | wv1] + [ba1 | bv1])                  -> (TB, 2H)
    h = jnp.maximum(
        jnp.dot(x_ref[...], w1_ref[...], preferred_element_type=jnp.float32)
        + b1_ref[...], 0.0)
    # [adv | v] = h @ blockdiag(wa2, wv2) + [ba2 | bv2]        -> (TB, A+1)
    av = jnp.dot(h, w2_ref[...], preferred_element_type=jnp.float32) + b2_ref[...]
    adv = av[:, :num_actions]
    v = av[:, num_actions:num_actions + 1]
    q_ref[...] = (v + adv - jnp.mean(adv, axis=-1, keepdims=True)).astype(q_ref.dtype)


def dueling_head(x, w1, b1, w2, b2, num_actions, tile_b=256):
    """Fused dueling head with packed weights (2 matmuls instead of 4)."""
    B, F = x.shape
    H2 = w1.shape[1]          # 2 * hidden_dim
    A1 = w2.shape[1]          # num_actions + 1
    tb = min(tile_b, _round_up(B, 16))
    b_pad = _round_up(B, tb)
    if b_pad != B:
        x = jnp.pad(x, ((0, b_pad - B), (0, 0)))
    q = pl.pallas_call(
        functools.partial(_dueling_head_kernel, num_actions=num_actions),
        out_shape=jax.ShapeDtypeStruct((b_pad, num_actions), jnp.float32),
        grid=(b_pad // tb,),
        in_specs=[pl.BlockSpec((tb, F), lambda i: (i, 0)),
                  pl.BlockSpec((F, H2), lambda i: (0, 0)),
                  pl.BlockSpec((1, H2), lambda i: (0, 0)),
                  pl.BlockSpec((H2, A1), lambda i: (0, 0)),
                  pl.BlockSpec((1, A1), lambda i: (0, 0))],
        out_specs=pl.BlockSpec((tb, num_actions), lambda i: (i, 0)),
        compiler_params=pltpu.CompilerParams(
            dimension_semantics=("parallel",),
            vmem_limit_bytes=_vmem_limit_bytes()),
    )(x, w1, b1, w2, b2)
    return q[:B] if b_pad != B else q


def _fc_head_kernel(x_ref, w1_ref, b1_ref, w2_ref, b2_ref, q_ref):
    h = jnp.maximum(
        jnp.dot(x_ref[...], w1_ref[...], preferred_element_type=jnp.float32)
        + b1_ref[...], 0.0)
    q_ref[...] = (jnp.dot(h, w2_ref[...], preferred_element_type=jnp.float32)
                  + b2_ref[...]).astype(q_ref.dtype)


def fc_head(x, w1, b1, w2, b2, tile_b=256):
    """Non-dueling head: q = relu(x @ w1 + b1) @ w2 + b2 (single fused kernel)."""
    B, F = x.shape
    H = w1.shape[1]
    A = w2.shape[1]
    tb = min(tile_b, _round_up(B, 16))
    b_pad = _round_up(B, tb)
    if b_pad != B:
        x = jnp.pad(x, ((0, b_pad - B), (0, 0)))
    q = pl.pallas_call(
        _fc_head_kernel,
        out_shape=jax.ShapeDtypeStruct((b_pad, A), jnp.float32),
        grid=(b_pad // tb,),
        in_specs=[pl.BlockSpec((tb, F), lambda i: (i, 0)),
                  pl.BlockSpec((F, H), lambda i: (0, 0)),
                  pl.BlockSpec((1, H), lambda i: (0, 0)),
                  pl.BlockSpec((H, A), lambda i: (0, 0)),
                  pl.BlockSpec((1, A), lambda i: (0, 0))],
        out_specs=pl.BlockSpec((tb, A), lambda i: (i, 0)),
        compiler_params=pltpu.CompilerParams(
            dimension_semantics=("parallel",),
            vmem_limit_bytes=_vmem_limit_bytes()),
    )(x, w1, b1, w2, b2)
    return q[:B] if b_pad != B else q


# --------------------------------------------------------------------------
# Conv-as-matmul glue (NHWC, strided-slice im2col in XLA, matmul in Pallas)
# --------------------------------------------------------------------------

def _im2col_nhwc(x, K, stride):
    """x:(N,H,W,C) -> patches (N*Ho*Wo, K*K*C) with feature order (kh, kw, c).

    Built from K*K strided lax.slice windows (no fancy-index gather HLO).
    """
    N, H, W, C = x.shape
    Ho = (H - K) // stride + 1
    Wo = (W - K) // stride + 1
    taps = []
    for kh in range(K):
        for kw in range(K):
            taps.append(jax.lax.slice(
                x, (0, kh, kw, 0),
                (N, kh + (Ho - 1) * stride + 1, kw + (Wo - 1) * stride + 1, C),
                (1, stride, stride, 1)))                    # (N, Ho, Wo, C)
    patches = jnp.stack(taps, axis=3)                       # (N, Ho, Wo, K*K, C)
    return patches.reshape(N * Ho * Wo, K * K * C), Ho, Wo


def conv2d_relu_nhwc(x, wm, b, K, stride):
    """x:(N,H,W,C) bf16, wm:(K*K*C,Cout) bf16, b:(1,Cout) f32 -> (N,Ho,Wo,Cout) bf16."""
    N = x.shape[0]
    Cout = wm.shape[1]
    patches, Ho, Wo = _im2col_nhwc(x, K, stride)
    out = matmul_bias_relu(patches, wm, b)                  # (N*Ho*Wo, Cout)
    return out.reshape(N, Ho, Wo, Cout)


# --------------------------------------------------------------------------
# Parameter init (deterministic, PyTorch-style fan-in uniform) + preparation
# --------------------------------------------------------------------------

def _init_linear(key, fan_in, fan_out):
    kw, kb = jax.random.split(key)
    lim = 1.0 / np.sqrt(fan_in)
    w = jax.random.uniform(kw, (fan_in, fan_out), jnp.float32, -lim, lim)
    b = jax.random.uniform(kb, (fan_out,), jnp.float32, -lim, lim)
    return w, b


def _init_conv(key, cout, cin, k):
    kw, kb = jax.random.split(key)
    lim = 1.0 / np.sqrt(cin * k * k)
    w = jax.random.uniform(kw, (cout, cin, k, k), jnp.float32, -lim, lim)
    b = jax.random.uniform(kb, (cout,), jnp.float32, -lim, lim)
    return w, b


def init_atari_dqn_params(key, num_actions, hidden_dim=512, dueling=True):
    keys = jax.random.split(key, 8)
    params = {
        "conv1": _init_conv(keys[0], 32, 4, 8),
        "conv2": _init_conv(keys[1], 64, 32, 4),
        "conv3": _init_conv(keys[2], 64, 64, 3),
        "fc": _init_linear(keys[3], 7 * 7 * 64, hidden_dim)
              + _init_linear(keys[4], hidden_dim, num_actions),
    }
    if dueling:
        params["fc_v"] = (_init_linear(keys[5], 7 * 7 * 64, hidden_dim)
                          + _init_linear(keys[6], hidden_dim, 1))
    return params


def _chw_to_hwc_perm(c, h, w):
    """Row permutation so w_pt[perm] consumes HWC-flattened features like CHW ones."""
    ci = np.arange(c)
    hi = np.arange(h)
    wi = np.arange(w)
    perm = ci[None, None, :] * (h * w) + hi[:, None, None] * w + wi[None, :, None]
    return perm.reshape(-1)                                  # indexed by (h, w, c)


def prepare_params(params, dueling=True):
    """Convert PyTorch-layout parameters into the layouts the kernels consume.

    * conv weights (Cout,Cin,K,K) -> (K*K*Cin, Cout) bf16 matmul weights.
    * fc / fc_v first-layer rows permuted from CHW- to HWC-flatten order (done once).
    * dueling head packed: W1 = [wa1 | wv1] bf16, W2 = blockdiag(wa2, wv2) f32.
    """
    prep = {}
    for name in ("conv1", "conv2", "conv3"):
        w, b = params[name]
        cout, cin, k, _ = w.shape
        prep[name] = (
            jnp.transpose(w, (2, 3, 1, 0)).reshape(k * k * cin, cout).astype(jnp.bfloat16),
            b.reshape(1, cout).astype(jnp.float32),
        )
    perm = _chw_to_hwc_perm(64, 7, 7)
    wa1, ba1, wa2, ba2 = params["fc"]
    hdim = wa1.shape[1]
    nact = wa2.shape[1]
    if dueling:
        wv1, bv1, wv2, bv2 = params["fc_v"]
        w1 = jnp.concatenate([wa1[perm], wv1[perm]], axis=1).astype(jnp.bfloat16)
        b1 = jnp.concatenate([ba1, bv1]).reshape(1, 2 * hdim).astype(jnp.float32)
        w2 = jnp.zeros((2 * hdim, nact + 1), jnp.float32)
        w2 = w2.at[:hdim, :nact].set(wa2).at[hdim:, nact:].set(wv2)
        b2 = jnp.concatenate([ba2, bv2]).reshape(1, nact + 1).astype(jnp.float32)
        prep["head"] = (w1, b1, w2, b2)
    else:
        prep["head"] = (wa1[perm].astype(jnp.bfloat16),
                        ba1.reshape(1, hdim).astype(jnp.float32),
                        wa2.astype(jnp.float32),
                        ba2.reshape(1, nact).astype(jnp.float32))
    return prep


# --------------------------------------------------------------------------
# Forward passes
# --------------------------------------------------------------------------

_CONV_LAYOUT = (("conv1", 8, 4), ("conv2", 4, 2), ("conv3", 3, 1))   # (name, K, stride)


def make_atari_dqn_forward(num_actions, dueling=True):
    """Returns a jitted forward(prep_params, x) -> q   (num_rnn_layers == 0)."""

    @jax.jit
    def forward(prep, x):
        lead = x.shape[:-3]
        xb = x.reshape((-1,) + x.shape[-3:])                 # (B, 4, 84, 84) NCHW
        # Single NCHW -> NHWC transpose; everything downstream stays NHWC (bf16).
        xb = jnp.transpose(xb, (0, 2, 3, 1)).astype(jnp.bfloat16)
        for name, ksz, stride in _CONV_LAYOUT:
            wm, b = prep[name]
            xb = conv2d_relu_nhwc(xb, wm, b, ksz, stride)    # stays NHWC
        feat = xb.reshape(xb.shape[0], -1)                   # (B, 3136) HWC order
        if dueling:
            q = dueling_head(feat, *prep["head"], num_actions=num_actions)
        else:
            q = fc_head(feat, *prep["head"])
        return q.reshape(lead + (q.shape[-1],))

    return forward


def atari_dqn_forward(net_prep, target_prep, forward_fn, x, hx=None, on_reset=None,
                      last_action=None, last_reward=None, target=False):
    """Equivalent of AtariDQN.forward (net / target_net selection)."""
    # TODO(synk): AutoResetRNN / last_action / last_reward paths (num_rnn_layers>0)
    #             are not implemented.
    prep = target_prep if target else net_prep
    return forward_fn(prep, x), hx


# --------------------------------------------------------------------------
# Pure-JAX reference (f32, PyTorch layouts) for a sanity check
# --------------------------------------------------------------------------

def reference_forward(params, x, dueling=True):
    lead = x.shape[:-3]
    x = x.reshape((-1,) + x.shape[-3:])
    for name, stride in (("conv1", 4), ("conv2", 2), ("conv3", 1)):
        w, b = params[name]
        x = jax.nn.relu(
            jax.lax.conv_general_dilated(
                x, w, (stride, stride), "VALID",
                dimension_numbers=("NCHW", "OIHW", "NCHW"))
            + b[None, :, None, None])
    feat = x.reshape(x.shape[0], -1)
    w1, b1, w2, b2 = params["fc"]
    adv = jax.nn.relu(feat @ w1 + b1) @ w2 + b2
    if dueling:
        wv1, bv1, wv2, bv2 = params["fc_v"]
        v = jax.nn.relu(feat @ wv1 + bv1) @ wv2 + bv2
        q = v + adv - adv.mean(-1, keepdims=True)
    else:
        q = adv
    return q.reshape(lead + (q.shape[-1],))


# --------------------------------------------------------------------------
# Main
# --------------------------------------------------------------------------

if __name__ == "__main__":
    num_actions = 6
    hidden_dim = 512
    dueling = True

    key = jax.random.PRNGKey(0)
    k_param, k_x = jax.random.split(key)

    raw_params = init_atari_dqn_params(k_param, num_actions, hidden_dim, dueling)
    net_prep = prepare_params(raw_params, dueling=dueling)
    # target_net is a deep copy of net in the PyTorch module.
    target_prep = jax.tree_util.tree_map(lambda p: p, net_prep)

    forward_fn = make_atari_dqn_forward(num_actions, dueling=dueling)

    # Atari DQN conv geometry requires 84x84 frames with 4 stacked channels.
    x = jax.random.normal(k_x, (2, 4, 84, 84), dtype=jnp.float32)

    q, hx = atari_dqn_forward(net_prep, target_prep, forward_fn, x, target=False)
    q = jax.block_until_ready(q)

    q_tgt, _ = atari_dqn_forward(net_prep, target_prep, forward_fn, x, target=True)
    q_tgt = jax.block_until_ready(q_tgt)

    assert q.shape == (2, num_actions), q.shape
    assert bool(jnp.all(jnp.isfinite(q)))

    q_ref = jax.block_until_ready(reference_forward(raw_params, x, dueling=dueling))
    np.testing.assert_allclose(np.asarray(q, dtype=np.float32), np.asarray(q_ref),
                               rtol=5e-2, atol=5e-2)

    print("KERNEL_OK")
</pallas_src>

<mosaic_0001>
module attributes {stable_mosaic.version = 11 : i64} {
  func.func @_matmul_bias_relu_kernel(%arg0: i32, %arg1: memref<512x256xbf16, #tpu.memory_space<vmem>>, %arg2: memref<256x32xbf16, #tpu.memory_space<vmem>>, %arg3: memref<1x32xf32, #tpu.memory_space<vmem>>, %arg4: memref<512x32xbf16, #tpu.memory_space<vmem>>) attributes {dimension_semantics = [#tpu.dimension_semantics<parallel>], iteration_bounds = array<i64: 2>, scalar_prefetch = 0 : i64, scratch_operands = 0 : i64, tpu.core_type = #tpu.core_type<tc>, window_params = [{transform_indices = @transform_0, window_bounds = array<i64: 512, 256>}, {pipeline_mode = #tpu.pipeline_mode<synchronous>, transform_indices = @transform_1, window_bounds = array<i64: 256, 32>}, {pipeline_mode = #tpu.pipeline_mode<synchronous>, transform_indices = @transform_2, window_bounds = array<i64: 1, 32>}, {transform_indices = @transform_3, window_bounds = array<i64: 512, 32>}]} {
    %c0 = arith.constant 0 : index
    %c0_0 = arith.constant 0 : index
    %0 = vector.load %arg1[%c0, %c0_0] : memref<512x256xbf16, #tpu.memory_space<vmem>>, vector<512x256xbf16>
    %c0_1 = arith.constant 0 : index
    %c0_2 = arith.constant 0 : index
    %1 = vector.load %arg2[%c0_1, %c0_2] : memref<256x32xbf16, #tpu.memory_space<vmem>>, vector<256x32xbf16>
    %cst = arith.constant dense<0.000000e+00> : vector<512x32xf32>
    %2 = tpu.matmul %0, %1, %cst {dimension_numbers = #tpu.dot_dimension_numbers<[1], [0], [0], [1], [0, 0, 1, 1], [], []>} : vector<512x256xbf16>, vector<256x32xbf16>, vector<512x32xf32> -> vector<512x32xf32>
    %c0_3 = arith.constant 0 : index
    %c0_4 = arith.constant 0 : index
    %3 = vector.load %arg3[%c0_3, %c0_4] : memref<1x32xf32, #tpu.memory_space<vmem>>, vector<1x32xf32>
    %4 = vector.broadcast %3 : vector<1x32xf32> to vector<512x32xf32>
    %5 = arith.addf %2, %4 : vector<512x32xf32>
    %cst_5 = arith.constant 0.000000e+00 : f32
    %6 = vector.broadcast %cst_5 : f32 to vector<512x32xf32>
    %7 = arith.maximumf %5, %6 : vector<512x32xf32>
    %8 = arith.truncf %7 : vector<512x32xf32> to vector<512x32xbf16>
    %c0_6 = arith.constant 0 : index
    %c0_7 = arith.constant 0 : index
    %9 = vector.load %arg4[%c0_6, %c0_7] : memref<512x32xbf16, #tpu.memory_space<vmem>>, vector<512x32xbf16>
    tpu.vector_store %arg4[%c0_6, %c0_7], %8 {strides = array<i32>} : memref<512x32xbf16, #tpu.memory_space<vmem>>, vector<512x32xbf16>,
    return
  }
  func.func @transform_0(%arg0: i32) -> (i32, i32) {
    %c0_i32 = arith.constant 0 : i32
    %c0_i32_0 = arith.constant 0 : i32
    return %arg0, %c0_i32 : i32, i32
  }
  func.func @transform_1(%arg0: i32) -> (i32, i32) {
    %c0_i32 = arith.constant 0 : i32
    %c0_i32_0 = arith.constant 0 : i32
    %c0_i32_1 = arith.constant 0 : i32
    return %c0_i32, %c0_i32_0 : i32, i32
  }
  func.func @transform_2(%arg0: i32) -> (i32, i32) {
    %c0_i32 = arith.constant 0 : i32
    %c0_i32_0 = arith.constant 0 : i32
    %c0_i32_1 = arith.constant 0 : i32
    return %c0_i32, %c0_i32_0 : i32, i32
  }
  func.func @transform_3(%arg0: i32) -> (i32, i32) {
    %c0_i32 = arith.constant 0 : i32
    %c0_i32_0 = arith.constant 0 : i32
    return %arg0, %c0_i32 : i32, i32
  }
}

module attributes {stable_mosaic.version = 11 : i64} {
  func.func @_matmul_bias_relu_kernel(%arg0: i32, %arg1: memref<176x512xbf16, #tpu.memory_space<vmem>>, %arg2: memref<512x64xbf16, #tpu.memory_space<vmem>>, %arg3: memref<1x64xf32, #tpu.memory_space<vmem>>, %arg4: memref<176x64xbf16, #tpu.memory_space<vmem>>) attributes {dimension_semantics = [#tpu.dimension_semantics<parallel>], iteration_bounds = array<i64: 1>, scalar_prefetch = 0 : i64, scratch_operands = 0 : i64, tpu.core_type = #tpu.core_type<tc>, window_params = [{transform_indices = @transform_0, window_bounds = array<i64: 176, 512>}, {pipeline_mode = #tpu.pipeline_mode<synchronous>, transform_indices = @transform_1, window_bounds = array<i64: 512, 64>}, {pipeline_mode = #tpu.pipeline_mode<synchronous>, transform_indices = @transform_2, window_bounds = array<i64: 1, 64>}, {transform_indices = @transform_3, window_bounds = array<i64: 176, 64>}]} {
    %c0 = arith.constant 0 : index
    %c0_0 = arith.constant 0 : index
    %0 = vector.load %arg1[%c0, %c0_0] : memref<176x512xbf16, #tpu.memory_space<vmem>>, vector<176x512xbf16>
    %c0_1 = arith.constant 0 : index
    %c0_2 = arith.constant 0 : index
    %1 = vector.load %arg2[%c0_1, %c0_2] : memref<512x64xbf16, #tpu.memory_space<vmem>>, vector<512x64xbf16>
    %cst = arith.constant dense<0.000000e+00> : vector<176x64xf32>
    %2 = tpu.matmul %0, %1, %cst {dimension_numbers = #tpu.dot_dimension_numbers<[1], [0], [0], [1], [0, 0, 1, 1], [], []>} : vector<176x512xbf16>, vector<512x64xbf16>, vector<176x64xf32> -> vector<176x64xf32>
    %c0_3 = arith.constant 0 : index
    %c0_4 = arith.constant 0 : index
    %3 = vector.load %arg3[%c0_3, %c0_4] : memref<1x64xf32, #tpu.memory_space<vmem>>, vector<1x64xf32>
    %4 = vector.broadcast %3 : vector<1x64xf32> to vector<176x64xf32>
    %5 = arith.addf %2, %4 : vector<176x64xf32>
    %cst_5 = arith.constant 0.000000e+00 : f32
    %6 = vector.broadcast %cst_5 : f32 to vector<176x64xf32>
    %7 = arith.maximumf %5, %6 : vector<176x64xf32>
    %8 = arith.truncf %7 : vector<176x64xf32> to vector<176x64xbf16>
    %c0_6 = arith.constant 0 : index
    %c0_7 = arith.constant 0 : index
    %9 = vector.load %arg4[%c0_6, %c0_7] : memref<176x64xbf16, #tpu.memory_space<vmem>>, vector<176x64xbf16>
    tpu.vector_store %arg4[%c0_6, %c0_7], %8 {strides = array<i32>} : memref<176x64xbf16, #tpu.memory_space<vmem>>, vector<176x64xbf16>,
    return
  }
  func.func @transform_0(%arg0: i32) -> (i32, i32) {
    %c0_i32 = arith.constant 0 : i32
    %c0_i32_0 = arith.constant 0 : i32
    return %arg0, %c0_i32 : i32, i32
  }
  func.func @transform_1(%arg0: i32) -> (i32, i32) {
    %c0_i32 = arith.constant 0 : i32
    %c0_i32_0 = arith.constant 0 : i32
    %c0_i32_1 = arith.constant 0 : i32
    return %c0_i32, %c0_i32_0 : i32, i32
  }
  func.func @transform_2(%arg0: i32) -> (i32, i32) {
    %c0_i32 = arith.constant 0 : i32
    %c0_i32_0 = arith.constant 0 : i32
    %c0_i32_1 = arith.constant 0 : i32
    return %c0_i32, %c0_i32_0 : i32, i32
  }
  func.func @transform_3(%arg0: i32) -> (i32, i32) {
    %c0_i32 = arith.constant 0 : i32
    %c0_i32_0 = arith.constant 0 : i32
    return %arg0, %c0_i32 : i32, i32
  }
}

module attributes {stable_mosaic.version = 11 : i64} {
  func.func @_matmul_bias_relu_kernel(%arg0: i32, %arg1: memref<112x576xbf16, #tpu.memory_space<vmem>>, %arg2: memref<576x64xbf16, #tpu.memory_space<vmem>>, %arg3: memref<1x64xf32, #tpu.memory_space<vmem>>, %arg4: memref<112x64xbf16, #tpu.memory_space<vmem>>) attributes {dimension_semantics = [#tpu.dimension_semantics<parallel>], iteration_bounds = array<i64: 1>, scalar_prefetch = 0 : i64, scratch_operands = 0 : i64, tpu.core_type = #tpu.core_type<tc>, window_params = [{transform_indices = @transform_0, window_bounds = array<i64: 112, 576>}, {pipeline_mode = #tpu.pipeline_mode<synchronous>, transform_indices = @transform_1, window_bounds = array<i64: 576, 64>}, {pipeline_mode = #tpu.pipeline_mode<synchronous>, transform_indices = @transform_2, window_bounds = array<i64: 1, 64>}, {transform_indices = @transform_3, window_bounds = array<i64: 112, 64>}]} {
    %c0 = arith.constant 0 : index
    %c0_0 = arith.constant 0 : index
    %0 = vector.load %arg1[%c0, %c0_0] : memref<112x576xbf16, #tpu.memory_space<vmem>>, vector<112x576xbf16>
    %c0_1 = arith.constant 0 : index
    %c0_2 = arith.constant 0 : index
    %1 = vector.load %arg2[%c0_1, %c0_2] : memref<576x64xbf16, #tpu.memory_space<vmem>>, vector<576x64xbf16>
    %cst = arith.constant dense<0.000000e+00> : vector<112x64xf32>
    %2 = tpu.matmul %0, %1, %cst {dimension_numbers = #tpu.dot_dimension_numbers<[1], [0], [0], [1], [0, 0, 1, 1], [], []>} : vector<112x576xbf16>, vector<576x64xbf16>, vector<112x64xf32> -> vector<112x64xf32>
    %c0_3 = arith.constant 0 : index
    %c0_4 = arith.constant 0 : index
    %3 = vector.load %arg3[%c0_3, %c0_4] : memref<1x64xf32, #tpu.memory_space<vmem>>, vector<1x64xf32>
    %4 = vector.broadcast %3 : vector<1x64xf32> to vector<112x64xf32>
    %5 = arith.addf %2, %4 : vector<112x64xf32>
    %cst_5 = arith.constant 0.000000e+00 : f32
    %6 = vector.broadcast %cst_5 : f32 to vector<112x64xf32>
    %7 = arith.maximumf %5, %6 : vector<112x64xf32>
    %8 = arith.truncf %7 : vector<112x64xf32> to vector<112x64xbf16>
    %c0_6 = arith.constant 0 : index
    %c0_7 = arith.constant 0 : index
    %9 = vector.load %arg4[%c0_6, %c0_7] : memref<112x64xbf16, #tpu.memory_space<vmem>>, vector<112x64xbf16>
    tpu.vector_store %arg4[%c0_6, %c0_7], %8 {strides = array<i32>} : memref<112x64xbf16, #tpu.memory_space<vmem>>, vector<112x64xbf16>,
    return
  }
  func.func @transform_0(%arg0: i32) -> (i32, i32) {
    %c0_i32 = arith.constant 0 : i32
    %c0_i32_0 = arith.constant 0 : i32
    return %arg0, %c0_i32 : i32, i32
  }
  func.func @transform_1(%arg0: i32) -> (i32, i32) {
    %c0_i32 = arith.constant 0 : i32
    %c0_i32_0 = arith.constant 0 : i32
    %c0_i32_1 = arith.constant 0 : i32
    return %c0_i32, %c0_i32_0 : i32, i32
  }
  func.func @transform_2(%arg0: i32) -> (i32, i32) {
    %c0_i32 = arith.constant 0 : i32
    %c0_i32_0 = arith.constant 0 : i32
    %c0_i32_1 = arith.constant 0 : i32
    return %c0_i32, %c0_i32_0 : i32, i32
  }
  func.func @transform_3(%arg0: i32) -> (i32, i32) {
    %c0_i32 = arith.constant 0 : i32
    %c0_i32_0 = arith.constant 0 : i32
    return %arg0, %c0_i32 : i32, i32
  }
}

module attributes {stable_mosaic.version = 11 : i64} {
  func.func @_dueling_head_kernel(%arg0: i32, %arg1: memref<16x3136xbf16, #tpu.memory_space<vmem>>, %arg2: memref<3136x1024xbf16, #tpu.memory_space<vmem>>, %arg3: memref<1x1024xf32, #tpu.memory_space<vmem>>, %arg4: memref<1024x7xf32, #tpu.memory_space<vmem>>, %arg5: memref<1x7xf32, #tpu.memory_space<vmem>>, %arg6: memref<16x6xf32, #tpu.memory_space<vmem>>) attributes {dimension_semantics = [#tpu.dimension_semantics<parallel>], iteration_bounds = array<i64: 1>, scalar_prefetch = 0 : i64, scratch_operands = 0 : i64, tpu.core_type = #tpu.core_type<tc>, window_params = [{transform_indices = @transform_0, window_bounds = array<i64: 16, 3136>}, {pipeline_mode = #tpu.pipeline_mode<synchronous>, transform_indices = @transform_1, window_bounds = array<i64: 3136, 1024>}, {pipeline_mode = #tpu.pipeline_mode<synchronous>, transform_indices = @transform_2, window_bounds = array<i64: 1, 1024>}, {pipeline_mode = #tpu.pipeline_mode<synchronous>, transform_indices = @transform_3, window_bounds = array<i64: 1024, 7>}, {pipeline_mode = #tpu.pipeline_mode<synchronous>, transform_indices = @transform_4, window_bounds = array<i64: 1, 7>}, {transform_indices = @transform_5, window_bounds = array<i64: 16, 6>}]} {
    %c0 = arith.constant 0 : index
    %c0_0 = arith.constant 0 : index
    %0 = vector.load %arg1[%c0, %c0_0] : memref<16x3136xbf16, #tpu.memory_space<vmem>>, vector<16x3136xbf16>
    %c0_1 = arith.constant 0 : index
    %c0_2 = arith.constant 0 : index
    %1 = vector.load %arg2[%c0_1, %c0_2] : memref<3136x1024xbf16, #tpu.memory_space<vmem>>, vector<3136x1024xbf16>
    %cst = arith.constant dense<0.000000e+00> : vector<16x1024xf32>
    %2 = tpu.matmul %0, %1, %cst {dimension_numbers = #tpu.dot_dimension_numbers<[1], [0], [0], [1], [0, 0, 1, 1], [], []>} : vector<16x3136xbf16>, vector<3136x1024xbf16>, vector<16x1024xf32> -> vector<16x1024xf32>
    %c0_3 = arith.constant 0 : index
    %c0_4 = arith.constant 0 : index
    %3 = vector.load %arg3[%c0_3, %c0_4] : memref<1x1024xf32, #tpu.memory_space<vmem>>, vector<1x1024xf32>
    %4 = vector.broadcast %3 : vector<1x1024xf32> to vector<16x1024xf32>
    %5 = arith.addf %2, %4 : vector<16x1024xf32>
    %cst_5 = arith.constant 0.000000e+00 : f32
    %6 = vector.broadcast %cst_5 : f32 to vector<16x1024xf32>
    %7 = arith.maximumf %5, %6 : vector<16x1024xf32>
    %c0_6 = arith.constant 0 : index
    %c0_7 = arith.constant 0 : index
    %8 = vector.load %arg4[%c0_6, %c0_7] : memref<1024x7xf32, #tpu.memory_space<vmem>>, vector<1024x7xf32>
    %cst_8 = arith.constant dense<0.000000e+00> : vector<16x7xf32>
    %9 = tpu.matmul %7, %8, %cst_8 {dimension_numbers = #tpu.dot_dimension_numbers<[1], [0], [0], [1], [0, 0, 1, 1], [], []>} : vector<16x1024xf32>, vector<1024x7xf32>, vector<16x7xf32> -> vector<16x7xf32>
    %c0_9 = arith.constant 0 : index
    %c0_10 = arith.constant 0 : index
    %10 = vector.load %arg5[%c0_9, %c0_10] : memref<1x7xf32, #tpu.memory_space<vmem>>, vector<1x7xf32>
    %11 = vector.broadcast %10 : vector<1x7xf32> to vector<16x7xf32>
    %12 = arith.addf %9, %11 : vector<16x7xf32>
    %13 = vector.extract_strided_slice %12 {offsets = [0, 0], sizes = [16, 6], strides = [1, 1]} : vector<16x7xf32> to vector<16x6xf32>
    %14 = vector.extract_strided_slice %12 {offsets = [0, 6], sizes = [16, 1], strides = [1, 1]} : vector<16x7xf32> to vector<16x1xf32>
    %15 = vector.broadcast %14 : vector<16x1xf32> to vector<16x6xf32>
    %16 = arith.addf %15, %13 : vector<16x6xf32>
    %cst_11 = arith.constant dense<0.000000e+00> : vector<16xf32>
    %17 = vector.multi_reduction <add>, %13, %cst_11 [1] : vector<16x6xf32> to vector<16xf32>
    %18 = vector.shape_cast %17 : vector<16xf32> to vector<16x1xf32>
    %cst_12 = arith.constant 6.000000e+00 : f32
    %19 = vector.broadcast %cst_12 : f32 to vector<16x1xf32>
    %20 = arith.divf %18, %19 : vector<16x1xf32>
    %21 = vector.broadcast %20 : vector<16x1xf32> to vector<16x6xf32>
    %22 = arith.subf %16, %21 : vector<16x6xf32>
    %c0_13 = arith.constant 0 : index
    %c0_14 = arith.constant 0 : index
    %23 = vector.load %arg6[%c0_13, %c0_14] : memref<16x6xf32, #tpu.memory_space<vmem>>, vector<16x6xf32>
    tpu.vector_store %arg6[%c0_13, %c0_14], %22 {strides = array<i32>} : memref<16x6xf32, #tpu.memory_space<vmem>>, vector<16x6xf32>,
    return
  }
  func.func @transform_0(%arg0: i32) -> (i32, i32) {
    %c0_i32 = arith.constant 0 : i32
    %c0_i32_0 = arith.constant 0 : i32
    return %arg0, %c0_i32 : i32, i32
  }
  func.func @transform_1(%arg0: i32) -> (i32, i32) {
    %c0_i32 = arith.constant 0 : i32
    %c0_i32_0 = arith.constant 0 : i32
    %c0_i32_1 = arith.constant 0 : i32
    return %c0_i32, %c0_i32_0 : i32, i32
  }
  func.func @transform_2(%arg0: i32) -> (i32, i32) {
    %c0_i32 = arith.constant 0 : i32
    %c0_i32_0 = arith.constant 0 : i32
    %c0_i32_1 = arith.constant 0 : i32
    return %c0_i32, %c0_i32_0 : i32, i32
  }
  func.func @transform_3(%arg0: i32) -> (i32, i32) {
    %c0_i32 = arith.constant 0 : i32
    %c0_i32_0 = arith.constant 0 : i32
    %c0_i32_1 = arith.constant 0 : i32
    return %c0_i32, %c0_i32_0 : i32, i32
  }
  func.func @transform_4(%arg0: i32) -> (i32, i32) {
    %c0_i32 = arith.constant 0 : i32
    %c0_i32_0 = arith.constant 0 : i32
    %c0_i32_1 = arith.constant 0 : i32
    return %c0_i32, %c0_i32_0 : i32, i32
  }
  func.func @transform_5(%arg0: i32) -> (i32, i32) {
    %c0_i32 = arith.constant 0 : i32
    %c0_i32_0 = arith.constant 0 : i32
    return %arg0, %c0_i32 : i32, i32
  }
}

</mosaic_0001>

<llo_original>
// kernel: forward.4
$region0: #{forward.4}
  #allocation0 [shape = 'u32[]', space=smem, size = 0x4, offset = 0x4, fixed_abs, tag = 'smem constant byte address 0x4 - core index']
  #allocation1 [shape = 'u32[72,128]{1,0:T(1,128)}', space=vmem, size = 0x9000, scoped, tag = 'internal scratch']
  %s0 = inlined_call_operand.vmem [shape: bf16[1024,256], index: 0, kind: input, shape index: {}]
  %s1 = inlined_call_operand.vmem [shape: bf16[256,32], index: 1, kind: input, shape index: {}]
  %s2 = inlined_call_operand.vmem [shape: f32[1,32], index: 2, kind: input, shape index: {}]
  %s3 = inlined_call_operand.vmem [shape: bf16[1024,32], index: 3, kind: output, shape index: {}]
  %s4 = sld [smem:[#allocation0]]
  $region45: #{forward.4} parent=0
    _
  %s6 = ssub.s32 1, %s4
  %s7 = scalar_select 0, %s6, %s4
  loop: start=0, step=1, limit=4
  $region2: #{forward.4} parent=0 // loop_pre_header
    _
  $region3: #{forward.4} parent=0 // loop_header
    %s9 = sphi 0, %s13
    %p10 = scmp.ge.s32.totalorder %s9, 4
    %s19 = sphi 0, %s21
    %s22 = sphi 0, %s19
    %s23 = sphi 0, %s22
    %s39 = sphi 0, %s23
    %s43 = sphi 0, %s43
    %s45 = sphi 0, %s43
    %s46 = sphi 0, %s45
    %s60 = sphi 0, %s46
    %s64 = sphi 0, %s64
    %s66 = sphi 0, %s64
    %s67 = sphi 0, %s66
    %s81 = sphi 0, %s67
    %s87 = sphi 0, %s89
    %s90 = sphi 0, %s87
    %s91 = sphi 0, %s90
    %s107 = sphi 0, %s91
  $region4: #{forward.4} parent=0 // loop_header_branch
    %12 = sbr.rel (%p10) target = $region8
  $region5: #{forward.4} parent=0 // loop_body
    %s14 = ssub.s32 %s9, 1
    %s15 = ssub.s32 %s9, 2
    %s16 = sadd.s32 %s9, 1
    %s17 = ssub.s32 %s9, %s16
    %p18 = scmp.eq.s32.totalorder %s17, 0
    %s20 = sadd.s32 %s19, 1
    %s21 = scalar_select %p18, %s19, %s20
    %p24 = pneg %p18
    %p25 = scmp.eq.s32.totalorder %s9, 1
    %p26 = por %p24, %p25
    %p27 = scmp.ne.s32.totalorder %s19, %s22
    %p28 = scmp.eq.s32.totalorder %s9, 0
    %p29 = por %p27, %p28
    %p30 = scmp.ne.s32.totalorder %s19, %s22
    %p31 = scmp.eq.s32.totalorder %s14, 1
    %p32 = por %p30, %p31
    %p33 = scmp.ne.s32.totalorder %s22, %s23
    %p34 = scmp.eq.s32.totalorder %s14, 0
    %p35 = por %p33, %p34
    %p36 = scmp.ne.s32.totalorder %s22, %s23
    %p37 = scmp.eq.s32.totalorder %s15, 1
    %p38 = por %p36, %p37
    %p40 = scmp.ne.s32.totalorder %s23, %s39
    %p41 = scmp.eq.s32.totalorder %s15, 0
    %p42 = por %p40, %p41
    %s44 = sadd.s32 %s43, 1
    %p47 = scmp.eq.s32.totalorder %s9, 1
    %p48 = scmp.ne.s32.totalorder %s43, %s45
    %p49 = scmp.eq.s32.totalorder %s9, 0
    %p50 = por %p48, %p49
    %p51 = scmp.ne.s32.totalorder %s43, %s45
    %p52 = scmp.eq.s32.totalorder %s14, 1
    %p53 = por %p51, %p52
    %p54 = scmp.ne.s32.totalorder %s45, %s46
    %p55 = scmp.eq.s32.totalorder %s14, 0
    %p56 = por %p54, %p55
    %p57 = scmp.ne.s32.totalorder %s45, %s46
    %p58 = scmp.eq.s32.totalorder %s15, 1
    %p59 = por %p57, %p58
    %p61 = scmp.ne.s32.totalorder %s46, %s60
    %p62 = scmp.eq.s32.totalorder %s15, 0
    %p63 = por %p61, %p62
    %s65 = sadd.s32 %s64, 1
    %p68 = scmp.eq.s32.totalorder %s9, 1
    %p69 = scmp.ne.s32.totalorder %s64, %s66
    %p70 = scmp.eq.s32.totalorder %s9, 0
    %p71 = por %p69, %p70
    %p72 = scmp.ne.s32.totalorder %s64, %s66
    %p73 = scmp.eq.s32.totalorder %s14, 1
    %p74 = por %p72, %p73
    %p75 = scmp.ne.s32.totalorder %s66, %s67
    %p76 = scmp.eq.s32.totalorder %s14, 0
    %p77 = por %p75, %p76
    %p78 = scmp.ne.s32.totalorder %s66, %s67
    %p79 = scmp.eq.s32.totalorder %s15, 1
    %p80 = por %p78, %p79
    %p82 = scmp.ne.s32.totalorder %s67, %s81
    %p83 = scmp.eq.s32.totalorder %s15, 0
    %p84 = por %p82, %p83
    %s85 = ssub.s32 %s9, %s16
    %p86 = scmp.eq.s32.totalorder %s85, 0
    %s88 = sadd.s32 %s87, 1
    %s89 = scalar_select %p86, %s87, %s88
    %p92 = pneg %p86
    %p93 = scmp.eq.s32.totalorder %s9, 1
    %p94 = por %p92, %p93
    %p95 = scmp.ne.s32.totalorder %s87, %s90
    %p96 = scmp.eq.s32.totalorder %s9, 0
    %p97 = por %p95, %p96
    %p98 = scmp.ne.s32.totalorder %s87, %s90
    %p99 = scmp.eq.s32.totalorder %s14, 1
    %p100 = por %p98, %p99
    %p101 = scmp.ne.s32.totalorder %s90, %s91
    %p102 = scmp.eq.s32.totalorder %s14, 0
    %p103 = por %p101, %p102
    %p104 = scmp.ne.s32.totalorder %s90, %s91
    %p105 = scmp.eq.s32.totalorder %s15, 1
    %p106 = por %p104, %p105
    %p108 = scmp.ne.s32.totalorder %s91, %s107
    %p109 = scmp.eq.s32.totalorder %s15, 0
    %p110 = por %p108, %p109
    %p111 = scmp.le.s32.totalorder 1, %s9
    %p112 = scmp.lt.s32.totalorder %s9, 3
    %p113 = pnand %p111, %p112
    %p114 = pneg %p113
    // Predicated region
    $region9: #{forward.4} parent=5 // pred_check
      _
    $region10: #{forward.4} parent=5 // pred_check_branch
      %116 = sbr.rel (%p113) target = $region12
    $region11: #{forward.4} parent=5 // pred_region
      %s117 = ssub.s32 %s9, 1
      // Predicated region
      $region13: #{forward.4} parent=11 // pred_check
        %p118 = pneg %p56
      $region14: #{forward.4} parent=11 // pred_check_branch
        %120 = sbr.rel (%p118) target = $region16
      $region15: #{forward.4} parent=11 // pred_region
        _
      $region16: #{forward.4} parent=11 // pred_fallthru
        _
      // Predicated region
      $region17: #{forward.4} parent=11 // pred_check
        %p121 = pneg %p77
      $region18: #{forward.4} parent=11 // pred_check_branch
        %123 = sbr.rel (%p121) target = $region20
      $region19: #{forward.4} parent=11 // pred_region
        _
      $region20: #{forward.4} parent=11 // pred_fallthru
        _
    $region12: #{forward.4} parent=5 // pred_fallthru
      _
    %p124 = scmp.lt.s32.totalorder %s9, 2
    // Predicated region
    $region21: #{forward.4} parent=5 // pred_check
      %p125 = pneg %p124
    $region22: #{forward.4} parent=5 // pred_check_branch
      %127 = sbr.rel (%p125) target = $region24
    $region23: #{forward.4} parent=5 // pred_region
      // Predicated region
      $region25: #{forward.4} parent=23 // pred_check
        %p128 = pneg %p29
      $region26: #{forward.4} parent=23 // pred_check_branch
        %130 = sbr.rel (%p128) target = $region28
      $region27: #{forward.4} parent=23 // pred_region
        %s131 = smul.u32 64, %s9
        %p132 = scmp.lt.s32.totalorder %s131, 127
        %s133 = scalar_select %p132, %s131, 127
        %s134 = smul.addr %s133, 2
        %s135 = smul.addr %s134, 4
        %s136 = scalar_lea.vmem %s0, %s135
        %s137 = smul.u32 64, %s9
      $region28: #{forward.4} parent=23 // pred_fallthru
        _
    $region24: #{forward.4} parent=5 // pred_fallthru
      _
    %p138 = scmp.le.s32.totalorder 1, %s9
    %p139 = scmp.lt.s32.totalorder %s9, 3
    %p140 = pnand %p138, %p139
    %p141 = pneg %p140
    // Predicated region
    $region29: #{forward.4} parent=5 // pred_check
      _
    $region30: #{forward.4} parent=5 // pred_check_branch
      %143 = sbr.rel (%p140) target = $region32
    $region31: #{forward.4} parent=5 // pred_region
      %s144 = ssub.s32 %s9, 1
      %s145 = smul.u32 64, %s14
      %p146 = scmp.lt.s32.totalorder %s145, 127
      %s147 = scalar_select %p146, %s145, 127
      %s148 = smul.addr %s147, 2
      %s149 = smul.addr %s148, 4
      %s150 = scalar_lea.vmem %s0, %s149
      %p151 = pneg %p35
      %p152 = pneg %p32
      %p153 = pneg %p56
      %p154 = pneg %p53
      %p155 = pneg %p77
      %p156 = pneg %p74
      %p157 = pneg %p103
      %p158 = pneg %p100
      %s159 = smul.u32 64, %s14
      %p160 = scmp.lt.s32.totalorder %s159, 127
      %s161 = scalar_select %p160, %s159, 127
      %s162 = smul.addr %s161, 4
      %s163 = scalar_lea.vmem %s3, %s162
      %s164 = smul.u32 64, %s14
      %p165 = scmp.lt.s32.totalorder %s164, 127
      %s166 = scalar_select %p165, %s164, 127
      %s167 = smul.addr %s166, 2
      %s168 = smul.addr %s167, 4
      %s169 = scalar_lea.vmem %s0, %s168
      %s170 = smul.u32 64, %s14
      %s171 = smul.u32 64, %s14
      %p172 = scmp.lt.s32.totalorder %s171, 127
      %s173 = scalar_select %p172, %s171, 127
      %s174 = smul.addr %s173, 4
      %s175 = scalar_lea.vmem %s3, %s174
      %s176 = smul.u32 64, %s14
      %v177 = vld [vmem:[%s169] sm:$0xff]
      %v178 = vld [vmem:[%s169 + $0x8] sm:$0xff]
      %v179 = vld [vmem:[%s169 + $0x10] sm:$0xff]
      %v180 = vld [vmem:[%s169 + $0x18] sm:$0xff]
      %v181 = vld [vmem:[%s169 + $0x20] sm:$0xff]
      %v182 = vld [vmem:[%s169 + $0x28] sm:$0xff]
      %v183 = vld [vmem:[%s169 + $0x30] sm:$0xff]
      %v184 = vld [vmem:[%s169 + $0x38] sm:$0xff]
      %v185 = vld [vmem:[%s169 + $0x40] sm:$0xff]
      %v186 = vld [vmem:[%s169 + $0x48] sm:$0xff]
      %v187 = vld [vmem:[%s169 + $0x50] sm:$0xff]
      %v188 = vld [vmem:[%s169 + $0x58] sm:$0xff]
      %v189 = vld [vmem:[%s169 + $0x60] sm:$0xff]
      %v190 = vld [vmem:[%s169 + $0x68] sm:$0xff]
      %v191 = vld [vmem:[%s169 + $0x70] sm:$0xff]
      %v192 = vld [vmem:[%s169 + $0x78] sm:$0xff]
      %v193 = vld [vmem:[%s169 + $0x80] sm:$0xff]
      %v194 = vld [vmem:[%s169 + $0x88] sm:$0xff]
      %v195 = vld [vmem:[%s169 + $0x90] sm:$0xff]
      %v196 = vld [vmem:[%s169 + $0x98] sm:$0xff]
      %v197 = vld [vmem:[%s169 + $0xa0] sm:$0xff]
      %v198 = vld [vmem:[%s169 + $0xa8] sm:$0xff]
      %v199 = vld [vmem:[%s169 + $0xb0] sm:$0xff]
      %v200 = vld [vmem:[%s169 + $0xb8] sm:$0xff]
      %v201 = vld [vmem:[%s169 + $0xc0] sm:$0xff]
      %v202 = vld [vmem:[%s169 + $0xc8] sm:$0xff]
      %v203 = vld [vmem:[%s169 + $0xd0] sm:$0xff]
      %v204 = vld [vmem:[%s169 + $0xd8] sm:$0xff]
      %v205 = vld [vmem:[%s169 + $0xe0] sm:$0xff]
      %v206 = vld [vmem:[%s169 + $0xe8] sm:$0xff]
      %v207 = vld [vmem:[%s169 + $0xf0] sm:$0xff]
      %v208 = vld [vmem:[%s169 + $0xf8] sm:$0xff]
      %v209 = vld [vmem:[%s169 + $0x100] sm:$0xff]
      %v210 = vld [vmem:[%s169 + $0x108] sm:$0xff]
      %v211 = vld [vmem:[%s169 + $0x110] sm:$0xff]
      %v212 = vld [vmem:[%s169 + $0x118] sm:$0xff]
      %v213 = vld [vmem:[%s169 + $0x120] sm:$0xff]
      %v214 = vld [vmem:[%s169 + $0x128] sm:$0xff]
      %v215 = vld [vmem:[%s169 + $0x130] sm:$0xff]
      %v216 = vld [vmem:[%s169 + $0x138] sm:$0xff]
      %v217 = vld [vmem:[%s169 + $0x140] sm:$0xff]
      %v218 = vld [vmem:[%s169 + $0x148] sm:$0xff]
      %v219 = vld [vmem:[%s169 + $0x150] sm:$0xff]
      %v220 = vld [vmem:[%s169 + $0x158] sm:$0xff]
      %v221 = vld [vmem:[%s169 + $0x160] sm:$0xff]
      %v222 = vld [vmem:[%s169 + $0x168] sm:$0xff]
      %v223 = vld [vmem:[%s169 + $0x170] sm:$0xff]
      %v224 = vld [vmem:[%s169 + $0x178] sm:$0xff]
      %v225 = vld [vmem:[%s169 + $0x180] sm:$0xff]
      %v226 = vld [vmem:[%s169 + $0x188] sm:$0xff]
      %v227 = vld [vmem:[%s169 + $0x190] sm:$0xff]
      %v228 = vld [vmem:[%s169 + $0x198] sm:$0xff]
      %v229 = vld [vmem:[%s169 + $0x1a0] sm:$0xff]
      %v230 = vld [vmem:[%s169 + $0x1a8] sm:$0xff]
      %v231 = vld [vmem:[%s169 + $0x1b0] sm:$0xff]
      %v232 = vld [vmem:[%s169 + $0x1b8] sm:$0xff]
      %v233 = vld [vmem:[%s169 + $0x1c0] sm:$0xff]
      %v234 = vld [vmem:[%s169 + $0x1c8] sm:$0xff]
      %v235 = vld [vmem:[%s169 + $0x1d0] sm:$0xff]
      %v236 = vld [vmem:[%s169 + $0x1d8] sm:$0xff]
      %v237 = vld [vmem:[%s169 + $0x1e0] sm:$0xff]
      %v238 = vld [vmem:[%s169 + $0x1e8] sm:$0xff]
      %v239 = vld [vmem:[%s169 + $0x1f0] sm:$0xff]
      %v240 = vld [vmem:[%s169 + $0x1f8] sm:$0xff]
      %v241 = vld [vmem:[%s1] sm:$0xf]
      %v242 = vld [vmem:[%s1 + $0x4] sm:$0xf]
      %v243 = vld [vmem:[%s1 + $0x8] sm:$0xf]
      %v244 = vld [vmem:[%s1 + $0xc] sm:$0xf]
      %v245 = vld [vmem:[%s1 + $0x10] sm:$0xf]
      %v246 = vld [vmem:[%s1 + $0x14] sm:$0xf]
      %v247 = vld [vmem:[%s1 + $0x18] sm:$0xf]
      %v248 = vld [vmem:[%s1 + $0x1c] sm:$0xf]
      %v249 = vld [vmem:[%s1 + $0x20] sm:$0xf]
      %v250 = vld [vmem:[%s1 + $0x24] sm:$0xf]
      %v251 = vld [vmem:[%s1 + $0x28] sm:$0xf]
      %v252 = vld [vmem:[%s1 + $0x2c] sm:$0xf]
      %v253 = vld [vmem:[%s1 + $0x30] sm:$0xf]
      %v254 = vld [vmem:[%s1 + $0x34] sm:$0xf]
      %v255 = vld [vmem:[%s1 + $0x38] sm:$0xf]
      %v256 = vld [vmem:[%s1 + $0x3c] sm:$0xf]
      %v257 = vld [vmem:[%s1 + $0x40] sm:$0xf]
      %v258 = vld [vmem:[%s1 + $0x44] sm:$0xf]
      %v259 = vld [vmem:[%s1 + $0x48] sm:$0xf]
      %v260 = vld [vmem:[%s1 + $0x4c] sm:$0xf]
      %v261 = vld [vmem:[%s1 + $0x50] sm:$0xf]
      %v262 = vld [vmem:[%s1 + $0x54] sm:$0xf]
      %v263 = vld [vmem:[%s1 + $0x58] sm:$0xf]
      %v264 = vld [vmem:[%s1 + $0x5c] sm:$0xf]
      %v265 = vld [vmem:[%s1 + $0x60] sm:$0xf]
      %v266 = vld [vmem:[%s1 + $0x64] sm:$0xf]
      %v267 = vld [vmem:[%s1 + $0x68] sm:$0xf]
      %v268 = vld [vmem:[%s1 + $0x6c] sm:$0xf]
      %v269 = vld [vmem:[%s1 + $0x70] sm:$0xf]
      %v270 = vld [vmem:[%s1 + $0x74] sm:$0xf]
      %v271 = vld [vmem:[%s1 + $0x78] sm:$0xf]
      %v272 = vld [vmem:[%s1 + $0x7c] sm:$0xf]
      %v273 = vld [vmem:[%s2] sm:$0x1]
      %v275 = vperm.slane %v273, 0
      %v341 = vunpack.c.l.b16 %v177
      %v342 = vunpack.c.h.b16 %v177
      %v343 = vunpack.c.l.b16 %v178
      %v344 = vunpack.c.h.b16 %v178
      %v345 = vunpack.c.l.b16 %v179
      %v346 = vunpack.c.h.b16 %v179
      %v347 = vunpack.c.l.b16 %v180
      %v348 = vunpack.c.h.b16 %v180
      %v349 = vunpack.c.l.b16 %v181
      %v350 = vunpack.c.h.b16 %v181
      %v351 = vunpack.c.l.b16 %v182
      %v352 = vunpack.c.h.b16 %v182
      %v353 = vunpack.c.l.b16 %v183
      %v354 = vunpack.c.h.b16 %v183
      %v355 = vunpack.c.l.b16 %v184
      %v356 = vunpack.c.h.b16 %v184
      %v357 = vunpack.c.l.b16 %v185
      %v358 = vunpack.c.h.b16 %v185
      %v359 = vunpack.c.l.b16 %v186
      %v360 = vunpack.c.h.b16 %v186
      %v361 = vunpack.c.l.b16 %v187
      %v362 = vunpack.c.h.b16 %v187
      %v363 = vunpack.c.l.b16 %v188
      %v364 = vunpack.c.h.b16 %v188
      %v365 = vunpack.c.l.b16 %v189
      %v366 = vunpack.c.h.b16 %v189
      %v367 = vunpack.c.l.b16 %v190
      %v368 = vunpack.c.h.b16 %v190
      %v369 = vunpack.c.l.b16 %v191
      %v370 = vunpack.c.h.b16 %v191
      %v371 = vunpack.c.l.b16 %v192
      %v372 = vunpack.c.h.b16 %v192
      %v373 = vunpack.c.l.b16 %v193
      %v374 = vunpack.c.h.b16 %v193
      %v375 = vunpack.c.l.b16 %v194
      %v376 = vunpack.c.h.b16 %v194
      %v377 = vunpack.c.l.b16 %v195
      %v378 = vunpack.c.h.b16 %v195
      %v379 = vunpack.c.l.b16 %v196
      %v380 = vunpack.c.h.b16 %v196
      %v381 = vunpack.c.l.b16 %v197
      %v382 = vunpack.c.h.b16 %v197
      %v383 = vunpack.c.l.b16 %v198
      %v384 = vunpack.c.h.b16 %v198
      %v385 = vunpack.c.l.b16 %v199
      %v386 = vunpack.c.h.b16 %v199
      %v387 = vunpack.c.l.b16 %v200
      %v388 = vunpack.c.h.b16 %v200
      %v389 = vunpack.c.l.b16 %v201
      %v390 = vunpack.c.h.b16 %v201
      %v391 = vunpack.c.l.b16 %v202
      %v392 = vunpack.c.h.b16 %v202
      %v393 = vunpack.c.l.b16 %v203
      %v394 = vunpack.c.h.b16 %v203
      %v395 = vunpack.c.l.b16 %v204
      %v396 = vunpack.c.h.b16 %v204
      %v397 = vunpack.c.l.b16 %v205
      %v398 = vunpack.c.h.b16 %v205
      %v399 = vunpack.c.l.b16 %v206
      %v400 = vunpack.c.h.b16 %v206
      %v401 = vunpack.c.l.b16 %v207
      %v402 = vunpack.c.h.b16 %v207
      %v403 = vunpack.c.l.b16 %v208
      %v404 = vunpack.c.h.b16 %v208
      %v405 = vunpack.c.l.b16 %v209
      %v406 = vunpack.c.h.b16 %v209
      %v407 = vunpack.c.l.b16 %v210
      %v408 = vunpack.c.h.b16 %v210
      %v409 = vunpack.c.l.b16 %v211
      %v410 = vunpack.c.h.b16 %v211
      %v411 = vunpack.c.l.b16 %v212
      %v412 = vunpack.c.h.b16 %v212
      %v413 = vunpack.c.l.b16 %v213
      %v414 = vunpack.c.h.b16 %v213
      %v415 = vunpack.c.l.b16 %v214
      %v416 = vunpack.c.h.b16 %v214
      %v417 = vunpack.c.l.b16 %v215
      %v418 = vunpack.c.h.b16 %v215
      %v419 = vunpack.c.l.b16 %v216
      %v420 = vunpack.c.h.b16 %v216
      %v421 = vunpack.c.l.b16 %v217
      %v422 = vunpack.c.h.b16 %v217
      %v423 = vunpack.c.l.b16 %v218
      %v424 = vunpack.c.h.b16 %v218
      %v425 = vunpack.c.l.b16 %v219
      %v426 = vunpack.c.h.b16 %v219
      %v427 = vunpack.c.l.b16 %v220
      %v428 = vunpack.c.h.b16 %v220
      %v429 = vunpack.c.l.b16 %v221
      %v430 = vunpack.c.h.b16 %v221
      %v431 = vunpack.c.l.b16 %v222
      %v432 = vunpack.c.h.b16 %v222
      %v433 = vunpack.c.l.b16 %v223
      %v434 = vunpack.c.h.b16 %v223
      %v435 = vunpack.c.l.b16 %v224
      %v436 = vunpack.c.h.b16 %v224
      %v437 = vunpack.c.l.b16 %v225
      %v438 = vunpack.c.h.b16 %v225
      %v439 = vunpack.c.l.b16 %v226
      %v440 = vunpack.c.h.b16 %v226
      %v441 = vunpack.c.l.b16 %v227
      %v442 = vunpack.c.h.b16 %v227
      %v443 = vunpack.c.l.b16 %v228
      %v444 = vunpack.c.h.b16 %v228
      %v445 = vunpack.c.l.b16 %v229
      %v446 = vunpack.c.h.b16 %v229
      %v447 = vunpack.c.l.b16 %v230
      %v448 = vunpack.c.h.b16 %v230
      %v449 = vunpack.c.l.b16 %v231
      %v450 = vunpack.c.h.b16 %v231
      %v451 = vunpack.c.l.b16 %v232
      %v452 = vunpack.c.h.b16 %v232
      %v453 = vunpack.c.l.b16 %v233
      %v454 = vunpack.c.h.b16 %v233
      %v455 = vunpack.c.l.b16 %v234
      %v456 = vunpack.c.h.b16 %v234
      %v457 = vunpack.c.l.b16 %v235
      %v458 = vunpack.c.h.b16 %v235
      %v459 = vunpack.c.l.b16 %v236
      %v460 = vunpack.c.h.b16 %v236
      %v461 = vunpack.c.l.b16 %v237
      %v462 = vunpack.c.h.b16 %v237
      %v463 = vunpack.c.l.b16 %v238
      %v464 = vunpack.c.h.b16 %v238
      %v465 = vunpack.c.l.b16 %v239
      %v466 = vunpack.c.h.b16 %v239
      %v467 = vunpack.c.l.b16 %v240
      %v468 = vunpack.c.h.b16 %v240
      %v469 = vpack.c.b16 %v343, %v341
      %v470 = vpack.c.b16 %v344, %v342
      %v471 = vpack.c.b16 %v347, %v345
      %v472 = vpack.c.b16 %v348, %v346
      %v473 = vpack.c.b16 %v351, %v349
      %v474 = vpack.c.b16 %v352, %v350
      %v475 = vpack.c.b16 %v355, %v353
      %v476 = vpack.c.b16 %v356, %v354
      %v477 = vpack.c.b16 %v359, %v357
      %v478 = vpack.c.b16 %v360, %v358
      %v479 = vpack.c.b16 %v363, %v361
      %v480 = vpack.c.b16 %v364, %v362
      %v481 = vpack.c.b16 %v367, %v365
      %v482 = vpack.c.b16 %v368, %v366
      %v483 = vpack.c.b16 %v371, %v369
      %v484 = vpack.c.b16 %v372, %v370
      %v485 = vpack.c.b16 %v375, %v373
      %v486 = vpack.c.b16 %v376, %v374
      %v487 = vpack.c.b16 %v379, %v377
      %v488 = vpack.c.b16 %v380, %v378
      %v489 = vpack.c.b16 %v383, %v381
      %v490 = vpack.c.b16 %v384, %v382
      %v491 = vpack.c.b16 %v387, %v385
      %v492 = vpack.c.b16 %v388, %v386
      %v493 = vpack.c.b16 %v391, %v389
      %v494 = vpack.c.b16 %v392, %v390
      %v495 = vpack.c.b16 %v395, %v393
      %v496 = vpack.c.b16 %v396, %v394
      %v497 = vpack.c.b16 %v399, %v397
      %v498 = vpack.c.b16 %v400, %v398
      %v499 = vpack.c.b16 %v403, %v401
      %v500 = vpack.c.b16 %v404, %v402
      %v501 = vpack.c.b16 %v407, %v405
      %v502 = vpack.c.b16 %v408, %v406
      %v503 = vpack.c.b16 %v411, %v409
      %v504 = vpack.c.b16 %v412, %v410
      %v505 = vpack.c.b16 %v415, %v413
      %v506 = vpack.c.b16 %v416, %v414
      %v507 = vpack.c.b16 %v419, %v417
      %v508 = vpack.c.b16 %v420, %v418
      %v509 = vpack.c.b16 %v423, %v421
      %v510 = vpack.c.b16 %v424, %v422
      %v511 = vpack.c.b16 %v427, %v425
      %v512 = vpack.c.b16 %v428, %v426
      %v513 = vpack.c.b16 %v431, %v429
      %v514 = vpack.c.b16 %v432, %v430
      %v515 = vpack.c.b16 %v435, %v433
      %v516 = vpack.c.b16 %v436, %v434
      %v517 = vpack.c.b16 %v439, %v437
      %v518 = vpack.c.b16 %v440, %v438
      %v519 = vpack.c.b16 %v443, %v441
      %v520 = vpack.c.b16 %v444, %v442
      %v521 = vpack.c.b16 %v447, %v445
      %v522 = vpack.c.b16 %v448, %v446
      %v523 = vpack.c.b16 %v451, %v449
      %v524 = vpack.c.b16 %v452, %v450
      %v525 = vpack.c.b16 %v455, %v453
      %v526 = vpack.c.b16 %v456, %v454
      %v527 = vpack.c.b16 %v459, %v457
      %v528 = vpack.c.b16 %v460, %v458
      %v529 = vpack.c.b16 %v463, %v461
      %v530 = vpack.c.b16 %v464, %v462
      %v531 = vpack.c.b16 %v467, %v465
      %v532 = vpack.c.b16 %v468, %v466
      %v629 = vunpack.c.l.b16 %v241
      %v630 = vunpack.c.l.b16 %v242
      %v631 = vunpack.c.l.b16 %v243
      %v632 = vunpack.c.l.b16 %v244
      %v633 = vunpack.c.l.b16 %v245
      %v634 = vunpack.c.l.b16 %v246
      %v635 = vunpack.c.l.b16 %v247
      %v636 = vunpack.c.l.b16 %v248
      %v637 = vunpack.c.l.b16 %v249
      %v638 = vunpack.c.l.b16 %v250
      %v639 = vunpack.c.l.b16 %v251
      %v640 = vunpack.c.l.b16 %v252
      %v641 = vunpack.c.l.b16 %v253
      %v642 = vunpack.c.l.b16 %v254
      %v643 = vunpack.c.l.b16 %v255
      %v644 = vunpack.c.l.b16 %v256
      %v645 = vunpack.c.l.b16 %v257
      %v646 = vunpack.c.l.b16 %v258
      %v647 = vunpack.c.l.b16 %v259
      %v648 = vunpack.c.l.b16 %v260
      %v649 = vunpack.c.l.b16 %v261
      %v650 = vunpack.c.l.b16 %v262
      %v651 = vunpack.c.l.b16 %v263
      %v652 = vunpack.c.l.b16 %v264
      %v653 = vunpack.c.l.b16 %v265
      %v654 = vunpack.c.l.b16 %v266
      %v655 = vunpack.c.l.b16 %v267
      %v656 = vunpack.c.l.b16 %v268
      %v657 = vunpack.c.l.b16 %v269
      %v658 = vunpack.c.l.b16 %v270
      %v659 = vunpack.c.l.b16 %v271
      %v660 = vunpack.c.l.b16 %v272
      %v661 = vpack.c.b16 %v630, %v629
      %v662 = vpack.c.b16 %v632, %v631
      %v663 = vpack.c.b16 %v634, %v633
      %v664 = vpack.c.b16 %v636, %v635
      %v665 = vpack.c.b16 %v638, %v637
      %v666 = vpack.c.b16 %v640, %v639
      %v667 = vpack.c.b16 %v642, %v641
      %v668 = vpack.c.b16 %v644, %v643
      %v669 = vpack.c.b16 %v646, %v645
      %v670 = vpack.c.b16 %v648, %v647
      %v671 = vpack.c.b16 %v650, %v649
      %v672 = vpack.c.b16 %v652, %v651
      %v673 = vpack.c.b16 %v654, %v653
      %v674 = vpack.c.b16 %v656, %v655
      %v675 = vpack.c.b16 %v658, %v657
      %v676 = vpack.c.b16 %v660, %v659
      %693 = vmatpush.bf16.msra.mxu0 %v668
      %694 = vmatpush.bf16.msra.mxu0 %v667
      %695 = vmatpush.bf16.msra.mxu0 %v666
      %696 = vmatpush.bf16.msra.mxu0 %v665
      %697 = vmatpush.bf16.msra.mxu0 %v664
      %698 = vmatpush.bf16.msra.mxu0 %v663
      %699 = vmatpush.bf16.msra.mxu0 %v662
      %700 = vmatpush.bf16.msra.mxu0 %v661
      %701 = vmatmul.bf16.gmra.mxu0 %v469
      %v702 = vpop.f32.mrf.mxu0
      %v703 = vadd.f32 %v275, %v702
      %v704 = vpop.f32.mrf.mxu0
      %v705 = vadd.f32 %v275, %v704
      %706 = vmatmul.bf16.gmra.mxu0 %v471
      %v707 = vpop.f32.mrf.mxu0
      %v708 = vadd.f32 %v275, %v707
      %v709 = vpop.f32.mrf.mxu0
      %v710 = vadd.f32 %v275, %v709
      %711 = vmatmul.bf16.gmra.mxu0 %v473
      %v712 = vpop.f32.mrf.mxu0
      %v713 = vadd.f32 %v275, %v712
      %v714 = vpop.f32.mrf.mxu0
      %v715 = vadd.f32 %v275, %v714
      %716 = vmatmul.bf16.gmra.mxu0 %v475
      %v717 = vpop.f32.mrf.mxu0
      %v718 = vadd.f32 %v275, %v717
      %v719 = vpop.f32.mrf.mxu0
      %v720 = vadd.f32 %v275, %v719
      %721 = vmatmul.bf16.gmra.mxu0 %v477
      %v722 = vpop.f32.mrf.mxu0
      %v723 = vadd.f32 %v275, %v722
      %v724 = vpop.f32.mrf.mxu0
      %v725 = vadd.f32 %v275, %v724
      %726 = vmatmul.bf16.gmra.mxu0 %v479
      %v727 = vpop.f32.mrf.mxu0
      %v728 = vadd.f32 %v275, %v727
      %v729 = vpop.f32.mrf.mxu0
      %v730 = vadd.f32 %v275, %v729
      %731 = vmatmul.bf16.gmra.mxu0 %v481
      %v732 = vpop.f32.mrf.mxu0
      %v733 = vadd.f32 %v275, %v732
      %v734 = vpop.f32.mrf.mxu0
      %v735 = vadd.f32 %v275, %v734
      %736 = vmatmul.bf16.gmra.mxu0 %v483
      %v737 = vpop.f32.mrf.mxu0
      %v738 = vadd.f32 %v275, %v737
      %v739 = vpop.f32.mrf.mxu0
      %v740 = vadd.f32 %v275, %v739
      %741 = vmatmul.bf16.gmra.mxu0 %v485
      %v742 = vpop.f32.mrf.mxu0
      %v743 = vadd.f32 %v275, %v742
      %v744 = vpop.f32.mrf.mxu0
      %v745 = vadd.f32 %v275, %v744
      %746 = vmatmul.bf16.gmra.mxu0 %v487
      %v747 = vpop.f32.mrf.mxu0
      %v748 = vadd.f32 %v275, %v747
      %v749 = vpop.f32.mrf.mxu0
      %v750 = vadd.f32 %v275, %v749
      %751 = vmatmul.bf16.gmra.mxu0 %v489
      %v752 = vpop.f32.mrf.mxu0
      %v753 = vadd.f32 %v275, %v752
      %v754 = vpop.f32.mrf.mxu0
      %v755 = vadd.f32 %v275, %v754
      %756 = vmatmul.bf16.gmra.mxu0 %v491
      %v757 = vpop.f32.mrf.mxu0
      %v758 = vadd.f32 %v275, %v757
      %v759 = vpop.f32.mrf.mxu0
      %v760 = vadd.f32 %v275, %v759
      %761 = vmatmul.bf16.gmra.mxu0 %v493
      %v762 = vpop.f32.mrf.mxu0
      %v763 = vadd.f32 %v275, %v762
      %v764 = vpop.f32.mrf.mxu0
      %v765 = vadd.f32 %v275, %v764
      %766 = vmatmul.bf16.gmra.mxu0 %v495
      %v767 = vpop.f32.mrf.mxu0
      %v768 = vadd.f32 %v275, %v767
      %v769 = vpop.f32.mrf.mxu0
      %v770 = vadd.f32 %v275, %v769
      %771 = vmatmul.bf16.gmra.mxu0 %v497
      %v772 = vpop.f32.mrf.mxu0
      %v773 = vadd.f32 %v275, %v772
      %v774 = vpop.f32.mrf.mxu0
      %v775 = vadd.f32 %v275, %v774
      %776 = vmatmul.bf16.gmra.mxu0 %v499
      %v777 = vpop.f32.mrf.mxu0
      %v778 = vadd.f32 %v275, %v777
      %v779 = vpop.f32.mrf.mxu0
      %v780 = vadd.f32 %v275, %v779
      %781 = vmatmul.bf16.gmra.mxu0 %v501
      %v782 = vpop.f32.mrf.mxu0
      %v783 = vadd.f32 %v275, %v782
      %v784 = vpop.f32.mrf.mxu0
      %v785 = vadd.f32 %v275, %v784
      %786 = vmatmul.bf16.gmra.mxu0 %v503
      %v787 = vpop.f32.mrf.mxu0
      %v788 = vadd.f32 %v275, %v787
      %v789 = vpop.f32.mrf.mxu0
      %v790 = vadd.f32 %v275, %v789
      %791 = vmatmul.bf16.gmra.mxu0 %v505
      %v792 = vpop.f32.mrf.mxu0
      %v793 = vadd.f32 %v275, %v792
      %v794 = vpop.f32.mrf.mxu0
      %v795 = vadd.f32 %v275, %v794
      %796 = vmatmul.bf16.gmra.mxu0 %v507
      %v797 = vpop.f32.mrf.mxu0
      %v798 = vadd.f32 %v275, %v797
      %v799 = vpop.f32.mrf.mxu0
      %v800 = vadd.f32 %v275, %v799
      %801 = vmatmul.bf16.gmra.mxu0 %v509
      %v802 = vpop.f32.mrf.mxu0
      %v803 = vadd.f32 %v275, %v802
      %v804 = vpop.f32.mrf.mxu0
      %v805 = vadd.f32 %v275, %v804
      %806 = vmatmul.bf16.gmra.mxu0 %v511
      %v807 = vpop.f32.mrf.mxu0
      %v808 = vadd.f32 %v275, %v807
      %v809 = vpop.f32.mrf.mxu0
      %v810 = vadd.f32 %v275, %v809
      %811 = vmatmul.bf16.gmra.mxu0 %v513
      %v812 = vpop.f32.mrf.mxu0
      %v813 = vadd.f32 %v275, %v812
      %v814 = vpop.f32.mrf.mxu0
      %v815 = vadd.f32 %v275, %v814
      %816 = vmatmul.bf16.gmra.mxu0 %v515
      %v817 = vpop.f32.mrf.mxu0
      %v818 = vadd.f32 %v275, %v817
      %v819 = vpop.f32.mrf.mxu0
      %v820 = vadd.f32 %v275, %v819
      %821 = vmatmul.bf16.gmra.mxu0 %v517
      %v822 = vpop.f32.mrf.mxu0
      %v823 = vadd.f32 %v275, %v822
      %v824 = vpop.f32.mrf.mxu0
      %v825 = vadd.f32 %v275, %v824
      %826 = vmatmul.bf16.gmra.mxu0 %v519
      %v827 = vpop.f32.mrf.mxu0
      %v828 = vadd.f32 %v275, %v827
      %v829 = vpop.f32.mrf.mxu0
      %v830 = vadd.f32 %v275, %v829
      %831 = vmatmul.bf16.gmra.mxu0 %v521
      %v832 = vpop.f32.mrf.mxu0
      %v833 = vadd.f32 %v275, %v832
      %v834 = vpop.f32.mrf.mxu0
      %v835 = vadd.f32 %v275, %v834
      %836 = vmatmul.bf16.gmra.mxu0 %v523
      %v837 = vpop.f32.mrf.mxu0
      %v838 = vadd.f32 %v275, %v837
      %v839 = vpop.f32.mrf.mxu0
      %v840 = vadd.f32 %v275, %v839
      %841 = vmatmul.bf16.gmra.mxu0 %v525
      %v842 = vpop.f32.mrf.mxu0
      %v843 = vadd.f32 %v275, %v842
      %v844 = vpop.f32.mrf.mxu0
      %v845 = vadd.f32 %v275, %v844
      %846 = vmatmul.bf16.gmra.mxu0 %v527
      %v847 = vpop.f32.mrf.mxu0
      %v848 = vadd.f32 %v275, %v847
      %v849 = vpop.f32.mrf.mxu0
      %v850 = vadd.f32 %v275, %v849
      %851 = vmatmul.bf16.gmra.mxu0 %v529
      %v852 = vpop.f32.mrf.mxu0
      %v853 = vadd.f32 %v275, %v852
      %v854 = vpop.f32.mrf.mxu0
      %v855 = vadd.f32 %v275, %v854
      %856 = vmatmul.bf16.gmra.mxu0 %v531
      %v857 = vpop.f32.mrf.mxu0
      %v858 = vadd.f32 %v275, %v857
      %v859 = vpop.f32.mrf.mxu0
      %v860 = vadd.f32 %v275, %v859
      %861 = vdwg.mxu0
      %862 = vmatpush.bf16.msra.mxu0 %v676
      %863 = vmatpush.bf16.msra.mxu0 %v675
      %864 = vmatpush.bf16.msra.mxu0 %v674
      %865 = vmatpush.bf16.msra.mxu0 %v673
      %866 = vmatpush.bf16.msra.mxu0 %v672
      %867 = vmatpush.bf16.msra.mxu0 %v671
      %868 = vmatpush.bf16.msra.mxu0 %v670
      %869 = vmatpush.bf16.msra.mxu0 %v669
      %870 = vmatmul.bf16.gmra.mxu0 %v470
      %v871 = vpop.f32.mrf.mxu0
      %v872 = vadd.f32 %v703, %v871
      %v873 = vpop.f32.mrf.mxu0
      %v874 = vadd.f32 %v705, %v873
      %875 = vmatmul.bf16.gmra.mxu0 %v472
      %v876 = vpop.f32.mrf.mxu0
      %v877 = vadd.f32 %v708, %v876
      %v878 = vpop.f32.mrf.mxu0
      %v879 = vadd.f32 %v710, %v878
      %880 = vmatmul.bf16.gmra.mxu0 %v474
      %v881 = vpop.f32.mrf.mxu0
      %v882 = vadd.f32 %v713, %v881
      %v883 = vpop.f32.mrf.mxu0
      %v884 = vadd.f32 %v715, %v883
      %885 = vmatmul.bf16.gmra.mxu0 %v476
      %v886 = vpop.f32.mrf.mxu0
      %v887 = vadd.f32 %v718, %v886
      %v888 = vpop.f32.mrf.mxu0
      %v889 = vadd.f32 %v720, %v888
      %890 = vmatmul.bf16.gmra.mxu0 %v478
      %v891 = vpop.f32.mrf.mxu0
      %v892 = vadd.f32 %v723, %v891
      %v893 = vpop.f32.mrf.mxu0
      %v894 = vadd.f32 %v725, %v893
      %895 = vmatmul.bf16.gmra.mxu0 %v480
      %v896 = vpop.f32.mrf.mxu0
      %v897 = vadd.f32 %v728, %v896
      %v898 = vpop.f32.mrf.mxu0
      %v899 = vadd.f32 %v730, %v898
      %900 = vmatmul.bf16.gmra.mxu0 %v482
      %v901 = vpop.f32.mrf.mxu0
      %v902 = vadd.f32 %v733, %v901
      %v903 = vpop.f32.mrf.mxu0
      %v904 = vadd.f32 %v735, %v903
      %905 = vmatmul.bf16.gmra.mxu0 %v484
      %v906 = vpop.f32.mrf.mxu0
      %v907 = vadd.f32 %v738, %v906
      %v908 = vpop.f32.mrf.mxu0
      %v909 = vadd.f32 %v740, %v908
      %910 = vmatmul.bf16.gmra.mxu0 %v486
      %v911 = vpop.f32.mrf.mxu0
      %v912 = vadd.f32 %v743, %v911
      %v913 = vpop.f32.mrf.mxu0
      %v914 = vadd.f32 %v745, %v913
      %915 = vmatmul.bf16.gmra.mxu0 %v488
      %v916 = vpop.f32.mrf.mxu0
      %v917 = vadd.f32 %v748, %v916
      %v918 = vpop.f32.mrf.mxu0
      %v919 = vadd.f32 %v750, %v918
      %920 = vmatmul.bf16.gmra.mxu0 %v490
      %v921 = vpop.f32.mrf.mxu0
      %v922 = vadd.f32 %v753, %v921
      %v923 = vpop.f32.mrf.mxu0
      %v924 = vadd.f32 %v755, %v923
      %925 = vmatmul.bf16.gmra.mxu0 %v492
      %v926 = vpop.f32.mrf.mxu0
      %v927 = vadd.f32 %v758, %v926
      %v928 = vpop.f32.mrf.mxu0
      %v929 = vadd.f32 %v760, %v928
      %930 = vmatmul.bf16.gmra.mxu0 %v494
      %v931 = vpop.f32.mrf.mxu0
      %v932 = vadd.f32 %v763, %v931
      %v933 = vpop.f32.mrf.mxu0
      %v934 = vadd.f32 %v765, %v933
      %935 = vmatmul.bf16.gmra.mxu0 %v496
      %v936 = vpop.f32.mrf.mxu0
      %v937 = vadd.f32 %v768, %v936
      %v938 = vpop.f32.mrf.mxu0
      %v939 = vadd.f32 %v770, %v938
      %940 = vmatmul.bf16.gmra.mxu0 %v498
      %v941 = vpop.f32.mrf.mxu0
      %v942 = vadd.f32 %v773, %v941
      %v943 = vpop.f32.mrf.mxu0
      %v944 = vadd.f32 %v775, %v943
      %945 = vmatmul.bf16.gmra.mxu0 %v500
      %v946 = vpop.f32.mrf.mxu0
      %v947 = vadd.f32 %v778, %v946
      %v948 = vpop.f32.mrf.mxu0
      %v949 = vadd.f32 %v780, %v948
      %950 = vmatmul.bf16.gmra.mxu0 %v502
      %v951 = vpop.f32.mrf.mxu0
      %v952 = vadd.f32 %v783, %v951
      %v953 = vpop.f32.mrf.mxu0
      %v954 = vadd.f32 %v785, %v953
      %955 = vmatmul.bf16.gmra.mxu0 %v504
      %v956 = vpop.f32.mrf.mxu0
      %v957 = vadd.f32 %v788, %v956
      %v958 = vpop.f32.mrf.mxu0
      %v959 = vadd.f32 %v790, %v958
      %960 = vmatmul.bf16.gmra.mxu0 %v506
      %v961 = vpop.f32.mrf.mxu0
      %v962 = vadd.f32 %v793, %v961
      %v963 = vpop.f32.mrf.mxu0
      %v964 = vadd.f32 %v795, %v963
      %965 = vmatmul.bf16.gmra.mxu0 %v508
      %v966 = vpop.f32.mrf.mxu0
      %v967 = vadd.f32 %v798, %v966
      %v968 = vpop.f32.mrf.mxu0
      %v969 = vadd.f32 %v800, %v968
      %970 = vmatmul.bf16.gmra.mxu0 %v510
      %v971 = vpop.f32.mrf.mxu0
      %v972 = vadd.f32 %v803, %v971
      %v973 = vpop.f32.mrf.mxu0
      %v974 = vadd.f32 %v805, %v973
      %975 = vmatmul.bf16.gmra.mxu0 %v512
      %v976 = vpop.f32.mrf.mxu0
      %v977 = vadd.f32 %v808, %v976
      %v978 = vpop.f32.mrf.mxu0
      %v979 = vadd.f32 %v810, %v978
      %980 = vmatmul.bf16.gmra.mxu0 %v514
      %v981 = vpop.f32.mrf.mxu0
      %v982 = vadd.f32 %v813, %v981
      %v983 = vpop.f32.mrf.mxu0
      %v984 = vadd.f32 %v815, %v983
      %985 = vmatmul.bf16.gmra.mxu0 %v516
      %v986 = vpop.f32.mrf.mxu0
      %v987 = vadd.f32 %v818, %v986
      %v988 = vpop.f32.mrf.mxu0
      %v989 = vadd.f32 %v820, %v988
      %990 = vmatmul.bf16.gmra.mxu0 %v518
      %v991 = vpop.f32.mrf.mxu0
      %v992 = vadd.f32 %v823, %v991
      %v993 = vpop.f32.mrf.mxu0
      %v994 = vadd.f32 %v825, %v993
      %995 = vmatmul.bf16.gmra.mxu0 %v520
      %v996 = vpop.f32.mrf.mxu0
      %v997 = vadd.f32 %v828, %v996
      %v998 = vpop.f32.mrf.mxu0
      %v999 = vadd.f32 %v830, %v998
      %1000 = vmatmul.bf16.gmra.mxu0 %v522
      %v1001 = vpop.f32.mrf.mxu0
      %v1002 = vadd.f32 %v833, %v1001
      %v1003 = vpop.f32.mrf.mxu0
      %v1004 = vadd.f32 %v835, %v1003
      %1005 = vmatmul.bf16.gmra.mxu0 %v524
      %v1006 = vpop.f32.mrf.mxu0
      %v1007 = vadd.f32 %v838, %v1006
      %v1008 = vpop.f32.mrf.mxu0
      %v1009 = vadd.f32 %v840, %v1008
      %1010 = vmatmul.bf16.gmra.mxu0 %v526
      %v1011 = vpop.f32.mrf.mxu0
      %v1012 = vadd.f32 %v843, %v1011
      %v1013 = vpop.f32.mrf.mxu0
      %v1014 = vadd.f32 %v845, %v1013
      %1015 = vmatmul.bf16.gmra.mxu0 %v528
      %v1016 = vpop.f32.mrf.mxu0
      %v1017 = vadd.f32 %v848, %v1016
      %v1018 = vpop.f32.mrf.mxu0
      %v1019 = vadd.f32 %v850, %v1018
      %1020 = vmatmul.bf16.gmra.mxu0 %v530
      %v1021 = vpop.f32.mrf.mxu0
      %v1022 = vadd.f32 %v853, %v1021
      %v1023 = vpop.f32.mrf.mxu0
      %v1024 = vadd.f32 %v855, %v1023
      %1025 = vmatmul.bf16.gmra.mxu0 %v532
      %v1026 = vpop.f32.mrf.mxu0
      %v1027 = vadd.f32 %v858, %v1026
      %v1028 = vpop.f32.mrf.mxu0
      %v1029 = vadd.f32 %v860, %v1028
      %1030 = vdwg.mxu0
      %v1031 = vmax.f32 %v872, 0.0
      %v1032 = vmax.f32 %v874, 0.0
      %v1033 = vmax.f32 %v877, 0.0
      %v1034 = vmax.f32 %v879, 0.0
      %v1035 = vmax.f32 %v882, 0.0
      %v1036 = vmax.f32 %v884, 0.0
      %v1037 = vmax.f32 %v887, 0.0
      %v1038 = vmax.f32 %v889, 0.0
      %v1039 = vmax.f32 %v892, 0.0
      %v1040 = vmax.f32 %v894, 0.0
      %v1041 = vmax.f32 %v897, 0.0
      %v1042 = vmax.f32 %v899, 0.0
      %v1043 = vmax.f32 %v902, 0.0
      %v1044 = vmax.f32 %v904, 0.0
      %v1045 = vmax.f32 %v907, 0.0
      %v1046 = vmax.f32 %v909, 0.0
      %v1047 = vmax.f32 %v912, 0.0
      %v1048 = vmax.f32 %v914, 0.0
      %v1049 = vmax.f32 %v917, 0.0
      %v1050 = vmax.f32 %v919, 0.0
      %v1051 = vmax.f32 %v922, 0.0
      %v1052 = vmax.f32 %v924, 0.0
      %v1053 = vmax.f32 %v927, 0.0
      %v1054 = vmax.f32 %v929, 0.0
      %v1055 = vmax.f32 %v932, 0.0
      %v1056 = vmax.f32 %v934, 0.0
      %v1057 = vmax.f32 %v937, 0.0
      %v1058 = vmax.f32 %v939, 0.0
      %v1059 = vmax.f32 %v942, 0.0
      %v1060 = vmax.f32 %v944, 0.0
      %v1061 = vmax.f32 %v947, 0.0
      %v1062 = vmax.f32 %v949, 0.0
      %v1063 = vmax.f32 %v952, 0.0
      %v1064 = vmax.f32 %v954, 0.0
      %v1065 = vmax.f32 %v957, 0.0
      %v1066 = vmax.f32 %v959, 0.0
      %v1067 = vmax.f32 %v962, 0.0
      %v1068 = vmax.f32 %v964, 0.0
      %v1069 = vmax.f32 %v967, 0.0
      %v1070 = vmax.f32 %v969, 0.0
      %v1071 = vmax.f32 %v972, 0.0
      %v1072 = vmax.f32 %v974, 0.0
      %v1073 = vmax.f32 %v977, 0.0
      %v1074 = vmax.f32 %v979, 0.0
      %v1075 = vmax.f32 %v982, 0.0
      %v1076 = vmax.f32 %v984, 0.0
      %v1077 = vmax.f32 %v987, 0.0
      %v1078 = vmax.f32 %v989, 0.0
      %v1079 = vmax.f32 %v992, 0.0
      %v1080 = vmax.f32 %v994, 0.0
      %v1081 = vmax.f32 %v997, 0.0
      %v1082 = vmax.f32 %v999, 0.0
      %v1083 = vmax.f32 %v1002, 0.0
      %v1084 = vmax.f32 %v1004, 0.0
      %v1085 = vmax.f32 %v1007, 0.0
      %v1086 = vmax.f32 %v1009, 0.0
      %v1087 = vmax.f32 %v1012, 0.0
      %v1088 = vmax.f32 %v1014, 0.0
      %v1089 = vmax.f32 %v1017, 0.0
      %v1090 = vmax.f32 %v1019, 0.0
      %v1091 = vmax.f32 %v1022, 0.0
      %v1092 = vmax.f32 %v1024, 0.0
      %v1093 = vmax.f32 %v1027, 0.0
      %v1094 = vmax.f32 %v1029, 0.0
      %v1095 = vpack.c.bf16 %v1031, %v1031
      %v1096 = vpack.c.bf16 %v1032, %v1032
      %v1097 = vpack.c.bf16 %v1033, %v1033
      %v1098 = vpack.c.bf16 %v1034, %v1034
      %v1099 = vpack.c.bf16 %v1035, %v1035
      %v1100 = vpack.c.bf16 %v1036, %v1036
      %v1101 = vpack.c.bf16 %v1037, %v1037
      %v1102 = vpack.c.bf16 %v1038, %v1038
      %v1103 = vpack.c.bf16 %v1039, %v1039
      %v1104 = vpack.c.bf16 %v1040, %v1040
      %v1105 = vpack.c.bf16 %v1041, %v1041
      %v1106 = vpack.c.bf16 %v1042, %v1042
      %v1107 = vpack.c.bf16 %v1043, %v1043
      %v1108 = vpack.c.bf16 %v1044, %v1044
      %v1109 = vpack.c.bf16 %v1045, %v1045
      %v1110 = vpack.c.bf16 %v1046, %v1046
      %v1111 = vpack.c.bf16 %v1047, %v1047
      %v1112 = vpack.c.bf16 %v1048, %v1048
      %v1113 = vpack.c.bf16 %v1049, %v1049
      %v1114 = vpack.c.bf16 %v1050, %v1050
      %v1115 = vpack.c.bf16 %v1051, %v1051
      %v1116 = vpack.c.bf16 %v1052, %v1052
      %v1117 = vpack.c.bf16 %v1053, %v1053
      %v1118 = vpack.c.bf16 %v1054, %v1054
      %v1119 = vpack.c.bf16 %v1055, %v1055
      %v1120 = vpack.c.bf16 %v1056, %v1056
      %v1121 = vpack.c.bf16 %v1057, %v1057
      %v1122 = vpack.c.bf16 %v1058, %v1058
      %v1123 = vpack.c.bf16 %v1059, %v1059
      %v1124 = vpack.c.bf16 %v1060, %v1060
      %v1125 = vpack.c.bf16 %v1061, %v1061
      %v1126 = vpack.c.bf16 %v1062, %v1062
      %v1127 = vpack.c.bf16 %v1063, %v1063
      %v1128 = vpack.c.bf16 %v1064, %v1064
      %v1129 = vpack.c.bf16 %v1065, %v1065
      %v1130 = vpack.c.bf16 %v1066, %v1066
      %v1131 = vpack.c.bf16 %v1067, %v1067
      %v1132 = vpack.c.bf16 %v1068, %v1068
      %v1133 = vpack.c.bf16 %v1069, %v1069
      %v1134 = vpack.c.bf16 %v1070, %v1070
      %v1135 = vpack.c.bf16 %v1071, %v1071
      %v1136 = vpack.c.bf16 %v1072, %v1072
      %v1137 = vpack.c.bf16 %v1073, %v1073
      %v1138 = vpack.c.bf16 %v1074, %v1074
      %v1139 = vpack.c.bf16 %v1075, %v1075
      %v1140 = vpack.c.bf16 %v1076, %v1076
      %v1141 = vpack.c.bf16 %v1077, %v1077
      %v1142 = vpack.c.bf16 %v1078, %v1078
      %v1143 = vpack.c.bf16 %v1079, %v1079
      %v1144 = vpack.c.bf16 %v1080, %v1080
      %v1145 = vpack.c.bf16 %v1081, %v1081
      %v1146 = vpack.c.bf16 %v1082, %v1082
      %v1147 = vpack.c.bf16 %v1083, %v1083
      %v1148 = vpack.c.bf16 %v1084, %v1084
      %v1149 = vpack.c.bf16 %v1085, %v1085
      %v1150 = vpack.c.bf16 %v1086, %v1086
      %v1151 = vpack.c.bf16 %v1087, %v1087
      %v1152 = vpack.c.bf16 %v1088, %v1088
      %v1153 = vpack.c.bf16 %v1089, %v1089
      %v1154 = vpack.c.bf16 %v1090, %v1090
      %v1155 = vpack.c.bf16 %v1091, %v1091
      %v1156 = vpack.c.bf16 %v1092, %v1092
      %v1157 = vpack.c.bf16 %v1093, %v1093
      %v1158 = vpack.c.bf16 %v1094, %v1094
      %vm1159 = vcmask 257024
      %1160 = vst.msk [vmem:[%s175] sm:$0xf] %vm1159, %v1095
      %1161 = vst.msk [vmem:[%s175 + $0x4] sm:$0xf] %vm1159, %v1096
      %1162 = vst.msk [vmem:[%s175 + $0x8] sm:$0xf] %vm1159, %v1097
      %1163 = vst.msk [vmem:[%s175 + $0xc] sm:$0xf] %vm1159, %v1098
      %1164 = vst.msk [vmem:[%s175 + $0x10] sm:$0xf] %vm1159, %v1099
      %1165 = vst.msk [vmem:[%s175 + $0x14] sm:$0xf] %vm1159, %v1100
      %1166 = vst.msk [vmem:[%s175 + $0x18] sm:$0xf] %vm1159, %v1101
      %1167 = vst.msk [vmem:[%s175 + $0x1c] sm:$0xf] %vm1159, %v1102
      %1168 = vst.msk [vmem:[%s175 + $0x20] sm:$0xf] %vm1159, %v1103
      %1169 = vst.msk [vmem:[%s175 + $0x24] sm:$0xf] %vm1159, %v1104
      %1170 = vst.msk [vmem:[%s175 + $0x28] sm:$0xf] %vm1159, %v1105
      %1171 = vst.msk [vmem:[%s175 + $0x2c] sm:$0xf] %vm1159, %v1106
      %1172 = vst.msk [vmem:[%s175 + $0x30] sm:$0xf] %vm1159, %v1107
      %1173 = vst.msk [vmem:[%s175 + $0x34] sm:$0xf] %vm1159, %v1108
      %1174 = vst.msk [vmem:[%s175 + $0x38] sm:$0xf] %vm1159, %v1109
      %1175 = vst.msk [vmem:[%s175 + $0x3c] sm:$0xf] %vm1159, %v1110
      %1176 = vst.msk [vmem:[%s175 + $0x40] sm:$0xf] %vm1159, %v1111
      %1177 = vst.msk [vmem:[%s175 + $0x44] sm:$0xf] %vm1159, %v1112
      %1178 = vst.msk [vmem:[%s175 + $0x48] sm:$0xf] %vm1159, %v1113
      %1179 = vst.msk [vmem:[%s175 + $0x4c] sm:$0xf] %vm1159, %v1114
      %1180 = vst.msk [vmem:[%s175 + $0x50] sm:$0xf] %vm1159, %v1115
      %1181 = vst.msk [vmem:[%s175 + $0x54] sm:$0xf] %vm1159, %v1116
      %1182 = vst.msk [vmem:[%s175 + $0x58] sm:$0xf] %vm1159, %v1117
      %1183 = vst.msk [vmem:[%s175 + $0x5c] sm:$0xf] %vm1159, %v1118
      %1184 = vst.msk [vmem:[%s175 + $0x60] sm:$0xf] %vm1159, %v1119
      %1185 = vst.msk [vmem:[%s175 + $0x64] sm:$0xf] %vm1159, %v1120
      %1186 = vst.msk [vmem:[%s175 + $0x68] sm:$0xf] %vm1159, %v1121
      %1187 = vst.msk [vmem:[%s175 + $0x6c] sm:$0xf] %vm1159, %v1122
      %1188 = vst.msk [vmem:[%s175 + $0x70] sm:$0xf] %vm1159, %v1123
      %1189 = vst.msk [vmem:[%s175 + $0x74] sm:$0xf] %vm1159, %v1124
      %1190 = vst.msk [vmem:[%s175 + $0x78] sm:$0xf] %vm1159, %v1125
      %1191 = vst.msk [vmem:[%s175 + $0x7c] sm:$0xf] %vm1159, %v1126
      %1192 = vst.msk [vmem:[%s175 + $0x80] sm:$0xf] %vm1159, %v1127
      %1193 = vst.msk [vmem:[%s175 + $0x84] sm:$0xf] %vm1159, %v1128
      %1194 = vst.msk [vmem:[%s175 + $0x88] sm:$0xf] %vm1159, %v1129
      %1195 = vst.msk [vmem:[%s175 + $0x8c] sm:$0xf] %vm1159, %v1130
      %1196 = vst.msk [vmem:[%s175 + $0x90] sm:$0xf] %vm1159, %v1131
      %1197 = vst.msk [vmem:[%s175 + $0x94] sm:$0xf] %vm1159, %v1132
      %1198 = vst.msk [vmem:[%s175 + $0x98] sm:$0xf] %vm1159, %v1133
      %1199 = vst.msk [vmem:[%s175 + $0x9c] sm:$0xf] %vm1159, %v1134
      %1200 = vst.msk [vmem:[%s175 + $0xa0] sm:$0xf] %vm1159, %v1135
      %1201 = vst.msk [vmem:[%s175 + $0xa4] sm:$0xf] %vm1159, %v1136
      %1202 = vst.msk [vmem:[%s175 + $0xa8] sm:$0xf] %vm1159, %v1137
      %1203 = vst.msk [vmem:[%s175 + $0xac] sm:$0xf] %vm1159, %v1138
      %1204 = vst.msk [vmem:[%s175 + $0xb0] sm:$0xf] %vm1159, %v1139
      %1205 = vst.msk [vmem:[%s175 + $0xb4] sm:$0xf] %vm1159, %v1140
      %1206 = vst.msk [vmem:[%s175 + $0xb8] sm:$0xf] %vm1159, %v1141
      %1207 = vst.msk [vmem:[%s175 + $0xbc] sm:$0xf] %vm1159, %v1142
      %1208 = vst.msk [vmem:[%s175 + $0xc0] sm:$0xf] %vm1159, %v1143
      %1209 = vst.msk [vmem:[%s175 + $0xc4] sm:$0xf] %vm1159, %v1144
      %1210 = vst.msk [vmem:[%s175 + $0xc8] sm:$0xf] %vm1159, %v1145
      %1211 = vst.msk [vmem:[%s175 + $0xcc] sm:$0xf] %vm1159, %v1146
      %1212 = vst.msk [vmem:[%s175 + $0xd0] sm:$0xf] %vm1159, %v1147
      %1213 = vst.msk [vmem:[%s175 + $0xd4] sm:$0xf] %vm1159, %v1148
      %1214 = vst.msk [vmem:[%s175 + $0xd8] sm:$0xf] %vm1159, %v1149
      %1215 = vst.msk [vmem:[%s175 + $0xdc] sm:$0xf] %vm1159, %v1150
      %1216 = vst.msk [vmem:[%s175 + $0xe0] sm:$0xf] %vm1159, %v1151
      %1217 = vst.msk [vmem:[%s175 + $0xe4] sm:$0xf] %vm1159, %v1152
      %1218 = vst.msk [vmem:[%s175 + $0xe8] sm:$0xf] %vm1159, %v1153
      %1219 = vst.msk [vmem:[%s175 + $0xec] sm:$0xf] %vm1159, %v1154
      %1220 = vst.msk [vmem:[%s175 + $0xf0] sm:$0xf] %vm1159, %v1155
      %1221 = vst.msk [vmem:[%s175 + $0xf4] sm:$0xf] %vm1159, %v1156
      %1222 = vst.msk [vmem:[%s175 + $0xf8] sm:$0xf] %vm1159, %v1157
      %1223 = vst.msk [vmem:[%s175 + $0xfc] sm:$0xf] %vm1159, %v1158
      %s1224 = smul.u32 64, %s14
      %p1225 = scmp.lt.s32.totalorder %s1224, 127
      %s1226 = scalar_select %p1225, %s1224, 127
      %s1227 = smul.addr %s1226, 4
      %s1228 = scalar_lea.vmem %s3, %s1227
      // Predicated region
      $region33: #{forward.4} parent=31 // pred_check
        %p1229 = pneg %p100
      $region34: #{forward.4} parent=31 // pred_check_branch
        %1231 = sbr.rel (%p1229) target = $region36
      $region35: #{forward.4} parent=31 // pred_region
        %s1232 = smul.u32 64, %s14
      $region36: #{forward.4} parent=31 // pred_fallthru
        _
    $region32: #{forward.4} parent=5 // pred_fallthru
      _
    %p1233 = scmp.le.s32.totalorder 2, %s9
    // Predicated region
    $region37: #{forward.4} parent=5 // pred_check
      %p1234 = pneg %p1233
    $region38: #{forward.4} parent=5 // pred_check_branch
      %1236 = sbr.rel (%p1234) target = $region40
    $region39: #{forward.4} parent=5 // pred_region
      %s1237 = ssub.s32 %s9, 2
      // Predicated region
      $region41: #{forward.4} parent=39 // pred_check
        %p1238 = pneg %p106
      $region42: #{forward.4} parent=39 // pred_check_branch
        %1240 = sbr.rel (%p1238) target = $region44
      $region43: #{forward.4} parent=39 // pred_region
        %s1241 = smul.u32 64, %s15
        %p1242 = scmp.lt.s32.totalorder %s1241, 127
        %s1243 = scalar_select %p1242, %s1241, 127
        %s1244 = smul.addr %s1243, 4
        %s1245 = scalar_lea.vmem %s3, %s1244
      $region44: #{forward.4} parent=39 // pred_fallthru
        _
    $region40: #{forward.4} parent=5 // pred_fallthru
      _
  $region6: #{forward.4} parent=0 // loop_footer
    %s13 = sadd.s32 1, %s9
  $region7: #{forward.4} parent=0 // loop_footer_branch
    %8 = sbr.rel target = $region3
  $region8: #{forward.4} parent=0 // loop_exit
    _

// kernel: forward.5
$region0: #{forward.5}
  #allocation0 [shape = 'u32[]', space=smem, size = 0x4, offset = 0x4, fixed_abs, tag = 'smem constant byte address 0x4 - core index']
  #allocation1 [shape = 'u32[72,128]{1,0:T(1,128)}', space=vmem, size = 0x9000, scoped, tag = 'internal scratch']
  %s0 = inlined_call_operand.vmem [shape: bf16[176,512], index: 0, kind: input, shape index: {}]
  %s1 = inlined_call_operand.vmem [shape: bf16[512,64], index: 1, kind: input, shape index: {}]
  %s2 = inlined_call_operand.vmem [shape: f32[1,64], index: 2, kind: input, shape index: {}]
  %s3 = inlined_call_operand.vmem [shape: bf16[176,64], index: 3, kind: output, shape index: {}]
  %s4 = sld [smem:[#allocation0]]
  $region22: #{forward.5} parent=0
    _
  %s6 = ssub.s32 1, %s4
  %s7 = scalar_select 0, %s6, %s4
  // Predicated region
  $region2: #{forward.5} parent=0 // pred_check
    _
  $region3: #{forward.5} parent=0 // pred_check_branch
    %9 = sbr.rel (0) target = $region5
  $region4: #{forward.5} parent=0 // pred_region
    _
  $region5: #{forward.5} parent=0 // pred_fallthru
    _
  // Predicated region
  $region6: #{forward.5} parent=0 // pred_check
    _
  $region7: #{forward.5} parent=0 // pred_check_branch
    %11 = sbr.rel (0) target = $region9
  $region8: #{forward.5} parent=0 // pred_region
    _
  $region9: #{forward.5} parent=0 // pred_fallthru
    _
  // Predicated region
  $region10: #{forward.5} parent=0 // pred_check
    _
  $region11: #{forward.5} parent=0 // pred_check_branch
    %13 = sbr.rel (0) target = $region13
  $region12: #{forward.5} parent=0 // pred_region
    _
  $region13: #{forward.5} parent=0 // pred_fallthru
    _
  %v14 = vld [vmem:[%s0] sm:$0xff]
  %v15 = vld [vmem:[%s0 + $0x8] sm:$0xff]
  %v16 = vld [vmem:[%s0 + $0x10] sm:$0xff]
  %v17 = vld [vmem:[%s0 + $0x18] sm:$0xff]
  %v18 = vld [vmem:[%s0 + $0x20] sm:$0xff]
  %v19 = vld [vmem:[%s0 + $0x28] sm:$0xff]
  %v20 = vld [vmem:[%s0 + $0x30] sm:$0xff]
  %v21 = vld [vmem:[%s0 + $0x38] sm:$0xff]
  %v22 = vld [vmem:[%s0 + $0x40] sm:$0xff]
  %v23 = vld [vmem:[%s0 + $0x48] sm:$0xff]
  %v24 = vld [vmem:[%s0 + $0x50] sm:$0xff]
  %v25 = vld [vmem:[%s0 + $0x58] sm:$0xff]
  %v26 = vld [vmem:[%s0 + $0x60] sm:$0xff]
  %v27 = vld [vmem:[%s0 + $0x68] sm:$0xff]
  %v28 = vld [vmem:[%s0 + $0x70] sm:$0xff]
  %v29 = vld [vmem:[%s0 + $0x78] sm:$0xff]
  %v30 = vld [vmem:[%s0 + $0x80] sm:$0xff]
  %v31 = vld [vmem:[%s0 + $0x88] sm:$0xff]
  %v32 = vld [vmem:[%s0 + $0x90] sm:$0xff]
  %v33 = vld [vmem:[%s0 + $0x98] sm:$0xff]
  %v34 = vld [vmem:[%s0 + $0xa0] sm:$0xff]
  %v35 = vld [vmem:[%s0 + $0xa8] sm:$0xff]
  %v36 = vld [vmem:[%s0 + $0xb0] sm:$0xff]
  %v37 = vld [vmem:[%s0 + $0xb8] sm:$0xff]
  %v38 = vld [vmem:[%s0 + $0xc0] sm:$0xff]
  %v39 = vld [vmem:[%s0 + $0xc8] sm:$0xff]
  %v40 = vld [vmem:[%s0 + $0xd0] sm:$0xff]
  %v41 = vld [vmem:[%s0 + $0xd8] sm:$0xff]
  %v42 = vld [vmem:[%s0 + $0xe0] sm:$0xff]
  %v43 = vld [vmem:[%s0 + $0xe8] sm:$0xff]
  %v44 = vld [vmem:[%s0 + $0xf0] sm:$0xff]
  %v45 = vld [vmem:[%s0 + $0xf8] sm:$0xff]
  %v46 = vld [vmem:[%s0 + $0x100] sm:$0xff]
  %v47 = vld [vmem:[%s0 + $0x108] sm:$0xff]
  %v48 = vld [vmem:[%s0 + $0x110] sm:$0xff]
  %v49 = vld [vmem:[%s0 + $0x118] sm:$0xff]
  %v50 = vld [vmem:[%s0 + $0x120] sm:$0xff]
  %v51 = vld [vmem:[%s0 + $0x128] sm:$0xff]
  %v52 = vld [vmem:[%s0 + $0x130] sm:$0xff]
  %v53 = vld [vmem:[%s0 + $0x138] sm:$0xff]
  %v54 = vld [vmem:[%s0 + $0x140] sm:$0xff]
  %v55 = vld [vmem:[%s0 + $0x148] sm:$0xff]
  %v56 = vld [vmem:[%s0 + $0x150] sm:$0xff]
  %v57 = vld [vmem:[%s0 + $0x158] sm:$0xff]
  %v58 = vld [vmem:[%s1] sm:$0xf]
  %v59 = vld [vmem:[%s1 + $0x4] sm:$0xf]
  %v60 = vld [vmem:[%s1 + $0x8] sm:$0xf]
  %v61 = vld [vmem:[%s1 + $0xc] sm:$0xf]
  %v62 = vld [vmem:[%s1 + $0x10] sm:$0xf]
  %v63 = vld [vmem:[%s1 + $0x14] sm:$0xf]
  %v64 = vld [vmem:[%s1 + $0x18] sm:$0xf]
  %v65 = vld [vmem:[%s1 + $0x1c] sm:$0xf]
  %v66 = vld [vmem:[%s1 + $0x20] sm:$0xf]
  %v67 = vld [vmem:[%s1 + $0x24] sm:$0xf]
  %v68 = vld [vmem:[%s1 + $0x28] sm:$0xf]
  %v69 = vld [vmem:[%s1 + $0x2c] sm:$0xf]
  %v70 = vld [vmem:[%s1 + $0x30] sm:$0xf]
  %v71 = vld [vmem:[%s1 + $0x34] sm:$0xf]
  %v72 = vld [vmem:[%s1 + $0x38] sm:$0xf]
  %v73 = vld [vmem:[%s1 + $0x3c] sm:$0xf]
  %v74 = vld [vmem:[%s1 + $0x40] sm:$0xf]
  %v75 = vld [vmem:[%s1 + $0x44] sm:$0xf]
  %v76 = vld [vmem:[%s1 + $0x48] sm:$0xf]
  %v77 = vld [vmem:[%s1 + $0x4c] sm:$0xf]
  %v78 = vld [vmem:[%s1 + $0x50] sm:$0xf]
  %v79 = vld [vmem:[%s1 + $0x54] sm:$0xf]
  %v80 = vld [vmem:[%s1 + $0x58] sm:$0xf]
  %v81 = vld [vmem:[%s1 + $0x5c] sm:$0xf]
  %v82 = vld [vmem:[%s1 + $0x60] sm:$0xf]
  %v83 = vld [vmem:[%s1 + $0x64] sm:$0xf]
  %v84 = vld [vmem:[%s1 + $0x68] sm:$0xf]
  %v85 = vld [vmem:[%s1 + $0x6c] sm:$0xf]
  %v86 = vld [vmem:[%s1 + $0x70] sm:$0xf]
  %v87 = vld [vmem:[%s1 + $0x74] sm:$0xf]
  %v88 = vld [vmem:[%s1 + $0x78] sm:$0xf]
  %v89 = vld [vmem:[%s1 + $0x7c] sm:$0xf]
  %v90 = vld [vmem:[%s1 + $0x80] sm:$0xf]
  %v91 = vld [vmem:[%s1 + $0x84] sm:$0xf]
  %v92 = vld [vmem:[%s1 + $0x88] sm:$0xf]
  %v93 = vld [vmem:[%s1 + $0x8c] sm:$0xf]
  %v94 = vld [vmem:[%s1 + $0x90] sm:$0xf]
  %v95 = vld [vmem:[%s1 + $0x94] sm:$0xf]
  %v96 = vld [vmem:[%s1 + $0x98] sm:$0xf]
  %v97 = vld [vmem:[%s1 + $0x9c] sm:$0xf]
  %v98 = vld [vmem:[%s1 + $0xa0] sm:$0xf]
  %v99 = vld [vmem:[%s1 + $0xa4] sm:$0xf]
  %v100 = vld [vmem:[%s1 + $0xa8] sm:$0xf]
  %v101 = vld [vmem:[%s1 + $0xac] sm:$0xf]
  %v102 = vld [vmem:[%s1 + $0xb0] sm:$0xf]
  %v103 = vld [vmem:[%s1 + $0xb4] sm:$0xf]
  %v104 = vld [vmem:[%s1 + $0xb8] sm:$0xf]
  %v105 = vld [vmem:[%s1 + $0xbc] sm:$0xf]
  %v106 = vld [vmem:[%s1 + $0xc0] sm:$0xf]
  %v107 = vld [vmem:[%s1 + $0xc4] sm:$0xf]
  %v108 = vld [vmem:[%s1 + $0xc8] sm:$0xf]
  %v109 = vld [vmem:[%s1 + $0xcc] sm:$0xf]
  %v110 = vld [vmem:[%s1 + $0xd0] sm:$0xf]
  %v111 = vld [vmem:[%s1 + $0xd4] sm:$0xf]
  %v112 = vld [vmem:[%s1 + $0xd8] sm:$0xf]
  %v113 = vld [vmem:[%s1 + $0xdc] sm:$0xf]
  %v114 = vld [vmem:[%s1 + $0xe0] sm:$0xf]
  %v115 = vld [vmem:[%s1 + $0xe4] sm:$0xf]
  %v116 = vld [vmem:[%s1 + $0xe8] sm:$0xf]
  %v117 = vld [vmem:[%s1 + $0xec] sm:$0xf]
  %v118 = vld [vmem:[%s1 + $0xf0] sm:$0xf]
  %v119 = vld [vmem:[%s1 + $0xf4] sm:$0xf]
  %v120 = vld [vmem:[%s1 + $0xf8] sm:$0xf]
  %v121 = vld [vmem:[%s1 + $0xfc] sm:$0xf]
  %v122 = vld [vmem:[%s2] sm:$0x1]
  %v124 = vperm.slane %v122, 0
  %v170 = vunpack.c.l.b16 %v14
  %v171 = vunpack.c.h.b16 %v14
  %v172 = vunpack.c.l.b16 %v15
  %v173 = vunpack.c.h.b16 %v15
  %v174 = vunpack.c.l.b16 %v16
  %v175 = vunpack.c.h.b16 %v16
  %v176 = vunpack.c.l.b16 %v17
  %v177 = vunpack.c.h.b16 %v17
  %v178 = vunpack.c.l.b16 %v18
  %v179 = vunpack.c.h.b16 %v18
  %v180 = vunpack.c.l.b16 %v19
  %v181 = vunpack.c.h.b16 %v19
  %v182 = vunpack.c.l.b16 %v20
  %v183 = vunpack.c.h.b16 %v20
  %v184 = vunpack.c.l.b16 %v21
  %v185 = vunpack.c.h.b16 %v21
  %v186 = vunpack.c.l.b16 %v22
  %v187 = vunpack.c.h.b16 %v22
  %v188 = vunpack.c.l.b16 %v23
  %v189 = vunpack.c.h.b16 %v23
  %v190 = vunpack.c.l.b16 %v24
  %v191 = vunpack.c.h.b16 %v24
  %v192 = vunpack.c.l.b16 %v25
  %v193 = vunpack.c.h.b16 %v25
  %v194 = vunpack.c.l.b16 %v26
  %v195 = vunpack.c.h.b16 %v26
  %v196 = vunpack.c.l.b16 %v27
  %v197 = vunpack.c.h.b16 %v27
  %v198 = vunpack.c.l.b16 %v28
  %v199 = vunpack.c.h.b16 %v28
  %v200 = vunpack.c.l.b16 %v29
  %v201 = vunpack.c.h.b16 %v29
  %v202 = vunpack.c.l.b16 %v30
  %v203 = vunpack.c.h.b16 %v30
  %v204 = vunpack.c.l.b16 %v31
  %v205 = vunpack.c.h.b16 %v31
  %v206 = vunpack.c.l.b16 %v32
  %v207 = vunpack.c.h.b16 %v32
  %v208 = vunpack.c.l.b16 %v33
  %v209 = vunpack.c.h.b16 %v33
  %v210 = vunpack.c.l.b16 %v34
  %v211 = vunpack.c.h.b16 %v34
  %v212 = vunpack.c.l.b16 %v35
  %v213 = vunpack.c.h.b16 %v35
  %v214 = vunpack.c.l.b16 %v36
  %v215 = vunpack.c.h.b16 %v36
  %v216 = vunpack.c.l.b16 %v37
  %v217 = vunpack.c.h.b16 %v37
  %v218 = vunpack.c.l.b16 %v38
  %v219 = vunpack.c.h.b16 %v38
  %v220 = vunpack.c.l.b16 %v39
  %v221 = vunpack.c.h.b16 %v39
  %v222 = vunpack.c.l.b16 %v40
  %v223 = vunpack.c.h.b16 %v40
  %v224 = vunpack.c.l.b16 %v41
  %v225 = vunpack.c.h.b16 %v41
  %v226 = vunpack.c.l.b16 %v42
  %v227 = vunpack.c.h.b16 %v42
  %v228 = vunpack.c.l.b16 %v43
  %v229 = vunpack.c.h.b16 %v43
  %v230 = vunpack.c.l.b16 %v44
  %v231 = vunpack.c.h.b16 %v44
  %v232 = vunpack.c.l.b16 %v45
  %v233 = vunpack.c.h.b16 %v45
  %v234 = vunpack.c.l.b16 %v46
  %v235 = vunpack.c.h.b16 %v46
  %v236 = vunpack.c.l.b16 %v47
  %v237 = vunpack.c.h.b16 %v47
  %v238 = vunpack.c.l.b16 %v48
  %v239 = vunpack.c.h.b16 %v48
  %v240 = vunpack.c.l.b16 %v49
  %v241 = vunpack.c.h.b16 %v49
  %v242 = vunpack.c.l.b16 %v50
  %v243 = vunpack.c.h.b16 %v50
  %v244 = vunpack.c.l.b16 %v51
  %v245 = vunpack.c.h.b16 %v51
  %v246 = vunpack.c.l.b16 %v52
  %v247 = vunpack.c.h.b16 %v52
  %v248 = vunpack.c.l.b16 %v53
  %v249 = vunpack.c.h.b16 %v53
  %v250 = vunpack.c.l.b16 %v54
  %v251 = vunpack.c.h.b16 %v54
  %v252 = vunpack.c.l.b16 %v55
  %v253 = vunpack.c.h.b16 %v55
  %v254 = vunpack.c.l.b16 %v56
  %v255 = vunpack.c.h.b16 %v56
  %v256 = vunpack.c.l.b16 %v57
  %v257 = vunpack.c.h.b16 %v57
  %v258 = vpack.c.b16 %v174, %v170
  %v259 = vpack.c.b16 %v175, %v171
  %v260 = vpack.c.b16 %v176, %v172
  %v261 = vpack.c.b16 %v177, %v173
  %v262 = vpack.c.b16 %v182, %v178
  %v263 = vpack.c.b16 %v183, %v179
  %v264 = vpack.c.b16 %v184, %v180
  %v265 = vpack.c.b16 %v185, %v181
  %v266 = vpack.c.b16 %v190, %v186
  %v267 = vpack.c.b16 %v191, %v187
  %v268 = vpack.c.b16 %v192, %v188
  %v269 = vpack.c.b16 %v193, %v189
  %v270 = vpack.c.b16 %v198, %v194
  %v271 = vpack.c.b16 %v199, %v195
  %v272 = vpack.c.b16 %v200, %v196
  %v273 = vpack.c.b16 %v201, %v197
  %v274 = vpack.c.b16 %v206, %v202
  %v275 = vpack.c.b16 %v207, %v203
  %v276 = vpack.c.b16 %v208, %v204
  %v277 = vpack.c.b16 %v209, %v205
  %v278 = vpack.c.b16 %v214, %v210
  %v279 = vpack.c.b16 %v215, %v211
  %v280 = vpack.c.b16 %v216, %v212
  %v281 = vpack.c.b16 %v217, %v213
  %v282 = vpack.c.b16 %v222, %v218
  %v283 = vpack.c.b16 %v223, %v219
  %v284 = vpack.c.b16 %v224, %v220
  %v285 = vpack.c.b16 %v225, %v221
  %v286 = vpack.c.b16 %v230, %v226
  %v287 = vpack.c.b16 %v231, %v227
  %v288 = vpack.c.b16 %v232, %v228
  %v289 = vpack.c.b16 %v233, %v229
  %v290 = vpack.c.b16 %v238, %v234
  %v291 = vpack.c.b16 %v239, %v235
  %v292 = vpack.c.b16 %v240, %v236
  %v293 = vpack.c.b16 %v241, %v237
  %v294 = vpack.c.b16 %v246, %v242
  %v295 = vpack.c.b16 %v247, %v243
  %v296 = vpack.c.b16 %v248, %v244
  %v297 = vpack.c.b16 %v249, %v245
  %v298 = vpack.c.b16 %v254, %v250
  %v299 = vpack.c.b16 %v255, %v251
  %v300 = vpack.c.b16 %v256, %v252
  %v301 = vpack.c.b16 %v257, %v253
  %v410 = vunpack.c.l.b16 %v58
  %v411 = vunpack.c.l.b16 %v59
  %v412 = vunpack.c.l.b16 %v60
  %v413 = vunpack.c.l.b16 %v61
  %v414 = vunpack.c.l.b16 %v62
  %v415 = vunpack.c.l.b16 %v63
  %v416 = vunpack.c.l.b16 %v64
  %v417 = vunpack.c.l.b16 %v65
  %v418 = vunpack.c.l.b16 %v66
  %v419 = vunpack.c.l.b16 %v67
  %v420 = vunpack.c.l.b16 %v68
  %v421 = vunpack.c.l.b16 %v69
  %v422 = vunpack.c.l.b16 %v70
  %v423 = vunpack.c.l.b16 %v71
  %v424 = vunpack.c.l.b16 %v72
  %v425 = vunpack.c.l.b16 %v73
  %v426 = vunpack.c.l.b16 %v74
  %v427 = vunpack.c.l.b16 %v75
  %v428 = vunpack.c.l.b16 %v76
  %v429 = vunpack.c.l.b16 %v77
  %v430 = vunpack.c.l.b16 %v78
  %v431 = vunpack.c.l.b16 %v79
  %v432 = vunpack.c.l.b16 %v80
  %v433 = vunpack.c.l.b16 %v81
  %v434 = vunpack.c.l.b16 %v82
  %v435 = vunpack.c.l.b16 %v83
  %v436 = vunpack.c.l.b16 %v84
  %v437 = vunpack.c.l.b16 %v85
  %v438 = vunpack.c.l.b16 %v86
  %v439 = vunpack.c.l.b16 %v87
  %v440 = vunpack.c.l.b16 %v88
  %v441 = vunpack.c.l.b16 %v89
  %v442 = vunpack.c.l.b16 %v90
  %v443 = vunpack.c.l.b16 %v91
  %v444 = vunpack.c.l.b16 %v92
  %v445 = vunpack.c.l.b16 %v93
  %v446 = vunpack.c.l.b16 %v94
  %v447 = vunpack.c.l.b16 %v95
  %v448 = vunpack.c.l.b16 %v96
  %v449 = vunpack.c.l.b16 %v97
  %v450 = vunpack.c.l.b16 %v98
  %v451 = vunpack.c.l.b16 %v99
  %v452 = vunpack.c.l.b16 %v100
  %v453 = vunpack.c.l.b16 %v101
  %v454 = vunpack.c.l.b16 %v102
  %v455 = vunpack.c.l.b16 %v103
  %v456 = vunpack.c.l.b16 %v104
  %v457 = vunpack.c.l.b16 %v105
  %v458 = vunpack.c.l.b16 %v106
  %v459 = vunpack.c.l.b16 %v107
  %v460 = vunpack.c.l.b16 %v108
  %v461 = vunpack.c.l.b16 %v109
  %v462 = vunpack.c.l.b16 %v110
  %v463 = vunpack.c.l.b16 %v111
  %v464 = vunpack.c.l.b16 %v112
  %v465 = vunpack.c.l.b16 %v113
  %v466 = vunpack.c.l.b16 %v114
  %v467 = vunpack.c.l.b16 %v115
  %v468 = vunpack.c.l.b16 %v116
  %v469 = vunpack.c.l.b16 %v117
  %v470 = vunpack.c.l.b16 %v118
  %v471 = vunpack.c.l.b16 %v119
  %v472 = vunpack.c.l.b16 %v120
  %v473 = vunpack.c.l.b16 %v121
  %v474 = vpack.c.b16 %v411, %v410
  %v475 = vpack.c.b16 %v413, %v412
  %v476 = vpack.c.b16 %v415, %v414
  %v477 = vpack.c.b16 %v417, %v416
  %v478 = vpack.c.b16 %v419, %v418
  %v479 = vpack.c.b16 %v421, %v420
  %v480 = vpack.c.b16 %v423, %v422
  %v481 = vpack.c.b16 %v425, %v424
  %v482 = vpack.c.b16 %v427, %v426
  %v483 = vpack.c.b16 %v429, %v428
  %v484 = vpack.c.b16 %v431, %v430
  %v485 = vpack.c.b16 %v433, %v432
  %v486 = vpack.c.b16 %v435, %v434
  %v487 = vpack.c.b16 %v437, %v436
  %v488 = vpack.c.b16 %v439, %v438
  %v489 = vpack.c.b16 %v441, %v440
  %v490 = vpack.c.b16 %v443, %v442
  %v491 = vpack.c.b16 %v445, %v444
  %v492 = vpack.c.b16 %v447, %v446
  %v493 = vpack.c.b16 %v449, %v448
  %v494 = vpack.c.b16 %v451, %v450
  %v495 = vpack.c.b16 %v453, %v452
  %v496 = vpack.c.b16 %v455, %v454
  %v497 = vpack.c.b16 %v457, %v456
  %v498 = vpack.c.b16 %v459, %v458
  %v499 = vpack.c.b16 %v461, %v460
  %v500 = vpack.c.b16 %v463, %v462
  %v501 = vpack.c.b16 %v465, %v464
  %v502 = vpack.c.b16 %v467, %v466
  %v503 = vpack.c.b16 %v469, %v468
  %v504 = vpack.c.b16 %v471, %v470
  %v505 = vpack.c.b16 %v473, %v472
  %538 = vmatpush.bf16.msra.mxu0 %v481
  %539 = vmatpush.bf16.msra.mxu0 %v480
  %540 = vmatpush.bf16.msra.mxu0 %v479
  %541 = vmatpush.bf16.msra.mxu0 %v478
  %542 = vmatpush.bf16.msra.mxu0 %v477
  %543 = vmatpush.bf16.msra.mxu0 %v476
  %544 = vmatpush.bf16.msra.mxu0 %v475
  %545 = vmatpush.bf16.msra.mxu0 %v474
  %546 = vmatmul.bf16.gmra.mxu0 %v258
  %v547 = vpop.f32.mrf.mxu0
  %v548 = vadd.f32 %v124, %v547
  %v549 = vpop.f32.mrf.mxu0
  %v550 = vadd.f32 %v124, %v549
  %551 = vmatmul.bf16.gmra.mxu0 %v262
  %v552 = vpop.f32.mrf.mxu0
  %v553 = vadd.f32 %v124, %v552
  %v554 = vpop.f32.mrf.mxu0
  %v555 = vadd.f32 %v124, %v554
  %556 = vmatmul.bf16.gmra.mxu0 %v266
  %v557 = vpop.f32.mrf.mxu0
  %v558 = vadd.f32 %v124, %v557
  %v559 = vpop.f32.mrf.mxu0
  %v560 = vadd.f32 %v124, %v559
  %561 = vmatmul.bf16.gmra.mxu0 %v270
  %v562 = vpop.f32.mrf.mxu0
  %v563 = vadd.f32 %v124, %v562
  %v564 = vpop.f32.mrf.mxu0
  %v565 = vadd.f32 %v124, %v564
  %566 = vmatmul.bf16.gmra.mxu0 %v274
  %v567 = vpop.f32.mrf.mxu0
  %v568 = vadd.f32 %v124, %v567
  %v569 = vpop.f32.mrf.mxu0
  %v570 = vadd.f32 %v124, %v569
  %571 = vmatmul.bf16.gmra.mxu0 %v278
  %v572 = vpop.f32.mrf.mxu0
  %v573 = vadd.f32 %v124, %v572
  %v574 = vpop.f32.mrf.mxu0
  %v575 = vadd.f32 %v124, %v574
  %576 = vmatmul.bf16.gmra.mxu0 %v282
  %v577 = vpop.f32.mrf.mxu0
  %v578 = vadd.f32 %v124, %v577
  %v579 = vpop.f32.mrf.mxu0
  %v580 = vadd.f32 %v124, %v579
  %581 = vmatmul.bf16.gmra.mxu0 %v286
  %v582 = vpop.f32.mrf.mxu0
  %v583 = vadd.f32 %v124, %v582
  %v584 = vpop.f32.mrf.mxu0
  %v585 = vadd.f32 %v124, %v584
  %586 = vmatmul.bf16.gmra.mxu0 %v290
  %v587 = vpop.f32.mrf.mxu0
  %v588 = vadd.f32 %v124, %v587
  %v589 = vpop.f32.mrf.mxu0
  %v590 = vadd.f32 %v124, %v589
  %591 = vmatmul.bf16.gmra.mxu0 %v294
  %v592 = vpop.f32.mrf.mxu0
  %v593 = vadd.f32 %v124, %v592
  %v594 = vpop.f32.mrf.mxu0
  %v595 = vadd.f32 %v124, %v594
  %596 = vmatmul.bf16.gmra.mxu0 %v298
  %v597 = vpop.f32.mrf.mxu0
  %v598 = vadd.f32 %v124, %v597
  %v599 = vpop.f32.mrf.mxu0
  %v600 = vadd.f32 %v124, %v599
  %601 = vdwg.mxu0
  %602 = vmatpush.bf16.msra.mxu0 %v489
  %603 = vmatpush.bf16.msra.mxu0 %v488
  %604 = vmatpush.bf16.msra.mxu0 %v487
  %605 = vmatpush.bf16.msra.mxu0 %v486
  %606 = vmatpush.bf16.msra.mxu0 %v485
  %607 = vmatpush.bf16.msra.mxu0 %v484
  %608 = vmatpush.bf16.msra.mxu0 %v483
  %609 = vmatpush.bf16.msra.mxu0 %v482
  %610 = vmatmul.bf16.gmra.mxu0 %v259
  %v611 = vpop.f32.mrf.mxu0
  %v612 = vadd.f32 %v548, %v611
  %v613 = vpop.f32.mrf.mxu0
  %v614 = vadd.f32 %v550, %v613
  %615 = vmatmul.bf16.gmra.mxu0 %v263
  %v616 = vpop.f32.mrf.mxu0
  %v617 = vadd.f32 %v553, %v616
  %v618 = vpop.f32.mrf.mxu0
  %v619 = vadd.f32 %v555, %v618
  %620 = vmatmul.bf16.gmra.mxu0 %v267
  %v621 = vpop.f32.mrf.mxu0
  %v622 = vadd.f32 %v558, %v621
  %v623 = vpop.f32.mrf.mxu0
  %v624 = vadd.f32 %v560, %v623
  %625 = vmatmul.bf16.gmra.mxu0 %v271
  %v626 = vpop.f32.mrf.mxu0
  %v627 = vadd.f32 %v563, %v626
  %v628 = vpop.f32.mrf.mxu0
  %v629 = vadd.f32 %v565, %v628
  %630 = vmatmul.bf16.gmra.mxu0 %v275
  %v631 = vpop.f32.mrf.mxu0
  %v632 = vadd.f32 %v568, %v631
  %v633 = vpop.f32.mrf.mxu0
  %v634 = vadd.f32 %v570, %v633
  %635 = vmatmul.bf16.gmra.mxu0 %v279
  %v636 = vpop.f32.mrf.mxu0
  %v637 = vadd.f32 %v573, %v636
  %v638 = vpop.f32.mrf.mxu0
  %v639 = vadd.f32 %v575, %v638
  %640 = vmatmul.bf16.gmra.mxu0 %v283
  %v641 = vpop.f32.mrf.mxu0
  %v642 = vadd.f32 %v578, %v641
  %v643 = vpop.f32.mrf.mxu0
  %v644 = vadd.f32 %v580, %v643
  %645 = vmatmul.bf16.gmra.mxu0 %v287
  %v646 = vpop.f32.mrf.mxu0
  %v647 = vadd.f32 %v583, %v646
  %v648 = vpop.f32.mrf.mxu0
  %v649 = vadd.f32 %v585, %v648
  %650 = vmatmul.bf16.gmra.mxu0 %v291
  %v651 = vpop.f32.mrf.mxu0
  %v652 = vadd.f32 %v588, %v651
  %v653 = vpop.f32.mrf.mxu0
  %v654 = vadd.f32 %v590, %v653
  %655 = vmatmul.bf16.gmra.mxu0 %v295
  %v656 = vpop.f32.mrf.mxu0
  %v657 = vadd.f32 %v593, %v656
  %v658 = vpop.f32.mrf.mxu0
  %v659 = vadd.f32 %v595, %v658
  %660 = vmatmul.bf16.gmra.mxu0 %v299
  %v661 = vpop.f32.mrf.mxu0
  %v662 = vadd.f32 %v598, %v661
  %v663 = vpop.f32.mrf.mxu0
  %v664 = vadd.f32 %v600, %v663
  %665 = vdwg.mxu0
  %666 = vmatpush.bf16.msra.mxu0 %v497
  %667 = vmatpush.bf16.msra.mxu0 %v496
  %668 = vmatpush.bf16.msra.mxu0 %v495
  %669 = vmatpush.bf16.msra.mxu0 %v494
  %670 = vmatpush.bf16.msra.mxu0 %v493
  %671 = vmatpush.bf16.msra.mxu0 %v492
  %672 = vmatpush.bf16.msra.mxu0 %v491
  %673 = vmatpush.bf16.msra.mxu0 %v490
  %674 = vmatmul.bf16.gmra.mxu0 %v260
  %v675 = vpop.f32.mrf.mxu0
  %v676 = vadd.f32 %v612, %v675
  %v677 = vpop.f32.mrf.mxu0
  %v678 = vadd.f32 %v614, %v677
  %679 = vmatmul.bf16.gmra.mxu0 %v264
  %v680 = vpop.f32.mrf.mxu0
  %v681 = vadd.f32 %v617, %v680
  %v682 = vpop.f32.mrf.mxu0
  %v683 = vadd.f32 %v619, %v682
  %684 = vmatmul.bf16.gmra.mxu0 %v268
  %v685 = vpop.f32.mrf.mxu0
  %v686 = vadd.f32 %v622, %v685
  %v687 = vpop.f32.mrf.mxu0
  %v688 = vadd.f32 %v624, %v687
  %689 = vmatmul.bf16.gmra.mxu0 %v272
  %v690 = vpop.f32.mrf.mxu0
  %v691 = vadd.f32 %v627, %v690
  %v692 = vpop.f32.mrf.mxu0
  %v693 = vadd.f32 %v629, %v692
  %694 = vmatmul.bf16.gmra.mxu0 %v276
  %v695 = vpop.f32.mrf.mxu0
  %v696 = vadd.f32 %v632, %v695
  %v697 = vpop.f32.mrf.mxu0
  %v698 = vadd.f32 %v634, %v697
  %699 = vmatmul.bf16.gmra.mxu0 %v280
  %v700 = vpop.f32.mrf.mxu0
  %v701 = vadd.f32 %v637, %v700
  %v702 = vpop.f32.mrf.mxu0
  %v703 = vadd.f32 %v639, %v702
  %704 = vmatmul.bf16.gmra.mxu0 %v284
  %v705 = vpop.f32.mrf.mxu0
  %v706 = vadd.f32 %v642, %v705
  %v707 = vpop.f32.mrf.mxu0
  %v708 = vadd.f32 %v644, %v707
  %709 = vmatmul.bf16.gmra.mxu0 %v288
  %v710 = vpop.f32.mrf.mxu0
  %v711 = vadd.f32 %v647, %v710
  %v712 = vpop.f32.mrf.mxu0
  %v713 = vadd.f32 %v649, %v712
  %714 = vmatmul.bf16.gmra.mxu0 %v292
  %v715 = vpop.f32.mrf.mxu0
  %v716 = vadd.f32 %v652, %v715
  %v717 = vpop.f32.mrf.mxu0
  %v718 = vadd.f32 %v654, %v717
  %719 = vmatmul.bf16.gmra.mxu0 %v296
  %v720 = vpop.f32.mrf.mxu0
  %v721 = vadd.f32 %v657, %v720
  %v722 = vpop.f32.mrf.mxu0
  %v723 = vadd.f32 %v659, %v722
  %724 = vmatmul.bf16.gmra.mxu0 %v300
  %v725 = vpop.f32.mrf.mxu0
  %v726 = vadd.f32 %v662, %v725
  %v727 = vpop.f32.mrf.mxu0
  %v728 = vadd.f32 %v664, %v727
  %729 = vdwg.mxu0
  %730 = vmatpush.bf16.msra.mxu0 %v505
  %731 = vmatpush.bf16.msra.mxu0 %v504
  %732 = vmatpush.bf16.msra.mxu0 %v503
  %733 = vmatpush.bf16.msra.mxu0 %v502
  %734 = vmatpush.bf16.msra.mxu0 %v501
  %735 = vmatpush.bf16.msra.mxu0 %v500
  %736 = vmatpush.bf16.msra.mxu0 %v499
  %737 = vmatpush.bf16.msra.mxu0 %v498
  %738 = vmatmul.bf16.gmra.mxu0 %v261
  %v739 = vpop.f32.mrf.mxu0
  %v740 = vadd.f32 %v676, %v739
  %v741 = vpop.f32.mrf.mxu0
  %v742 = vadd.f32 %v678, %v741
  %743 = vmatmul.bf16.gmra.mxu0 %v265
  %v744 = vpop.f32.mrf.mxu0
  %v745 = vadd.f32 %v681, %v744
  %v746 = vpop.f32.mrf.mxu0
  %v747 = vadd.f32 %v683, %v746
  %748 = vmatmul.bf16.gmra.mxu0 %v269
  %v749 = vpop.f32.mrf.mxu0
  %v750 = vadd.f32 %v686, %v749
  %v751 = vpop.f32.mrf.mxu0
  %v752 = vadd.f32 %v688, %v751
  %753 = vmatmul.bf16.gmra.mxu0 %v273
  %v754 = vpop.f32.mrf.mxu0
  %v755 = vadd.f32 %v691, %v754
  %v756 = vpop.f32.mrf.mxu0
  %v757 = vadd.f32 %v693, %v756
  %758 = vmatmul.bf16.gmra.mxu0 %v277
  %v759 = vpop.f32.mrf.mxu0
  %v760 = vadd.f32 %v696, %v759
  %v761 = vpop.f32.mrf.mxu0
  %v762 = vadd.f32 %v698, %v761
  %763 = vmatmul.bf16.gmra.mxu0 %v281
  %v764 = vpop.f32.mrf.mxu0
  %v765 = vadd.f32 %v701, %v764
  %v766 = vpop.f32.mrf.mxu0
  %v767 = vadd.f32 %v703, %v766
  %768 = vmatmul.bf16.gmra.mxu0 %v285
  %v769 = vpop.f32.mrf.mxu0
  %v770 = vadd.f32 %v706, %v769
  %v771 = vpop.f32.mrf.mxu0
  %v772 = vadd.f32 %v708, %v771
  %773 = vmatmul.bf16.gmra.mxu0 %v289
  %v774 = vpop.f32.mrf.mxu0
  %v775 = vadd.f32 %v711, %v774
  %v776 = vpop.f32.mrf.mxu0
  %v777 = vadd.f32 %v713, %v776
  %778 = vmatmul.bf16.gmra.mxu0 %v293
  %v779 = vpop.f32.mrf.mxu0
  %v780 = vadd.f32 %v716, %v779
  %v781 = vpop.f32.mrf.mxu0
  %v782 = vadd.f32 %v718, %v781
  %783 = vmatmul.bf16.gmra.mxu0 %v297
  %v784 = vpop.f32.mrf.mxu0
  %v785 = vadd.f32 %v721, %v784
  %v786 = vpop.f32.mrf.mxu0
  %v787 = vadd.f32 %v723, %v786
  %788 = vmatmul.bf16.gmra.mxu0 %v301
  %v789 = vpop.f32.mrf.mxu0
  %v790 = vadd.f32 %v726, %v789
  %v791 = vpop.f32.mrf.mxu0
  %v792 = vadd.f32 %v728, %v791
  %793 = vdwg.mxu0
  %v794 = vmax.f32 %v740, 0.0
  %v795 = vmax.f32 %v742, 0.0
  %v796 = vmax.f32 %v745, 0.0
  %v797 = vmax.f32 %v747, 0.0
  %v798 = vmax.f32 %v750, 0.0
  %v799 = vmax.f32 %v752, 0.0
  %v800 = vmax.f32 %v755, 0.0
  %v801 = vmax.f32 %v757, 0.0
  %v802 = vmax.f32 %v760, 0.0
  %v803 = vmax.f32 %v762, 0.0
  %v804 = vmax.f32 %v765, 0.0
  %v805 = vmax.f32 %v767, 0.0
  %v806 = vmax.f32 %v770, 0.0
  %v807 = vmax.f32 %v772, 0.0
  %v808 = vmax.f32 %v775, 0.0
  %v809 = vmax.f32 %v777, 0.0
  %v810 = vmax.f32 %v780, 0.0
  %v811 = vmax.f32 %v782, 0.0
  %v812 = vmax.f32 %v785, 0.0
  %v813 = vmax.f32 %v787, 0.0
  %v814 = vmax.f32 %v790, 0.0
  %v815 = vmax.f32 %v792, 0.0
  %v816 = vpack.c.bf16 %v794, %v794
  %v817 = vpack.c.bf16 %v795, %v795
  %v818 = vpack.c.bf16 %v796, %v796
  %v819 = vpack.c.bf16 %v797, %v797
  %v820 = vpack.c.bf16 %v798, %v798
  %v821 = vpack.c.bf16 %v799, %v799
  %v822 = vpack.c.bf16 %v800, %v800
  %v823 = vpack.c.bf16 %v801, %v801
  %v824 = vpack.c.bf16 %v802, %v802
  %v825 = vpack.c.bf16 %v803, %v803
  %v826 = vpack.c.bf16 %v804, %v804
  %v827 = vpack.c.bf16 %v805, %v805
  %v828 = vpack.c.bf16 %v806, %v806
  %v829 = vpack.c.bf16 %v807, %v807
  %v830 = vpack.c.bf16 %v808, %v808
  %v831 = vpack.c.bf16 %v809, %v809
  %v832 = vpack.c.bf16 %v810, %v810
  %v833 = vpack.c.bf16 %v811, %v811
  %v834 = vpack.c.bf16 %v812, %v812
  %v835 = vpack.c.bf16 %v813, %v813
  %v836 = vpack.c.bf16 %v814, %v814
  %v837 = vpack.c.bf16 %v815, %v815
  %vm838 = vcmask 519168
  %839 = vst.msk [vmem:[%s3] sm:$0xf] %vm838, %v816
  %840 = vst.msk [vmem:[%s3 + $0x4] sm:$0xf] %vm838, %v817
  %841 = vst.msk [vmem:[%s3 + $0x8] sm:$0xf] %vm838, %v818
  %842 = vst.msk [vmem:[%s3 + $0xc] sm:$0xf] %vm838, %v819
  %843 = vst.msk [vmem:[%s3 + $0x10] sm:$0xf] %vm838, %v820
  %844 = vst.msk [vmem:[%s3 + $0x14] sm:$0xf] %vm838, %v821
  %845 = vst.msk [vmem:[%s3 + $0x18] sm:$0xf] %vm838, %v822
  %846 = vst.msk [vmem:[%s3 + $0x1c] sm:$0xf] %vm838, %v823
  %847 = vst.msk [vmem:[%s3 + $0x20] sm:$0xf] %vm838, %v824
  %848 = vst.msk [vmem:[%s3 + $0x24] sm:$0xf] %vm838, %v825
  %849 = vst.msk [vmem:[%s3 + $0x28] sm:$0xf] %vm838, %v826
  %850 = vst.msk [vmem:[%s3 + $0x2c] sm:$0xf] %vm838, %v827
  %851 = vst.msk [vmem:[%s3 + $0x30] sm:$0xf] %vm838, %v828
  %852 = vst.msk [vmem:[%s3 + $0x34] sm:$0xf] %vm838, %v829
  %853 = vst.msk [vmem:[%s3 + $0x38] sm:$0xf] %vm838, %v830
  %854 = vst.msk [vmem:[%s3 + $0x3c] sm:$0xf] %vm838, %v831
  %855 = vst.msk [vmem:[%s3 + $0x40] sm:$0xf] %vm838, %v832
  %856 = vst.msk [vmem:[%s3 + $0x44] sm:$0xf] %vm838, %v833
  %857 = vst.msk [vmem:[%s3 + $0x48] sm:$0xf] %vm838, %v834
  %858 = vst.msk [vmem:[%s3 + $0x4c] sm:$0xf] %vm838, %v835
  %859 = vst.msk [vmem:[%s3 + $0x50] sm:$0xf] %vm838, %v836
  %860 = vst.msk [vmem:[%s3 + $0x54] sm:$0xf] %vm838, %v837
  // Predicated region
  $region14: #{forward.5} parent=0 // pred_check
    _
  $region15: #{forward.5} parent=0 // pred_check_branch
    %862 = sbr.rel (0) target = $region17
  $region16: #{forward.5} parent=0 // pred_region
    _
  $region17: #{forward.5} parent=0 // pred_fallthru
    _
  // Predicated region
  $region18: #{forward.5} parent=0 // pred_check
    _
  $region19: #{forward.5} parent=0 // pred_check_branch
    %864 = sbr.rel (0) target = $region21
  $region20: #{forward.5} parent=0 // pred_region
    _
  $region21: #{forward.5} parent=0 // pred_fallthru
    _

// kernel: forward.6
$region0: #{forward.6}
  #allocation0 [shape = 'u32[]', space=smem, size = 0x4, offset = 0x4, fixed_abs, tag = 'smem constant byte address 0x4 - core index']
  #allocation1 [shape = 'u32[72,128]{1,0:T(1,128)}', space=vmem, size = 0x9000, scoped, tag = 'internal scratch']
  %s0 = inlined_call_operand.vmem [shape: bf16[112,576], index: 0, kind: input, shape index: {}]
  %s1 = inlined_call_operand.vmem [shape: bf16[576,64], index: 1, kind: input, shape index: {}]
  %s2 = inlined_call_operand.vmem [shape: f32[1,64], index: 2, kind: input, shape index: {}]
  %s3 = inlined_call_operand.vmem [shape: bf16[112,64], index: 3, kind: output, shape index: {}]
  %s4 = sld [smem:[#allocation0]]
  $region22: #{forward.6} parent=0
    _
  %s6 = ssub.s32 1, %s4
  %s7 = scalar_select 0, %s6, %s4
  // Predicated region
  $region2: #{forward.6} parent=0 // pred_check
    _
  $region3: #{forward.6} parent=0 // pred_check_branch
    %9 = sbr.rel (0) target = $region5
  $region4: #{forward.6} parent=0 // pred_region
    _
  $region5: #{forward.6} parent=0 // pred_fallthru
    _
  // Predicated region
  $region6: #{forward.6} parent=0 // pred_check
    _
  $region7: #{forward.6} parent=0 // pred_check_branch
    %11 = sbr.rel (0) target = $region9
  $region8: #{forward.6} parent=0 // pred_region
    _
  $region9: #{forward.6} parent=0 // pred_fallthru
    _
  // Predicated region
  $region10: #{forward.6} parent=0 // pred_check
    _
  $region11: #{forward.6} parent=0 // pred_check_branch
    %13 = sbr.rel (0) target = $region13
  $region12: #{forward.6} parent=0 // pred_region
    _
  $region13: #{forward.6} parent=0 // pred_fallthru
    _
  %v15 = vld [vmem:[%s0] sm:$0xff]
  %v16 = vld [vmem:[%s0 + $0x8] sm:$0xff]
  %v17 = vld [vmem:[%s0 + $0x10] sm:$0xf]
  %v18 = vld [vmem:[%s0 + $0x14] sm:$0xff]
  %v19 = vld [vmem:[%s0 + $0x1c] sm:$0xff]
  %v20 = vld [vmem:[%s0 + $0x24] sm:$0xf]
  %v21 = vld [vmem:[%s0 + $0x28] sm:$0xff]
  %v22 = vld [vmem:[%s0 + $0x30] sm:$0xff]
  %v23 = vld [vmem:[%s0 + $0x38] sm:$0xf]
  %v24 = vld [vmem:[%s0 + $0x3c] sm:$0xff]
  %v25 = vld [vmem:[%s0 + $0x44] sm:$0xff]
  %v26 = vld [vmem:[%s0 + $0x4c] sm:$0xf]
  %v27 = vld [vmem:[%s0 + $0x50] sm:$0xff]
  %v28 = vld [vmem:[%s0 + $0x58] sm:$0xff]
  %v29 = vld [vmem:[%s0 + $0x60] sm:$0xf]
  %v30 = vld [vmem:[%s0 + $0x64] sm:$0xff]
  %v31 = vld [vmem:[%s0 + $0x6c] sm:$0xff]
  %v32 = vld [vmem:[%s0 + $0x74] sm:$0xf]
  %v33 = vld [vmem:[%s0 + $0x78] sm:$0xff]
  %v34 = vld [vmem:[%s0 + $0x80] sm:$0xff]
  %v35 = vld [vmem:[%s0 + $0x88] sm:$0xf]
  %v36 = vld [vmem:[%s0 + $0x8c] sm:$0xff]
  %v37 = vld [vmem:[%s0 + $0x94] sm:$0xff]
  %v38 = vld [vmem:[%s0 + $0x9c] sm:$0xf]
  %v39 = vld [vmem:[%s0 + $0xa0] sm:$0xff]
  %v40 = vld [vmem:[%s0 + $0xa8] sm:$0xff]
  %v41 = vld [vmem:[%s0 + $0xb0] sm:$0xf]
  %v42 = vld [vmem:[%s0 + $0xb4] sm:$0xff]
  %v43 = vld [vmem:[%s0 + $0xbc] sm:$0xff]
  %v44 = vld [vmem:[%s0 + $0xc4] sm:$0xf]
  %v45 = vld [vmem:[%s0 + $0xc8] sm:$0xff]
  %v46 = vld [vmem:[%s0 + $0xd0] sm:$0xff]
  %v47 = vld [vmem:[%s0 + $0xd8] sm:$0xf]
  %v48 = vld [vmem:[%s0 + $0xdc] sm:$0xff]
  %v49 = vld [vmem:[%s0 + $0xe4] sm:$0xff]
  %v50 = vld [vmem:[%s0 + $0xec] sm:$0xf]
  %v51 = vld [vmem:[%s0 + $0xf0] sm:$0xff]
  %v52 = vld [vmem:[%s0 + $0xf8] sm:$0xff]
  %v53 = vld [vmem:[%s0 + $0x100] sm:$0xf]
  %v54 = vld [vmem:[%s0 + $0x104] sm:$0xff]
  %v55 = vld [vmem:[%s0 + $0x10c] sm:$0xff]
  %v56 = vld [vmem:[%s0 + $0x114] sm:$0xf]
  %v57 = vld [vmem:[%s1] sm:$0xf]
  %v58 = vld [vmem:[%s1 + $0x4] sm:$0xf]
  %v59 = vld [vmem:[%s1 + $0x8] sm:$0xf]
  %v60 = vld [vmem:[%s1 + $0xc] sm:$0xf]
  %v61 = vld [vmem:[%s1 + $0x10] sm:$0xf]
  %v62 = vld [vmem:[%s1 + $0x14] sm:$0xf]
  %v63 = vld [vmem:[%s1 + $0x18] sm:$0xf]
  %v64 = vld [vmem:[%s1 + $0x1c] sm:$0xf]
  %v65 = vld [vmem:[%s1 + $0x20] sm:$0xf]
  %v66 = vld [vmem:[%s1 + $0x24] sm:$0xf]
  %v67 = vld [vmem:[%s1 + $0x28] sm:$0xf]
  %v68 = vld [vmem:[%s1 + $0x2c] sm:$0xf]
  %v69 = vld [vmem:[%s1 + $0x30] sm:$0xf]
  %v70 = vld [vmem:[%s1 + $0x34] sm:$0xf]
  %v71 = vld [vmem:[%s1 + $0x38] sm:$0xf]
  %v72 = vld [vmem:[%s1 + $0x3c] sm:$0xf]
  %v73 = vld [vmem:[%s1 + $0x40] sm:$0xf]
  %v74 = vld [vmem:[%s1 + $0x44] sm:$0xf]
  %v75 = vld [vmem:[%s1 + $0x48] sm:$0xf]
  %v76 = vld [vmem:[%s1 + $0x4c] sm:$0xf]
  %v77 = vld [vmem:[%s1 + $0x50] sm:$0xf]
  %v78 = vld [vmem:[%s1 + $0x54] sm:$0xf]
  %v79 = vld [vmem:[%s1 + $0x58] sm:$0xf]
  %v80 = vld [vmem:[%s1 + $0x5c] sm:$0xf]
  %v81 = vld [vmem:[%s1 + $0x60] sm:$0xf]
  %v82 = vld [vmem:[%s1 + $0x64] sm:$0xf]
  %v83 = vld [vmem:[%s1 + $0x68] sm:$0xf]
  %v84 = vld [vmem:[%s1 + $0x6c] sm:$0xf]
  %v85 = vld [vmem:[%s1 + $0x70] sm:$0xf]
  %v86 = vld [vmem:[%s1 + $0x74] sm:$0xf]
  %v87 = vld [vmem:[%s1 + $0x78] sm:$0xf]
  %v88 = vld [vmem:[%s1 + $0x7c] sm:$0xf]
  %v89 = vld [vmem:[%s1 + $0x80] sm:$0xf]
  %v90 = vld [vmem:[%s1 + $0x84] sm:$0xf]
  %v91 = vld [vmem:[%s1 + $0x88] sm:$0xf]
  %v92 = vld [vmem:[%s1 + $0x8c] sm:$0xf]
  %v93 = vld [vmem:[%s1 + $0x90] sm:$0xf]
  %v94 = vld [vmem:[%s1 + $0x94] sm:$0xf]
  %v95 = vld [vmem:[%s1 + $0x98] sm:$0xf]
  %v96 = vld [vmem:[%s1 + $0x9c] sm:$0xf]
  %v97 = vld [vmem:[%s1 + $0xa0] sm:$0xf]
  %v98 = vld [vmem:[%s1 + $0xa4] sm:$0xf]
  %v99 = vld [vmem:[%s1 + $0xa8] sm:$0xf]
  %v100 = vld [vmem:[%s1 + $0xac] sm:$0xf]
  %v101 = vld [vmem:[%s1 + $0xb0] sm:$0xf]
  %v102 = vld [vmem:[%s1 + $0xb4] sm:$0xf]
  %v103 = vld [vmem:[%s1 + $0xb8] sm:$0xf]
  %v104 = vld [vmem:[%s1 + $0xbc] sm:$0xf]
  %v105 = vld [vmem:[%s1 + $0xc0] sm:$0xf]
  %v106 = vld [vmem:[%s1 + $0xc4] sm:$0xf]
  %v107 = vld [vmem:[%s1 + $0xc8] sm:$0xf]
  %v108 = vld [vmem:[%s1 + $0xcc] sm:$0xf]
  %v109 = vld [vmem:[%s1 + $0xd0] sm:$0xf]
  %v110 = vld [vmem:[%s1 + $0xd4] sm:$0xf]
  %v111 = vld [vmem:[%s1 + $0xd8] sm:$0xf]
  %v112 = vld [vmem:[%s1 + $0xdc] sm:$0xf]
  %v113 = vld [vmem:[%s1 + $0xe0] sm:$0xf]
  %v114 = vld [vmem:[%s1 + $0xe4] sm:$0xf]
  %v115 = vld [vmem:[%s1 + $0xe8] sm:$0xf]
  %v116 = vld [vmem:[%s1 + $0xec] sm:$0xf]
  %v117 = vld [vmem:[%s1 + $0xf0] sm:$0xf]
  %v118 = vld [vmem:[%s1 + $0xf4] sm:$0xf]
  %v119 = vld [vmem:[%s1 + $0xf8] sm:$0xf]
  %v120 = vld [vmem:[%s1 + $0xfc] sm:$0xf]
  %v121 = vld [vmem:[%s1 + $0x100] sm:$0xf]
  %v122 = vld [vmem:[%s1 + $0x104] sm:$0xf]
  %v123 = vld [vmem:[%s1 + $0x108] sm:$0xf]
  %v124 = vld [vmem:[%s1 + $0x10c] sm:$0xf]
  %v125 = vld [vmem:[%s1 + $0x110] sm:$0xf]
  %v126 = vld [vmem:[%s1 + $0x114] sm:$0xf]
  %v127 = vld [vmem:[%s1 + $0x118] sm:$0xf]
  %v128 = vld [vmem:[%s1 + $0x11c] sm:$0xf]
  %v129 = vld [vmem:[%s2] sm:$0x1]
  %v131 = vperm.slane %v129, 0
  %v175 = vunpack.c.l.b16 %v15
  %v176 = vunpack.c.h.b16 %v15
  %v177 = vunpack.c.l.b16 %v16
  %v178 = vunpack.c.h.b16 %v16
  %v179 = vunpack.c.l.b16 %v17
  %v180 = vunpack.c.l.b16 %v18
  %v181 = vunpack.c.h.b16 %v18
  %v182 = vunpack.c.l.b16 %v19
  %v183 = vunpack.c.h.b16 %v19
  %v184 = vunpack.c.l.b16 %v20
  %v185 = vunpack.c.l.b16 %v21
  %v186 = vunpack.c.h.b16 %v21
  %v187 = vunpack.c.l.b16 %v22
  %v188 = vunpack.c.h.b16 %v22
  %v189 = vunpack.c.l.b16 %v23
  %v190 = vunpack.c.l.b16 %v24
  %v191 = vunpack.c.h.b16 %v24
  %v192 = vunpack.c.l.b16 %v25
  %v193 = vunpack.c.h.b16 %v25
  %v194 = vunpack.c.l.b16 %v26
  %v195 = vunpack.c.l.b16 %v27
  %v196 = vunpack.c.h.b16 %v27
  %v197 = vunpack.c.l.b16 %v28
  %v198 = vunpack.c.h.b16 %v28
  %v199 = vunpack.c.l.b16 %v29
  %v200 = vunpack.c.l.b16 %v30
  %v201 = vunpack.c.h.b16 %v30
  %v202 = vunpack.c.l.b16 %v31
  %v203 = vunpack.c.h.b16 %v31
  %v204 = vunpack.c.l.b16 %v32
  %v205 = vunpack.c.l.b16 %v33
  %v206 = vunpack.c.h.b16 %v33
  %v207 = vunpack.c.l.b16 %v34
  %v208 = vunpack.c.h.b16 %v34
  %v209 = vunpack.c.l.b16 %v35
  %v210 = vunpack.c.l.b16 %v36
  %v211 = vunpack.c.h.b16 %v36
  %v212 = vunpack.c.l.b16 %v37
  %v213 = vunpack.c.h.b16 %v37
  %v214 = vunpack.c.l.b16 %v38
  %v215 = vunpack.c.l.b16 %v39
  %v216 = vunpack.c.h.b16 %v39
  %v217 = vunpack.c.l.b16 %v40
  %v218 = vunpack.c.h.b16 %v40
  %v219 = vunpack.c.l.b16 %v41
  %v220 = vunpack.c.l.b16 %v42
  %v221 = vunpack.c.h.b16 %v42
  %v222 = vunpack.c.l.b16 %v43
  %v223 = vunpack.c.h.b16 %v43
  %v224 = vunpack.c.l.b16 %v44
  %v225 = vunpack.c.l.b16 %v45
  %v226 = vunpack.c.h.b16 %v45
  %v227 = vunpack.c.l.b16 %v46
  %v228 = vunpack.c.h.b16 %v46
  %v229 = vunpack.c.l.b16 %v47
  %v230 = vunpack.c.l.b16 %v48
  %v231 = vunpack.c.h.b16 %v48
  %v232 = vunpack.c.l.b16 %v49
  %v233 = vunpack.c.h.b16 %v49
  %v234 = vunpack.c.l.b16 %v50
  %v235 = vunpack.c.l.b16 %v51
  %v236 = vunpack.c.h.b16 %v51
  %v237 = vunpack.c.l.b16 %v52
  %v238 = vunpack.c.h.b16 %v52
  %v239 = vunpack.c.l.b16 %v53
  %v240 = vunpack.c.l.b16 %v54
  %v241 = vunpack.c.h.b16 %v54
  %v242 = vunpack.c.l.b16 %v55
  %v243 = vunpack.c.h.b16 %v55
  %v244 = vunpack.c.l.b16 %v56
  %v245 = vpack.c.b16 %v180, %v175
  %v246 = vpack.c.b16 %v181, %v176
  %v247 = vpack.c.b16 %v182, %v177
  %v248 = vpack.c.b16 %v183, %v178
  %v249 = vpack.c.b16 %v184, %v179
  %v250 = vpack.c.b16 %v190, %v185
  %v251 = vpack.c.b16 %v191, %v186
  %v252 = vpack.c.b16 %v192, %v187
  %v253 = vpack.c.b16 %v193, %v188
  %v254 = vpack.c.b16 %v194, %v189
  %v255 = vpack.c.b16 %v200, %v195
  %v256 = vpack.c.b16 %v201, %v196
  %v257 = vpack.c.b16 %v202, %v197
  %v258 = vpack.c.b16 %v203, %v198
  %v259 = vpack.c.b16 %v204, %v199
  %v260 = vpack.c.b16 %v210, %v205
  %v261 = vpack.c.b16 %v211, %v206
  %v262 = vpack.c.b16 %v212, %v207
  %v263 = vpack.c.b16 %v213, %v208
  %v264 = vpack.c.b16 %v214, %v209
  %v265 = vpack.c.b16 %v220, %v215
  %v266 = vpack.c.b16 %v221, %v216
  %v267 = vpack.c.b16 %v222, %v217
  %v268 = vpack.c.b16 %v223, %v218
  %v269 = vpack.c.b16 %v224, %v219
  %v270 = vpack.c.b16 %v230, %v225
  %v271 = vpack.c.b16 %v231, %v226
  %v272 = vpack.c.b16 %v232, %v227
  %v273 = vpack.c.b16 %v233, %v228
  %v274 = vpack.c.b16 %v234, %v229
  %v275 = vpack.c.b16 %v240, %v235
  %v276 = vpack.c.b16 %v241, %v236
  %v277 = vpack.c.b16 %v242, %v237
  %v278 = vpack.c.b16 %v243, %v238
  %v279 = vpack.c.b16 %v244, %v239
  %v380 = vunpack.c.l.b16 %v57
  %v381 = vunpack.c.l.b16 %v58
  %v382 = vunpack.c.l.b16 %v59
  %v383 = vunpack.c.l.b16 %v60
  %v384 = vunpack.c.l.b16 %v61
  %v385 = vunpack.c.l.b16 %v62
  %v386 = vunpack.c.l.b16 %v63
  %v387 = vunpack.c.l.b16 %v64
  %v388 = vunpack.c.l.b16 %v65
  %v389 = vunpack.c.l.b16 %v66
  %v390 = vunpack.c.l.b16 %v67
  %v391 = vunpack.c.l.b16 %v68
  %v392 = vunpack.c.l.b16 %v69
  %v393 = vunpack.c.l.b16 %v70
  %v394 = vunpack.c.l.b16 %v71
  %v395 = vunpack.c.l.b16 %v72
  %v396 = vunpack.c.l.b16 %v73
  %v397 = vunpack.c.l.b16 %v74
  %v398 = vunpack.c.l.b16 %v75
  %v399 = vunpack.c.l.b16 %v76
  %v400 = vunpack.c.l.b16 %v77
  %v401 = vunpack.c.l.b16 %v78
  %v402 = vunpack.c.l.b16 %v79
  %v403 = vunpack.c.l.b16 %v80
  %v404 = vunpack.c.l.b16 %v81
  %v405 = vunpack.c.l.b16 %v82
  %v406 = vunpack.c.l.b16 %v83
  %v407 = vunpack.c.l.b16 %v84
  %v408 = vunpack.c.l.b16 %v85
  %v409 = vunpack.c.l.b16 %v86
  %v410 = vunpack.c.l.b16 %v87
  %v411 = vunpack.c.l.b16 %v88
  %v412 = vunpack.c.l.b16 %v89
  %v413 = vunpack.c.l.b16 %v90
  %v414 = vunpack.c.l.b16 %v91
  %v415 = vunpack.c.l.b16 %v92
  %v416 = vunpack.c.l.b16 %v93
  %v417 = vunpack.c.l.b16 %v94
  %v418 = vunpack.c.l.b16 %v95
  %v419 = vunpack.c.l.b16 %v96
  %v420 = vunpack.c.l.b16 %v97
  %v421 = vunpack.c.l.b16 %v98
  %v422 = vunpack.c.l.b16 %v99
  %v423 = vunpack.c.l.b16 %v100
  %v424 = vunpack.c.l.b16 %v101
  %v425 = vunpack.c.l.b16 %v102
  %v426 = vunpack.c.l.b16 %v103
  %v427 = vunpack.c.l.b16 %v104
  %v428 = vunpack.c.l.b16 %v105
  %v429 = vunpack.c.l.b16 %v106
  %v430 = vunpack.c.l.b16 %v107
  %v431 = vunpack.c.l.b16 %v108
  %v432 = vunpack.c.l.b16 %v109
  %v433 = vunpack.c.l.b16 %v110
  %v434 = vunpack.c.l.b16 %v111
  %v435 = vunpack.c.l.b16 %v112
  %v436 = vunpack.c.l.b16 %v113
  %v437 = vunpack.c.l.b16 %v114
  %v438 = vunpack.c.l.b16 %v115
  %v439 = vunpack.c.l.b16 %v116
  %v440 = vunpack.c.l.b16 %v117
  %v441 = vunpack.c.l.b16 %v118
  %v442 = vunpack.c.l.b16 %v119
  %v443 = vunpack.c.l.b16 %v120
  %v444 = vunpack.c.l.b16 %v121
  %v445 = vunpack.c.l.b16 %v122
  %v446 = vunpack.c.l.b16 %v123
  %v447 = vunpack.c.l.b16 %v124
  %v448 = vunpack.c.l.b16 %v125
  %v449 = vunpack.c.l.b16 %v126
  %v450 = vunpack.c.l.b16 %v127
  %v451 = vunpack.c.l.b16 %v128
  %v452 = vpack.c.b16 %v381, %v380
  %v453 = vpack.c.b16 %v383, %v382
  %v454 = vpack.c.b16 %v385, %v384
  %v455 = vpack.c.b16 %v387, %v386
  %v456 = vpack.c.b16 %v389, %v388
  %v457 = vpack.c.b16 %v391, %v390
  %v458 = vpack.c.b16 %v393, %v392
  %v459 = vpack.c.b16 %v395, %v394
  %v460 = vpack.c.b16 %v397, %v396
  %v461 = vpack.c.b16 %v399, %v398
  %v462 = vpack.c.b16 %v401, %v400
  %v463 = vpack.c.b16 %v403, %v402
  %v464 = vpack.c.b16 %v405, %v404
  %v465 = vpack.c.b16 %v407, %v406
  %v466 = vpack.c.b16 %v409, %v408
  %v467 = vpack.c.b16 %v411, %v410
  %v468 = vpack.c.b16 %v413, %v412
  %v469 = vpack.c.b16 %v415, %v414
  %v470 = vpack.c.b16 %v417, %v416
  %v471 = vpack.c.b16 %v419, %v418
  %v472 = vpack.c.b16 %v421, %v420
  %v473 = vpack.c.b16 %v423, %v422
  %v474 = vpack.c.b16 %v425, %v424
  %v475 = vpack.c.b16 %v427, %v426
  %v476 = vpack.c.b16 %v429, %v428
  %v477 = vpack.c.b16 %v431, %v430
  %v478 = vpack.c.b16 %v433, %v432
  %v479 = vpack.c.b16 %v435, %v434
  %v480 = vpack.c.b16 %v437, %v436
  %v481 = vpack.c.b16 %v439, %v438
  %v482 = vpack.c.b16 %v441, %v440
  %v483 = vpack.c.b16 %v443, %v442
  %v484 = vpack.c.b16 %v445, %v444
  %v485 = vpack.c.b16 %v447, %v446
  %v486 = vpack.c.b16 %v449, %v448
  %v487 = vpack.c.b16 %v451, %v450
  %vm524 = vcmask 523264
  %v526 = vsel %vm524, %v249, 0
  %v529 = vsel %vm524, %v254, 0
  %v532 = vsel %vm524, %v259, 0
  %v535 = vsel %vm524, %v264, 0
  %v538 = vsel %vm524, %v269, 0
  %v541 = vsel %vm524, %v274, 0
  %v544 = vsel %vm524, %v279, 0
  %546 = vmatpush.bf16.msra.mxu0 %v459
  %547 = vmatpush.bf16.msra.mxu0 %v458
  %548 = vmatpush.bf16.msra.mxu0 %v457
  %549 = vmatpush.bf16.msra.mxu0 %v456
  %550 = vmatpush.bf16.msra.mxu0 %v455
  %551 = vmatpush.bf16.msra.mxu0 %v454
  %552 = vmatpush.bf16.msra.mxu0 %v453
  %553 = vmatpush.bf16.msra.mxu0 %v452
  %554 = vmatmul.bf16.gmra.mxu0 %v245
  %v555 = vpop.f32.mrf.mxu0
  %v556 = vadd.f32 %v131, %v555
  %v557 = vpop.f32.mrf.mxu0
  %v558 = vadd.f32 %v131, %v557
  %559 = vmatmul.bf16.gmra.mxu0 %v250
  %v560 = vpop.f32.mrf.mxu0
  %v561 = vadd.f32 %v131, %v560
  %v562 = vpop.f32.mrf.mxu0
  %v563 = vadd.f32 %v131, %v562
  %564 = vmatmul.bf16.gmra.mxu0 %v255
  %v565 = vpop.f32.mrf.mxu0
  %v566 = vadd.f32 %v131, %v565
  %v567 = vpop.f32.mrf.mxu0
  %v568 = vadd.f32 %v131, %v567
  %569 = vmatmul.bf16.gmra.mxu0 %v260
  %v570 = vpop.f32.mrf.mxu0
  %v571 = vadd.f32 %v131, %v570
  %v572 = vpop.f32.mrf.mxu0
  %v573 = vadd.f32 %v131, %v572
  %574 = vmatmul.bf16.gmra.mxu0 %v265
  %v575 = vpop.f32.mrf.mxu0
  %v576 = vadd.f32 %v131, %v575
  %v577 = vpop.f32.mrf.mxu0
  %v578 = vadd.f32 %v131, %v577
  %579 = vmatmul.bf16.gmra.mxu0 %v270
  %v580 = vpop.f32.mrf.mxu0
  %v581 = vadd.f32 %v131, %v580
  %v582 = vpop.f32.mrf.mxu0
  %v583 = vadd.f32 %v131, %v582
  %584 = vmatmul.bf16.gmra.mxu0 %v275
  %v585 = vpop.f32.mrf.mxu0
  %v586 = vadd.f32 %v131, %v585
  %v587 = vpop.f32.mrf.mxu0
  %v588 = vadd.f32 %v131, %v587
  %589 = vdwg.mxu0
  %590 = vmatpush.bf16.msra.mxu0 %v467
  %591 = vmatpush.bf16.msra.mxu0 %v466
  %592 = vmatpush.bf16.msra.mxu0 %v465
  %593 = vmatpush.bf16.msra.mxu0 %v464
  %594 = vmatpush.bf16.msra.mxu0 %v463
  %595 = vmatpush.bf16.msra.mxu0 %v462
  %596 = vmatpush.bf16.msra.mxu0 %v461
  %597 = vmatpush.bf16.msra.mxu0 %v460
  %598 = vmatmul.bf16.gmra.mxu0 %v246
  %v599 = vpop.f32.mrf.mxu0
  %v600 = vadd.f32 %v556, %v599
  %v601 = vpop.f32.mrf.mxu0
  %v602 = vadd.f32 %v558, %v601
  %603 = vmatmul.bf16.gmra.mxu0 %v251
  %v604 = vpop.f32.mrf.mxu0
  %v605 = vadd.f32 %v561, %v604
  %v606 = vpop.f32.mrf.mxu0
  %v607 = vadd.f32 %v563, %v606
  %608 = vmatmul.bf16.gmra.mxu0 %v256
  %v609 = vpop.f32.mrf.mxu0
  %v610 = vadd.f32 %v566, %v609
  %v611 = vpop.f32.mrf.mxu0
  %v612 = vadd.f32 %v568, %v611
  %613 = vmatmul.bf16.gmra.mxu0 %v261
  %v614 = vpop.f32.mrf.mxu0
  %v615 = vadd.f32 %v571, %v614
  %v616 = vpop.f32.mrf.mxu0
  %v617 = vadd.f32 %v573, %v616
  %618 = vmatmul.bf16.gmra.mxu0 %v266
  %v619 = vpop.f32.mrf.mxu0
  %v620 = vadd.f32 %v576, %v619
  %v621 = vpop.f32.mrf.mxu0
  %v622 = vadd.f32 %v578, %v621
  %623 = vmatmul.bf16.gmra.mxu0 %v271
  %v624 = vpop.f32.mrf.mxu0
  %v625 = vadd.f32 %v581, %v624
  %v626 = vpop.f32.mrf.mxu0
  %v627 = vadd.f32 %v583, %v626
  %628 = vmatmul.bf16.gmra.mxu0 %v276
  %v629 = vpop.f32.mrf.mxu0
  %v630 = vadd.f32 %v586, %v629
  %v631 = vpop.f32.mrf.mxu0
  %v632 = vadd.f32 %v588, %v631
  %633 = vdwg.mxu0
  %634 = vmatpush.bf16.msra.mxu0 %v475
  %635 = vmatpush.bf16.msra.mxu0 %v474
  %636 = vmatpush.bf16.msra.mxu0 %v473
  %637 = vmatpush.bf16.msra.mxu0 %v472
  %638 = vmatpush.bf16.msra.mxu0 %v471
  %639 = vmatpush.bf16.msra.mxu0 %v470
  %640 = vmatpush.bf16.msra.mxu0 %v469
  %641 = vmatpush.bf16.msra.mxu0 %v468
  %642 = vmatmul.bf16.gmra.mxu0 %v247
  %v643 = vpop.f32.mrf.mxu0
  %v644 = vadd.f32 %v600, %v643
  %v645 = vpop.f32.mrf.mxu0
  %v646 = vadd.f32 %v602, %v645
  %647 = vmatmul.bf16.gmra.mxu0 %v252
  %v648 = vpop.f32.mrf.mxu0
  %v649 = vadd.f32 %v605, %v648
  %v650 = vpop.f32.mrf.mxu0
  %v651 = vadd.f32 %v607, %v650
  %652 = vmatmul.bf16.gmra.mxu0 %v257
  %v653 = vpop.f32.mrf.mxu0
  %v654 = vadd.f32 %v610, %v653
  %v655 = vpop.f32.mrf.mxu0
  %v656 = vadd.f32 %v612, %v655
  %657 = vmatmul.bf16.gmra.mxu0 %v262
  %v658 = vpop.f32.mrf.mxu0
  %v659 = vadd.f32 %v615, %v658
  %v660 = vpop.f32.mrf.mxu0
  %v661 = vadd.f32 %v617, %v660
  %662 = vmatmul.bf16.gmra.mxu0 %v267
  %v663 = vpop.f32.mrf.mxu0
  %v664 = vadd.f32 %v620, %v663
  %v665 = vpop.f32.mrf.mxu0
  %v666 = vadd.f32 %v622, %v665
  %667 = vmatmul.bf16.gmra.mxu0 %v272
  %v668 = vpop.f32.mrf.mxu0
  %v669 = vadd.f32 %v625, %v668
  %v670 = vpop.f32.mrf.mxu0
  %v671 = vadd.f32 %v627, %v670
  %672 = vmatmul.bf16.gmra.mxu0 %v277
  %v673 = vpop.f32.mrf.mxu0
  %v674 = vadd.f32 %v630, %v673
  %v675 = vpop.f32.mrf.mxu0
  %v676 = vadd.f32 %v632, %v675
  %677 = vdwg.mxu0
  %678 = vmatpush.bf16.msra.mxu0 %v483
  %679 = vmatpush.bf16.msra.mxu0 %v482
  %680 = vmatpush.bf16.msra.mxu0 %v481
  %681 = vmatpush.bf16.msra.mxu0 %v480
  %682 = vmatpush.bf16.msra.mxu0 %v479
  %683 = vmatpush.bf16.msra.mxu0 %v478
  %684 = vmatpush.bf16.msra.mxu0 %v477
  %685 = vmatpush.bf16.msra.mxu0 %v476
  %686 = vmatmul.bf16.gmra.mxu0 %v248
  %v687 = vpop.f32.mrf.mxu0
  %v688 = vadd.f32 %v644, %v687
  %v689 = vpop.f32.mrf.mxu0
  %v690 = vadd.f32 %v646, %v689
  %691 = vmatmul.bf16.gmra.mxu0 %v253
  %v692 = vpop.f32.mrf.mxu0
  %v693 = vadd.f32 %v649, %v692
  %v694 = vpop.f32.mrf.mxu0
  %v695 = vadd.f32 %v651, %v694
  %696 = vmatmul.bf16.gmra.mxu0 %v258
  %v697 = vpop.f32.mrf.mxu0
  %v698 = vadd.f32 %v654, %v697
  %v699 = vpop.f32.mrf.mxu0
  %v700 = vadd.f32 %v656, %v699
  %701 = vmatmul.bf16.gmra.mxu0 %v263
  %v702 = vpop.f32.mrf.mxu0
  %v703 = vadd.f32 %v659, %v702
  %v704 = vpop.f32.mrf.mxu0
  %v705 = vadd.f32 %v661, %v704
  %706 = vmatmul.bf16.gmra.mxu0 %v268
  %v707 = vpop.f32.mrf.mxu0
  %v708 = vadd.f32 %v664, %v707
  %v709 = vpop.f32.mrf.mxu0
  %v710 = vadd.f32 %v666, %v709
  %711 = vmatmul.bf16.gmra.mxu0 %v273
  %v712 = vpop.f32.mrf.mxu0
  %v713 = vadd.f32 %v669, %v712
  %v714 = vpop.f32.mrf.mxu0
  %v715 = vadd.f32 %v671, %v714
  %716 = vmatmul.bf16.gmra.mxu0 %v278
  %v717 = vpop.f32.mrf.mxu0
  %v718 = vadd.f32 %v674, %v717
  %v719 = vpop.f32.mrf.mxu0
  %v720 = vadd.f32 %v676, %v719
  %721 = vdwg.mxu0
  %722 = vmatpush.bf16.msra.mxu0 0
  %723 = vmatpush.bf16.msra.mxu0 0
  %724 = vmatpush.bf16.msra.mxu0 0
  %725 = vmatpush.bf16.msra.mxu0 0
  %726 = vmatpush.bf16.msra.mxu0 %v487
  %727 = vmatpush.bf16.msra.mxu0 %v486
  %728 = vmatpush.bf16.msra.mxu0 %v485
  %729 = vmatpush.bf16.msra.mxu0 %v484
  %730 = vmatmul.bf16.gmra.mxu0 %v526
  %v731 = vpop.f32.mrf.mxu0
  %v732 = vadd.f32 %v688, %v731
  %v733 = vpop.f32.mrf.mxu0
  %v734 = vadd.f32 %v690, %v733
  %735 = vmatmul.bf16.gmra.mxu0 %v529
  %v736 = vpop.f32.mrf.mxu0
  %v737 = vadd.f32 %v693, %v736
  %v738 = vpop.f32.mrf.mxu0
  %v739 = vadd.f32 %v695, %v738
  %740 = vmatmul.bf16.gmra.mxu0 %v532
  %v741 = vpop.f32.mrf.mxu0
  %v742 = vadd.f32 %v698, %v741
  %v743 = vpop.f32.mrf.mxu0
  %v744 = vadd.f32 %v700, %v743
  %745 = vmatmul.bf16.gmra.mxu0 %v535
  %v746 = vpop.f32.mrf.mxu0
  %v747 = vadd.f32 %v703, %v746
  %v748 = vpop.f32.mrf.mxu0
  %v749 = vadd.f32 %v705, %v748
  %750 = vmatmul.bf16.gmra.mxu0 %v538
  %v751 = vpop.f32.mrf.mxu0
  %v752 = vadd.f32 %v708, %v751
  %v753 = vpop.f32.mrf.mxu0
  %v754 = vadd.f32 %v710, %v753
  %755 = vmatmul.bf16.gmra.mxu0 %v541
  %v756 = vpop.f32.mrf.mxu0
  %v757 = vadd.f32 %v713, %v756
  %v758 = vpop.f32.mrf.mxu0
  %v759 = vadd.f32 %v715, %v758
  %760 = vmatmul.bf16.gmra.mxu0 %v544
  %v761 = vpop.f32.mrf.mxu0
  %v762 = vadd.f32 %v718, %v761
  %v763 = vpop.f32.mrf.mxu0
  %v764 = vadd.f32 %v720, %v763
  %765 = vdwg.mxu0
  %v766 = vmax.f32 %v732, 0.0
  %v767 = vmax.f32 %v734, 0.0
  %v768 = vmax.f32 %v737, 0.0
  %v769 = vmax.f32 %v739, 0.0
  %v770 = vmax.f32 %v742, 0.0
  %v771 = vmax.f32 %v744, 0.0
  %v772 = vmax.f32 %v747, 0.0
  %v773 = vmax.f32 %v749, 0.0
  %v774 = vmax.f32 %v752, 0.0
  %v775 = vmax.f32 %v754, 0.0
  %v776 = vmax.f32 %v757, 0.0
  %v777 = vmax.f32 %v759, 0.0
  %v778 = vmax.f32 %v762, 0.0
  %v779 = vmax.f32 %v764, 0.0
  %v780 = vpack.c.bf16 %v766, %v766
  %v781 = vpack.c.bf16 %v767, %v767
  %v782 = vpack.c.bf16 %v768, %v768
  %v783 = vpack.c.bf16 %v769, %v769
  %v784 = vpack.c.bf16 %v770, %v770
  %v785 = vpack.c.bf16 %v771, %v771
  %v786 = vpack.c.bf16 %v772, %v772
  %v787 = vpack.c.bf16 %v773, %v773
  %v788 = vpack.c.bf16 %v774, %v774
  %v789 = vpack.c.bf16 %v775, %v775
  %v790 = vpack.c.bf16 %v776, %v776
  %v791 = vpack.c.bf16 %v777, %v777
  %v792 = vpack.c.bf16 %v778, %v778
  %v793 = vpack.c.bf16 %v779, %v779
  %vm794 = vcmask 519168
  %795 = vst.msk [vmem:[%s3] sm:$0xf] %vm794, %v780
  %796 = vst.msk [vmem:[%s3 + $0x4] sm:$0xf] %vm794, %v781
  %797 = vst.msk [vmem:[%s3 + $0x8] sm:$0xf] %vm794, %v782
  %798 = vst.msk [vmem:[%s3 + $0xc] sm:$0xf] %vm794, %v783
  %799 = vst.msk [vmem:[%s3 + $0x10] sm:$0xf] %vm794, %v784
  %800 = vst.msk [vmem:[%s3 + $0x14] sm:$0xf] %vm794, %v785
  %801 = vst.msk [vmem:[%s3 + $0x18] sm:$0xf] %vm794, %v786
  %802 = vst.msk [vmem:[%s3 + $0x1c] sm:$0xf] %vm794, %v787
  %803 = vst.msk [vmem:[%s3 + $0x20] sm:$0xf] %vm794, %v788
  %804 = vst.msk [vmem:[%s3 + $0x24] sm:$0xf] %vm794, %v789
  %805 = vst.msk [vmem:[%s3 + $0x28] sm:$0xf] %vm794, %v790
  %806 = vst.msk [vmem:[%s3 + $0x2c] sm:$0xf] %vm794, %v791
  %807 = vst.msk [vmem:[%s3 + $0x30] sm:$0xf] %vm794, %v792
  %808 = vst.msk [vmem:[%s3 + $0x34] sm:$0xf] %vm794, %v793
  // Predicated region
  $region14: #{forward.6} parent=0 // pred_check
    _
  $region15: #{forward.6} parent=0 // pred_check_branch
    %810 = sbr.rel (0) target = $region17
  $region16: #{forward.6} parent=0 // pred_region
    _
  $region17: #{forward.6} parent=0 // pred_fallthru
    _
  // Predicated region
  $region18: #{forward.6} parent=0 // pred_check
    _
  $region19: #{forward.6} parent=0 // pred_check_branch
    %812 = sbr.rel (0) target = $region21
  $region20: #{forward.6} parent=0 // pred_region
    _
  $region21: #{forward.6} parent=0 // pred_fallthru
    _

// kernel: forward.7
$region0: #{forward.7}
  #allocation0 [shape = 'u32[]', space=smem, size = 0x4, offset = 0x4, fixed_abs, tag = 'smem constant byte address 0x4 - core index']
  #allocation1 [shape = 'u32[72,128]{1,0:T(1,128)}', space=vmem, size = 0x9000, scoped, tag = 'internal scratch']
  %s0 = inlined_call_operand.vmem [shape: bf16[16,3136], index: 0, kind: input, shape index: {}]
  %s1 = inlined_call_operand.vmem [shape: bf16[3136,1024], index: 1, kind: input, shape index: {}]
  %s2 = inlined_call_operand.vmem [shape: f32[1,1024], index: 2, kind: input, shape index: {}]
  %s3 = inlined_call_operand.vmem [shape: f32[1024,7], index: 3, kind: input, shape index: {}]
  %s4 = inlined_call_operand.vmem [shape: f32[1,7], index: 4, kind: input, shape index: {}]
  %s5 = inlined_call_operand.vmem [shape: f32[16,6], index: 5, kind: output, shape index: {}]
  %s6 = sld [smem:[#allocation0]]
  $region30: #{forward.7} parent=0
    _
  %s8 = ssub.s32 1, %s6
  %s9 = scalar_select 0, %s8, %s6
  // Predicated region
  $region2: #{forward.7} parent=0 // pred_check
    _
  $region3: #{forward.7} parent=0 // pred_check_branch
    %11 = sbr.rel (0) target = $region5
  $region4: #{forward.7} parent=0 // pred_region
    _
  $region5: #{forward.7} parent=0 // pred_fallthru
    _
  // Predicated region
  $region6: #{forward.7} parent=0 // pred_check
    _
  $region7: #{forward.7} parent=0 // pred_check_branch
    %13 = sbr.rel (0) target = $region9
  $region8: #{forward.7} parent=0 // pred_region
    _
  $region9: #{forward.7} parent=0 // pred_fallthru
    _
  // Predicated region
  $region10: #{forward.7} parent=0 // pred_check
    _
  $region11: #{forward.7} parent=0 // pred_check_branch
    %15 = sbr.rel (0) target = $region13
  $region12: #{forward.7} parent=0 // pred_region
    _
  $region13: #{forward.7} parent=0 // pred_fallthru
    _
  // Predicated region
  $region14: #{forward.7} parent=0 // pred_check
    _
  $region15: #{forward.7} parent=0 // pred_check_branch
    %17 = sbr.rel (0) target = $region17
  $region16: #{forward.7} parent=0 // pred_region
    _
  $region17: #{forward.7} parent=0 // pred_fallthru
    _
  // Predicated region
  $region18: #{forward.7} parent=0 // pred_check
    _
  $region19: #{forward.7} parent=0 // pred_check_branch
    %19 = sbr.rel (0) target = $region21
  $region20: #{forward.7} parent=0 // pred_region
    _
  $region21: #{forward.7} parent=0 // pred_fallthru
    _
  %v21 = vld [vmem:[%s0] sm:$0xff]
  %v22 = vld [vmem:[%s0 + $0x8] sm:$0xff]
  %v23 = vld [vmem:[%s0 + $0x10] sm:$0xff]
  %v24 = vld [vmem:[%s0 + $0x18] sm:$0xff]
  %v25 = vld [vmem:[%s0 + $0x20] sm:$0xff]
  %v26 = vld [vmem:[%s0 + $0x28] sm:$0xff]
  %v27 = vld [vmem:[%s0 + $0x30] sm:$0xff]
  %v28 = vld [vmem:[%s0 + $0x38] sm:$0xff]
  %v29 = vld [vmem:[%s0 + $0x40] sm:$0xff]
  %v30 = vld [vmem:[%s0 + $0x48] sm:$0xff]
  %v31 = vld [vmem:[%s0 + $0x50] sm:$0xff]
  %v32 = vld [vmem:[%s0 + $0x58] sm:$0xff]
  %v33 = vld [vmem:[%s0 + $0x60] sm:$0xf]
  %v34 = vld [vmem:[%s0 + $0x64] sm:$0xff]
  %v35 = vld [vmem:[%s0 + $0x6c] sm:$0xff]
  %v36 = vld [vmem:[%s0 + $0x74] sm:$0xff]
  %v37 = vld [vmem:[%s0 + $0x7c] sm:$0xff]
  %v38 = vld [vmem:[%s0 + $0x84] sm:$0xff]
  %v39 = vld [vmem:[%s0 + $0x8c] sm:$0xff]
  %v40 = vld [vmem:[%s0 + $0x94] sm:$0xff]
  %v41 = vld [vmem:[%s0 + $0x9c] sm:$0xff]
  %v42 = vld [vmem:[%s0 + $0xa4] sm:$0xff]
  %v43 = vld [vmem:[%s0 + $0xac] sm:$0xff]
  %v44 = vld [vmem:[%s0 + $0xb4] sm:$0xff]
  %v45 = vld [vmem:[%s0 + $0xbc] sm:$0xff]
  %v46 = vld [vmem:[%s0 + $0xc4] sm:$0xf]
  %v47 = vld [vmem:[%s1] sm:$0xff]
  %v48 = vld [vmem:[%s1 + $0x8] sm:$0xff]
  %v49 = vld [vmem:[%s1 + $0x10] sm:$0xff]
  %v50 = vld [vmem:[%s1 + $0x18] sm:$0xff]
  %v51 = vld [vmem:[%s1 + $0x20] sm:$0xff]
  %v52 = vld [vmem:[%s1 + $0x28] sm:$0xff]
  %v53 = vld [vmem:[%s1 + $0x30] sm:$0xff]
  %v54 = vld [vmem:[%s1 + $0x38] sm:$0xff]
  %v55 = vld [vmem:[%s1 + $0x40] sm:$0xff]
  %v56 = vld [vmem:[%s1 + $0x48] sm:$0xff]
  %v57 = vld [vmem:[%s1 + $0x50] sm:$0xff]
  %v58 = vld [vmem:[%s1 + $0x58] sm:$0xff]
  %v59 = vld [vmem:[%s1 + $0x60] sm:$0xff]
  %v60 = vld [vmem:[%s1 + $0x68] sm:$0xff]
  %v61 = vld [vmem:[%s1 + $0x70] sm:$0xff]
  %v62 = vld [vmem:[%s1 + $0x78] sm:$0xff]
  %v63 = vld [vmem:[%s1 + $0x80] sm:$0xff]
  %v64 = vld [vmem:[%s1 + $0x88] sm:$0xff]
  %v65 = vld [vmem:[%s1 + $0x90] sm:$0xff]
  %v66 = vld [vmem:[%s1 + $0x98] sm:$0xff]
  %v67 = vld [vmem:[%s1 + $0xa0] sm:$0xff]
  %v68 = vld [vmem:[%s1 + $0xa8] sm:$0xff]
  %v69 = vld [vmem:[%s1 + $0xb0] sm:$0xff]
  %v70 = vld [vmem:[%s1 + $0xb8] sm:$0xff]
  %v71 = vld [vmem:[%s1 + $0xc0] sm:$0xff]
  %v72 = vld [vmem:[%s1 + $0xc8] sm:$0xff]
  %v73 = vld [vmem:[%s1 + $0xd0] sm:$0xff]
  %v74 = vld [vmem:[%s1 + $0xd8] sm:$0xff]
  %v75 = vld [vmem:[%s1 + $0xe0] sm:$0xff]
  %v76 = vld [vmem:[%s1 + $0xe8] sm:$0xff]
  %v77 = vld [vmem:[%s1 + $0xf0] sm:$0xff]
  %v78 = vld [vmem:[%s1 + $0xf8] sm:$0xff]
  %v79 = vld [vmem:[%s1 + $0x100] sm:$0xff]
  %v80 = vld [vmem:[%s1 + $0x108] sm:$0xff]
  %v81 = vld [vmem:[%s1 + $0x110] sm:$0xff]
  %v82 = vld [vmem:[%s1 + $0x118] sm:$0xff]
  %v83 = vld [vmem:[%s1 + $0x120] sm:$0xff]
  %v84 = vld [vmem:[%s1 + $0x128] sm:$0xff]
  %v85 = vld [vmem:[%s1 + $0x130] sm:$0xff]
  %v86 = vld [vmem:[%s1 + $0x138] sm:$0xff]
  %v87 = vld [vmem:[%s1 + $0x140] sm:$0xff]
  %v88 = vld [vmem:[%s1 + $0x148] sm:$0xff]
  %v89 = vld [vmem:[%s1 + $0x150] sm:$0xff]
  %v90 = vld [vmem:[%s1 + $0x158] sm:$0xff]
  %v91 = vld [vmem:[%s1 + $0x160] sm:$0xff]
  %v92 = vld [vmem:[%s1 + $0x168] sm:$0xff]
  %v93 = vld [vmem:[%s1 + $0x170] sm:$0xff]
  %v94 = vld [vmem:[%s1 + $0x178] sm:$0xff]
  %v95 = vld [vmem:[%s1 + $0x180] sm:$0xff]
  %v96 = vld [vmem:[%s1 + $0x188] sm:$0xff]
  %v97 = vld [vmem:[%s1 + $0x190] sm:$0xff]
  %v98 = vld [vmem:[%s1 + $0x198] sm:$0xff]
  %v99 = vld [vmem:[%s1 + $0x1a0] sm:$0xff]
  %v100 = vld [vmem:[%s1 + $0x1a8] sm:$0xff]
  %v101 = vld [vmem:[%s1 + $0x1b0] sm:$0xff]
  %v102 = vld [vmem:[%s1 + $0x1b8] sm:$0xff]
  %v103 = vld [vmem:[%s1 + $0x1c0] sm:$0xff]
  %v104 = vld [vmem:[%s1 + $0x1c8] sm:$0xff]
  %v105 = vld [vmem:[%s1 + $0x1d0] sm:$0xff]
  %v106 = vld [vmem:[%s1 + $0x1d8] sm:$0xff]
  %v107 = vld [vmem:[%s1 + $0x1e0] sm:$0xff]
  %v108 = vld [vmem:[%s1 + $0x1e8] sm:$0xff]
  %v109 = vld [vmem:[%s1 + $0x1f0] sm:$0xff]
  %v110 = vld [vmem:[%s1 + $0x1f8] sm:$0xff]
  %v111 = vld [vmem:[%s1 + $0x200] sm:$0xff]
  %v112 = vld [vmem:[%s1 + $0x208] sm:$0xff]
  %v113 = vld [vmem:[%s1 + $0x210] sm:$0xff]
  %v114 = vld [vmem:[%s1 + $0x218] sm:$0xff]
  %v115 = vld [vmem:[%s1 + $0x220] sm:$0xff]
  %v116 = vld [vmem:[%s1 + $0x228] sm:$0xff]
  %v117 = vld [vmem:[%s1 + $0x230] sm:$0xff]
  %v118 = vld [vmem:[%s1 + $0x238] sm:$0xff]
  %v119 = vld [vmem:[%s1 + $0x240] sm:$0xff]
  %v120 = vld [vmem:[%s1 + $0x248] sm:$0xff]
  %v121 = vld [vmem:[%s1 + $0x250] sm:$0xff]
  %v122 = vld [vmem:[%s1 + $0x258] sm:$0xff]
  %v123 = vld [vmem:[%s1 + $0x260] sm:$0xff]
  %v124 = vld [vmem:[%s1 + $0x268] sm:$0xff]
  %v125 = vld [vmem:[%s1 + $0x270] sm:$0xff]
  %v126 = vld [vmem:[%s1 + $0x278] sm:$0xff]
  %v127 = vld [vmem:[%s1 + $0x280] sm:$0xff]
  %v128 = vld [vmem:[%s1 + $0x288] sm:$0xff]
  %v129 = vld [vmem:[%s1 + $0x290] sm:$0xff]
  %v130 = vld [vmem:[%s1 + $0x298] sm:$0xff]
  %v131 = vld [vmem:[%s1 + $0x2a0] sm:$0xff]
  %v132 = vld [vmem:[%s1 + $0x2a8] sm:$0xff]
  %v133 = vld [vmem:[%s1 + $0x2b0] sm:$0xff]
  %v134 = vld [vmem:[%s1 + $0x2b8] sm:$0xff]
  %v135 = vld [vmem:[%s1 + $0x2c0] sm:$0xff]
  %v136 = vld [vmem:[%s1 + $0x2c8] sm:$0xff]
  %v137 = vld [vmem:[%s1 + $0x2d0] sm:$0xff]
  %v138 = vld [vmem:[%s1 + $0x2d8] sm:$0xff]
  %v139 = vld [vmem:[%s1 + $0x2e0] sm:$0xff]
  %v140 = vld [vmem:[%s1 + $0x2e8] sm:$0xff]
  %v141 = vld [vmem:[%s1 + $0x2f0] sm:$0xff]
  %v142 = vld [vmem:[%s1 + $0x2f8] sm:$0xff]
  %v143 = vld [vmem:[%s1 + $0x300] sm:$0xff]
  %v144 = vld [vmem:[%s1 + $0x308] sm:$0xff]
  %v145 = vld [vmem:[%s1 + $0x310] sm:$0xff]
  %v146 = vld [vmem:[%s1 + $0x318] sm:$0xff]
  %v147 = vld [vmem:[%s1 + $0x320] sm:$0xff]
  %v148 = vld [vmem:[%s1 + $0x328] sm:$0xff]
  %v149 = vld [vmem:[%s1 + $0x330] sm:$0xff]
  %v150 = vld [vmem:[%s1 + $0x338] sm:$0xff]
  %v151 = vld [vmem:[%s1 + $0x340] sm:$0xff]
  %v152 = vld [vmem:[%s1 + $0x348] sm:$0xff]
  %v153 = vld [vmem:[%s1 + $0x350] sm:$0xff]
  %v154 = vld [vmem:[%s1 + $0x358] sm:$0xff]
  %v155 = vld [vmem:[%s1 + $0x360] sm:$0xff]
  %v156 = vld [vmem:[%s1 + $0x368] sm:$0xff]
  %v157 = vld [vmem:[%s1 + $0x370] sm:$0xff]
  %v158 = vld [vmem:[%s1 + $0x378] sm:$0xff]
  %v159 = vld [vmem:[%s1 + $0x380] sm:$0xff]
  %v160 = vld [vmem:[%s1 + $0x388] sm:$0xff]
  %v161 = vld [vmem:[%s1 + $0x390] sm:$0xff]
  %v162 = vld [vmem:[%s1 + $0x398] sm:$0xff]
  %v163 = vld [vmem:[%s1 + $0x3a0] sm:$0xff]
  %v164 = vld [vmem:[%s1 + $0x3a8] sm:$0xff]
  %v165 = vld [vmem:[%s1 + $0x3b0] sm:$0xff]
  %v166 = vld [vmem:[%s1 + $0x3b8] sm:$0xff]
  %v167 = vld [vmem:[%s1 + $0x3c0] sm:$0xff]
  %v168 = vld [vmem:[%s1 + $0x3c8] sm:$0xff]
  %v169 = vld [vmem:[%s1 + $0x3d0] sm:$0xff]
  %v170 = vld [vmem:[%s1 + $0x3d8] sm:$0xff]
  %v171 = vld [vmem:[%s1 + $0x3e0] sm:$0xff]
  %v172 = vld [vmem:[%s1 + $0x3e8] sm:$0xff]
  %v173 = vld [vmem:[%s1 + $0x3f0] sm:$0xff]
  %v174 = vld [vmem:[%s1 + $0x3f8] sm:$0xff]
  %v175 = vld [vmem:[%s1 + $0x400] sm:$0xff]
  %v176 = vld [vmem:[%s1 + $0x408] sm:$0xff]
  %v177 = vld [vmem:[%s1 + $0x410] sm:$0xff]
  %v178 = vld [vmem:[%s1 + $0x418] sm:$0xff]
  %v179 = vld [vmem:[%s1 + $0x420] sm:$0xff]
  %v180 = vld [vmem:[%s1 + $0x428] sm:$0xff]
  %v181 = vld [vmem:[%s1 + $0x430] sm:$0xff]
  %v182 = vld [vmem:[%s1 + $0x438] sm:$0xff]
  %v183 = vld [vmem:[%s1 + $0x440] sm:$0xff]
  %v184 = vld [vmem:[%s1 + $0x448] sm:$0xff]
  %v185 = vld [vmem:[%s1 + $0x450] sm:$0xff]
  %v186 = vld [vmem:[%s1 + $0x458] sm:$0xff]
  %v187 = vld [vmem:[%s1 + $0x460] sm:$0xff]
  %v188 = vld [vmem:[%s1 + $0x468] sm:$0xff]
  %v189 = vld [vmem:[%s1 + $0x470] sm:$0xff]
  %v190 = vld [vmem:[%s1 + $0x478] sm:$0xff]
  %v191 = vld [vmem:[%s1 + $0x480] sm:$0xff]
  %v192 = vld [vmem:[%s1 + $0x488] sm:$0xff]
  %v193 = vld [vmem:[%s1 + $0x490] sm:$0xff]
  %v194 = vld [vmem:[%s1 + $0x498] sm:$0xff]
  %v195 = vld [vmem:[%s1 + $0x4a0] sm:$0xff]
  %v196 = vld [vmem:[%s1 + $0x4a8] sm:$0xff]
  %v197 = vld [vmem:[%s1 + $0x4b0] sm:$0xff]
  %v198 = vld [vmem:[%s1 + $0x4b8] sm:$0xff]
  %v199 = vld [vmem:[%s1 + $0x4c0] sm:$0xff]
  %v200 = vld [vmem:[%s1 + $0x4c8] sm:$0xff]
  %v201 = vld [vmem:[%s1 + $0x4d0] sm:$0xff]
  %v202 = vld [vmem:[%s1 + $0x4d8] sm:$0xff]
  %v203 = vld [vmem:[%s1 + $0x4e0] sm:$0xff]
  %v204 = vld [vmem:[%s1 + $0x4e8] sm:$0xff]
  %v205 = vld [vmem:[%s1 + $0x4f0] sm:$0xff]
  %v206 = vld [vmem:[%s1 + $0x4f8] sm:$0xff]
  %v207 = vld [vmem:[%s1 + $0x500] sm:$0xff]
  %v208 = vld [vmem:[%s1 + $0x508] sm:$0xff]
  %v209 = vld [vmem:[%s1 + $0x510] sm:$0xff]
  %v210 = vld [vmem:[%s1 + $0x518] sm:$0xff]
  %v211 = vld [vmem:[%s1 + $0x520] sm:$0xff]
  %v212 = vld [vmem:[%s1 + $0x528] sm:$0xff]
  %v213 = vld [vmem:[%s1 + $0x530] sm:$0xff]
  %v214 = vld [vmem:[%s1 + $0x538] sm:$0xff]
  %v215 = vld [vmem:[%s1 + $0x540] sm:$0xff]
  %v216 = vld [vmem:[%s1 + $0x548] sm:$0xff]
  %v217 = vld [vmem:[%s1 + $0x550] sm:$0xff]
  %v218 = vld [vmem:[%s1 + $0x558] sm:$0xff]
  %v219 = vld [vmem:[%s1 + $0x560] sm:$0xff]
  %v220 = vld [vmem:[%s1 + $0x568] sm:$0xff]
  %v221 = vld [vmem:[%s1 + $0x570] sm:$0xff]
  %v222 = vld [vmem:[%s1 + $0x578] sm:$0xff]
  %v223 = vld [vmem:[%s1 + $0x580] sm:$0xff]
  %v224 = vld [vmem:[%s1 + $0x588] sm:$0xff]
  %v225 = vld [vmem:[%s1 + $0x590] sm:$0xff]
  %v226 = vld [vmem:[%s1 + $0x598] sm:$0xff]
  %v227 = vld [vmem:[%s1 + $0x5a0] sm:$0xff]
  %v228 = vld [vmem:[%s1 + $0x5a8] sm:$0xff]
  %v229 = vld [vmem:[%s1 + $0x5b0] sm:$0xff]
  %v230 = vld [vmem:[%s1 + $0x5b8] sm:$0xff]
  %v231 = vld [vmem:[%s1 + $0x5c0] sm:$0xff]
  %v232 = vld [vmem:[%s1 + $0x5c8] sm:$0xff]
  %v233 = vld [vmem:[%s1 + $0x5d0] sm:$0xff]
  %v234 = vld [vmem:[%s1 + $0x5d8] sm:$0xff]
  %v235 = vld [vmem:[%s1 + $0x5e0] sm:$0xff]
  %v236 = vld [vmem:[%s1 + $0x5e8] sm:$0xff]
  %v237 = vld [vmem:[%s1 + $0x5f0] sm:$0xff]
  %v238 = vld [vmem:[%s1 + $0x5f8] sm:$0xff]
  %v239 = vld [vmem:[%s1 + $0x600] sm:$0xff]
  %v240 = vld [vmem:[%s1 + $0x608] sm:$0xff]
  %v241 = vld [vmem:[%s1 + $0x610] sm:$0xff]
  %v242 = vld [vmem:[%s1 + $0x618] sm:$0xff]
  %v243 = vld [vmem:[%s1 + $0x620] sm:$0xff]
  %v244 = vld [vmem:[%s1 + $0x628] sm:$0xff]
  %v245 = vld [vmem:[%s1 + $0x630] sm:$0xff]
  %v246 = vld [vmem:[%s1 + $0x638] sm:$0xff]
  %v247 = vld [vmem:[%s1 + $0x640] sm:$0xff]
  %v248 = vld [vmem:[%s1 + $0x648] sm:$0xff]
  %v249 = vld [vmem:[%s1 + $0x650] sm:$0xff]
  %v250 = vld [vmem:[%s1 + $0x658] sm:$0xff]
  %v251 = vld [vmem:[%s1 + $0x660] sm:$0xff]
  %v252 = vld [vmem:[%s1 + $0x668] sm:$0xff]
  %v253 = vld [vmem:[%s1 + $0x670] sm:$0xff]
  %v254 = vld [vmem:[%s1 + $0x678] sm:$0xff]
  %v255 = vld [vmem:[%s1 + $0x680] sm:$0xff]
  %v256 = vld [vmem:[%s1 + $0x688] sm:$0xff]
  %v257 = vld [vmem:[%s1 + $0x690] sm:$0xff]
  %v258 = vld [vmem:[%s1 + $0x698] sm:$0xff]
  %v259 = vld [vmem:[%s1 + $0x6a0] sm:$0xff]
  %v260 = vld [vmem:[%s1 + $0x6a8] sm:$0xff]
  %v261 = vld [vmem:[%s1 + $0x6b0] sm:$0xff]
  %v262 = vld [vmem:[%s1 + $0x6b8] sm:$0xff]
  %v263 = vld [vmem:[%s1 + $0x6c0] sm:$0xff]
  %v264 = vld [vmem:[%s1 + $0x6c8] sm:$0xff]
  %v265 = vld [vmem:[%s1 + $0x6d0] sm:$0xff]
  %v266 = vld [vmem:[%s1 + $0x6d8] sm:$0xff]
  %v267 = vld [vmem:[%s1 + $0x6e0] sm:$0xff]
  %v268 = vld [vmem:[%s1 + $0x6e8] sm:$0xff]
  %v269 = vld [vmem:[%s1 + $0x6f0] sm:$0xff]
  %v270 = vld [vmem:[%s1 + $0x6f8] sm:$0xff]
  %v271 = vld [vmem:[%s1 + $0x700] sm:$0xff]
  %v272 = vld [vmem:[%s1 + $0x708] sm:$0xff]
  %v273 = vld [vmem:[%s1 + $0x710] sm:$0xff]
  %v274 = vld [vmem:[%s1 + $0x718] sm:$0xff]
  %v275 = vld [vmem:[%s1 + $0x720] sm:$0xff]
  %v276 = vld [vmem:[%s1 + $0x728] sm:$0xff]
  %v277 = vld [vmem:[%s1 + $0x730] sm:$0xff]
  %v278 = vld [vmem:[%s1 + $0x738] sm:$0xff]
  %v279 = vld [vmem:[%s1 + $0x740] sm:$0xff]
  %v280 = vld [vmem:[%s1 + $0x748] sm:$0xff]
  %v281 = vld [vmem:[%s1 + $0x750] sm:$0xff]
  %v282 = vld [vmem:[%s1 + $0x758] sm:$0xff]
  %v283 = vld [vmem:[%s1 + $0x760] sm:$0xff]
  %v284 = vld [vmem:[%s1 + $0x768] sm:$0xff]
  %v285 = vld [vmem:[%s1 + $0x770] sm:$0xff]
  %v286 = vld [vmem:[%s1 + $0x778] sm:$0xff]
  %v287 = vld [vmem:[%s1 + $0x780] sm:$0xff]
  %v288 = vld [vmem:[%s1 + $0x788] sm:$0xff]
  %v289 = vld [vmem:[%s1 + $0x790] sm:$0xff]
  %v290 = vld [vmem:[%s1 + $0x798] sm:$0xff]
  %v291 = vld [vmem:[%s1 + $0x7a0] sm:$0xff]
  %v292 = vld [vmem:[%s1 + $0x7a8] sm:$0xff]
  %v293 = vld [vmem:[%s1 + $0x7b0] sm:$0xff]
  %v294 = vld [vmem:[%s1 + $0x7b8] sm:$0xff]
  %v295 = vld [vmem:[%s1 + $0x7c0] sm:$0xff]
  %v296 = vld [vmem:[%s1 + $0x7c8] sm:$0xff]
  %v297 = vld [vmem:[%s1 + $0x7d0] sm:$0xff]
  %v298 = vld [vmem:[%s1 + $0x7d8] sm:$0xff]
  %v299 = vld [vmem:[%s1 + $0x7e0] sm:$0xff]
  %v300 = vld [vmem:[%s1 + $0x7e8] sm:$0xff]
  %v301 = vld [vmem:[%s1 + $0x7f0] sm:$0xff]
  %v302 = vld [vmem:[%s1 + $0x7f8] sm:$0xff]
  %v303 = vld [vmem:[%s1 + $0x800] sm:$0xff]
  %v304 = vld [vmem:[%s1 + $0x808] sm:$0xff]
  %v305 = vld [vmem:[%s1 + $0x810] sm:$0xff]
  %v306 = vld [vmem:[%s1 + $0x818] sm:$0xff]
  %v307 = vld [vmem:[%s1 + $0x820] sm:$0xff]
  %v308 = vld [vmem:[%s1 + $0x828] sm:$0xff]
  %v309 = vld [vmem:[%s1 + $0x830] sm:$0xff]
  %v310 = vld [vmem:[%s1 + $0x838] sm:$0xff]
  %v311 = vld [vmem:[%s1 + $0x840] sm:$0xff]
  %v312 = vld [vmem:[%s1 + $0x848] sm:$0xff]
  %v313 = vld [vmem:[%s1 + $0x850] sm:$0xff]
  %v314 = vld [vmem:[%s1 + $0x858] sm:$0xff]
  %v315 = vld [vmem:[%s1 + $0x860] sm:$0xff]
  %v316 = vld [vmem:[%s1 + $0x868] sm:$0xff]
  %v317 = vld [vmem:[%s1 + $0x870] sm:$0xff]
  %v318 = vld [vmem:[%s1 + $0x878] sm:$0xff]
  %v319 = vld [vmem:[%s1 + $0x880] sm:$0xff]
  %v320 = vld [vmem:[%s1 + $0x888] sm:$0xff]
  %v321 = vld [vmem:[%s1 + $0x890] sm:$0xff]
  %v322 = vld [vmem:[%s1 + $0x898] sm:$0xff]
  %v323 = vld [vmem:[%s1 + $0x8a0] sm:$0xff]
  %v324 = vld [vmem:[%s1 + $0x8a8] sm:$0xff]
  %v325 = vld [vmem:[%s1 + $0x8b0] sm:$0xff]
  %v326 = vld [vmem:[%s1 + $0x8b8] sm:$0xff]
  %v327 = vld [vmem:[%s1 + $0x8c0] sm:$0xff]
  %v328 = vld [vmem:[%s1 + $0x8c8] sm:$0xff]
  %v329 = vld [vmem:[%s1 + $0x8d0] sm:$0xff]
  %v330 = vld [vmem:[%s1 + $0x8d8] sm:$0xff]
  %v331 = vld [vmem:[%s1 + $0x8e0] sm:$0xff]
  %v332 = vld [vmem:[%s1 + $0x8e8] sm:$0xff]
  %v333 = vld [vmem:[%s1 + $0x8f0] sm:$0xff]
  %v334 = vld [vmem:[%s1 + $0x8f8] sm:$0xff]
  %v335 = vld [vmem:[%s1 + $0x900] sm:$0xff]
  %v336 = vld [vmem:[%s1 + $0x908] sm:$0xff]
  %v337 = vld [vmem:[%s1 + $0x910] sm:$0xff]
  %v338 = vld [vmem:[%s1 + $0x918] sm:$0xff]
  %v339 = vld [vmem:[%s1 + $0x920] sm:$0xff]
  %v340 = vld [vmem:[%s1 + $0x928] sm:$0xff]
  %v341 = vld [vmem:[%s1 + $0x930] sm:$0xff]
  %v342 = vld [vmem:[%s1 + $0x938] sm:$0xff]
  %v343 = vld [vmem:[%s1 + $0x940] sm:$0xff]
  %v344 = vld [vmem:[%s1 + $0x948] sm:$0xff]
  %v345 = vld [vmem:[%s1 + $0x950] sm:$0xff]
  %v346 = vld [vmem:[%s1 + $0x958] sm:$0xff]
  %v347 = vld [vmem:[%s1 + $0x960] sm:$0xff]
  %v348 = vld [vmem:[%s1 + $0x968] sm:$0xff]
  %v349 = vld [vmem:[%s1 + $0x970] sm:$0xff]
  %v350 = vld [vmem:[%s1 + $0x978] sm:$0xff]
  %v351 = vld [vmem:[%s1 + $0x980] sm:$0xff]
  %v352 = vld [vmem:[%s1 + $0x988] sm:$0xff]
  %v353 = vld [vmem:[%s1 + $0x990] sm:$0xff]
  %v354 = vld [vmem:[%s1 + $0x998] sm:$0xff]
  %v355 = vld [vmem:[%s1 + $0x9a0] sm:$0xff]
  %v356 = vld [vmem:[%s1 + $0x9a8] sm:$0xff]
  %v357 = vld [vmem:[%s1 + $0x9b0] sm:$0xff]
  %v358 = vld [vmem:[%s1 + $0x9b8] sm:$0xff]
  %v359 = vld [vmem:[%s1 + $0x9c0] sm:$0xff]
  %v360 = vld [vmem:[%s1 + $0x9c8] sm:$0xff]
  %v361 = vld [vmem:[%s1 + $0x9d0] sm:$0xff]
  %v362 = vld [vmem:[%s1 + $0x9d8] sm:$0xff]
  %v363 = vld [vmem:[%s1 + $0x9e0] sm:$0xff]
  %v364 = vld [vmem:[%s1 + $0x9e8] sm:$0xff]
  %v365 = vld [vmem:[%s1 + $0x9f0] sm:$0xff]
  %v366 = vld [vmem:[%s1 + $0x9f8] sm:$0xff]
  %v367 = vld [vmem:[%s1 + $0xa00] sm:$0xff]
  %v368 = vld [vmem:[%s1 + $0xa08] sm:$0xff]
  %v369 = vld [vmem:[%s1 + $0xa10] sm:$0xff]
  %v370 = vld [vmem:[%s1 + $0xa18] sm:$0xff]
  %v371 = vld [vmem:[%s1 + $0xa20] sm:$0xff]
  %v372 = vld [vmem:[%s1 + $0xa28] sm:$0xff]
  %v373 = vld [vmem:[%s1 + $0xa30] sm:$0xff]
  %v374 = vld [vmem:[%s1 + $0xa38] sm:$0xff]
  %v375 = vld [vmem:[%s1 + $0xa40] sm:$0xff]
  %v376 = vld [vmem:[%s1 + $0xa48] sm:$0xff]
  %v377 = vld [vmem:[%s1 + $0xa50] sm:$0xff]
  %v378 = vld [vmem:[%s1 + $0xa58] sm:$0xff]
  %v379 = vld [vmem:[%s1 + $0xa60] sm:$0xff]
  %v380 = vld [vmem:[%s1 + $0xa68] sm:$0xff]
  %v381 = vld [vmem:[%s1 + $0xa70] sm:$0xff]
  %v382 = vld [vmem:[%s1 + $0xa78] sm:$0xff]
  %v383 = vld [vmem:[%s1 + $0xa80] sm:$0xff]
  %v384 = vld [vmem:[%s1 + $0xa88] sm:$0xff]
  %v385 = vld [vmem:[%s1 + $0xa90] sm:$0xff]
  %v386 = vld [vmem:[%s1 + $0xa98] sm:$0xff]
  %v387 = vld [vmem:[%s1 + $0xaa0] sm:$0xff]
  %v388 = vld [vmem:[%s1 + $0xaa8] sm:$0xff]
  %v389 = vld [vmem:[%s1 + $0xab0] sm:$0xff]
  %v390 = vld [vmem:[%s1 + $0xab8] sm:$0xff]
  %v391 = vld [vmem:[%s1 + $0xac0] sm:$0xff]
  %v392 = vld [vmem:[%s1 + $0xac8] sm:$0xff]
  %v393 = vld [vmem:[%s1 + $0xad0] sm:$0xff]
  %v394 = vld [vmem:[%s1 + $0xad8] sm:$0xff]
  %v395 = vld [vmem:[%s1 + $0xae0] sm:$0xff]
  %v396 = vld [vmem:[%s1 + $0xae8] sm:$0xff]
  %v397 = vld [vmem:[%s1 + $0xaf0] sm:$0xff]
  %v398 = vld [vmem:[%s1 + $0xaf8] sm:$0xff]
  %v399 = vld [vmem:[%s1 + $0xb00] sm:$0xff]
  %v400 = vld [vmem:[%s1 + $0xb08] sm:$0xff]
  %v401 = vld [vmem:[%s1 + $0xb10] sm:$0xff]
  %v402 = vld [vmem:[%s1 + $0xb18] sm:$0xff]
  %v403 = vld [vmem:[%s1 + $0xb20] sm:$0xff]
  %v404 = vld [vmem:[%s1 + $0xb28] sm:$0xff]
  %v405 = vld [vmem:[%s1 + $0xb30] sm:$0xff]
  %v406 = vld [vmem:[%s1 + $0xb38] sm:$0xff]
  %v407 = vld [vmem:[%s1 + $0xb40] sm:$0xff]
  %v408 = vld [vmem:[%s1 + $0xb48] sm:$0xff]
  %v409 = vld [vmem:[%s1 + $0xb50] sm:$0xff]
  %v410 = vld [vmem:[%s1 + $0xb58] sm:$0xff]
  %v411 = vld [vmem:[%s1 + $0xb60] sm:$0xff]
  %v412 = vld [vmem:[%s1 + $0xb68] sm:$0xff]
  %v413 = vld [vmem:[%s1 + $0xb70] sm:$0xff]
  %v414 = vld [vmem:[%s1 + $0xb78] sm:$0xff]
  %v415 = vld [vmem:[%s1 + $0xb80] sm:$0xff]
  %v416 = vld [vmem:[%s1 + $0xb88] sm:$0xff]
  %v417 = vld [vmem:[%s1 + $0xb90] sm:$0xff]
  %v418 = vld [vmem:[%s1 + $0xb98] sm:$0xff]
  %v419 = vld [vmem:[%s1 + $0xba0] sm:$0xff]
  %v420 = vld [vmem:[%s1 + $0xba8] sm:$0xff]
  %v421 = vld [vmem:[%s1 + $0xbb0] sm:$0xff]
  %v422 = vld [vmem:[%s1 + $0xbb8] sm:$0xff]
  %v423 = vld [vmem:[%s1 + $0xbc0] sm:$0xff]
  %v424 = vld [vmem:[%s1 + $0xbc8] sm:$0xff]
  %v425 = vld [vmem:[%s1 + $0xbd0] sm:$0xff]
  %v426 = vld [vmem:[%s1 + $0xbd8] sm:$0xff]
  %v427 = vld [vmem:[%s1 + $0xbe0] sm:$0xff]
  %v428 = vld [vmem:[%s1 + $0xbe8] sm:$0xff]
  %v429 = vld [vmem:[%s1 + $0xbf0] sm:$0xff]
  %v430 = vld [vmem:[%s1 + $0xbf8] sm:$0xff]
  %v431 = vld [vmem:[%s1 + $0xc00] sm:$0xff]
  %v432 = vld [vmem:[%s1 + $0xc08] sm:$0xff]
  %v433 = vld [vmem:[%s1 + $0xc10] sm:$0xff]
  %v434 = vld [vmem:[%s1 + $0xc18] sm:$0xff]
  %v435 = vld [vmem:[%s1 + $0xc20] sm:$0xff]
  %v436 = vld [vmem:[%s1 + $0xc28] sm:$0xff]
  %v437 = vld [vmem:[%s1 + $0xc30] sm:$0xff]
  %v438 = vld [vmem:[%s1 + $0xc38] sm:$0xff]
  %v439 = vld [vmem:[%s1 + $0xc40] sm:$0xff]
  %v440 = vld [vmem:[%s1 + $0xc48] sm:$0xff]
  %v441 = vld [vmem:[%s1 + $0xc50] sm:$0xff]
  %v442 = vld [vmem:[%s1 + $0xc58] sm:$0xff]
  %v443 = vld [vmem:[%s1 + $0xc60] sm:$0xff]
  %v444 = vld [vmem:[%s1 + $0xc68] sm:$0xff]
  %v445 = vld [vmem:[%s1 + $0xc70] sm:$0xff]
  %v446 = vld [vmem:[%s1 + $0xc78] sm:$0xff]
  %v447 = vld [vmem:[%s1 + $0xc80] sm:$0xff]
  %v448 = vld [vmem:[%s1 + $0xc88] sm:$0xff]
  %v449 = vld [vmem:[%s1 + $0xc90] sm:$0xff]
  %v450 = vld [vmem:[%s1 + $0xc98] sm:$0xff]
  %v451 = vld [vmem:[%s1 + $0xca0] sm:$0xff]
  %v452 = vld [vmem:[%s1 + $0xca8] sm:$0xff]
  %v453 = vld [vmem:[%s1 + $0xcb0] sm:$0xff]
  %v454 = vld [vmem:[%s1 + $0xcb8] sm:$0xff]
  %v455 = vld [vmem:[%s1 + $0xcc0] sm:$0xff]
  %v456 = vld [vmem:[%s1 + $0xcc8] sm:$0xff]
  %v457 = vld [vmem:[%s1 + $0xcd0] sm:$0xff]
  %v458 = vld [vmem:[%s1 + $0xcd8] sm:$0xff]
  %v459 = vld [vmem:[%s1 + $0xce0] sm:$0xff]
  %v460 = vld [vmem:[%s1 + $0xce8] sm:$0xff]
  %v461 = vld [vmem:[%s1 + $0xcf0] sm:$0xff]
  %v462 = vld [vmem:[%s1 + $0xcf8] sm:$0xff]
  %v463 = vld [vmem:[%s1 + $0xd00] sm:$0xff]
  %v464 = vld [vmem:[%s1 + $0xd08] sm:$0xff]
  %v465 = vld [vmem:[%s1 + $0xd10] sm:$0xff]
  %v466 = vld [vmem:[%s1 + $0xd18] sm:$0xff]
  %v467 = vld [vmem:[%s1 + $0xd20] sm:$0xff]
  %v468 = vld [vmem:[%s1 + $0xd28] sm:$0xff]
  %v469 = vld [vmem:[%s1 + $0xd30] sm:$0xff]
  %v470 = vld [vmem:[%s1 + $0xd38] sm:$0xff]
  %v471 = vld [vmem:[%s1 + $0xd40] sm:$0xff]
  %v472 = vld [vmem:[%s1 + $0xd48] sm:$0xff]
  %v473 = vld [vmem:[%s1 + $0xd50] sm:$0xff]
  %v474 = vld [vmem:[%s1 + $0xd58] sm:$0xff]
  %v475 = vld [vmem:[%s1 + $0xd60] sm:$0xff]
  %v476 = vld [vmem:[%s1 + $0xd68] sm:$0xff]
  %v477 = vld [vmem:[%s1 + $0xd70] sm:$0xff]
  %v478 = vld [vmem:[%s1 + $0xd78] sm:$0xff]
  %v479 = vld [vmem:[%s1 + $0xd80] sm:$0xff]
  %v480 = vld [vmem:[%s1 + $0xd88] sm:$0xff]
  %v481 = vld [vmem:[%s1 + $0xd90] sm:$0xff]
  %v482 = vld [vmem:[%s1 + $0xd98] sm:$0xff]
  %v483 = vld [vmem:[%s1 + $0xda0] sm:$0xff]
  %v484 = vld [vmem:[%s1 + $0xda8] sm:$0xff]
  %v485 = vld [vmem:[%s1 + $0xdb0] sm:$0xff]
  %v486 = vld [vmem:[%s1 + $0xdb8] sm:$0xff]
  %v487 = vld [vmem:[%s1 + $0xdc0] sm:$0xff]
  %v488 = vld [vmem:[%s1 + $0xdc8] sm:$0xff]
  %v489 = vld [vmem:[%s1 + $0xdd0] sm:$0xff]
  %v490 = vld [vmem:[%s1 + $0xdd8] sm:$0xff]
  %v491 = vld [vmem:[%s1 + $0xde0] sm:$0xff]
  %v492 = vld [vmem:[%s1 + $0xde8] sm:$0xff]
  %v493 = vld [vmem:[%s1 + $0xdf0] sm:$0xff]
  %v494 = vld [vmem:[%s1 + $0xdf8] sm:$0xff]
  %v495 = vld [vmem:[%s1 + $0xe00] sm:$0xff]
  %v496 = vld [vmem:[%s1 + $0xe08] sm:$0xff]
  %v497 = vld [vmem:[%s1 + $0xe10] sm:$0xff]
  %v498 = vld [vmem:[%s1 + $0xe18] sm:$0xff]
  %v499 = vld [vmem:[%s1 + $0xe20] sm:$0xff]
  %v500 = vld [vmem:[%s1 + $0xe28] sm:$0xff]
  %v501 = vld [vmem:[%s1 + $0xe30] sm:$0xff]
  %v502 = vld [vmem:[%s1 + $0xe38] sm:$0xff]
  %v503 = vld [vmem:[%s1 + $0xe40] sm:$0xff]
  %v504 = vld [vmem:[%s1 + $0xe48] sm:$0xff]
  %v505 = vld [vmem:[%s1 + $0xe50] sm:$0xff]
  %v506 = vld [vmem:[%s1 + $0xe58] sm:$0xff]
  %v507 = vld [vmem:[%s1 + $0xe60] sm:$0xff]
  %v508 = vld [vmem:[%s1 + $0xe68] sm:$0xff]
  %v509 = vld [vmem:[%s1 + $0xe70] sm:$0xff]
  %v510 = vld [vmem:[%s1 + $0xe78] sm:$0xff]
  %v511 = vld [vmem:[%s1 + $0xe80] sm:$0xff]
  %v512 = vld [vmem:[%s1 + $0xe88] sm:$0xff]
  %v513 = vld [vmem:[%s1 + $0xe90] sm:$0xff]
  %v514 = vld [vmem:[%s1 + $0xe98] sm:$0xff]
  %v515 = vld [vmem:[%s1 + $0xea0] sm:$0xff]
  %v516 = vld [vmem:[%s1 + $0xea8] sm:$0xff]
  %v517 = vld [vmem:[%s1 + $0xeb0] sm:$0xff]
  %v518 = vld [vmem:[%s1 + $0xeb8] sm:$0xff]
  %v519 = vld [vmem:[%s1 + $0xec0] sm:$0xff]
  %v520 = vld [vmem:[%s1 + $0xec8] sm:$0xff]
  %v521 = vld [vmem:[%s1 + $0xed0] sm:$0xff]
  %v522 = vld [vmem:[%s1 + $0xed8] sm:$0xff]
  %v523 = vld [vmem:[%s1 + $0xee0] sm:$0xff]
  %v524 = vld [vmem:[%s1 + $0xee8] sm:$0xff]
  %v525 = vld [vmem:[%s1 + $0xef0] sm:$0xff]
  %v526 = vld [vmem:[%s1 + $0xef8] sm:$0xff]
  %v527 = vld [vmem:[%s1 + $0xf00] sm:$0xff]
  %v528 = vld [vmem:[%s1 + $0xf08] sm:$0xff]
  %v529 = vld [vmem:[%s1 + $0xf10] sm:$0xff]
  %v530 = vld [vmem:[%s1 + $0xf18] sm:$0xff]
  %v531 = vld [vmem:[%s1 + $0xf20] sm:$0xff]
  %v532 = vld [vmem:[%s1 + $0xf28] sm:$0xff]
  %v533 = vld [vmem:[%s1 + $0xf30] sm:$0xff]
  %v534 = vld [vmem:[%s1 + $0xf38] sm:$0xff]
  %v535 = vld [vmem:[%s1 + $0xf40] sm:$0xff]
  %v536 = vld [vmem:[%s1 + $0xf48] sm:$0xff]
  %v537 = vld [vmem:[%s1 + $0xf50] sm:$0xff]
  %v538 = vld [vmem:[%s1 + $0xf58] sm:$0xff]
  %v539 = vld [vmem:[%s1 + $0xf60] sm:$0xff]
  %v540 = vld [vmem:[%s1 + $0xf68] sm:$0xff]
  %v541 = vld [vmem:[%s1 + $0xf70] sm:$0xff]
  %v542 = vld [vmem:[%s1 + $0xf78] sm:$0xff]
  %v543 = vld [vmem:[%s1 + $0xf80] sm:$0xff]
  %v544 = vld [vmem:[%s1 + $0xf88] sm:$0xff]
  %v545 = vld [vmem:[%s1 + $0xf90] sm:$0xff]
  %v546 = vld [vmem:[%s1 + $0xf98] sm:$0xff]
  %v547 = vld [vmem:[%s1 + $0xfa0] sm:$0xff]
  %v548 = vld [vmem:[%s1 + $0xfa8] sm:$0xff]
  %v549 = vld [vmem:[%s1 + $0xfb0] sm:$0xff]
  %v550 = vld [vmem:[%s1 + $0xfb8] sm:$0xff]
  %v551 = vld [vmem:[%s1 + $0xfc0] sm:$0xff]
  %v552 = vld [vmem:[%s1 + $0xfc8] sm:$0xff]
  %v553 = vld [vmem:[%s1 + $0xfd0] sm:$0xff]
  %v554 = vld [vmem:[%s1 + $0xfd8] sm:$0xff]
  %v555 = vld [vmem:[%s1 + $0xfe0] sm:$0xff]
  %v556 = vld [vmem:[%s1 + $0xfe8] sm:$0xff]
  %v557 = vld [vmem:[%s1 + $0xff0] sm:$0xff]
  %v558 = vld [vmem:[%s1 + $0xff8] sm:$0xff]
  %v559 = vld [vmem:[%s1 + $0x1000] sm:$0xff]
  %v560 = vld [vmem:[%s1 + $0x1008] sm:$0xff]
  %v561 = vld [vmem:[%s1 + $0x1010] sm:$0xff]
  %v562 = vld [vmem:[%s1 + $0x1018] sm:$0xff]
  %v563 = vld [vmem:[%s1 + $0x1020] sm:$0xff]
  %v564 = vld [vmem:[%s1 + $0x1028] sm:$0xff]
  %v565 = vld [vmem:[%s1 + $0x1030] sm:$0xff]
  %v566 = vld [vmem:[%s1 + $0x1038] sm:$0xff]
  %v567 = vld [vmem:[%s1 + $0x1040] sm:$0xff]
  %v568 = vld [vmem:[%s1 + $0x1048] sm:$0xff]
  %v569 = vld [vmem:[%s1 + $0x1050] sm:$0xff]
  %v570 = vld [vmem:[%s1 + $0x1058] sm:$0xff]
  %v571 = vld [vmem:[%s1 + $0x1060] sm:$0xff]
  %v572 = vld [vmem:[%s1 + $0x1068] sm:$0xff]
  %v573 = vld [vmem:[%s1 + $0x1070] sm:$0xff]
  %v574 = vld [vmem:[%s1 + $0x1078] sm:$0xff]
  %v575 = vld [vmem:[%s1 + $0x1080] sm:$0xff]
  %v576 = vld [vmem:[%s1 + $0x1088] sm:$0xff]
  %v577 = vld [vmem:[%s1 + $0x1090] sm:$0xff]
  %v578 = vld [vmem:[%s1 + $0x1098] sm:$0xff]
  %v579 = vld [vmem:[%s1 + $0x10a0] sm:$0xff]
  %v580 = vld [vmem:[%s1 + $0x10a8] sm:$0xff]
  %v581 = vld [vmem:[%s1 + $0x10b0] sm:$0xff]
  %v582 = vld [vmem:[%s1 + $0x10b8] sm:$0xff]
  %v583 = vld [vmem:[%s1 + $0x10c0] sm:$0xff]
  %v584 = vld [vmem:[%s1 + $0x10c8] sm:$0xff]
  %v585 = vld [vmem:[%s1 + $0x10d0] sm:$0xff]
  %v586 = vld [vmem:[%s1 + $0x10d8] sm:$0xff]
  %v587 = vld [vmem:[%s1 + $0x10e0] sm:$0xff]
  %v588 = vld [vmem:[%s1 + $0x10e8] sm:$0xff]
  %v589 = vld [vmem:[%s1 + $0x10f0] sm:$0xff]
  %v590 = vld [vmem:[%s1 + $0x10f8] sm:$0xff]
  %v591 = vld [vmem:[%s1 + $0x1100] sm:$0xff]
  %v592 = vld [vmem:[%s1 + $0x1108] sm:$0xff]
  %v593 = vld [vmem:[%s1 + $0x1110] sm:$0xff]
  %v594 = vld [vmem:[%s1 + $0x1118] sm:$0xff]
  %v595 = vld [vmem:[%s1 + $0x1120] sm:$0xff]
  %v596 = vld [vmem:[%s1 + $0x1128] sm:$0xff]
  %v597 = vld [vmem:[%s1 + $0x1130] sm:$0xff]
  %v598 = vld [vmem:[%s1 + $0x1138] sm:$0xff]
  %v599 = vld [vmem:[%s1 + $0x1140] sm:$0xff]
  %v600 = vld [vmem:[%s1 + $0x1148] sm:$0xff]
  %v601 = vld [vmem:[%s1 + $0x1150] sm:$0xff]
  %v602 = vld [vmem:[%s1 + $0x1158] sm:$0xff]
  %v603 = vld [vmem:[%s1 + $0x1160] sm:$0xff]
  %v604 = vld [vmem:[%s1 + $0x1168] sm:$0xff]
  %v605 = vld [vmem:[%s1 + $0x1170] sm:$0xff]
  %v606 = vld [vmem:[%s1 + $0x1178] sm:$0xff]
  %v607 = vld [vmem:[%s1 + $0x1180] sm:$0xff]
  %v608 = vld [vmem:[%s1 + $0x1188] sm:$0xff]
  %v609 = vld [vmem:[%s1 + $0x1190] sm:$0xff]
  %v610 = vld [vmem:[%s1 + $0x1198] sm:$0xff]
  %v611 = vld [vmem:[%s1 + $0x11a0] sm:$0xff]
  %v612 = vld [vmem:[%s1 + $0x11a8] sm:$0xff]
  %v613 = vld [vmem:[%s1 + $0x11b0] sm:$0xff]
  %v614 = vld [vmem:[%s1 + $0x11b8] sm:$0xff]
  %v615 = vld [vmem:[%s1 + $0x11c0] sm:$0xff]
  %v616 = vld [vmem:[%s1 + $0x11c8] sm:$0xff]
  %v617 = vld [vmem:[%s1 + $0x11d0] sm:$0xff]
  %v618 = vld [vmem:[%s1 + $0x11d8] sm:$0xff]
  %v619 = vld [vmem:[%s1 + $0x11e0] sm:$0xff]
  %v620 = vld [vmem:[%s1 + $0x11e8] sm:$0xff]
  %v621 = vld [vmem:[%s1 + $0x11f0] sm:$0xff]
  %v622 = vld [vmem:[%s1 + $0x11f8] sm:$0xff]
  %v623 = vld [vmem:[%s1 + $0x1200] sm:$0xff]
  %v624 = vld [vmem:[%s1 + $0x1208] sm:$0xff]
  %v625 = vld [vmem:[%s1 + $0x1210] sm:$0xff]
  %v626 = vld [vmem:[%s1 + $0x1218] sm:$0xff]
  %v627 = vld [vmem:[%s1 + $0x1220] sm:$0xff]
  %v628 = vld [vmem:[%s1 + $0x1228] sm:$0xff]
  %v629 = vld [vmem:[%s1 + $0x1230] sm:$0xff]
  %v630 = vld [vmem:[%s1 + $0x1238] sm:$0xff]
  %v631 = vld [vmem:[%s1 + $0x1240] sm:$0xff]
  %v632 = vld [vmem:[%s1 + $0x1248] sm:$0xff]
  %v633 = vld [vmem:[%s1 + $0x1250] sm:$0xff]
  %v634 = vld [vmem:[%s1 + $0x1258] sm:$0xff]
  %v635 = vld [vmem:[%s1 + $0x1260] sm:$0xff]
  %v636 = vld [vmem:[%s1 + $0x1268] sm:$0xff]
  %v637 = vld [vmem:[%s1 + $0x1270] sm:$0xff]
  %v638 = vld [vmem:[%s1 + $0x1278] sm:$0xff]
  %v639 = vld [vmem:[%s1 + $0x1280] sm:$0xff]
  %v640 = vld [vmem:[%s1 + $0x1288] sm:$0xff]
  %v641 = vld [vmem:[%s1 + $0x1290] sm:$0xff]
  %v642 = vld [vmem:[%s1 + $0x1298] sm:$0xff]
  %v643 = vld [vmem:[%s1 + $0x12a0] sm:$0xff]
  %v644 = vld [vmem:[%s1 + $0x12a8] sm:$0xff]
  %v645 = vld [vmem:[%s1 + $0x12b0] sm:$0xff]
  %v646 = vld [vmem:[%s1 + $0x12b8] sm:$0xff]
  %v647 = vld [vmem:[%s1 + $0x12c0] sm:$0xff]
  %v648 = vld [vmem:[%s1 + $0x12c8] sm:$0xff]
  %v649 = vld [vmem:[%s1 + $0x12d0] sm:$0xff]
  %v650 = vld [vmem:[%s1 + $0x12d8] sm:$0xff]
  %v651 = vld [vmem:[%s1 + $0x12e0] sm:$0xff]
  %v652 = vld [vmem:[%s1 + $0x12e8] sm:$0xff]
  %v653 = vld [vmem:[%s1 + $0x12f0] sm:$0xff]
  %v654 = vld [vmem:[%s1 + $0x12f8] sm:$0xff]
  %v655 = vld [vmem:[%s1 + $0x1300] sm:$0xff]
  %v656 = vld [vmem:[%s1 + $0x1308] sm:$0xff]
  %v657 = vld [vmem:[%s1 + $0x1310] sm:$0xff]
  %v658 = vld [vmem:[%s1 + $0x1318] sm:$0xff]
  %v659 = vld [vmem:[%s1 + $0x1320] sm:$0xff]
  %v660 = vld [vmem:[%s1 + $0x1328] sm:$0xff]
  %v661 = vld [vmem:[%s1 + $0x1330] sm:$0xff]
  %v662 = vld [vmem:[%s1 + $0x1338] sm:$0xff]
  %v663 = vld [vmem:[%s1 + $0x1340] sm:$0xff]
  %v664 = vld [vmem:[%s1 + $0x1348] sm:$0xff]
  %v665 = vld [vmem:[%s1 + $0x1350] sm:$0xff]
  %v666 = vld [vmem:[%s1 + $0x1358] sm:$0xff]
  %v667 = vld [vmem:[%s1 + $0x1360] sm:$0xff]
  %v668 = vld [vmem:[%s1 + $0x1368] sm:$0xff]
  %v669 = vld [vmem:[%s1 + $0x1370] sm:$0xff]
  %v670 = vld [vmem:[%s1 + $0x1378] sm:$0xff]
  %v671 = vld [vmem:[%s1 + $0x1380] sm:$0xff]
  %v672 = vld [vmem:[%s1 + $0x1388] sm:$0xff]
  %v673 = vld [vmem:[%s1 + $0x1390] sm:$0xff]
  %v674 = vld [vmem:[%s1 + $0x1398] sm:$0xff]
  %v675 = vld [vmem:[%s1 + $0x13a0] sm:$0xff]
  %v676 = vld [vmem:[%s1 + $0x13a8] sm:$0xff]
  %v677 = vld [vmem:[%s1 + $0x13b0] sm:$0xff]
  %v678 = vld [vmem:[%s1 + $0x13b8] sm:$0xff]
  %v679 = vld [vmem:[%s1 + $0x13c0] sm:$0xff]
  %v680 = vld [vmem:[%s1 + $0x13c8] sm:$0xff]
  %v681 = vld [vmem:[%s1 + $0x13d0] sm:$0xff]
  %v682 = vld [vmem:[%s1 + $0x13d8] sm:$0xff]
  %v683 = vld [vmem:[%s1 + $0x13e0] sm:$0xff]
  %v684 = vld [vmem:[%s1 + $0x13e8] sm:$0xff]
  %v685 = vld [vmem:[%s1 + $0x13f0] sm:$0xff]
  %v686 = vld [vmem:[%s1 + $0x13f8] sm:$0xff]
  %v687 = vld [vmem:[%s1 + $0x1400] sm:$0xff]
  %v688 = vld [vmem:[%s1 + $0x1408] sm:$0xff]
  %v689 = vld [vmem:[%s1 + $0x1410] sm:$0xff]
  %v690 = vld [vmem:[%s1 + $0x1418] sm:$0xff]
  %v691 = vld [vmem:[%s1 + $0x1420] sm:$0xff]
  %v692 = vld [vmem:[%s1 + $0x1428] sm:$0xff]
  %v693 = vld [vmem:[%s1 + $0x1430] sm:$0xff]
  %v694 = vld [vmem:[%s1 + $0x1438] sm:$0xff]
  %v695 = vld [vmem:[%s1 + $0x1440] sm:$0xff]
  %v696 = vld [vmem:[%s1 + $0x1448] sm:$0xff]
  %v697 = vld [vmem:[%s1 + $0x1450] sm:$0xff]
  %v698 = vld [vmem:[%s1 + $0x1458] sm:$0xff]
  %v699 = vld [vmem:[%s1 + $0x1460] sm:$0xff]
  %v700 = vld [vmem:[%s1 + $0x1468] sm:$0xff]
  %v701 = vld [vmem:[%s1 + $0x1470] sm:$0xff]
  %v702 = vld [vmem:[%s1 + $0x1478] sm:$0xff]
  %v703 = vld [vmem:[%s1 + $0x1480] sm:$0xff]
  %v704 = vld [vmem:[%s1 + $0x1488] sm:$0xff]
  %v705 = vld [vmem:[%s1 + $0x1490] sm:$0xff]
  %v706 = vld [vmem:[%s1 + $0x1498] sm:$0xff]
  %v707 = vld [vmem:[%s1 + $0x14a0] sm:$0xff]
  %v708 = vld [vmem:[%s1 + $0x14a8] sm:$0xff]
  %v709 = vld [vmem:[%s1 + $0x14b0] sm:$0xff]
  %v710 = vld [vmem:[%s1 + $0x14b8] sm:$0xff]
  %v711 = vld [vmem:[%s1 + $0x14c0] sm:$0xff]
  %v712 = vld [vmem:[%s1 + $0x14c8] sm:$0xff]
  %v713 = vld [vmem:[%s1 + $0x14d0] sm:$0xff]
  %v714 = vld [vmem:[%s1 + $0x14d8] sm:$0xff]
  %v715 = vld [vmem:[%s1 + $0x14e0] sm:$0xff]
  %v716 = vld [vmem:[%s1 + $0x14e8] sm:$0xff]
  %v717 = vld [vmem:[%s1 + $0x14f0] sm:$0xff]
  %v718 = vld [vmem:[%s1 + $0x14f8] sm:$0xff]
  %v719 = vld [vmem:[%s1 + $0x1500] sm:$0xff]
  %v720 = vld [vmem:[%s1 + $0x1508] sm:$0xff]
  %v721 = vld [vmem:[%s1 + $0x1510] sm:$0xff]
  %v722 = vld [vmem:[%s1 + $0x1518] sm:$0xff]
  %v723 = vld [vmem:[%s1 + $0x1520] sm:$0xff]
  %v724 = vld [vmem:[%s1 + $0x1528] sm:$0xff]
  %v725 = vld [vmem:[%s1 + $0x1530] sm:$0xff]
  %v726 = vld [vmem:[%s1 + $0x1538] sm:$0xff]
  %v727 = vld [vmem:[%s1 + $0x1540] sm:$0xff]
  %v728 = vld [vmem:[%s1 + $0x1548] sm:$0xff]
  %v729 = vld [vmem:[%s1 + $0x1550] sm:$0xff]
  %v730 = vld [vmem:[%s1 + $0x1558] sm:$0xff]
  %v731 = vld [vmem:[%s1 + $0x1560] sm:$0xff]
  %v732 = vld [vmem:[%s1 + $0x1568] sm:$0xff]
  %v733 = vld [vmem:[%s1 + $0x1570] sm:$0xff]
  %v734 = vld [vmem:[%s1 + $0x1578] sm:$0xff]
  %v735 = vld [vmem:[%s1 + $0x1580] sm:$0xff]
  %v736 = vld [vmem:[%s1 + $0x1588] sm:$0xff]
  %v737 = vld [vmem:[%s1 + $0x1590] sm:$0xff]
  %v738 = vld [vmem:[%s1 + $0x1598] sm:$0xff]
  %v739 = vld [vmem:[%s1 + $0x15a0] sm:$0xff]
  %v740 = vld [vmem:[%s1 + $0x15a8] sm:$0xff]
  %v741 = vld [vmem:[%s1 + $0x15b0] sm:$0xff]
  %v742 = vld [vmem:[%s1 + $0x15b8] sm:$0xff]
  %v743 = vld [vmem:[%s1 + $0x15c0] sm:$0xff]
  %v744 = vld [vmem:[%s1 + $0x15c8] sm:$0xff]
  %v745 = vld [vmem:[%s1 + $0x15d0] sm:$0xff]
  %v746 = vld [vmem:[%s1 + $0x15d8] sm:$0xff]
  %v747 = vld [vmem:[%s1 + $0x15e0] sm:$0xff]
  %v748 = vld [vmem:[%s1 + $0x15e8] sm:$0xff]
  %v749 = vld [vmem:[%s1 + $0x15f0] sm:$0xff]
  %v750 = vld [vmem:[%s1 + $0x15f8] sm:$0xff]
  %v751 = vld [vmem:[%s1 + $0x1600] sm:$0xff]
  %v752 = vld [vmem:[%s1 + $0x1608] sm:$0xff]
  %v753 = vld [vmem:[%s1 + $0x1610] sm:$0xff]
  %v754 = vld [vmem:[%s1 + $0x1618] sm:$0xff]
  %v755 = vld [vmem:[%s1 + $0x1620] sm:$0xff]
  %v756 = vld [vmem:[%s1 + $0x1628] sm:$0xff]
  %v757 = vld [vmem:[%s1 + $0x1630] sm:$0xff]
  %v758 = vld [vmem:[%s1 + $0x1638] sm:$0xff]
  %v759 = vld [vmem:[%s1 + $0x1640] sm:$0xff]
  %v760 = vld [vmem:[%s1 + $0x1648] sm:$0xff]
  %v761 = vld [vmem:[%s1 + $0x1650] sm:$0xff]
  %v762 = vld [vmem:[%s1 + $0x1658] sm:$0xff]
  %v763 = vld [vmem:[%s1 + $0x1660] sm:$0xff]
  %v764 = vld [vmem:[%s1 + $0x1668] sm:$0xff]
  %v765 = vld [vmem:[%s1 + $0x1670] sm:$0xff]
  %v766 = vld [vmem:[%s1 + $0x1678] sm:$0xff]
  %v767 = vld [vmem:[%s1 + $0x1680] sm:$0xff]
  %v768 = vld [vmem:[%s1 + $0x1688] sm:$0xff]
  %v769 = vld [vmem:[%s1 + $0x1690] sm:$0xff]
  %v770 = vld [vmem:[%s1 + $0x1698] sm:$0xff]
  %v771 = vld [vmem:[%s1 + $0x16a0] sm:$0xff]
  %v772 = vld [vmem:[%s1 + $0x16a8] sm:$0xff]
  %v773 = vld [vmem:[%s1 + $0x16b0] sm:$0xff]
  %v774 = vld [vmem:[%s1 + $0x16b8] sm:$0xff]
  %v775 = vld [vmem:[%s1 + $0x16c0] sm:$0xff]
  %v776 = vld [vmem:[%s1 + $0x16c8] sm:$0xff]
  %v777 = vld [vmem:[%s1 + $0x16d0] sm:$0xff]
  %v778 = vld [vmem:[%s1 + $0x16d8] sm:$0xff]
  %v779 = vld [vmem:[%s1 + $0x16e0] sm:$0xff]
  %v780 = vld [vmem:[%s1 + $0x16e8] sm:$0xff]
  %v781 = vld [vmem:[%s1 + $0x16f0] sm:$0xff]
  %v782 = vld [vmem:[%s1 + $0x16f8] sm:$0xff]
  %v783 = vld [vmem:[%s1 + $0x1700] sm:$0xff]
  %v784 = vld [vmem:[%s1 + $0x1708] sm:$0xff]
  %v785 = vld [vmem:[%s1 + $0x1710] sm:$0xff]
  %v786 = vld [vmem:[%s1 + $0x1718] sm:$0xff]
  %v787 = vld [vmem:[%s1 + $0x1720] sm:$0xff]
  %v788 = vld [vmem:[%s1 + $0x1728] sm:$0xff]
  %v789 = vld [vmem:[%s1 + $0x1730] sm:$0xff]
  %v790 = vld [vmem:[%s1 + $0x1738] sm:$0xff]
  %v791 = vld [vmem:[%s1 + $0x1740] sm:$0xff]
  %v792 = vld [vmem:[%s1 + $0x1748] sm:$0xff]
  %v793 = vld [vmem:[%s1 + $0x1750] sm:$0xff]
  %v794 = vld [vmem:[%s1 + $0x1758] sm:$0xff]
  %v795 = vld [vmem:[%s1 + $0x1760] sm:$0xff]
  %v796 = vld [vmem:[%s1 + $0x1768] sm:$0xff]
  %v797 = vld [vmem:[%s1 + $0x1770] sm:$0xff]
  %v798 = vld [vmem:[%s1 + $0x1778] sm:$0xff]
  %v799 = vld [vmem:[%s1 + $0x1780] sm:$0xff]
  %v800 = vld [vmem:[%s1 + $0x1788] sm:$0xff]
  %v801 = vld [vmem:[%s1 + $0x1790] sm:$0xff]
  %v802 = vld [vmem:[%s1 + $0x1798] sm:$0xff]
  %v803 = vld [vmem:[%s1 + $0x17a0] sm:$0xff]
  %v804 = vld [vmem:[%s1 + $0x17a8] sm:$0xff]
  %v805 = vld [vmem:[%s1 + $0x17b0] sm:$0xff]
  %v806 = vld [vmem:[%s1 + $0x17b8] sm:$0xff]
  %v807 = vld [vmem:[%s1 + $0x17c0] sm:$0xff]
  %v808 = vld [vmem:[%s1 + $0x17c8] sm:$0xff]
  %v809 = vld [vmem:[%s1 + $0x17d0] sm:$0xff]
  %v810 = vld [vmem:[%s1 + $0x17d8] sm:$0xff]
  %v811 = vld [vmem:[%s1 + $0x17e0] sm:$0xff]
  %v812 = vld [vmem:[%s1 + $0x17e8] sm:$0xff]
  %v813 = vld [vmem:[%s1 + $0x17f0] sm:$0xff]
  %v814 = vld [vmem:[%s1 + $0x17f8] sm:$0xff]
  %v815 = vld [vmem:[%s1 + $0x1800] sm:$0xff]
  %v816 = vld [vmem:[%s1 + $0x1808] sm:$0xff]
  %v817 = vld [vmem:[%s1 + $0x1810] sm:$0xff]
  %v818 = vld [vmem:[%s1 + $0x1818] sm:$0xff]
  %v819 = vld [vmem:[%s1 + $0x1820] sm:$0xff]
  %v820 = vld [vmem:[%s1 + $0x1828] sm:$0xff]
  %v821 = vld [vmem:[%s1 + $0x1830] sm:$0xff]
  %v822 = vld [vmem:[%s1 + $0x1838] sm:$0xff]
  %v823 = vld [vmem:[%s1 + $0x1840] sm:$0xff]
  %v824 = vld [vmem:[%s1 + $0x1848] sm:$0xff]
  %v825 = vld [vmem:[%s1 + $0x1850] sm:$0xff]
  %v826 = vld [vmem:[%s1 + $0x1858] sm:$0xff]
  %v827 = vld [vmem:[%s1 + $0x1860] sm:$0xff]
  %v828 = vld [vmem:[%s1 + $0x1868] sm:$0xff]
  %v829 = vld [vmem:[%s1 + $0x1870] sm:$0xff]
  %v830 = vld [vmem:[%s1 + $0x1878] sm:$0xff]
  %v831 = vld [vmem:[%s1 + $0x1880] sm:$0xff]
  %v832 = vld [vmem:[%s1 + $0x1888] sm:$0xff]
  %v833 = vld [vmem:[%s1 + $0x1890] sm:$0xff]
  %v834 = vld [vmem:[%s1 + $0x1898] sm:$0xff]
  %v835 = vld [vmem:[%s1 + $0x18a0] sm:$0xff]
  %v836 = vld [vmem:[%s1 + $0x18a8] sm:$0xff]
  %v837 = vld [vmem:[%s1 + $0x18b0] sm:$0xff]
  %v838 = vld [vmem:[%s1 + $0x18b8] sm:$0xff]
  %v839 = vld [vmem:[%s1 + $0x18c0] sm:$0xff]
  %v840 = vld [vmem:[%s1 + $0x18c8] sm:$0xff]
  %v841 = vld [vmem:[%s1 + $0x18d0] sm:$0xff]
  %v842 = vld [vmem:[%s1 + $0x18d8] sm:$0xff]
  %v843 = vld [vmem:[%s1 + $0x18e0] sm:$0xff]
  %v844 = vld [vmem:[%s1 + $0x18e8] sm:$0xff]
  %v845 = vld [vmem:[%s1 + $0x18f0] sm:$0xff]
  %v846 = vld [vmem:[%s1 + $0x18f8] sm:$0xff]
  %v847 = vld [vmem:[%s1 + $0x1900] sm:$0xff]
  %v848 = vld [vmem:[%s1 + $0x1908] sm:$0xff]
  %v849 = vld [vmem:[%s1 + $0x1910] sm:$0xff]
  %v850 = vld [vmem:[%s1 + $0x1918] sm:$0xff]
  %v851 = vld [vmem:[%s1 + $0x1920] sm:$0xff]
  %v852 = vld [vmem:[%s1 + $0x1928] sm:$0xff]
  %v853 = vld [vmem:[%s1 + $0x1930] sm:$0xff]
  %v854 = vld [vmem:[%s1 + $0x1938] sm:$0xff]
  %v855 = vld [vmem:[%s1 + $0x1940] sm:$0xff]
  %v856 = vld [vmem:[%s1 + $0x1948] sm:$0xff]
  %v857 = vld [vmem:[%s1 + $0x1950] sm:$0xff]
  %v858 = vld [vmem:[%s1 + $0x1958] sm:$0xff]
  %v859 = vld [vmem:[%s1 + $0x1960] sm:$0xff]
  %v860 = vld [vmem:[%s1 + $0x1968] sm:$0xff]
  %v861 = vld [vmem:[%s1 + $0x1970] sm:$0xff]
  %v862 = vld [vmem:[%s1 + $0x1978] sm:$0xff]
  %v863 = vld [vmem:[%s1 + $0x1980] sm:$0xff]
  %v864 = vld [vmem:[%s1 + $0x1988] sm:$0xff]
  %v865 = vld [vmem:[%s1 + $0x1990] sm:$0xff]
  %v866 = vld [vmem:[%s1 + $0x1998] sm:$0xff]
  %v867 = vld [vmem:[%s1 + $0x19a0] sm:$0xff]
  %v868 = vld [vmem:[%s1 + $0x19a8] sm:$0xff]
  %v869 = vld [vmem:[%s1 + $0x19b0] sm:$0xff]
  %v870 = vld [vmem:[%s1 + $0x19b8] sm:$0xff]
  %v871 = vld [vmem:[%s1 + $0x19c0] sm:$0xff]
  %v872 = vld [vmem:[%s1 + $0x19c8] sm:$0xff]
  %v873 = vld [vmem:[%s1 + $0x19d0] sm:$0xff]
  %v874 = vld [vmem:[%s1 + $0x19d8] sm:$0xff]
  %v875 = vld [vmem:[%s1 + $0x19e0] sm:$0xff]
  %v876 = vld [vmem:[%s1 + $0x19e8] sm:$0xff]
  %v877 = vld [vmem:[%s1 + $0x19f0] sm:$0xff]
  %v878 = vld [vmem:[%s1 + $0x19f8] sm:$0xff]
  %v879 = vld [vmem:[%s1 + $0x1a00] sm:$0xff]
  %v880 = vld [vmem:[%s1 + $0x1a08] sm:$0xff]
  %v881 = vld [vmem:[%s1 + $0x1a10] sm:$0xff]
  %v882 = vld [vmem:[%s1 + $0x1a18] sm:$0xff]
  %v883 = vld [vmem:[%s1 + $0x1a20] sm:$0xff]
  %v884 = vld [vmem:[%s1 + $0x1a28] sm:$0xff]
  %v885 = vld [vmem:[%s1 + $0x1a30] sm:$0xff]
  %v886 = vld [vmem:[%s1 + $0x1a38] sm:$0xff]
  %v887 = vld [vmem:[%s1 + $0x1a40] sm:$0xff]
  %v888 = vld [vmem:[%s1 + $0x1a48] sm:$0xff]
  %v889 = vld [vmem:[%s1 + $0x1a50] sm:$0xff]
  %v890 = vld [vmem:[%s1 + $0x1a58] sm:$0xff]
  %v891 = vld [vmem:[%s1 + $0x1a60] sm:$0xff]
  %v892 = vld [vmem:[%s1 + $0x1a68] sm:$0xff]
  %v893 = vld [vmem:[%s1 + $0x1a70] sm:$0xff]
  %v894 = vld [vmem:[%s1 + $0x1a78] sm:$0xff]
  %v895 = vld [vmem:[%s1 + $0x1a80] sm:$0xff]
  %v896 = vld [vmem:[%s1 + $0x1a88] sm:$0xff]
  %v897 = vld [vmem:[%s1 + $0x1a90] sm:$0xff]
  %v898 = vld [vmem:[%s1 + $0x1a98] sm:$0xff]
  %v899 = vld [vmem:[%s1 + $0x1aa0] sm:$0xff]
  %v900 = vld [vmem:[%s1 + $0x1aa8] sm:$0xff]
  %v901 = vld [vmem:[%s1 + $0x1ab0] sm:$0xff]
  %v902 = vld [vmem:[%s1 + $0x1ab8] sm:$0xff]
  %v903 = vld [vmem:[%s1 + $0x1ac0] sm:$0xff]
  %v904 = vld [vmem:[%s1 + $0x1ac8] sm:$0xff]
  %v905 = vld [vmem:[%s1 + $0x1ad0] sm:$0xff]
  %v906 = vld [vmem:[%s1 + $0x1ad8] sm:$0xff]
  %v907 = vld [vmem:[%s1 + $0x1ae0] sm:$0xff]
  %v908 = vld [vmem:[%s1 + $0x1ae8] sm:$0xff]
  %v909 = vld [vmem:[%s1 + $0x1af0] sm:$0xff]
  %v910 = vld [vmem:[%s1 + $0x1af8] sm:$0xff]
  %v911 = vld [vmem:[%s1 + $0x1b00] sm:$0xff]
  %v912 = vld [vmem:[%s1 + $0x1b08] sm:$0xff]
  %v913 = vld [vmem:[%s1 + $0x1b10] sm:$0xff]
  %v914 = vld [vmem:[%s1 + $0x1b18] sm:$0xff]
  %v915 = vld [vmem:[%s1 + $0x1b20] sm:$0xff]
  %v916 = vld [vmem:[%s1 + $0x1b28] sm:$0xff]
  %v917 = vld [vmem:[%s1 + $0x1b30] sm:$0xff]
  %v918 = vld [vmem:[%s1 + $0x1b38] sm:$0xff]
  %v919 = vld [vmem:[%s1 + $0x1b40] sm:$0xff]
  %v920 = vld [vmem:[%s1 + $0x1b48] sm:$0xff]
  %v921 = vld [vmem:[%s1 + $0x1b50] sm:$0xff]
  %v922 = vld [vmem:[%s1 + $0x1b58] sm:$0xff]
  %v923 = vld [vmem:[%s1 + $0x1b60] sm:$0xff]
  %v924 = vld [vmem:[%s1 + $0x1b68] sm:$0xff]
  %v925 = vld [vmem:[%s1 + $0x1b70] sm:$0xff]
  %v926 = vld [vmem:[%s1 + $0x1b78] sm:$0xff]
  %v927 = vld [vmem:[%s1 + $0x1b80] sm:$0xff]
  %v928 = vld [vmem:[%s1 + $0x1b88] sm:$0xff]
  %v929 = vld [vmem:[%s1 + $0x1b90] sm:$0xff]
  %v930 = vld [vmem:[%s1 + $0x1b98] sm:$0xff]
  %v931 = vld [vmem:[%s1 + $0x1ba0] sm:$0xff]
  %v932 = vld [vmem:[%s1 + $0x1ba8] sm:$0xff]
  %v933 = vld [vmem:[%s1 + $0x1bb0] sm:$0xff]
  %v934 = vld [vmem:[%s1 + $0x1bb8] sm:$0xff]
  %v935 = vld [vmem:[%s1 + $0x1bc0] sm:$0xff]
  %v936 = vld [vmem:[%s1 + $0x1bc8] sm:$0xff]
  %v937 = vld [vmem:[%s1 + $0x1bd0] sm:$0xff]
  %v938 = vld [vmem:[%s1 + $0x1bd8] sm:$0xff]
  %v939 = vld [vmem:[%s1 + $0x1be0] sm:$0xff]
  %v940 = vld [vmem:[%s1 + $0x1be8] sm:$0xff]
  %v941 = vld [vmem:[%s1 + $0x1bf0] sm:$0xff]
  %v942 = vld [vmem:[%s1 + $0x1bf8] sm:$0xff]
  %v943 = vld [vmem:[%s1 + $0x1c00] sm:$0xff]
  %v944 = vld [vmem:[%s1 + $0x1c08] sm:$0xff]
  %v945 = vld [vmem:[%s1 + $0x1c10] sm:$0xff]
  %v946 = vld [vmem:[%s1 + $0x1c18] sm:$0xff]
  %v947 = vld [vmem:[%s1 + $0x1c20] sm:$0xff]
  %v948 = vld [vmem:[%s1 + $0x1c28] sm:$0xff]
  %v949 = vld [vmem:[%s1 + $0x1c30] sm:$0xff]
  %v950 = vld [vmem:[%s1 + $0x1c38] sm:$0xff]
  %v951 = vld [vmem:[%s1 + $0x1c40] sm:$0xff]
  %v952 = vld [vmem:[%s1 + $0x1c48] sm:$0xff]
  %v953 = vld [vmem:[%s1 + $0x1c50] sm:$0xff]
  %v954 = vld [vmem:[%s1 + $0x1c58] sm:$0xff]
  %v955 = vld [vmem:[%s1 + $0x1c60] sm:$0xff]
  %v956 = vld [vmem:[%s1 + $0x1c68] sm:$0xff]
  %v957 = vld [vmem:[%s1 + $0x1c70] sm:$0xff]
  %v958 = vld [vmem:[%s1 + $0x1c78] sm:$0xff]
  %v959 = vld [vmem:[%s1 + $0x1c80] sm:$0xff]
  %v960 = vld [vmem:[%s1 + $0x1c88] sm:$0xff]
  %v961 = vld [vmem:[%s1 + $0x1c90] sm:$0xff]
  %v962 = vld [vmem:[%s1 + $0x1c98] sm:$0xff]
  %v963 = vld [vmem:[%s1 + $0x1ca0] sm:$0xff]
  %v964 = vld [vmem:[%s1 + $0x1ca8] sm:$0xff]
  %v965 = vld [vmem:[%s1 + $0x1cb0] sm:$0xff]
  %v966 = vld [vmem:[%s1 + $0x1cb8] sm:$0xff]
  %v967 = vld [vmem:[%s1 + $0x1cc0] sm:$0xff]
  %v968 = vld [vmem:[%s1 + $0x1cc8] sm:$0xff]
  %v969 = vld [vmem:[%s1 + $0x1cd0] sm:$0xff]
  %v970 = vld [vmem:[%s1 + $0x1cd8] sm:$0xff]
  %v971 = vld [vmem:[%s1 + $0x1ce0] sm:$0xff]
  %v972 = vld [vmem:[%s1 + $0x1ce8] sm:$0xff]
  %v973 = vld [vmem:[%s1 + $0x1cf0] sm:$0xff]
  %v974 = vld [vmem:[%s1 + $0x1cf8] sm:$0xff]
  %v975 = vld [vmem:[%s1 + $0x1d00] sm:$0xff]
  %v976 = vld [vmem:[%s1 + $0x1d08] sm:$0xff]
  %v977 = vld [vmem:[%s1 + $0x1d10] sm:$0xff]
  %v978 = vld [vmem:[%s1 + $0x1d18] sm:$0xff]
  %v979 = vld [vmem:[%s1 + $0x1d20] sm:$0xff]
  %v980 = vld [vmem:[%s1 + $0x1d28] sm:$0xff]
  %v981 = vld [vmem:[%s1 + $0x1d30] sm:$0xff]
  %v982 = vld [vmem:[%s1 + $0x1d38] sm:$0xff]
  %v983 = vld [vmem:[%s1 + $0x1d40] sm:$0xff]
  %v984 = vld [vmem:[%s1 + $0x1d48] sm:$0xff]
  %v985 = vld [vmem:[%s1 + $0x1d50] sm:$0xff]
  %v986 = vld [vmem:[%s1 + $0x1d58] sm:$0xff]
  %v987 = vld [vmem:[%s1 + $0x1d60] sm:$0xff]
  %v988 = vld [vmem:[%s1 + $0x1d68] sm:$0xff]
  %v989 = vld [vmem:[%s1 + $0x1d70] sm:$0xff]
  %v990 = vld [vmem:[%s1 + $0x1d78] sm:$0xff]
  %v991 = vld [vmem:[%s1 + $0x1d80] sm:$0xff]
  %v992 = vld [vmem:[%s1 + $0x1d88] sm:$0xff]
  %v993 = vld [vmem:[%s1 + $0x1d90] sm:$0xff]
  %v994 = vld [vmem:[%s1 + $0x1d98] sm:$0xff]
  %v995 = vld [vmem:[%s1 + $0x1da0] sm:$0xff]
  %v996 = vld [vmem:[%s1 + $0x1da8] sm:$0xff]
  %v997 = vld [vmem:[%s1 + $0x1db0] sm:$0xff]
  %v998 = vld [vmem:[%s1 + $0x1db8] sm:$0xff]
  %v999 = vld [vmem:[%s1 + $0x1dc0] sm:$0xff]
  %v1000 = vld [vmem:[%s1 + $0x1dc8] sm:$0xff]
  %v1001 = vld [vmem:[%s1 + $0x1dd0] sm:$0xff]
  %v1002 = vld [vmem:[%s1 + $0x1dd8] sm:$0xff]
  %v1003 = vld [vmem:[%s1 + $0x1de0] sm:$0xff]
  %v1004 = vld [vmem:[%s1 + $0x1de8] sm:$0xff]
  %v1005 = vld [vmem:[%s1 + $0x1df0] sm:$0xff]
  %v1006 = vld [vmem:[%s1 + $0x1df8] sm:$0xff]
  %v1007 = vld [vmem:[%s1 + $0x1e00] sm:$0xff]
  %v1008 = vld [vmem:[%s1 + $0x1e08] sm:$0xff]
  %v1009 = vld [vmem:[%s1 + $0x1e10] sm:$0xff]
  %v1010 = vld [vmem:[%s1 + $0x1e18] sm:$0xff]
  %v1011 = vld [vmem:[%s1 + $0x1e20] sm:$0xff]
  %v1012 = vld [vmem:[%s1 + $0x1e28] sm:$0xff]
  %v1013 = vld [vmem:[%s1 + $0x1e30] sm:$0xff]
  %v1014 = vld [vmem:[%s1 + $0x1e38] sm:$0xff]
  %v1015 = vld [vmem:[%s1 + $0x1e40] sm:$0xff]
  %v1016 = vld [vmem:[%s1 + $0x1e48] sm:$0xff]
  %v1017 = vld [vmem:[%s1 + $0x1e50] sm:$0xff]
  %v1018 = vld [vmem:[%s1 + $0x1e58] sm:$0xff]
  %v1019 = vld [vmem:[%s1 + $0x1e60] sm:$0xff]
  %v1020 = vld [vmem:[%s1 + $0x1e68] sm:$0xff]
  %v1021 = vld [vmem:[%s1 + $0x1e70] sm:$0xff]
  %v1022 = vld [vmem:[%s1 + $0x1e78] sm:$0xff]
  %v1023 = vld [vmem:[%s1 + $0x1e80] sm:$0xff]
  %v1024 = vld [vmem:[%s1 + $0x1e88] sm:$0xff]
  %v1025 = vld [vmem:[%s1 + $0x1e90] sm:$0xff]
  %v1026 = vld [vmem:[%s1 + $0x1e98] sm:$0xff]
  %v1027 = vld [vmem:[%s1 + $0x1ea0] sm:$0xff]
  %v1028 = vld [vmem:[%s1 + $0x1ea8] sm:$0xff]
  %v1029 = vld [vmem:[%s1 + $0x1eb0] sm:$0xff]
  %v1030 = vld [vmem:[%s1 + $0x1eb8] sm:$0xff]
  %v1031 = vld [vmem:[%s1 + $0x1ec0] sm:$0xff]
  %v1032 = vld [vmem:[%s1 + $0x1ec8] sm:$0xff]
  %v1033 = vld [vmem:[%s1 + $0x1ed0] sm:$0xff]
  %v1034 = vld [vmem:[%s1 + $0x1ed8] sm:$0xff]
  %v1035 = vld [vmem:[%s1 + $0x1ee0] sm:$0xff]
  %v1036 = vld [vmem:[%s1 + $0x1ee8] sm:$0xff]
  %v1037 = vld [vmem:[%s1 + $0x1ef0] sm:$0xff]
  %v1038 = vld [vmem:[%s1 + $0x1ef8] sm:$0xff]
  %v1039 = vld [vmem:[%s1 + $0x1f00] sm:$0xff]
  %v1040 = vld [vmem:[%s1 + $0x1f08] sm:$0xff]
  %v1041 = vld [vmem:[%s1 + $0x1f10] sm:$0xff]
  %v1042 = vld [vmem:[%s1 + $0x1f18] sm:$0xff]
  %v1043 = vld [vmem:[%s1 + $0x1f20] sm:$0xff]
  %v1044 = vld [vmem:[%s1 + $0x1f28] sm:$0xff]
  %v1045 = vld [vmem:[%s1 + $0x1f30] sm:$0xff]
  %v1046 = vld [vmem:[%s1 + $0x1f38] sm:$0xff]
  %v1047 = vld [vmem:[%s1 + $0x1f40] sm:$0xff]
  %v1048 = vld [vmem:[%s1 + $0x1f48] sm:$0xff]
  %v1049 = vld [vmem:[%s1 + $0x1f50] sm:$0xff]
  %v1050 = vld [vmem:[%s1 + $0x1f58] sm:$0xff]
  %v1051 = vld [vmem:[%s1 + $0x1f60] sm:$0xff]
  %v1052 = vld [vmem:[%s1 + $0x1f68] sm:$0xff]
  %v1053 = vld [vmem:[%s1 + $0x1f70] sm:$0xff]
  %v1054 = vld [vmem:[%s1 + $0x1f78] sm:$0xff]
  %v1055 = vld [vmem:[%s1 + $0x1f80] sm:$0xff]
  %v1056 = vld [vmem:[%s1 + $0x1f88] sm:$0xff]
  %v1057 = vld [vmem:[%s1 + $0x1f90] sm:$0xff]
  %v1058 = vld [vmem:[%s1 + $0x1f98] sm:$0xff]
  %v1059 = vld [vmem:[%s1 + $0x1fa0] sm:$0xff]
  %v1060 = vld [vmem:[%s1 + $0x1fa8] sm:$0xff]
  %v1061 = vld [vmem:[%s1 + $0x1fb0] sm:$0xff]
  %v1062 = vld [vmem:[%s1 + $0x1fb8] sm:$0xff]
  %v1063 = vld [vmem:[%s1 + $0x1fc0] sm:$0xff]
  %v1064 = vld [vmem:[%s1 + $0x1fc8] sm:$0xff]
  %v1065 = vld [vmem:[%s1 + $0x1fd0] sm:$0xff]
  %v1066 = vld [vmem:[%s1 + $0x1fd8] sm:$0xff]
  %v1067 = vld [vmem:[%s1 + $0x1fe0] sm:$0xff]
  %v1068 = vld [vmem:[%s1 + $0x1fe8] sm:$0xff]
  %v1069 = vld [vmem:[%s1 + $0x1ff0] sm:$0xff]
  %v1070 = vld [vmem:[%s1 + $0x1ff8] sm:$0xff]
  %v1071 = vld [vmem:[%s1 + $0x2000] sm:$0xff]
  %v1072 = vld [vmem:[%s1 + $0x2008] sm:$0xff]
  %v1073 = vld [vmem:[%s1 + $0x2010] sm:$0xff]
  %v1074 = vld [vmem:[%s1 + $0x2018] sm:$0xff]
  %v1075 = vld [vmem:[%s1 + $0x2020] sm:$0xff]
  %v1076 = vld [vmem:[%s1 + $0x2028] sm:$0xff]
  %v1077 = vld [vmem:[%s1 + $0x2030] sm:$0xff]
  %v1078 = vld [vmem:[%s1 + $0x2038] sm:$0xff]
  %v1079 = vld [vmem:[%s1 + $0x2040] sm:$0xff]
  %v1080 = vld [vmem:[%s1 + $0x2048] sm:$0xff]
  %v1081 = vld [vmem:[%s1 + $0x2050] sm:$0xff]
  %v1082 = vld [vmem:[%s1 + $0x2058] sm:$0xff]
  %v1083 = vld [vmem:[%s1 + $0x2060] sm:$0xff]
  %v1084 = vld [vmem:[%s1 + $0x2068] sm:$0xff]
  %v1085 = vld [vmem:[%s1 + $0x2070] sm:$0xff]
  %v1086 = vld [vmem:[%s1 + $0x2078] sm:$0xff]
  %v1087 = vld [vmem:[%s1 + $0x2080] sm:$0xff]
  %v1088 = vld [vmem:[%s1 + $0x2088] sm:$0xff]
  %v1089 = vld [vmem:[%s1 + $0x2090] sm:$0xff]
  %v1090 = vld [vmem:[%s1 + $0x2098] sm:$0xff]
  %v1091 = vld [vmem:[%s1 + $0x20a0] sm:$0xff]
  %v1092 = vld [vmem:[%s1 + $0x20a8] sm:$0xff]
  %v1093 = vld [vmem:[%s1 + $0x20b0] sm:$0xff]
  %v1094 = vld [vmem:[%s1 + $0x20b8] sm:$0xff]
  %v1095 = vld [vmem:[%s1 + $0x20c0] sm:$0xff]
  %v1096 = vld [vmem:[%s1 + $0x20c8] sm:$0xff]
  %v1097 = vld [vmem:[%s1 + $0x20d0] sm:$0xff]
  %v1098 = vld [vmem:[%s1 + $0x20d8] sm:$0xff]
  %v1099 = vld [vmem:[%s1 + $0x20e0] sm:$0xff]
  %v1100 = vld [vmem:[%s1 + $0x20e8] sm:$0xff]
  %v1101 = vld [vmem:[%s1 + $0x20f0] sm:$0xff]
  %v1102 = vld [vmem:[%s1 + $0x20f8] sm:$0xff]
  %v1103 = vld [vmem:[%s1 + $0x2100] sm:$0xff]
  %v1104 = vld [vmem:[%s1 + $0x2108] sm:$0xff]
  %v1105 = vld [vmem:[%s1 + $0x2110] sm:$0xff]
  %v1106 = vld [vmem:[%s1 + $0x2118] sm:$0xff]
  %v1107 = vld [vmem:[%s1 + $0x2120] sm:$0xff]
  %v1108 = vld [vmem:[%s1 + $0x2128] sm:$0xff]
  %v1109 = vld [vmem:[%s1 + $0x2130] sm:$0xff]
  %v1110 = vld [vmem:[%s1 + $0x2138] sm:$0xff]
  %v1111 = vld [vmem:[%s1 + $0x2140] sm:$0xff]
  %v1112 = vld [vmem:[%s1 + $0x2148] sm:$0xff]
  %v1113 = vld [vmem:[%s1 + $0x2150] sm:$0xff]
  %v1114 = vld [vmem:[%s1 + $0x2158] sm:$0xff]
  %v1115 = vld [vmem:[%s1 + $0x2160] sm:$0xff]
  %v1116 = vld [vmem:[%s1 + $0x2168] sm:$0xff]
  %v1117 = vld [vmem:[%s1 + $0x2170] sm:$0xff]
  %v1118 = vld [vmem:[%s1 + $0x2178] sm:$0xff]
  %v1119 = vld [vmem:[%s1 + $0x2180] sm:$0xff]
  %v1120 = vld [vmem:[%s1 + $0x2188] sm:$0xff]
  %v1121 = vld [vmem:[%s1 + $0x2190] sm:$0xff]
  %v1122 = vld [vmem:[%s1 + $0x2198] sm:$0xff]
  %v1123 = vld [vmem:[%s1 + $0x21a0] sm:$0xff]
  %v1124 = vld [vmem:[%s1 + $0x21a8] sm:$0xff]
  %v1125 = vld [vmem:[%s1 + $0x21b0] sm:$0xff]
  %v1126 = vld [vmem:[%s1 + $0x21b8] sm:$0xff]
  %v1127 = vld [vmem:[%s1 + $0x21c0] sm:$0xff]
  %v1128 = vld [vmem:[%s1 + $0x21c8] sm:$0xff]
  %v1129 = vld [vmem:[%s1 + $0x21d0] sm:$0xff]
  %v1130 = vld [vmem:[%s1 + $0x21d8] sm:$0xff]
  %v1131 = vld [vmem:[%s1 + $0x21e0] sm:$0xff]
  %v1132 = vld [vmem:[%s1 + $0x21e8] sm:$0xff]
  %v1133 = vld [vmem:[%s1 + $0x21f0] sm:$0xff]
  %v1134 = vld [vmem:[%s1 + $0x21f8] sm:$0xff]
  %v1135 = vld [vmem:[%s1 + $0x2200] sm:$0xff]
  %v1136 = vld [vmem:[%s1 + $0x2208] sm:$0xff]
  %v1137 = vld [vmem:[%s1 + $0x2210] sm:$0xff]
  %v1138 = vld [vmem:[%s1 + $0x2218] sm:$0xff]
  %v1139 = vld [vmem:[%s1 + $0x2220] sm:$0xff]
  %v1140 = vld [vmem:[%s1 + $0x2228] sm:$0xff]
  %v1141 = vld [vmem:[%s1 + $0x2230] sm:$0xff]
  %v1142 = vld [vmem:[%s1 + $0x2238] sm:$0xff]
  %v1143 = vld [vmem:[%s1 + $0x2240] sm:$0xff]
  %v1144 = vld [vmem:[%s1 + $0x2248] sm:$0xff]
  %v1145 = vld [vmem:[%s1 + $0x2250] sm:$0xff]
  %v1146 = vld [vmem:[%s1 + $0x2258] sm:$0xff]
  %v1147 = vld [vmem:[%s1 + $0x2260] sm:$0xff]
  %v1148 = vld [vmem:[%s1 + $0x2268] sm:$0xff]
  %v1149 = vld [vmem:[%s1 + $0x2270] sm:$0xff]
  %v1150 = vld [vmem:[%s1 + $0x2278] sm:$0xff]
  %v1151 = vld [vmem:[%s1 + $0x2280] sm:$0xff]
  %v1152 = vld [vmem:[%s1 + $0x2288] sm:$0xff]
  %v1153 = vld [vmem:[%s1 + $0x2290] sm:$0xff]
  %v1154 = vld [vmem:[%s1 + $0x2298] sm:$0xff]
  %v1155 = vld [vmem:[%s1 + $0x22a0] sm:$0xff]
  %v1156 = vld [vmem:[%s1 + $0x22a8] sm:$0xff]
  %v1157 = vld [vmem:[%s1 + $0x22b0] sm:$0xff]
  %v1158 = vld [vmem:[%s1 + $0x22b8] sm:$0xff]
  %v1159 = vld [vmem:[%s1 + $0x22c0] sm:$0xff]
  %v1160 = vld [vmem:[%s1 + $0x22c8] sm:$0xff]
  %v1161 = vld [vmem:[%s1 + $0x22d0] sm:$0xff]
  %v1162 = vld [vmem:[%s1 + $0x22d8] sm:$0xff]
  %v1163 = vld [vmem:[%s1 + $0x22e0] sm:$0xff]
  %v1164 = vld [vmem:[%s1 + $0x22e8] sm:$0xff]
  %v1165 = vld [vmem:[%s1 + $0x22f0] sm:$0xff]
  %v1166 = vld [vmem:[%s1 + $0x22f8] sm:$0xff]
  %v1167 = vld [vmem:[%s1 + $0x2300] sm:$0xff]
  %v1168 = vld [vmem:[%s1 + $0x2308] sm:$0xff]
  %v1169 = vld [vmem:[%s1 + $0x2310] sm:$0xff]
  %v1170 = vld [vmem:[%s1 + $0x2318] sm:$0xff]
  %v1171 = vld [vmem:[%s1 + $0x2320] sm:$0xff]
  %v1172 = vld [vmem:[%s1 + $0x2328] sm:$0xff]
  %v1173 = vld [vmem:[%s1 + $0x2330] sm:$0xff]
  %v1174 = vld [vmem:[%s1 + $0x2338] sm:$0xff]
  %v1175 = vld [vmem:[%s1 + $0x2340] sm:$0xff]
  %v1176 = vld [vmem:[%s1 + $0x2348] sm:$0xff]
  %v1177 = vld [vmem:[%s1 + $0x2350] sm:$0xff]
  %v1178 = vld [vmem:[%s1 + $0x2358] sm:$0xff]
  %v1179 = vld [vmem:[%s1 + $0x2360] sm:$0xff]
  %v1180 = vld [vmem:[%s1 + $0x2368] sm:$0xff]
  %v1181 = vld [vmem:[%s1 + $0x2370] sm:$0xff]
  %v1182 = vld [vmem:[%s1 + $0x2378] sm:$0xff]
  %v1183 = vld [vmem:[%s1 + $0x2380] sm:$0xff]
  %v1184 = vld [vmem:[%s1 + $0x2388] sm:$0xff]
  %v1185 = vld [vmem:[%s1 + $0x2390] sm:$0xff]
  %v1186 = vld [vmem:[%s1 + $0x2398] sm:$0xff]
  %v1187 = vld [vmem:[%s1 + $0x23a0] sm:$0xff]
  %v1188 = vld [vmem:[%s1 + $0x23a8] sm:$0xff]
  %v1189 = vld [vmem:[%s1 + $0x23b0] sm:$0xff]
  %v1190 = vld [vmem:[%s1 + $0x23b8] sm:$0xff]
  %v1191 = vld [vmem:[%s1 + $0x23c0] sm:$0xff]
  %v1192 = vld [vmem:[%s1 + $0x23c8] sm:$0xff]
  %v1193 = vld [vmem:[%s1 + $0x23d0] sm:$0xff]
  %v1194 = vld [vmem:[%s1 + $0x23d8] sm:$0xff]
  %v1195 = vld [vmem:[%s1 + $0x23e0] sm:$0xff]
  %v1196 = vld [vmem:[%s1 + $0x23e8] sm:$0xff]
  %v1197 = vld [vmem:[%s1 + $0x23f0] sm:$0xff]
  %v1198 = vld [vmem:[%s1 + $0x23f8] sm:$0xff]
  %v1199 = vld [vmem:[%s1 + $0x2400] sm:$0xff]
  %v1200 = vld [vmem:[%s1 + $0x2408] sm:$0xff]
  %v1201 = vld [vmem:[%s1 + $0x2410] sm:$0xff]
  %v1202 = vld [vmem:[%s1 + $0x2418] sm:$0xff]
  %v1203 = vld [vmem:[%s1 + $0x2420] sm:$0xff]
  %v1204 = vld [vmem:[%s1 + $0x2428] sm:$0xff]
  %v1205 = vld [vmem:[%s1 + $0x2430] sm:$0xff]
  %v1206 = vld [vmem:[%s1 + $0x2438] sm:$0xff]
  %v1207 = vld [vmem:[%s1 + $0x2440] sm:$0xff]
  %v1208 = vld [vmem:[%s1 + $0x2448] sm:$0xff]
  %v1209 = vld [vmem:[%s1 + $0x2450] sm:$0xff]
  %v1210 = vld [vmem:[%s1 + $0x2458] sm:$0xff]
  %v1211 = vld [vmem:[%s1 + $0x2460] sm:$0xff]
  %v1212 = vld [vmem:[%s1 + $0x2468] sm:$0xff]
  %v1213 = vld [vmem:[%s1 + $0x2470] sm:$0xff]
  %v1214 = vld [vmem:[%s1 + $0x2478] sm:$0xff]
  %v1215 = vld [vmem:[%s1 + $0x2480] sm:$0xff]
  %v1216 = vld [vmem:[%s1 + $0x2488] sm:$0xff]
  %v1217 = vld [vmem:[%s1 + $0x2490] sm:$0xff]
  %v1218 = vld [vmem:[%s1 + $0x2498] sm:$0xff]
  %v1219 = vld [vmem:[%s1 + $0x24a0] sm:$0xff]
  %v1220 = vld [vmem:[%s1 + $0x24a8] sm:$0xff]
  %v1221 = vld [vmem:[%s1 + $0x24b0] sm:$0xff]
  %v1222 = vld [vmem:[%s1 + $0x24b8] sm:$0xff]
  %v1223 = vld [vmem:[%s1 + $0x24c0] sm:$0xff]
  %v1224 = vld [vmem:[%s1 + $0x24c8] sm:$0xff]
  %v1225 = vld [vmem:[%s1 + $0x24d0] sm:$0xff]
  %v1226 = vld [vmem:[%s1 + $0x24d8] sm:$0xff]
  %v1227 = vld [vmem:[%s1 + $0x24e0] sm:$0xff]
  %v1228 = vld [vmem:[%s1 + $0x24e8] sm:$0xff]
  %v1229 = vld [vmem:[%s1 + $0x24f0] sm:$0xff]
  %v1230 = vld [vmem:[%s1 + $0x24f8] sm:$0xff]
  %v1231 = vld [vmem:[%s1 + $0x2500] sm:$0xff]
  %v1232 = vld [vmem:[%s1 + $0x2508] sm:$0xff]
  %v1233 = vld [vmem:[%s1 + $0x2510] sm:$0xff]
  %v1234 = vld [vmem:[%s1 + $0x2518] sm:$0xff]
  %v1235 = vld [vmem:[%s1 + $0x2520] sm:$0xff]
  %v1236 = vld [vmem:[%s1 + $0x2528] sm:$0xff]
  %v1237 = vld [vmem:[%s1 + $0x2530] sm:$0xff]
  %v1238 = vld [vmem:[%s1 + $0x2538] sm:$0xff]
  %v1239 = vld [vmem:[%s1 + $0x2540] sm:$0xff]
  %v1240 = vld [vmem:[%s1 + $0x2548] sm:$0xff]
  %v1241 = vld [vmem:[%s1 + $0x2550] sm:$0xff]
  %v1242 = vld [vmem:[%s1 + $0x2558] sm:$0xff]
  %v1243 = vld [vmem:[%s1 + $0x2560] sm:$0xff]
  %v1244 = vld [vmem:[%s1 + $0x2568] sm:$0xff]
  %v1245 = vld [vmem:[%s1 + $0x2570] sm:$0xff]
  %v1246 = vld [vmem:[%s1 + $0x2578] sm:$0xff]
  %v1247 = vld [vmem:[%s1 + $0x2580] sm:$0xff]
  %v1248 = vld [vmem:[%s1 + $0x2588] sm:$0xff]
  %v1249 = vld [vmem:[%s1 + $0x2590] sm:$0xff]
  %v1250 = vld [vmem:[%s1 + $0x2598] sm:$0xff]
  %v1251 = vld [vmem:[%s1 + $0x25a0] sm:$0xff]
  %v1252 = vld [vmem:[%s1 + $0x25a8] sm:$0xff]
  %v1253 = vld [vmem:[%s1 + $0x25b0] sm:$0xff]
  %v1254 = vld [vmem:[%s1 + $0x25b8] sm:$0xff]
  %v1255 = vld [vmem:[%s1 + $0x25c0] sm:$0xff]
  %v1256 = vld [vmem:[%s1 + $0x25c8] sm:$0xff]
  %v1257 = vld [vmem:[%s1 + $0x25d0] sm:$0xff]
  %v1258 = vld [vmem:[%s1 + $0x25d8] sm:$0xff]
  %v1259 = vld [vmem:[%s1 + $0x25e0] sm:$0xff]
  %v1260 = vld [vmem:[%s1 + $0x25e8] sm:$0xff]
  %v1261 = vld [vmem:[%s1 + $0x25f0] sm:$0xff]
  %v1262 = vld [vmem:[%s1 + $0x25f8] sm:$0xff]
  %v1263 = vld [vmem:[%s1 + $0x2600] sm:$0xff]
  %v1264 = vld [vmem:[%s1 + $0x2608] sm:$0xff]
  %v1265 = vld [vmem:[%s1 + $0x2610] sm:$0xff]
  %v1266 = vld [vmem:[%s1 + $0x2618] sm:$0xff]
  %v1267 = vld [vmem:[%s1 + $0x2620] sm:$0xff]
  %v1268 = vld [vmem:[%s1 + $0x2628] sm:$0xff]
  %v1269 = vld [vmem:[%s1 + $0x2630] sm:$0xff]
  %v1270 = vld [vmem:[%s1 + $0x2638] sm:$0xff]
  %v1271 = vld [vmem:[%s1 + $0x2640] sm:$0xff]
  %v1272 = vld [vmem:[%s1 + $0x2648] sm:$0xff]
  %v1273 = vld [vmem:[%s1 + $0x2650] sm:$0xff]
  %v1274 = vld [vmem:[%s1 + $0x2658] sm:$0xff]
  %v1275 = vld [vmem:[%s1 + $0x2660] sm:$0xff]
  %v1276 = vld [vmem:[%s1 + $0x2668] sm:$0xff]
  %v1277 = vld [vmem:[%s1 + $0x2670] sm:$0xff]
  %v1278 = vld [vmem:[%s1 + $0x2678] sm:$0xff]
  %v1279 = vld [vmem:[%s1 + $0x2680] sm:$0xff]
  %v1280 = vld [vmem:[%s1 + $0x2688] sm:$0xff]
  %v1281 = vld [vmem:[%s1 + $0x2690] sm:$0xff]
  %v1282 = vld [vmem:[%s1 + $0x2698] sm:$0xff]
  %v1283 = vld [vmem:[%s1 + $0x26a0] sm:$0xff]
  %v1284 = vld [vmem:[%s1 + $0x26a8] sm:$0xff]
  %v1285 = vld [vmem:[%s1 + $0x26b0] sm:$0xff]
  %v1286 = vld [vmem:[%s1 + $0x26b8] sm:$0xff]
  %v1287 = vld [vmem:[%s1 + $0x26c0] sm:$0xff]
  %v1288 = vld [vmem:[%s1 + $0x26c8] sm:$0xff]
  %v1289 = vld [vmem:[%s1 + $0x26d0] sm:$0xff]
  %v1290 = vld [vmem:[%s1 + $0x26d8] sm:$0xff]
  %v1291 = vld [vmem:[%s1 + $0x26e0] sm:$0xff]
  %v1292 = vld [vmem:[%s1 + $0x26e8] sm:$0xff]
  %v1293 = vld [vmem:[%s1 + $0x26f0] sm:$0xff]
  %v1294 = vld [vmem:[%s1 + $0x26f8] sm:$0xff]
  %v1295 = vld [vmem:[%s1 + $0x2700] sm:$0xff]
  %v1296 = vld [vmem:[%s1 + $0x2708] sm:$0xff]
  %v1297 = vld [vmem:[%s1 + $0x2710] sm:$0xff]
  %v1298 = vld [vmem:[%s1 + $0x2718] sm:$0xff]
  %v1299 = vld [vmem:[%s1 + $0x2720] sm:$0xff]
  %v1300 = vld [vmem:[%s1 + $0x2728] sm:$0xff]
  %v1301 = vld [vmem:[%s1 + $0x2730] sm:$0xff]
  %v1302 = vld [vmem:[%s1 + $0x2738] sm:$0xff]
  %v1303 = vld [vmem:[%s1 + $0x2740] sm:$0xff]
  %v1304 = vld [vmem:[%s1 + $0x2748] sm:$0xff]
  %v1305 = vld [vmem:[%s1 + $0x2750] sm:$0xff]
  %v1306 = vld [vmem:[%s1 + $0x2758] sm:$0xff]
  %v1307 = vld [vmem:[%s1 + $0x2760] sm:$0xff]
  %v1308 = vld [vmem:[%s1 + $0x2768] sm:$0xff]
  %v1309 = vld [vmem:[%s1 + $0x2770] sm:$0xff]
  %v1310 = vld [vmem:[%s1 + $0x2778] sm:$0xff]
  %v1311 = vld [vmem:[%s1 + $0x2780] sm:$0xff]
  %v1312 = vld [vmem:[%s1 + $0x2788] sm:$0xff]
  %v1313 = vld [vmem:[%s1 + $0x2790] sm:$0xff]
  %v1314 = vld [vmem:[%s1 + $0x2798] sm:$0xff]
  %v1315 = vld [vmem:[%s1 + $0x27a0] sm:$0xff]
  %v1316 = vld [vmem:[%s1 + $0x27a8] sm:$0xff]
  %v1317 = vld [vmem:[%s1 + $0x27b0] sm:$0xff]
  %v1318 = vld [vmem:[%s1 + $0x27b8] sm:$0xff]
  %v1319 = vld [vmem:[%s1 + $0x27c0] sm:$0xff]
  %v1320 = vld [vmem:[%s1 + $0x27c8] sm:$0xff]
  %v1321 = vld [vmem:[%s1 + $0x27d0] sm:$0xff]
  %v1322 = vld [vmem:[%s1 + $0x27d8] sm:$0xff]
  %v1323 = vld [vmem:[%s1 + $0x27e0] sm:$0xff]
  %v1324 = vld [vmem:[%s1 + $0x27e8] sm:$0xff]
  %v1325 = vld [vmem:[%s1 + $0x27f0] sm:$0xff]
  %v1326 = vld [vmem:[%s1 + $0x27f8] sm:$0xff]
  %v1327 = vld [vmem:[%s1 + $0x2800] sm:$0xff]
  %v1328 = vld [vmem:[%s1 + $0x2808] sm:$0xff]
  %v1329 = vld [vmem:[%s1 + $0x2810] sm:$0xff]
  %v1330 = vld [vmem:[%s1 + $0x2818] sm:$0xff]
  %v1331 = vld [vmem:[%s1 + $0x2820] sm:$0xff]
  %v1332 = vld [vmem:[%s1 + $0x2828] sm:$0xff]
  %v1333 = vld [vmem:[%s1 + $0x2830] sm:$0xff]
  %v1334 = vld [vmem:[%s1 + $0x2838] sm:$0xff]
  %v1335 = vld [vmem:[%s1 + $0x2840] sm:$0xff]
  %v1336 = vld [vmem:[%s1 + $0x2848] sm:$0xff]
  %v1337 = vld [vmem:[%s1 + $0x2850] sm:$0xff]
  %v1338 = vld [vmem:[%s1 + $0x2858] sm:$0xff]
  %v1339 = vld [vmem:[%s1 + $0x2860] sm:$0xff]
  %v1340 = vld [vmem:[%s1 + $0x2868] sm:$0xff]
  %v1341 = vld [vmem:[%s1 + $0x2870] sm:$0xff]
  %v1342 = vld [vmem:[%s1 + $0x2878] sm:$0xff]
  %v1343 = vld [vmem:[%s1 + $0x2880] sm:$0xff]
  %v1344 = vld [vmem:[%s1 + $0x2888] sm:$0xff]
  %v1345 = vld [vmem:[%s1 + $0x2890] sm:$0xff]
  %v1346 = vld [vmem:[%s1 + $0x2898] sm:$0xff]
  %v1347 = vld [vmem:[%s1 + $0x28a0] sm:$0xff]
  %v1348 = vld [vmem:[%s1 + $0x28a8] sm:$0xff]
  %v1349 = vld [vmem:[%s1 + $0x28b0] sm:$0xff]
  %v1350 = vld [vmem:[%s1 + $0x28b8] sm:$0xff]
  %v1351 = vld [vmem:[%s1 + $0x28c0] sm:$0xff]
  %v1352 = vld [vmem:[%s1 + $0x28c8] sm:$0xff]
  %v1353 = vld [vmem:[%s1 + $0x28d0] sm:$0xff]
  %v1354 = vld [vmem:[%s1 + $0x28d8] sm:$0xff]
  %v1355 = vld [vmem:[%s1 + $0x28e0] sm:$0xff]
  %v1356 = vld [vmem:[%s1 + $0x28e8] sm:$0xff]
  %v1357 = vld [vmem:[%s1 + $0x28f0] sm:$0xff]
  %v1358 = vld [vmem:[%s1 + $0x28f8] sm:$0xff]
  %v1359 = vld [vmem:[%s1 + $0x2900] sm:$0xff]
  %v1360 = vld [vmem:[%s1 + $0x2908] sm:$0xff]
  %v1361 = vld [vmem:[%s1 + $0x2910] sm:$0xff]
  %v1362 = vld [vmem:[%s1 + $0x2918] sm:$0xff]
  %v1363 = vld [vmem:[%s1 + $0x2920] sm:$0xff]
  %v1364 = vld [vmem:[%s1 + $0x2928] sm:$0xff]
  %v1365 = vld [vmem:[%s1 + $0x2930] sm:$0xff]
  %v1366 = vld [vmem:[%s1 + $0x2938] sm:$0xff]
  %v1367 = vld [vmem:[%s1 + $0x2940] sm:$0xff]
  %v1368 = vld [vmem:[%s1 + $0x2948] sm:$0xff]
  %v1369 = vld [vmem:[%s1 + $0x2950] sm:$0xff]
  %v1370 = vld [vmem:[%s1 + $0x2958] sm:$0xff]
  %v1371 = vld [vmem:[%s1 + $0x2960] sm:$0xff]
  %v1372 = vld [vmem:[%s1 + $0x2968] sm:$0xff]
  %v1373 = vld [vmem:[%s1 + $0x2970] sm:$0xff]
  %v1374 = vld [vmem:[%s1 + $0x2978] sm:$0xff]
  %v1375 = vld [vmem:[%s1 + $0x2980] sm:$0xff]
  %v1376 = vld [vmem:[%s1 + $0x2988] sm:$0xff]
  %v1377 = vld [vmem:[%s1 + $0x2990] sm:$0xff]
  %v1378 = vld [vmem:[%s1 + $0x2998] sm:$0xff]
  %v1379 = vld [vmem:[%s1 + $0x29a0] sm:$0xff]
  %v1380 = vld [vmem:[%s1 + $0x29a8] sm:$0xff]
  %v1381 = vld [vmem:[%s1 + $0x29b0] sm:$0xff]
  %v1382 = vld [vmem:[%s1 + $0x29b8] sm:$0xff]
  %v1383 = vld [vmem:[%s1 + $0x29c0] sm:$0xff]
  %v1384 = vld [vmem:[%s1 + $0x29c8] sm:$0xff]
  %v1385 = vld [vmem:[%s1 + $0x29d0] sm:$0xff]
  %v1386 = vld [vmem:[%s1 + $0x29d8] sm:$0xff]
  %v1387 = vld [vmem:[%s1 + $0x29e0] sm:$0xff]
  %v1388 = vld [vmem:[%s1 + $0x29e8] sm:$0xff]
  %v1389 = vld [vmem:[%s1 + $0x29f0] sm:$0xff]
  %v1390 = vld [vmem:[%s1 + $0x29f8] sm:$0xff]
  %v1391 = vld [vmem:[%s1 + $0x2a00] sm:$0xff]
  %v1392 = vld [vmem:[%s1 + $0x2a08] sm:$0xff]
  %v1393 = vld [vmem:[%s1 + $0x2a10] sm:$0xff]
  %v1394 = vld [vmem:[%s1 + $0x2a18] sm:$0xff]
  %v1395 = vld [vmem:[%s1 + $0x2a20] sm:$0xff]
  %v1396 = vld [vmem:[%s1 + $0x2a28] sm:$0xff]
  %v1397 = vld [vmem:[%s1 + $0x2a30] sm:$0xff]
  %v1398 = vld [vmem:[%s1 + $0x2a38] sm:$0xff]
  %v1399 = vld [vmem:[%s1 + $0x2a40] sm:$0xff]
  %v1400 = vld [vmem:[%s1 + $0x2a48] sm:$0xff]
  %v1401 = vld [vmem:[%s1 + $0x2a50] sm:$0xff]
  %v1402 = vld [vmem:[%s1 + $0x2a58] sm:$0xff]
  %v1403 = vld [vmem:[%s1 + $0x2a60] sm:$0xff]
  %v1404 = vld [vmem:[%s1 + $0x2a68] sm:$0xff]
  %v1405 = vld [vmem:[%s1 + $0x2a70] sm:$0xff]
  %v1406 = vld [vmem:[%s1 + $0x2a78] sm:$0xff]
  %v1407 = vld [vmem:[%s1 + $0x2a80] sm:$0xff]
  %v1408 = vld [vmem:[%s1 + $0x2a88] sm:$0xff]
  %v1409 = vld [vmem:[%s1 + $0x2a90] sm:$0xff]
  %v1410 = vld [vmem:[%s1 + $0x2a98] sm:$0xff]
  %v1411 = vld [vmem:[%s1 + $0x2aa0] sm:$0xff]
  %v1412 = vld [vmem:[%s1 + $0x2aa8] sm:$0xff]
  %v1413 = vld [vmem:[%s1 + $0x2ab0] sm:$0xff]
  %v1414 = vld [vmem:[%s1 + $0x2ab8] sm:$0xff]
  %v1415 = vld [vmem:[%s1 + $0x2ac0] sm:$0xff]
  %v1416 = vld [vmem:[%s1 + $0x2ac8] sm:$0xff]
  %v1417 = vld [vmem:[%s1 + $0x2ad0] sm:$0xff]
  %v1418 = vld [vmem:[%s1 + $0x2ad8] sm:$0xff]
  %v1419 = vld [vmem:[%s1 + $0x2ae0] sm:$0xff]
  %v1420 = vld [vmem:[%s1 + $0x2ae8] sm:$0xff]
  %v1421 = vld [vmem:[%s1 + $0x2af0] sm:$0xff]
  %v1422 = vld [vmem:[%s1 + $0x2af8] sm:$0xff]
  %v1423 = vld [vmem:[%s1 + $0x2b00] sm:$0xff]
  %v1424 = vld [vmem:[%s1 + $0x2b08] sm:$0xff]
  %v1425 = vld [vmem:[%s1 + $0x2b10] sm:$0xff]
  %v1426 = vld [vmem:[%s1 + $0x2b18] sm:$0xff]
  %v1427 = vld [vmem:[%s1 + $0x2b20] sm:$0xff]
  %v1428 = vld [vmem:[%s1 + $0x2b28] sm:$0xff]
  %v1429 = vld [vmem:[%s1 + $0x2b30] sm:$0xff]
  %v1430 = vld [vmem:[%s1 + $0x2b38] sm:$0xff]
  %v1431 = vld [vmem:[%s1 + $0x2b40] sm:$0xff]
  %v1432 = vld [vmem:[%s1 + $0x2b48] sm:$0xff]
  %v1433 = vld [vmem:[%s1 + $0x2b50] sm:$0xff]
  %v1434 = vld [vmem:[%s1 + $0x2b58] sm:$0xff]
  %v1435 = vld [vmem:[%s1 + $0x2b60] sm:$0xff]
  %v1436 = vld [vmem:[%s1 + $0x2b68] sm:$0xff]
  %v1437 = vld [vmem:[%s1 + $0x2b70] sm:$0xff]
  %v1438 = vld [vmem:[%s1 + $0x2b78] sm:$0xff]
  %v1439 = vld [vmem:[%s1 + $0x2b80] sm:$0xff]
  %v1440 = vld [vmem:[%s1 + $0x2b88] sm:$0xff]
  %v1441 = vld [vmem:[%s1 + $0x2b90] sm:$0xff]
  %v1442 = vld [vmem:[%s1 + $0x2b98] sm:$0xff]
  %v1443 = vld [vmem:[%s1 + $0x2ba0] sm:$0xff]
  %v1444 = vld [vmem:[%s1 + $0x2ba8] sm:$0xff]
  %v1445 = vld [vmem:[%s1 + $0x2bb0] sm:$0xff]
  %v1446 = vld [vmem:[%s1 + $0x2bb8] sm:$0xff]
  %v1447 = vld [vmem:[%s1 + $0x2bc0] sm:$0xff]
  %v1448 = vld [vmem:[%s1 + $0x2bc8] sm:$0xff]
  %v1449 = vld [vmem:[%s1 + $0x2bd0] sm:$0xff]
  %v1450 = vld [vmem:[%s1 + $0x2bd8] sm:$0xff]
  %v1451 = vld [vmem:[%s1 + $0x2be0] sm:$0xff]
  %v1452 = vld [vmem:[%s1 + $0x2be8] sm:$0xff]
  %v1453 = vld [vmem:[%s1 + $0x2bf0] sm:$0xff]
  %v1454 = vld [vmem:[%s1 + $0x2bf8] sm:$0xff]
  %v1455 = vld [vmem:[%s1 + $0x2c00] sm:$0xff]
  %v1456 = vld [vmem:[%s1 + $0x2c08] sm:$0xff]
  %v1457 = vld [vmem:[%s1 + $0x2c10] sm:$0xff]
  %v1458 = vld [vmem:[%s1 + $0x2c18] sm:$0xff]
  %v1459 = vld [vmem:[%s1 + $0x2c20] sm:$0xff]
  %v1460 = vld [vmem:[%s1 + $0x2c28] sm:$0xff]
  %v1461 = vld [vmem:[%s1 + $0x2c30] sm:$0xff]
  %v1462 = vld [vmem:[%s1 + $0x2c38] sm:$0xff]
  %v1463 = vld [vmem:[%s1 + $0x2c40] sm:$0xff]
  %v1464 = vld [vmem:[%s1 + $0x2c48] sm:$0xff]
  %v1465 = vld [vmem:[%s1 + $0x2c50] sm:$0xff]
  %v1466 = vld [vmem:[%s1 + $0x2c58] sm:$0xff]
  %v1467 = vld [vmem:[%s1 + $0x2c60] sm:$0xff]
  %v1468 = vld [vmem:[%s1 + $0x2c68] sm:$0xff]
  %v1469 = vld [vmem:[%s1 + $0x2c70] sm:$0xff]
  %v1470 = vld [vmem:[%s1 + $0x2c78] sm:$0xff]
  %v1471 = vld [vmem:[%s1 + $0x2c80] sm:$0xff]
  %v1472 = vld [vmem:[%s1 + $0x2c88] sm:$0xff]
  %v1473 = vld [vmem:[%s1 + $0x2c90] sm:$0xff]
  %v1474 = vld [vmem:[%s1 + $0x2c98] sm:$0xff]
  %v1475 = vld [vmem:[%s1 + $0x2ca0] sm:$0xff]
  %v1476 = vld [vmem:[%s1 + $0x2ca8] sm:$0xff]
  %v1477 = vld [vmem:[%s1 + $0x2cb0] sm:$0xff]
  %v1478 = vld [vmem:[%s1 + $0x2cb8] sm:$0xff]
  %v1479 = vld [vmem:[%s1 + $0x2cc0] sm:$0xff]
  %v1480 = vld [vmem:[%s1 + $0x2cc8] sm:$0xff]
  %v1481 = vld [vmem:[%s1 + $0x2cd0] sm:$0xff]
  %v1482 = vld [vmem:[%s1 + $0x2cd8] sm:$0xff]
  %v1483 = vld [vmem:[%s1 + $0x2ce0] sm:$0xff]
  %v1484 = vld [vmem:[%s1 + $0x2ce8] sm:$0xff]
  %v1485 = vld [vmem:[%s1 + $0x2cf0] sm:$0xff]
  %v1486 = vld [vmem:[%s1 + $0x2cf8] sm:$0xff]
  %v1487 = vld [vmem:[%s1 + $0x2d00] sm:$0xff]
  %v1488 = vld [vmem:[%s1 + $0x2d08] sm:$0xff]
  %v1489 = vld [vmem:[%s1 + $0x2d10] sm:$0xff]
  %v1490 = vld [vmem:[%s1 + $0x2d18] sm:$0xff]
  %v1491 = vld [vmem:[%s1 + $0x2d20] sm:$0xff]
  %v1492 = vld [vmem:[%s1 + $0x2d28] sm:$0xff]
  %v1493 = vld [vmem:[%s1 + $0x2d30] sm:$0xff]
  %v1494 = vld [vmem:[%s1 + $0x2d38] sm:$0xff]
  %v1495 = vld [vmem:[%s1 + $0x2d40] sm:$0xff]
  %v1496 = vld [vmem:[%s1 + $0x2d48] sm:$0xff]
  %v1497 = vld [vmem:[%s1 + $0x2d50] sm:$0xff]
  %v1498 = vld [vmem:[%s1 + $0x2d58] sm:$0xff]
  %v1499 = vld [vmem:[%s1 + $0x2d60] sm:$0xff]
  %v1500 = vld [vmem:[%s1 + $0x2d68] sm:$0xff]
  %v1501 = vld [vmem:[%s1 + $0x2d70] sm:$0xff]
  %v1502 = vld [vmem:[%s1 + $0x2d78] sm:$0xff]
  %v1503 = vld [vmem:[%s1 + $0x2d80] sm:$0xff]
  %v1504 = vld [vmem:[%s1 + $0x2d88] sm:$0xff]
  %v1505 = vld [vmem:[%s1 + $0x2d90] sm:$0xff]
  %v1506 = vld [vmem:[%s1 + $0x2d98] sm:$0xff]
  %v1507 = vld [vmem:[%s1 + $0x2da0] sm:$0xff]
  %v1508 = vld [vmem:[%s1 + $0x2da8] sm:$0xff]
  %v1509 = vld [vmem:[%s1 + $0x2db0] sm:$0xff]
  %v1510 = vld [vmem:[%s1 + $0x2db8] sm:$0xff]
  %v1511 = vld [vmem:[%s1 + $0x2dc0] sm:$0xff]
  %v1512 = vld [vmem:[%s1 + $0x2dc8] sm:$0xff]
  %v1513 = vld [vmem:[%s1 + $0x2dd0] sm:$0xff]
  %v1514 = vld [vmem:[%s1 + $0x2dd8] sm:$0xff]
  %v1515 = vld [vmem:[%s1 + $0x2de0] sm:$0xff]
  %v1516 = vld [vmem:[%s1 + $0x2de8] sm:$0xff]
  %v1517 = vld [vmem:[%s1 + $0x2df0] sm:$0xff]
  %v1518 = vld [vmem:[%s1 + $0x2df8] sm:$0xff]
  %v1519 = vld [vmem:[%s1 + $0x2e00] sm:$0xff]
  %v1520 = vld [vmem:[%s1 + $0x2e08] sm:$0xff]
  %v1521 = vld [vmem:[%s1 + $0x2e10] sm:$0xff]
  %v1522 = vld [vmem:[%s1 + $0x2e18] sm:$0xff]
  %v1523 = vld [vmem:[%s1 + $0x2e20] sm:$0xff]
  %v1524 = vld [vmem:[%s1 + $0x2e28] sm:$0xff]
  %v1525 = vld [vmem:[%s1 + $0x2e30] sm:$0xff]
  %v1526 = vld [vmem:[%s1 + $0x2e38] sm:$0xff]
  %v1527 = vld [vmem:[%s1 + $0x2e40] sm:$0xff]
  %v1528 = vld [vmem:[%s1 + $0x2e48] sm:$0xff]
  %v1529 = vld [vmem:[%s1 + $0x2e50] sm:$0xff]
  %v1530 = vld [vmem:[%s1 + $0x2e58] sm:$0xff]
  %v1531 = vld [vmem:[%s1 + $0x2e60] sm:$0xff]
  %v1532 = vld [vmem:[%s1 + $0x2e68] sm:$0xff]
  %v1533 = vld [vmem:[%s1 + $0x2e70] sm:$0xff]
  %v1534 = vld [vmem:[%s1 + $0x2e78] sm:$0xff]
  %v1535 = vld [vmem:[%s1 + $0x2e80] sm:$0xff]
  %v1536 = vld [vmem:[%s1 + $0x2e88] sm:$0xff]
  %v1537 = vld [vmem:[%s1 + $0x2e90] sm:$0xff]
  %v1538 = vld [vmem:[%s1 + $0x2e98] sm:$0xff]
  %v1539 = vld [vmem:[%s1 + $0x2ea0] sm:$0xff]
  %v1540 = vld [vmem:[%s1 + $0x2ea8] sm:$0xff]
  %v1541 = vld [vmem:[%s1 + $0x2eb0] sm:$0xff]
  %v1542 = vld [vmem:[%s1 + $0x2eb8] sm:$0xff]
  %v1543 = vld [vmem:[%s1 + $0x2ec0] sm:$0xff]
  %v1544 = vld [vmem:[%s1 + $0x2ec8] sm:$0xff]
  %v1545 = vld [vmem:[%s1 + $0x2ed0] sm:$0xff]
  %v1546 = vld [vmem:[%s1 + $0x2ed8] sm:$0xff]
  %v1547 = vld [vmem:[%s1 + $0x2ee0] sm:$0xff]
  %v1548 = vld [vmem:[%s1 + $0x2ee8] sm:$0xff]
  %v1549 = vld [vmem:[%s1 + $0x2ef0] sm:$0xff]
  %v1550 = vld [vmem:[%s1 + $0x2ef8] sm:$0xff]
  %v1551 = vld [vmem:[%s1 + $0x2f00] sm:$0xff]
  %v1552 = vld [vmem:[%s1 + $0x2f08] sm:$0xff]
  %v1553 = vld [vmem:[%s1 + $0x2f10] sm:$0xff]
  %v1554 = vld [vmem:[%s1 + $0x2f18] sm:$0xff]
  %v1555 = vld [vmem:[%s1 + $0x2f20] sm:$0xff]
  %v1556 = vld [vmem:[%s1 + $0x2f28] sm:$0xff]
  %v1557 = vld [vmem:[%s1 + $0x2f30] sm:$0xff]
  %v1558 = vld [vmem:[%s1 + $0x2f38] sm:$0xff]
  %v1559 = vld [vmem:[%s1 + $0x2f40] sm:$0xff]
  %v1560 = vld [vmem:[%s1 + $0x2f48] sm:$0xff]
  %v1561 = vld [vmem:[%s1 + $0x2f50] sm:$0xff]
  %v1562 = vld [vmem:[%s1 + $0x2f58] sm:$0xff]
  %v1563 = vld [vmem:[%s1 + $0x2f60] sm:$0xff]
  %v1564 = vld [vmem:[%s1 + $0x2f68] sm:$0xff]
  %v1565 = vld [vmem:[%s1 + $0x2f70] sm:$0xff]
  %v1566 = vld [vmem:[%s1 + $0x2f78] sm:$0xff]
  %v1567 = vld [vmem:[%s1 + $0x2f80] sm:$0xff]
  %v1568 = vld [vmem:[%s1 + $0x2f88] sm:$0xff]
  %v1569 = vld [vmem:[%s1 + $0x2f90] sm:$0xff]
  %v1570 = vld [vmem:[%s1 + $0x2f98] sm:$0xff]
  %v1571 = vld [vmem:[%s1 + $0x2fa0] sm:$0xff]
  %v1572 = vld [vmem:[%s1 + $0x2fa8] sm:$0xff]
  %v1573 = vld [vmem:[%s1 + $0x2fb0] sm:$0xff]
  %v1574 = vld [vmem:[%s1 + $0x2fb8] sm:$0xff]
  %v1575 = vld [vmem:[%s1 + $0x2fc0] sm:$0xff]
  %v1576 = vld [vmem:[%s1 + $0x2fc8] sm:$0xff]
  %v1577 = vld [vmem:[%s1 + $0x2fd0] sm:$0xff]
  %v1578 = vld [vmem:[%s1 + $0x2fd8] sm:$0xff]
  %v1579 = vld [vmem:[%s1 + $0x2fe0] sm:$0xff]
  %v1580 = vld [vmem:[%s1 + $0x2fe8] sm:$0xff]
  %v1581 = vld [vmem:[%s1 + $0x2ff0] sm:$0xff]
  %v1582 = vld [vmem:[%s1 + $0x2ff8] sm:$0xff]
  %v1583 = vld [vmem:[%s1 + $0x3000] sm:$0xff]
  %v1584 = vld [vmem:[%s1 + $0x3008] sm:$0xff]
  %v1585 = vld [vmem:[%s1 + $0x3010] sm:$0xff]
  %v1586 = vld [vmem:[%s1 + $0x3018] sm:$0xff]
  %v1587 = vld [vmem:[%s1 + $0x3020] sm:$0xff]
  %v1588 = vld [vmem:[%s1 + $0x3028] sm:$0xff]
  %v1589 = vld [vmem:[%s1 + $0x3030] sm:$0xff]
  %v1590 = vld [vmem:[%s1 + $0x3038] sm:$0xff]
  %v1591 = vld [vmem:[%s1 + $0x3040] sm:$0xff]
  %v1592 = vld [vmem:[%s1 + $0x3048] sm:$0xff]
  %v1593 = vld [vmem:[%s1 + $0x3050] sm:$0xff]
  %v1594 = vld [vmem:[%s1 + $0x3058] sm:$0xff]
  %v1595 = vld [vmem:[%s1 + $0x3060] sm:$0xff]
  %v1596 = vld [vmem:[%s1 + $0x3068] sm:$0xff]
  %v1597 = vld [vmem:[%s1 + $0x3070] sm:$0xff]
  %v1598 = vld [vmem:[%s1 + $0x3078] sm:$0xff]
  %v1599 = vld [vmem:[%s1 + $0x3080] sm:$0xff]
  %v1600 = vld [vmem:[%s1 + $0x3088] sm:$0xff]
  %v1601 = vld [vmem:[%s1 + $0x3090] sm:$0xff]
  %v1602 = vld [vmem:[%s1 + $0x3098] sm:$0xff]
  %v1603 = vld [vmem:[%s1 + $0x30a0] sm:$0xff]
  %v1604 = vld [vmem:[%s1 + $0x30a8] sm:$0xff]
  %v1605 = vld [vmem:[%s1 + $0x30b0] sm:$0xff]
  %v1606 = vld [vmem:[%s1 + $0x30b8] sm:$0xff]
  %v1607 = vld [vmem:[%s1 + $0x30c0] sm:$0xff]
  %v1608 = vld [vmem:[%s1 + $0x30c8] sm:$0xff]
  %v1609 = vld [vmem:[%s1 + $0x30d0] sm:$0xff]
  %v1610 = vld [vmem:[%s1 + $0x30d8] sm:$0xff]
  %v1611 = vld [vmem:[%s1 + $0x30e0] sm:$0xff]
  %v1612 = vld [vmem:[%s1 + $0x30e8] sm:$0xff]
  %v1613 = vld [vmem:[%s1 + $0x30f0] sm:$0xff]
  %v1614 = vld [vmem:[%s1 + $0x30f8] sm:$0xff]
  %v1615 = vld [vmem:[%s2] sm:$0xff]
  %v1617 = vperm.slane %v1615, 0
  %v1618 = vperm.slane %v1615, 1
  %v1619 = vperm.slane %v1615, 2
  %v1620 = vperm.slane %v1615, 3
  %v1621 = vperm.slane %v1615, 4
  %v1622 = vperm.slane %v1615, 5
  %v1623 = vperm.slane %v1615, 6
  %v1624 = vperm.slane %v1615, 7
  %v1659 = vunpack.c.l.b16 %v21
  %v1660 = vunpack.c.h.b16 %v21
  %v1661 = vunpack.c.l.b16 %v22
  %v1662 = vunpack.c.h.b16 %v22
  %v1663 = vunpack.c.l.b16 %v23
  %v1664 = vunpack.c.h.b16 %v23
  %v1665 = vunpack.c.l.b16 %v24
  %v1666 = vunpack.c.h.b16 %v24
  %v1667 = vunpack.c.l.b16 %v25
  %v1668 = vunpack.c.h.b16 %v25
  %v1669 = vunpack.c.l.b16 %v26
  %v1670 = vunpack.c.h.b16 %v26
  %v1671 = vunpack.c.l.b16 %v27
  %v1672 = vunpack.c.h.b16 %v27
  %v1673 = vunpack.c.l.b16 %v28
  %v1674 = vunpack.c.h.b16 %v28
  %v1675 = vunpack.c.l.b16 %v29
  %v1676 = vunpack.c.h.b16 %v29
  %v1677 = vunpack.c.l.b16 %v30
  %v1678 = vunpack.c.h.b16 %v30
  %v1679 = vunpack.c.l.b16 %v31
  %v1680 = vunpack.c.h.b16 %v31
  %v1681 = vunpack.c.l.b16 %v32
  %v1682 = vunpack.c.h.b16 %v32
  %v1683 = vunpack.c.l.b16 %v33
  %v1684 = vunpack.c.l.b16 %v34
  %v1685 = vunpack.c.h.b16 %v34
  %v1686 = vunpack.c.l.b16 %v35
  %v1687 = vunpack.c.h.b16 %v35
  %v1688 = vunpack.c.l.b16 %v36
  %v1689 = vunpack.c.h.b16 %v36
  %v1690 = vunpack.c.l.b16 %v37
  %v1691 = vunpack.c.h.b16 %v37
  %v1692 = vunpack.c.l.b16 %v38
  %v1693 = vunpack.c.h.b16 %v38
  %v1694 = vunpack.c.l.b16 %v39
  %v1695 = vunpack.c.h.b16 %v39
  %v1696 = vunpack.c.l.b16 %v40
  %v1697 = vunpack.c.h.b16 %v40
  %v1698 = vunpack.c.l.b16 %v41
  %v1699 = vunpack.c.h.b16 %v41
  %v1700 = vunpack.c.l.b16 %v42
  %v1701 = vunpack.c.h.b16 %v42
  %v1702 = vunpack.c.l.b16 %v43
  %v1703 = vunpack.c.h.b16 %v43
  %v1704 = vunpack.c.l.b16 %v44
  %v1705 = vunpack.c.h.b16 %v44
  %v1706 = vunpack.c.l.b16 %v45
  %v1707 = vunpack.c.h.b16 %v45
  %v1708 = vunpack.c.l.b16 %v46
  %v1709 = vpack.c.b16 %v1684, %v1659
  %v1710 = vpack.c.b16 %v1685, %v1660
  %v1711 = vpack.c.b16 %v1686, %v1661
  %v1712 = vpack.c.b16 %v1687, %v1662
  %v1713 = vpack.c.b16 %v1688, %v1663
  %v1714 = vpack.c.b16 %v1689, %v1664
  %v1715 = vpack.c.b16 %v1690, %v1665
  %v1716 = vpack.c.b16 %v1691, %v1666
  %v1717 = vpack.c.b16 %v1692, %v1667
  %v1718 = vpack.c.b16 %v1693, %v1668
  %v1719 = vpack.c.b16 %v1694, %v1669
  %v1720 = vpack.c.b16 %v1695, %v1670
  %v1721 = vpack.c.b16 %v1696, %v1671
  %v1722 = vpack.c.b16 %v1697, %v1672
  %v1723 = vpack.c.b16 %v1698, %v1673
  %v1724 = vpack.c.b16 %v1699, %v1674
  %v1725 = vpack.c.b16 %v1700, %v1675
  %v1726 = vpack.c.b16 %v1701, %v1676
  %v1727 = vpack.c.b16 %v1702, %v1677
  %v1728 = vpack.c.b16 %v1703, %v1678
  %v1729 = vpack.c.b16 %v1704, %v1679
  %v1730 = vpack.c.b16 %v1705, %v1680
  %v1731 = vpack.c.b16 %v1706, %v1681
  %v1732 = vpack.c.b16 %v1707, %v1682
  %v1733 = vpack.c.b16 %v1708, %v1683
  %v3326 = vunpack.c.l.b16 %v47
  %v3327 = vunpack.c.h.b16 %v47
  %v3328 = vunpack.c.l.b16 %v48
  %v3329 = vunpack.c.h.b16 %v48
  %v3330 = vunpack.c.l.b16 %v49
  %v3331 = vunpack.c.h.b16 %v49
  %v3332 = vunpack.c.l.b16 %v50
  %v3333 = vunpack.c.h.b16 %v50
  %v3334 = vunpack.c.l.b16 %v51
  %v3335 = vunpack.c.h.b16 %v51
  %v3336 = vunpack.c.l.b16 %v52
  %v3337 = vunpack.c.h.b16 %v52
  %v3338 = vunpack.c.l.b16 %v53
  %v3339 = vunpack.c.h.b16 %v53
  %v3340 = vunpack.c.l.b16 %v54
  %v3341 = vunpack.c.h.b16 %v54
  %v3342 = vunpack.c.l.b16 %v55
  %v3343 = vunpack.c.h.b16 %v55
  %v3344 = vunpack.c.l.b16 %v56
  %v3345 = vunpack.c.h.b16 %v56
  %v3346 = vunpack.c.l.b16 %v57
  %v3347 = vunpack.c.h.b16 %v57
  %v3348 = vunpack.c.l.b16 %v58
  %v3349 = vunpack.c.h.b16 %v58
  %v3350 = vunpack.c.l.b16 %v59
  %v3351 = vunpack.c.h.b16 %v59
  %v3352 = vunpack.c.l.b16 %v60
  %v3353 = vunpack.c.h.b16 %v60
  %v3354 = vunpack.c.l.b16 %v61
  %v3355 = vunpack.c.h.b16 %v61
  %v3356 = vunpack.c.l.b16 %v62
  %v3357 = vunpack.c.h.b16 %v62
  %v3358 = vunpack.c.l.b16 %v63
  %v3359 = vunpack.c.h.b16 %v63
  %v3360 = vunpack.c.l.b16 %v64
  %v3361 = vunpack.c.h.b16 %v64
  %v3362 = vunpack.c.l.b16 %v65
  %v3363 = vunpack.c.h.b16 %v65
  %v3364 = vunpack.c.l.b16 %v66
  %v3365 = vunpack.c.h.b16 %v66
  %v3366 = vunpack.c.l.b16 %v67
  %v3367 = vunpack.c.h.b16 %v67
  %v3368 = vunpack.c.l.b16 %v68
  %v3369 = vunpack.c.h.b16 %v68
  %v3370 = vunpack.c.l.b16 %v69
  %v3371 = vunpack.c.h.b16 %v69
  %v3372 = vunpack.c.l.b16 %v70
  %v3373 = vunpack.c.h.b16 %v70
  %v3374 = vunpack.c.l.b16 %v71
  %v3375 = vunpack.c.h.b16 %v71
  %v3376 = vunpack.c.l.b16 %v72
  %v3377 = vunpack.c.h.b16 %v72
  %v3378 = vunpack.c.l.b16 %v73
  %v3379 = vunpack.c.h.b16 %v73
  %v3380 = vunpack.c.l.b16 %v74
  %v3381 = vunpack.c.h.b16 %v74
  %v3382 = vunpack.c.l.b16 %v75
  %v3383 = vunpack.c.h.b16 %v75
  %v3384 = vunpack.c.l.b16 %v76
  %v3385 = vunpack.c.h.b16 %v76
  %v3386 = vunpack.c.l.b16 %v77
  %v3387 = vunpack.c.h.b16 %v77
  %v3388 = vunpack.c.l.b16 %v78
  %v3389 = vunpack.c.h.b16 %v78
  %v3390 = vunpack.c.l.b16 %v79
  %v3391 = vunpack.c.h.b16 %v79
  %v3392 = vunpack.c.l.b16 %v80
  %v3393 = vunpack.c.h.b16 %v80
  %v3394 = vunpack.c.l.b16 %v81
  %v3395 = vunpack.c.h.b16 %v81
  %v3396 = vunpack.c.l.b16 %v82
  %v3397 = vunpack.c.h.b16 %v82
  %v3398 = vunpack.c.l.b16 %v83
  %v3399 = vunpack.c.h.b16 %v83
  %v3400 = vunpack.c.l.b16 %v84
  %v3401 = vunpack.c.h.b16 %v84
  %v3402 = vunpack.c.l.b16 %v85
  %v3403 = vunpack.c.h.b16 %v85
  %v3404 = vunpack.c.l.b16 %v86
  %v3405 = vunpack.c.h.b16 %v86
  %v3406 = vunpack.c.l.b16 %v87
  %v3407 = vunpack.c.h.b16 %v87
  %v3408 = vunpack.c.l.b16 %v88
  %v3409 = vunpack.c.h.b16 %v88
  %v3410 = vunpack.c.l.b16 %v89
  %v3411 = vunpack.c.h.b16 %v89
  %v3412 = vunpack.c.l.b16 %v90
  %v3413 = vunpack.c.h.b16 %v90
  %v3414 = vunpack.c.l.b16 %v91
  %v3415 = vunpack.c.h.b16 %v91
  %v3416 = vunpack.c.l.b16 %v92
  %v3417 = vunpack.c.h.b16 %v92
  %v3418 = vunpack.c.l.b16 %v93
  %v3419 = vunpack.c.h.b16 %v93
  %v3420 = vunpack.c.l.b16 %v94
  %v3421 = vunpack.c.h.b16 %v94
  %v3422 = vunpack.c.l.b16 %v95
  %v3423 = vunpack.c.h.b16 %v95
  %v3424 = vunpack.c.l.b16 %v96
  %v3425 = vunpack.c.h.b16 %v96
  %v3426 = vunpack.c.l.b16 %v97
  %v3427 = vunpack.c.h.b16 %v97
  %v3428 = vunpack.c.l.b16 %v98
  %v3429 = vunpack.c.h.b16 %v98
  %v3430 = vunpack.c.l.b16 %v99
  %v3431 = vunpack.c.h.b16 %v99
  %v3432 = vunpack.c.l.b16 %v100
  %v3433 = vunpack.c.h.b16 %v100
  %v3434 = vunpack.c.l.b16 %v101
  %v3435 = vunpack.c.h.b16 %v101
  %v3436 = vunpack.c.l.b16 %v102
  %v3437 = vunpack.c.h.b16 %v102
  %v3438 = vunpack.c.l.b16 %v103
  %v3439 = vunpack.c.h.b16 %v103
  %v3440 = vunpack.c.l.b16 %v104
  %v3441 = vunpack.c.h.b16 %v104
  %v3442 = vunpack.c.l.b16 %v105
  %v3443 = vunpack.c.h.b16 %v105
  %v3444 = vunpack.c.l.b16 %v106
  %v3445 = vunpack.c.h.b16 %v106
  %v3446 = vunpack.c.l.b16 %v107
  %v3447 = vunpack.c.h.b16 %v107
  %v3448 = vunpack.c.l.b16 %v108
  %v3449 = vunpack.c.h.b16 %v108
  %v3450 = vunpack.c.l.b16 %v109
  %v3451 = vunpack.c.h.b16 %v109
  %v3452 = vunpack.c.l.b16 %v110
  %v3453 = vunpack.c.h.b16 %v110
  %v3454 = vunpack.c.l.b16 %v111
  %v3455 = vunpack.c.h.b16 %v111
  %v3456 = vunpack.c.l.b16 %v112
  %v3457 = vunpack.c.h.b16 %v112
  %v3458 = vunpack.c.l.b16 %v113
  %v3459 = vunpack.c.h.b16 %v113
  %v3460 = vunpack.c.l.b16 %v114
  %v3461 = vunpack.c.h.b16 %v114
  %v3462 = vunpack.c.l.b16 %v115
  %v3463 = vunpack.c.h.b16 %v115
  %v3464 = vunpack.c.l.b16 %v116
  %v3465 = vunpack.c.h.b16 %v116
  %v3466 = vunpack.c.l.b16 %v117
  %v3467 = vunpack.c.h.b16 %v117
  %v3468 = vunpack.c.l.b16 %v118
  %v3469 = vunpack.c.h.b16 %v118
  %v3470 = vunpack.c.l.b16 %v119
  %v3471 = vunpack.c.h.b16 %v119
  %v3472 = vunpack.c.l.b16 %v120
  %v3473 = vunpack.c.h.b16 %v120
  %v3474 = vunpack.c.l.b16 %v121
  %v3475 = vunpack.c.h.b16 %v121
  %v3476 = vunpack.c.l.b16 %v122
  %v3477 = vunpack.c.h.b16 %v122
  %v3478 = vunpack.c.l.b16 %v123
  %v3479 = vunpack.c.h.b16 %v123
  %v3480 = vunpack.c.l.b16 %v124
  %v3481 = vunpack.c.h.b16 %v124
  %v3482 = vunpack.c.l.b16 %v125
  %v3483 = vunpack.c.h.b16 %v125
  %v3484 = vunpack.c.l.b16 %v126
  %v3485 = vunpack.c.h.b16 %v126
  %v3486 = vunpack.c.l.b16 %v127
  %v3487 = vunpack.c.h.b16 %v127
  %v3488 = vunpack.c.l.b16 %v128
  %v3489 = vunpack.c.h.b16 %v128
  %v3490 = vunpack.c.l.b16 %v129
  %v3491 = vunpack.c.h.b16 %v129
  %v3492 = vunpack.c.l.b16 %v130
  %v3493 = vunpack.c.h.b16 %v130
  %v3494 = vunpack.c.l.b16 %v131
  %v3495 = vunpack.c.h.b16 %v131
  %v3496 = vunpack.c.l.b16 %v132
  %v3497 = vunpack.c.h.b16 %v132
  %v3498 = vunpack.c.l.b16 %v133
  %v3499 = vunpack.c.h.b16 %v133
  %v3500 = vunpack.c.l.b16 %v134
  %v3501 = vunpack.c.h.b16 %v134
  %v3502 = vunpack.c.l.b16 %v135
  %v3503 = vunpack.c.h.b16 %v135
  %v3504 = vunpack.c.l.b16 %v136
  %v3505 = vunpack.c.h.b16 %v136
  %v3506 = vunpack.c.l.b16 %v137
  %v3507 = vunpack.c.h.b16 %v137
  %v3508 = vunpack.c.l.b16 %v138
  %v3509 = vunpack.c.h.b16 %v138
  %v3510 = vunpack.c.l.b16 %v139
  %v3511 = vunpack.c.h.b16 %v139
  %v3512 = vunpack.c.l.b16 %v140
  %v3513 = vunpack.c.h.b16 %v140
  %v3514 = vunpack.c.l.b16 %v141
  %v3515 = vunpack.c.h.b16 %v141
  %v3516 = vunpack.c.l.b16 %v142
  %v3517 = vunpack.c.h.b16 %v142
  %v3518 = vunpack.c.l.b16 %v143
  %v3519 = vunpack.c.h.b16 %v143
  %v3520 = vunpack.c.l.b16 %v144
  %v3521 = vunpack.c.h.b16 %v144
  %v3522 = vunpack.c.l.b16 %v145
  %v3523 = vunpack.c.h.b16 %v145
  %v3524 = vunpack.c.l.b16 %v146
  %v3525 = vunpack.c.h.b16 %v146
  %v3526 = vunpack.c.l.b16 %v147
  %v3527 = vunpack.c.h.b16 %v147
  %v3528 = vunpack.c.l.b16 %v148
  %v3529 = vunpack.c.h.b16 %v148
  %v3530 = vunpack.c.l.b16 %v149
  %v3531 = vunpack.c.h.b16 %v149
  %v3532 = vunpack.c.l.b16 %v150
  %v3533 = vunpack.c.h.b16 %v150
  %v3534 = vunpack.c.l.b16 %v151
  %v3535 = vunpack.c.h.b16 %v151
  %v3536 = vunpack.c.l.b16 %v152
  %v3537 = vunpack.c.h.b16 %v152
  %v3538 = vunpack.c.l.b16 %v153
  %v3539 = vunpack.c.h.b16 %v153
  %v3540 = vunpack.c.l.b16 %v154
  %v3541 = vunpack.c.h.b16 %v154
  %v3542 = vunpack.c.l.b16 %v155
  %v3543 = vunpack.c.h.b16 %v155
  %v3544 = vunpack.c.l.b16 %v156
  %v3545 = vunpack.c.h.b16 %v156
  %v3546 = vunpack.c.l.b16 %v157
  %v3547 = vunpack.c.h.b16 %v157
  %v3548 = vunpack.c.l.b16 %v158
  %v3549 = vunpack.c.h.b16 %v158
  %v3550 = vunpack.c.l.b16 %v159
  %v3551 = vunpack.c.h.b16 %v159
  %v3552 = vunpack.c.l.b16 %v160
  %v3553 = vunpack.c.h.b16 %v160
  %v3554 = vunpack.c.l.b16 %v161
  %v3555 = vunpack.c.h.b16 %v161
  %v3556 = vunpack.c.l.b16 %v162
  %v3557 = vunpack.c.h.b16 %v162
  %v3558 = vunpack.c.l.b16 %v163
  %v3559 = vunpack.c.h.b16 %v163
  %v3560 = vunpack.c.l.b16 %v164
  %v3561 = vunpack.c.h.b16 %v164
  %v3562 = vunpack.c.l.b16 %v165
  %v3563 = vunpack.c.h.b16 %v165
  %v3564 = vunpack.c.l.b16 %v166
  %v3565 = vunpack.c.h.b16 %v166
  %v3566 = vunpack.c.l.b16 %v167
  %v3567 = vunpack.c.h.b16 %v167
  %v3568 = vunpack.c.l.b16 %v168
  %v3569 = vunpack.c.h.b16 %v168
  %v3570 = vunpack.c.l.b16 %v169
  %v3571 = vunpack.c.h.b16 %v169
  %v3572 = vunpack.c.l.b16 %v170
  %v3573 = vunpack.c.h.b16 %v170
  %v3574 = vunpack.c.l.b16 %v171
  %v3575 = vunpack.c.h.b16 %v171
  %v3576 = vunpack.c.l.b16 %v172
  %v3577 = vunpack.c.h.b16 %v172
  %v3578 = vunpack.c.l.b16 %v173
  %v3579 = vunpack.c.h.b16 %v173
  %v3580 = vunpack.c.l.b16 %v174
  %v3581 = vunpack.c.h.b16 %v174
  %v3582 = vunpack.c.l.b16 %v175
  %v3583 = vunpack.c.h.b16 %v175
  %v3584 = vunpack.c.l.b16 %v176
  %v3585 = vunpack.c.h.b16 %v176
  %v3586 = vunpack.c.l.b16 %v177
  %v3587 = vunpack.c.h.b16 %v177
  %v3588 = vunpack.c.l.b16 %v178
  %v3589 = vunpack.c.h.b16 %v178
  %v3590 = vunpack.c.l.b16 %v179
  %v3591 = vunpack.c.h.b16 %v179
  %v3592 = vunpack.c.l.b16 %v180
  %v3593 = vunpack.c.h.b16 %v180
  %v3594 = vunpack.c.l.b16 %v181
  %v3595 = vunpack.c.h.b16 %v181
  %v3596 = vunpack.c.l.b16 %v182
  %v3597 = vunpack.c.h.b16 %v182
  %v3598 = vunpack.c.l.b16 %v183
  %v3599 = vunpack.c.h.b16 %v183
  %v3600 = vunpack.c.l.b16 %v184
  %v3601 = vunpack.c.h.b16 %v184
  %v3602 = vunpack.c.l.b16 %v185
  %v3603 = vunpack.c.h.b16 %v185
  %v3604 = vunpack.c.l.b16 %v186
  %v3605 = vunpack.c.h.b16 %v186
  %v3606 = vunpack.c.l.b16 %v187
  %v3607 = vunpack.c.h.b16 %v187
  %v3608 = vunpack.c.l.b16 %v188
  %v3609 = vunpack.c.h.b16 %v188
  %v3610 = vunpack.c.l.b16 %v189
  %v3611 = vunpack.c.h.b16 %v189
  %v3612 = vunpack.c.l.b16 %v190
  %v3613 = vunpack.c.h.b16 %v190
  %v3614 = vunpack.c.l.b16 %v191
  %v3615 = vunpack.c.h.b16 %v191
  %v3616 = vunpack.c.l.b16 %v192
  %v3617 = vunpack.c.h.b16 %v192
  %v3618 = vunpack.c.l.b16 %v193
  %v3619 = vunpack.c.h.b16 %v193
  %v3620 = vunpack.c.l.b16 %v194
  %v3621 = vunpack.c.h.b16 %v194
  %v3622 = vunpack.c.l.b16 %v195
  %v3623 = vunpack.c.h.b16 %v195
  %v3624 = vunpack.c.l.b16 %v196
  %v3625 = vunpack.c.h.b16 %v196
  %v3626 = vunpack.c.l.b16 %v197
  %v3627 = vunpack.c.h.b16 %v197
  %v3628 = vunpack.c.l.b16 %v198
  %v3629 = vunpack.c.h.b16 %v198
  %v3630 = vunpack.c.l.b16 %v199
  %v3631 = vunpack.c.h.b16 %v199
  %v3632 = vunpack.c.l.b16 %v200
  %v3633 = vunpack.c.h.b16 %v200
  %v3634 = vunpack.c.l.b16 %v201
  %v3635 = vunpack.c.h.b16 %v201
  %v3636 = vunpack.c.l.b16 %v202
  %v3637 = vunpack.c.h.b16 %v202
  %v3638 = vunpack.c.l.b16 %v203
  %v3639 = vunpack.c.h.b16 %v203
  %v3640 = vunpack.c.l.b16 %v204
  %v3641 = vunpack.c.h.b16 %v204
  %v3642 = vunpack.c.l.b16 %v205
  %v3643 = vunpack.c.h.b16 %v205
  %v3644 = vunpack.c.l.b16 %v206
  %v3645 = vunpack.c.h.b16 %v206
  %v3646 = vunpack.c.l.b16 %v207
  %v3647 = vunpack.c.h.b16 %v207
  %v3648 = vunpack.c.l.b16 %v208
  %v3649 = vunpack.c.h.b16 %v208
  %v3650 = vunpack.c.l.b16 %v209
  %v3651 = vunpack.c.h.b16 %v209
  %v3652 = vunpack.c.l.b16 %v210
  %v3653 = vunpack.c.h.b16 %v210
  %v3654 = vunpack.c.l.b16 %v211
  %v3655 = vunpack.c.h.b16 %v211
  %v3656 = vunpack.c.l.b16 %v212
  %v3657 = vunpack.c.h.b16 %v212
  %v3658 = vunpack.c.l.b16 %v213
  %v3659 = vunpack.c.h.b16 %v213
  %v3660 = vunpack.c.l.b16 %v214
  %v3661 = vunpack.c.h.b16 %v214
  %v3662 = vunpack.c.l.b16 %v215
  %v3663 = vunpack.c.h.b16 %v215
  %v3664 = vunpack.c.l.b16 %v216
  %v3665 = vunpack.c.h.b16 %v216
  %v3666 = vunpack.c.l.b16 %v217
  %v3667 = vunpack.c.h.b16 %v217
  %v3668 = vunpack.c.l.b16 %v218
  %v3669 = vunpack.c.h.b16 %v218
  %v3670 = vunpack.c.l.b16 %v219
  %v3671 = vunpack.c.h.b16 %v219
  %v3672 = vunpack.c.l.b16 %v220
  %v3673 = vunpack.c.h.b16 %v220
  %v3674 = vunpack.c.l.b16 %v221
  %v3675 = vunpack.c.h.b16 %v221
  %v3676 = vunpack.c.l.b16 %v222
  %v3677 = vunpack.c.h.b16 %v222
  %v3678 = vunpack.c.l.b16 %v223
  %v3679 = vunpack.c.h.b16 %v223
  %v3680 = vunpack.c.l.b16 %v224
  %v3681 = vunpack.c.h.b16 %v224
  %v3682 = vunpack.c.l.b16 %v225
  %v3683 = vunpack.c.h.b16 %v225
  %v3684 = vunpack.c.l.b16 %v226
  %v3685 = vunpack.c.h.b16 %v226
  %v3686 = vunpack.c.l.b16 %v227
  %v3687 = vunpack.c.h.b16 %v227
  %v3688 = vunpack.c.l.b16 %v228
  %v3689 = vunpack.c.h.b16 %v228
  %v3690 = vunpack.c.l.b16 %v229
  %v3691 = vunpack.c.h.b16 %v229
  %v3692 = vunpack.c.l.b16 %v230
  %v3693 = vunpack.c.h.b16 %v230
  %v3694 = vunpack.c.l.b16 %v231
  %v3695 = vunpack.c.h.b16 %v231
  %v3696 = vunpack.c.l.b16 %v232
  %v3697 = vunpack.c.h.b16 %v232
  %v3698 = vunpack.c.l.b16 %v233
  %v3699 = vunpack.c.h.b16 %v233
  %v3700 = vunpack.c.l.b16 %v234
  %v3701 = vunpack.c.h.b16 %v234
  %v3702 = vunpack.c.l.b16 %v235
  %v3703 = vunpack.c.h.b16 %v235
  %v3704 = vunpack.c.l.b16 %v236
  %v3705 = vunpack.c.h.b16 %v236
  %v3706 = vunpack.c.l.b16 %v237
  %v3707 = vunpack.c.h.b16 %v237
  %v3708 = vunpack.c.l.b16 %v238
  %v3709 = vunpack.c.h.b16 %v238
  %v3710 = vunpack.c.l.b16 %v239
  %v3711 = vunpack.c.h.b16 %v239
  %v3712 = vunpack.c.l.b16 %v240
  %v3713 = vunpack.c.h.b16 %v240
  %v3714 = vunpack.c.l.b16 %v241
  %v3715 = vunpack.c.h.b16 %v241
  %v3716 = vunpack.c.l.b16 %v242
  %v3717 = vunpack.c.h.b16 %v242
  %v3718 = vunpack.c.l.b16 %v243
  %v3719 = vunpack.c.h.b16 %v243
  %v3720 = vunpack.c.l.b16 %v244
  %v3721 = vunpack.c.h.b16 %v244
  %v3722 = vunpack.c.l.b16 %v245
  %v3723 = vunpack.c.h.b16 %v245
  %v3724 = vunpack.c.l.b16 %v246
  %v3725 = vunpack.c.h.b16 %v246
  %v3726 = vunpack.c.l.b16 %v247
  %v3727 = vunpack.c.h.b16 %v247
  %v3728 = vunpack.c.l.b16 %v248
  %v3729 = vunpack.c.h.b16 %v248
  %v3730 = vunpack.c.l.b16 %v249
  %v3731 = vunpack.c.h.b16 %v249
  %v3732 = vunpack.c.l.b16 %v250
  %v3733 = vunpack.c.h.b16 %v250
  %v3734 = vunpack.c.l.b16 %v251
  %v3735 = vunpack.c.h.b16 %v251
  %v3736 = vunpack.c.l.b16 %v252
  %v3737 = vunpack.c.h.b16 %v252
  %v3738 = vunpack.c.l.b16 %v253
  %v3739 = vunpack.c.h.b16 %v253
  %v3740 = vunpack.c.l.b16 %v254
  %v3741 = vunpack.c.h.b16 %v254
  %v3742 = vunpack.c.l.b16 %v255
  %v3743 = vunpack.c.h.b16 %v255
  %v3744 = vunpack.c.l.b16 %v256
  %v3745 = vunpack.c.h.b16 %v256
  %v3746 = vunpack.c.l.b16 %v257
  %v3747 = vunpack.c.h.b16 %v257
  %v3748 = vunpack.c.l.b16 %v258
  %v3749 = vunpack.c.h.b16 %v258
  %v3750 = vunpack.c.l.b16 %v259
  %v3751 = vunpack.c.h.b16 %v259
  %v3752 = vunpack.c.l.b16 %v260
  %v3753 = vunpack.c.h.b16 %v260
  %v3754 = vunpack.c.l.b16 %v261
  %v3755 = vunpack.c.h.b16 %v261
  %v3756 = vunpack.c.l.b16 %v262
  %v3757 = vunpack.c.h.b16 %v262
  %v3758 = vunpack.c.l.b16 %v263
  %v3759 = vunpack.c.h.b16 %v263
  %v3760 = vunpack.c.l.b16 %v264
  %v3761 = vunpack.c.h.b16 %v264
  %v3762 = vunpack.c.l.b16 %v265
  %v3763 = vunpack.c.h.b16 %v265
  %v3764 = vunpack.c.l.b16 %v266
  %v3765 = vunpack.c.h.b16 %v266
  %v3766 = vunpack.c.l.b16 %v267
  %v3767 = vunpack.c.h.b16 %v267
  %v3768 = vunpack.c.l.b16 %v268
  %v3769 = vunpack.c.h.b16 %v268
  %v3770 = vunpack.c.l.b16 %v269
  %v3771 = vunpack.c.h.b16 %v269
  %v3772 = vunpack.c.l.b16 %v270
  %v3773 = vunpack.c.h.b16 %v270
  %v3774 = vunpack.c.l.b16 %v271
  %v3775 = vunpack.c.h.b16 %v271
  %v3776 = vunpack.c.l.b16 %v272
  %v3777 = vunpack.c.h.b16 %v272
  %v3778 = vunpack.c.l.b16 %v273
  %v3779 = vunpack.c.h.b16 %v273
  %v3780 = vunpack.c.l.b16 %v274
  %v3781 = vunpack.c.h.b16 %v274
  %v3782 = vunpack.c.l.b16 %v275
  %v3783 = vunpack.c.h.b16 %v275
  %v3784 = vunpack.c.l.b16 %v276
  %v3785 = vunpack.c.h.b16 %v276
  %v3786 = vunpack.c.l.b16 %v277
  %v3787 = vunpack.c.h.b16 %v277
  %v3788 = vunpack.c.l.b16 %v278
  %v3789 = vunpack.c.h.b16 %v278
  %v3790 = vunpack.c.l.b16 %v279
  %v3791 = vunpack.c.h.b16 %v279
  %v3792 = vunpack.c.l.b16 %v280
  %v3793 = vunpack.c.h.b16 %v280
  %v3794 = vunpack.c.l.b16 %v281
  %v3795 = vunpack.c.h.b16 %v281
  %v3796 = vunpack.c.l.b16 %v282
  %v3797 = vunpack.c.h.b16 %v282
  %v3798 = vunpack.c.l.b16 %v283
  %v3799 = vunpack.c.h.b16 %v283
  %v3800 = vunpack.c.l.b16 %v284
  %v3801 = vunpack.c.h.b16 %v284
  %v3802 = vunpack.c.l.b16 %v285
  %v3803 = vunpack.c.h.b16 %v285
  %v3804 = vunpack.c.l.b16 %v286
  %v3805 = vunpack.c.h.b16 %v286
  %v3806 = vunpack.c.l.b16 %v287
  %v3807 = vunpack.c.h.b16 %v287
  %v3808 = vunpack.c.l.b16 %v288
  %v3809 = vunpack.c.h.b16 %v288
  %v3810 = vunpack.c.l.b16 %v289
  %v3811 = vunpack.c.h.b16 %v289
  %v3812 = vunpack.c.l.b16 %v290
  %v3813 = vunpack.c.h.b16 %v290
  %v3814 = vunpack.c.l.b16 %v291
  %v3815 = vunpack.c.h.b16 %v291
  %v3816 = vunpack.c.l.b16 %v292
  %v3817 = vunpack.c.h.b16 %v292
  %v3818 = vunpack.c.l.b16 %v293
  %v3819 = vunpack.c.h.b16 %v293
  %v3820 = vunpack.c.l.b16 %v294
  %v3821 = vunpack.c.h.b16 %v294
  %v3822 = vunpack.c.l.b16 %v295
  %v3823 = vunpack.c.h.b16 %v295
  %v3824 = vunpack.c.l.b16 %v296
  %v3825 = vunpack.c.h.b16 %v296
  %v3826 = vunpack.c.l.b16 %v297
  %v3827 = vunpack.c.h.b16 %v297
  %v3828 = vunpack.c.l.b16 %v298
  %v3829 = vunpack.c.h.b16 %v298
  %v3830 = vunpack.c.l.b16 %v299
  %v3831 = vunpack.c.h.b16 %v299
  %v3832 = vunpack.c.l.b16 %v300
  %v3833 = vunpack.c.h.b16 %v300
  %v3834 = vunpack.c.l.b16 %v301
  %v3835 = vunpack.c.h.b16 %v301
  %v3836 = vunpack.c.l.b16 %v302
  %v3837 = vunpack.c.h.b16 %v302
  %v3838 = vunpack.c.l.b16 %v303
  %v3839 = vunpack.c.h.b16 %v303
  %v3840 = vunpack.c.l.b16 %v304
  %v3841 = vunpack.c.h.b16 %v304
  %v3842 = vunpack.c.l.b16 %v305
  %v3843 = vunpack.c.h.b16 %v305
  %v3844 = vunpack.c.l.b16 %v306
  %v3845 = vunpack.c.h.b16 %v306
  %v3846 = vunpack.c.l.b16 %v307
  %v3847 = vunpack.c.h.b16 %v307
  %v3848 = vunpack.c.l.b16 %v308
  %v3849 = vunpack.c.h.b16 %v308
  %v3850 = vunpack.c.l.b16 %v309
  %v3851 = vunpack.c.h.b16 %v309
  %v3852 = vunpack.c.l.b16 %v310
  %v3853 = vunpack.c.h.b16 %v310
  %v3854 = vunpack.c.l.b16 %v311
  %v3855 = vunpack.c.h.b16 %v311
  %v3856 = vunpack.c.l.b16 %v312
  %v3857 = vunpack.c.h.b16 %v312
  %v3858 = vunpack.c.l.b16 %v313
  %v3859 = vunpack.c.h.b16 %v313
  %v3860 = vunpack.c.l.b16 %v314
  %v3861 = vunpack.c.h.b16 %v314
  %v3862 = vunpack.c.l.b16 %v315
  %v3863 = vunpack.c.h.b16 %v315
  %v3864 = vunpack.c.l.b16 %v316
  %v3865 = vunpack.c.h.b16 %v316
  %v3866 = vunpack.c.l.b16 %v317
  %v3867 = vunpack.c.h.b16 %v317
  %v3868 = vunpack.c.l.b16 %v318
  %v3869 = vunpack.c.h.b16 %v318
  %v3870 = vunpack.c.l.b16 %v319
  %v3871 = vunpack.c.h.b16 %v319
  %v3872 = vunpack.c.l.b16 %v320
  %v3873 = vunpack.c.h.b16 %v320
  %v3874 = vunpack.c.l.b16 %v321
  %v3875 = vunpack.c.h.b16 %v321
  %v3876 = vunpack.c.l.b16 %v322
  %v3877 = vunpack.c.h.b16 %v322
  %v3878 = vunpack.c.l.b16 %v323
  %v3879 = vunpack.c.h.b16 %v323
  %v3880 = vunpack.c.l.b16 %v324
  %v3881 = vunpack.c.h.b16 %v324
  %v3882 = vunpack.c.l.b16 %v325
  %v3883 = vunpack.c.h.b16 %v325
  %v3884 = vunpack.c.l.b16 %v326
  %v3885 = vunpack.c.h.b16 %v326
  %v3886 = vunpack.c.l.b16 %v327
  %v3887 = vunpack.c.h.b16 %v327
  %v3888 = vunpack.c.l.b16 %v328
  %v3889 = vunpack.c.h.b16 %v328
  %v3890 = vunpack.c.l.b16 %v329
  %v3891 = vunpack.c.h.b16 %v329
  %v3892 = vunpack.c.l.b16 %v330
  %v3893 = vunpack.c.h.b16 %v330
  %v3894 = vunpack.c.l.b16 %v331
  %v3895 = vunpack.c.h.b16 %v331
  %v3896 = vunpack.c.l.b16 %v332
  %v3897 = vunpack.c.h.b16 %v332
  %v3898 = vunpack.c.l.b16 %v333
  %v3899 = vunpack.c.h.b16 %v333
  %v3900 = vunpack.c.l.b16 %v334
  %v3901 = vunpack.c.h.b16 %v334
  %v3902 = vunpack.c.l.b16 %v335
  %v3903 = vunpack.c.h.b16 %v335
  %v3904 = vunpack.c.l.b16 %v336
  %v3905 = vunpack.c.h.b16 %v336
  %v3906 = vunpack.c.l.b16 %v337
  %v3907 = vunpack.c.h.b16 %v337
  %v3908 = vunpack.c.l.b16 %v338
  %v3909 = vunpack.c.h.b16 %v338
  %v3910 = vunpack.c.l.b16 %v339
  %v3911 = vunpack.c.h.b16 %v339
  %v3912 = vunpack.c.l.b16 %v340
  %v3913 = vunpack.c.h.b16 %v340
  %v3914 = vunpack.c.l.b16 %v341
  %v3915 = vunpack.c.h.b16 %v341
  %v3916 = vunpack.c.l.b16 %v342
  %v3917 = vunpack.c.h.b16 %v342
  %v3918 = vunpack.c.l.b16 %v343
  %v3919 = vunpack.c.h.b16 %v343
  %v3920 = vunpack.c.l.b16 %v344
  %v3921 = vunpack.c.h.b16 %v344
  %v3922 = vunpack.c.l.b16 %v345
  %v3923 = vunpack.c.h.b16 %v345
  %v3924 = vunpack.c.l.b16 %v346
  %v3925 = vunpack.c.h.b16 %v346
  %v3926 = vunpack.c.l.b16 %v347
  %v3927 = vunpack.c.h.b16 %v347
  %v3928 = vunpack.c.l.b16 %v348
  %v3929 = vunpack.c.h.b16 %v348
  %v3930 = vunpack.c.l.b16 %v349
  %v3931 = vunpack.c.h.b16 %v349
  %v3932 = vunpack.c.l.b16 %v350
  %v3933 = vunpack.c.h.b16 %v350
  %v3934 = vunpack.c.l.b16 %v351
  %v3935 = vunpack.c.h.b16 %v351
  %v3936 = vunpack.c.l.b16 %v352
  %v3937 = vunpack.c.h.b16 %v352
  %v3938 = vunpack.c.l.b16 %v353
  %v3939 = vunpack.c.h.b16 %v353
  %v3940 = vunpack.c.l.b16 %v354
  %v3941 = vunpack.c.h.b16 %v354
  %v3942 = vunpack.c.l.b16 %v355
  %v3943 = vunpack.c.h.b16 %v355
  %v3944 = vunpack.c.l.b16 %v356
  %v3945 = vunpack.c.h.b16 %v356
  %v3946 = vunpack.c.l.b16 %v357
  %v3947 = vunpack.c.h.b16 %v357
  %v3948 = vunpack.c.l.b16 %v358
  %v3949 = vunpack.c.h.b16 %v358
  %v3950 = vunpack.c.l.b16 %v359
  %v3951 = vunpack.c.h.b16 %v359
  %v3952 = vunpack.c.l.b16 %v360
  %v3953 = vunpack.c.h.b16 %v360
  %v3954 = vunpack.c.l.b16 %v361
  %v3955 = vunpack.c.h.b16 %v361
  %v3956 = vunpack.c.l.b16 %v362
  %v3957 = vunpack.c.h.b16 %v362
  %v3958 = vunpack.c.l.b16 %v363
  %v3959 = vunpack.c.h.b16 %v363
  %v3960 = vunpack.c.l.b16 %v364
  %v3961 = vunpack.c.h.b16 %v364
  %v3962 = vunpack.c.l.b16 %v365
  %v3963 = vunpack.c.h.b16 %v365
  %v3964 = vunpack.c.l.b16 %v366
  %v3965 = vunpack.c.h.b16 %v366
  %v3966 = vunpack.c.l.b16 %v367
  %v3967 = vunpack.c.h.b16 %v367
  %v3968 = vunpack.c.l.b16 %v368
  %v3969 = vunpack.c.h.b16 %v368
  %v3970 = vunpack.c.l.b16 %v369
  %v3971 = vunpack.c.h.b16 %v369
  %v3972 = vunpack.c.l.b16 %v370
  %v3973 = vunpack.c.h.b16 %v370
  %v3974 = vunpack.c.l.b16 %v371
  %v3975 = vunpack.c.h.b16 %v371
  %v3976 = vunpack.c.l.b16 %v372
  %v3977 = vunpack.c.h.b16 %v372
  %v3978 = vunpack.c.l.b16 %v373
  %v3979 = vunpack.c.h.b16 %v373
  %v3980 = vunpack.c.l.b16 %v374
  %v3981 = vunpack.c.h.b16 %v374
  %v3982 = vunpack.c.l.b16 %v375
  %v3983 = vunpack.c.h.b16 %v375
  %v3984 = vunpack.c.l.b16 %v376
  %v3985 = vunpack.c.h.b16 %v376
  %v3986 = vunpack.c.l.b16 %v377
  %v3987 = vunpack.c.h.b16 %v377
  %v3988 = vunpack.c.l.b16 %v378
  %v3989 = vunpack.c.h.b16 %v378
  %v3990 = vunpack.c.l.b16 %v379
  %v3991 = vunpack.c.h.b16 %v379
  %v3992 = vunpack.c.l.b16 %v380
  %v3993 = vunpack.c.h.b16 %v380
  %v3994 = vunpack.c.l.b16 %v381
  %v3995 = vunpack.c.h.b16 %v381
  %v3996 = vunpack.c.l.b16 %v382
  %v3997 = vunpack.c.h.b16 %v382
  %v3998 = vunpack.c.l.b16 %v383
  %v3999 = vunpack.c.h.b16 %v383
  %v4000 = vunpack.c.l.b16 %v384
  %v4001 = vunpack.c.h.b16 %v384
  %v4002 = vunpack.c.l.b16 %v385
  %v4003 = vunpack.c.h.b16 %v385
  %v4004 = vunpack.c.l.b16 %v386
  %v4005 = vunpack.c.h.b16 %v386
  %v4006 = vunpack.c.l.b16 %v387
  %v4007 = vunpack.c.h.b16 %v387
  %v4008 = vunpack.c.l.b16 %v388
  %v4009 = vunpack.c.h.b16 %v388
  %v4010 = vunpack.c.l.b16 %v389
  %v4011 = vunpack.c.h.b16 %v389
  %v4012 = vunpack.c.l.b16 %v390
  %v4013 = vunpack.c.h.b16 %v390
  %v4014 = vunpack.c.l.b16 %v391
  %v4015 = vunpack.c.h.b16 %v391
  %v4016 = vunpack.c.l.b16 %v392
  %v4017 = vunpack.c.h.b16 %v392
  %v4018 = vunpack.c.l.b16 %v393
  %v4019 = vunpack.c.h.b16 %v393
  %v4020 = vunpack.c.l.b16 %v394
  %v4021 = vunpack.c.h.b16 %v394
  %v4022 = vunpack.c.l.b16 %v395
  %v4023 = vunpack.c.h.b16 %v395
  %v4024 = vunpack.c.l.b16 %v396
  %v4025 = vunpack.c.h.b16 %v396
  %v4026 = vunpack.c.l.b16 %v397
  %v4027 = vunpack.c.h.b16 %v397
  %v4028 = vunpack.c.l.b16 %v398
  %v4029 = vunpack.c.h.b16 %v398
  %v4030 = vunpack.c.l.b16 %v399
  %v4031 = vunpack.c.h.b16 %v399
  %v4032 = vunpack.c.l.b16 %v400
  %v4033 = vunpack.c.h.b16 %v400
  %v4034 = vunpack.c.l.b16 %v401
  %v4035 = vunpack.c.h.b16 %v401
  %v4036 = vunpack.c.l.b16 %v402
  %v4037 = vunpack.c.h.b16 %v402
  %v4038 = vunpack.c.l.b16 %v403
  %v4039 = vunpack.c.h.b16 %v403
  %v4040 = vunpack.c.l.b16 %v404
  %v4041 = vunpack.c.h.b16 %v404
  %v4042 = vunpack.c.l.b16 %v405
  %v4043 = vunpack.c.h.b16 %v405
  %v4044 = vunpack.c.l.b16 %v406
  %v4045 = vunpack.c.h.b16 %v406
  %v4046 = vunpack.c.l.b16 %v407
  %v4047 = vunpack.c.h.b16 %v407
  %v4048 = vunpack.c.l.b16 %v408
  %v4049 = vunpack.c.h.b16 %v408
  %v4050 = vunpack.c.l.b16 %v409
  %v4051 = vunpack.c.h.b16 %v409
  %v4052 = vunpack.c.l.b16 %v410
  %v4053 = vunpack.c.h.b16 %v410
  %v4054 = vunpack.c.l.b16 %v411
  %v4055 = vunpack.c.h.b16 %v411
  %v4056 = vunpack.c.l.b16 %v412
  %v4057 = vunpack.c.h.b16 %v412
  %v4058 = vunpack.c.l.b16 %v413
  %v4059 = vunpack.c.h.b16 %v413
  %v4060 = vunpack.c.l.b16 %v414
  %v4061 = vunpack.c.h.b16 %v414
  %v4062 = vunpack.c.l.b16 %v415
  %v4063 = vunpack.c.h.b16 %v415
  %v4064 = vunpack.c.l.b16 %v416
  %v4065 = vunpack.c.h.b16 %v416
  %v4066 = vunpack.c.l.b16 %v417
  %v4067 = vunpack.c.h.b16 %v417
  %v4068 = vunpack.c.l.b16 %v418
  %v4069 = vunpack.c.h.b16 %v418
  %v4070 = vunpack.c.l.b16 %v419
  %v4071 = vunpack.c.h.b16 %v419
  %v4072 = vunpack.c.l.b16 %v420
  %v4073 = vunpack.c.h.b16 %v420
  %v4074 = vunpack.c.l.b16 %v421
  %v4075 = vunpack.c.h.b16 %v421
  %v4076 = vunpack.c.l.b16 %v422
  %v4077 = vunpack.c.h.b16 %v422
  %v4078 = vunpack.c.l.b16 %v423
  %v4079 = vunpack.c.h.b16 %v423
  %v4080 = vunpack.c.l.b16 %v424
  %v4081 = vunpack.c.h.b16 %v424
  %v4082 = vunpack.c.l.b16 %v425
  %v4083 = vunpack.c.h.b16 %v425
  %v4084 = vunpack.c.l.b16 %v426
  %v4085 = vunpack.c.h.b16 %v426
  %v4086 = vunpack.c.l.b16 %v427
  %v4087 = vunpack.c.h.b16 %v427
  %v4088 = vunpack.c.l.b16 %v428
  %v4089 = vunpack.c.h.b16 %v428
  %v4090 = vunpack.c.l.b16 %v429
  %v4091 = vunpack.c.h.b16 %v429
  %v4092 = vunpack.c.l.b16 %v430
  %v4093 = vunpack.c.h.b16 %v430
  %v4094 = vunpack.c.l.b16 %v431
  %v4095 = vunpack.c.h.b16 %v431
  %v4096 = vunpack.c.l.b16 %v432
  %v4097 = vunpack.c.h.b16 %v432
  %v4098 = vunpack.c.l.b16 %v433
  %v4099 = vunpack.c.h.b16 %v433
  %v4100 = vunpack.c.l.b16 %v434
  %v4101 = vunpack.c.h.b16 %v434
  %v4102 = vunpack.c.l.b16 %v435
  %v4103 = vunpack.c.h.b16 %v435
  %v4104 = vunpack.c.l.b16 %v436
  %v4105 = vunpack.c.h.b16 %v436
  %v4106 = vunpack.c.l.b16 %v437
  %v4107 = vunpack.c.h.b16 %v437
  %v4108 = vunpack.c.l.b16 %v438
  %v4109 = vunpack.c.h.b16 %v438
  %v4110 = vunpack.c.l.b16 %v439
  %v4111 = vunpack.c.h.b16 %v439
  %v4112 = vunpack.c.l.b16 %v440
  %v4113 = vunpack.c.h.b16 %v440
  %v4114 = vunpack.c.l.b16 %v441
  %v4115 = vunpack.c.h.b16 %v441
  %v4116 = vunpack.c.l.b16 %v442
  %v4117 = vunpack.c.h.b16 %v442
  %v4118 = vunpack.c.l.b16 %v443
  %v4119 = vunpack.c.h.b16 %v443
  %v4120 = vunpack.c.l.b16 %v444
  %v4121 = vunpack.c.h.b16 %v444
  %v4122 = vunpack.c.l.b16 %v445
  %v4123 = vunpack.c.h.b16 %v445
  %v4124 = vunpack.c.l.b16 %v446
  %v4125 = vunpack.c.h.b16 %v446
  %v4126 = vunpack.c.l.b16 %v447
  %v4127 = vunpack.c.h.b16 %v447
  %v4128 = vunpack.c.l.b16 %v448
  %v4129 = vunpack.c.h.b16 %v448
  %v4130 = vunpack.c.l.b16 %v449
  %v4131 = vunpack.c.h.b16 %v449
  %v4132 = vunpack.c.l.b16 %v450
  %v4133 = vunpack.c.h.b16 %v450
  %v4134 = vunpack.c.l.b16 %v451
  %v4135 = vunpack.c.h.b16 %v451
  %v4136 = vunpack.c.l.b16 %v452
  %v4137 = vunpack.c.h.b16 %v452
  %v4138 = vunpack.c.l.b16 %v453
  %v4139 = vunpack.c.h.b16 %v453
  %v4140 = vunpack.c.l.b16 %v454
  %v4141 = vunpack.c.h.b16 %v454
  %v4142 = vunpack.c.l.b16 %v455
  %v4143 = vunpack.c.h.b16 %v455
  %v4144 = vunpack.c.l.b16 %v456
  %v4145 = vunpack.c.h.b16 %v456
  %v4146 = vunpack.c.l.b16 %v457
  %v4147 = vunpack.c.h.b16 %v457
  %v4148 = vunpack.c.l.b16 %v458
  %v4149 = vunpack.c.h.b16 %v458
  %v4150 = vunpack.c.l.b16 %v459
  %v4151 = vunpack.c.h.b16 %v459
  %v4152 = vunpack.c.l.b16 %v460
  %v4153 = vunpack.c.h.b16 %v460
  %v4154 = vunpack.c.l.b16 %v461
  %v4155 = vunpack.c.h.b16 %v461
  %v4156 = vunpack.c.l.b16 %v462
  %v4157 = vunpack.c.h.b16 %v462
  %v4158 = vunpack.c.l.b16 %v463
  %v4159 = vunpack.c.h.b16 %v463
  %v4160 = vunpack.c.l.b16 %v464
  %v4161 = vunpack.c.h.b16 %v464
  %v4162 = vunpack.c.l.b16 %v465
  %v4163 = vunpack.c.h.b16 %v465
  %v4164 = vunpack.c.l.b16 %v466
  %v4165 = vunpack.c.h.b16 %v466
  %v4166 = vunpack.c.l.b16 %v467
  %v4167 = vunpack.c.h.b16 %v467
  %v4168 = vunpack.c.l.b16 %v468
  %v4169 = vunpack.c.h.b16 %v468
  %v4170 = vunpack.c.l.b16 %v469
  %v4171 = vunpack.c.h.b16 %v469
  %v4172 = vunpack.c.l.b16 %v470
  %v4173 = vunpack.c.h.b16 %v470
  %v4174 = vunpack.c.l.b16 %v471
  %v4175 = vunpack.c.h.b16 %v471
  %v4176 = vunpack.c.l.b16 %v472
  %v4177 = vunpack.c.h.b16 %v472
  %v4178 = vunpack.c.l.b16 %v473
  %v4179 = vunpack.c.h.b16 %v473
  %v4180 = vunpack.c.l.b16 %v474
  %v4181 = vunpack.c.h.b16 %v474
  %v4182 = vunpack.c.l.b16 %v475
  %v4183 = vunpack.c.h.b16 %v475
  %v4184 = vunpack.c.l.b16 %v476
  %v4185 = vunpack.c.h.b16 %v476
  %v4186 = vunpack.c.l.b16 %v477
  %v4187 = vunpack.c.h.b16 %v477
  %v4188 = vunpack.c.l.b16 %v478
  %v4189 = vunpack.c.h.b16 %v478
  %v4190 = vunpack.c.l.b16 %v479
  %v4191 = vunpack.c.h.b16 %v479
  %v4192 = vunpack.c.l.b16 %v480
  %v4193 = vunpack.c.h.b16 %v480
  %v4194 = vunpack.c.l.b16 %v481
  %v4195 = vunpack.c.h.b16 %v481
  %v4196 = vunpack.c.l.b16 %v482
  %v4197 = vunpack.c.h.b16 %v482
  %v4198 = vunpack.c.l.b16 %v483
  %v4199 = vunpack.c.h.b16 %v483
  %v4200 = vunpack.c.l.b16 %v484
  %v4201 = vunpack.c.h.b16 %v484
  %v4202 = vunpack.c.l.b16 %v485
  %v4203 = vunpack.c.h.b16 %v485
  %v4204 = vunpack.c.l.b16 %v486
  %v4205 = vunpack.c.h.b16 %v486
  %v4206 = vunpack.c.l.b16 %v487
  %v4207 = vunpack.c.h.b16 %v487
  %v4208 = vunpack.c.l.b16 %v488
  %v4209 = vunpack.c.h.b16 %v488
  %v4210 = vunpack.c.l.b16 %v489
  %v4211 = vunpack.c.h.b16 %v489
  %v4212 = vunpack.c.l.b16 %v490
  %v4213 = vunpack.c.h.b16 %v490
  %v4214 = vunpack.c.l.b16 %v491
  %v4215 = vunpack.c.h.b16 %v491
  %v4216 = vunpack.c.l.b16 %v492
  %v4217 = vunpack.c.h.b16 %v492
  %v4218 = vunpack.c.l.b16 %v493
  %v4219 = vunpack.c.h.b16 %v493
  %v4220 = vunpack.c.l.b16 %v494
  %v4221 = vunpack.c.h.b16 %v494
  %v4222 = vunpack.c.l.b16 %v495
  %v4223 = vunpack.c.h.b16 %v495
  %v4224 = vunpack.c.l.b16 %v496
  %v4225 = vunpack.c.h.b16 %v496
  %v4226 = vunpack.c.l.b16 %v497
  %v4227 = vunpack.c.h.b16 %v497
  %v4228 = vunpack.c.l.b16 %v498
  %v4229 = vunpack.c.h.b16 %v498
  %v4230 = vunpack.c.l.b16 %v499
  %v4231 = vunpack.c.h.b16 %v499
  %v4232 = vunpack.c.l.b16 %v500
  %v4233 = vunpack.c.h.b16 %v500
  %v4234 = vunpack.c.l.b16 %v501
  %v4235 = vunpack.c.h.b16 %v501
  %v4236 = vunpack.c.l.b16 %v502
  %v4237 = vunpack.c.h.b16 %v502
  %v4238 = vunpack.c.l.b16 %v503
  %v4239 = vunpack.c.h.b16 %v503
  %v4240 = vunpack.c.l.b16 %v504
  %v4241 = vunpack.c.h.b16 %v504
  %v4242 = vunpack.c.l.b16 %v505
  %v4243 = vunpack.c.h.b16 %v505
  %v4244 = vunpack.c.l.b16 %v506
  %v4245 = vunpack.c.h.b16 %v506
  %v4246 = vunpack.c.l.b16 %v507
  %v4247 = vunpack.c.h.b16 %v507
  %v4248 = vunpack.c.l.b16 %v508
  %v4249 = vunpack.c.h.b16 %v508
  %v4250 = vunpack.c.l.b16 %v509
  %v4251 = vunpack.c.h.b16 %v509
  %v4252 = vunpack.c.l.b16 %v510
  %v4253 = vunpack.c.h.b16 %v510
  %v4254 = vunpack.c.l.b16 %v511
  %v4255 = vunpack.c.h.b16 %v511
  %v4256 = vunpack.c.l.b16 %v512
  %v4257 = vunpack.c.h.b16 %v512
  %v4258 = vunpack.c.l.b16 %v513
  %v4259 = vunpack.c.h.b16 %v513
  %v4260 = vunpack.c.l.b16 %v514
  %v4261 = vunpack.c.h.b16 %v514
  %v4262 = vunpack.c.l.b16 %v515
  %v4263 = vunpack.c.h.b16 %v515
  %v4264 = vunpack.c.l.b16 %v516
  %v4265 = vunpack.c.h.b16 %v516
  %v4266 = vunpack.c.l.b16 %v517
  %v4267 = vunpack.c.h.b16 %v517
  %v4268 = vunpack.c.l.b16 %v518
  %v4269 = vunpack.c.h.b16 %v518
  %v4270 = vunpack.c.l.b16 %v519
  %v4271 = vunpack.c.h.b16 %v519
  %v4272 = vunpack.c.l.b16 %v520
  %v4273 = vunpack.c.h.b16 %v520
  %v4274 = vunpack.c.l.b16 %v521
  %v4275 = vunpack.c.h.b16 %v521
  %v4276 = vunpack.c.l.b16 %v522
  %v4277 = vunpack.c.h.b16 %v522
  %v4278 = vunpack.c.l.b16 %v523
  %v4279 = vunpack.c.h.b16 %v523
  %v4280 = vunpack.c.l.b16 %v524
  %v4281 = vunpack.c.h.b16 %v524
  %v4282 = vunpack.c.l.b16 %v525
  %v4283 = vunpack.c.h.b16 %v525
  %v4284 = vunpack.c.l.b16 %v526
  %v4285 = vunpack.c.h.b16 %v526
  %v4286 = vunpack.c.l.b16 %v527
  %v4287 = vunpack.c.h.b16 %v527
  %v4288 = vunpack.c.l.b16 %v528
  %v4289 = vunpack.c.h.b16 %v528
  %v4290 = vunpack.c.l.b16 %v529
  %v4291 = vunpack.c.h.b16 %v529
  %v4292 = vunpack.c.l.b16 %v530
  %v4293 = vunpack.c.h.b16 %v530
  %v4294 = vunpack.c.l.b16 %v531
  %v4295 = vunpack.c.h.b16 %v531
  %v4296 = vunpack.c.l.b16 %v532
  %v4297 = vunpack.c.h.b16 %v532
  %v4298 = vunpack.c.l.b16 %v533
  %v4299 = vunpack.c.h.b16 %v533
  %v4300 = vunpack.c.l.b16 %v534
  %v4301 = vunpack.c.h.b16 %v534
  %v4302 = vunpack.c.l.b16 %v535
  %v4303 = vunpack.c.h.b16 %v535
  %v4304 = vunpack.c.l.b16 %v536
  %v4305 = vunpack.c.h.b16 %v536
  %v4306 = vunpack.c.l.b16 %v537
  %v4307 = vunpack.c.h.b16 %v537
  %v4308 = vunpack.c.l.b16 %v538
  %v4309 = vunpack.c.h.b16 %v538
  %v4310 = vunpack.c.l.b16 %v539
  %v4311 = vunpack.c.h.b16 %v539
  %v4312 = vunpack.c.l.b16 %v540
  %v4313 = vunpack.c.h.b16 %v540
  %v4314 = vunpack.c.l.b16 %v541
  %v4315 = vunpack.c.h.b16 %v541
  %v4316 = vunpack.c.l.b16 %v542
  %v4317 = vunpack.c.h.b16 %v542
  %v4318 = vunpack.c.l.b16 %v543
  %v4319 = vunpack.c.h.b16 %v543
  %v4320 = vunpack.c.l.b16 %v544
  %v4321 = vunpack.c.h.b16 %v544
  %v4322 = vunpack.c.l.b16 %v545
  %v4323 = vunpack.c.h.b16 %v545
  %v4324 = vunpack.c.l.b16 %v546
  %v4325 = vunpack.c.h.b16 %v546
  %v4326 = vunpack.c.l.b16 %v547
  %v4327 = vunpack.c.h.b16 %v547
  %v4328 = vunpack.c.l.b16 %v548
  %v4329 = vunpack.c.h.b16 %v548
  %v4330 = vunpack.c.l.b16 %v549
  %v4331 = vunpack.c.h.b16 %v549
  %v4332 = vunpack.c.l.b16 %v550
  %v4333 = vunpack.c.h.b16 %v550
  %v4334 = vunpack.c.l.b16 %v551
  %v4335 = vunpack.c.h.b16 %v551
  %v4336 = vunpack.c.l.b16 %v552
  %v4337 = vunpack.c.h.b16 %v552
  %v4338 = vunpack.c.l.b16 %v553
  %v4339 = vunpack.c.h.b16 %v553
  %v4340 = vunpack.c.l.b16 %v554
  %v4341 = vunpack.c.h.b16 %v554
  %v4342 = vunpack.c.l.b16 %v555
  %v4343 = vunpack.c.h.b16 %v555
  %v4344 = vunpack.c.l.b16 %v556
  %v4345 = vunpack.c.h.b16 %v556
  %v4346 = vunpack.c.l.b16 %v557
  %v4347 = vunpack.c.h.b16 %v557
  %v4348 = vunpack.c.l.b16 %v558
  %v4349 = vunpack.c.h.b16 %v558
  %v4350 = vunpack.c.l.b16 %v559
  %v4351 = vunpack.c.h.b16 %v559
  %v4352 = vunpack.c.l.b16 %v560
  %v4353 = vunpack.c.h.b16 %v560
  %v4354 = vunpack.c.l.b16 %v561
  %v4355 = vunpack.c.h.b16 %v561
  %v4356 = vunpack.c.l.b16 %v562
  %v4357 = vunpack.c.h.b16 %v562
  %v4358 = vunpack.c.l.b16 %v563
  %v4359 = vunpack.c.h.b16 %v563
  %v4360 = vunpack.c.l.b16 %v564
  %v4361 = vunpack.c.h.b16 %v564
  %v4362 = vunpack.c.l.b16 %v565
  %v4363 = vunpack.c.h.b16 %v565
  %v4364 = vunpack.c.l.b16 %v566
  %v4365 = vunpack.c.h.b16 %v566
  %v4366 = vunpack.c.l.b16 %v567
  %v4367 = vunpack.c.h.b16 %v567
  %v4368 = vunpack.c.l.b16 %v568
  %v4369 = vunpack.c.h.b16 %v568
  %v4370 = vunpack.c.l.b16 %v569
  %v4371 = vunpack.c.h.b16 %v569
  %v4372 = vunpack.c.l.b16 %v570
  %v4373 = vunpack.c.h.b16 %v570
  %v4374 = vunpack.c.l.b16 %v571
  %v4375 = vunpack.c.h.b16 %v571
  %v4376 = vunpack.c.l.b16 %v572
  %v4377 = vunpack.c.h.b16 %v572
  %v4378 = vunpack.c.l.b16 %v573
  %v4379 = vunpack.c.h.b16 %v573
  %v4380 = vunpack.c.l.b16 %v574
  %v4381 = vunpack.c.h.b16 %v574
  %v4382 = vunpack.c.l.b16 %v575
  %v4383 = vunpack.c.h.b16 %v575
  %v4384 = vunpack.c.l.b16 %v576
  %v4385 = vunpack.c.h.b16 %v576
  %v4386 = vunpack.c.l.b16 %v577
  %v4387 = vunpack.c.h.b16 %v577
  %v4388 = vunpack.c.l.b16 %v578
  %v4389 = vunpack.c.h.b16 %v578
  %v4390 = vunpack.c.l.b16 %v579
  %v4391 = vunpack.c.h.b16 %v579
  %v4392 = vunpack.c.l.b16 %v580
  %v4393 = vunpack.c.h.b16 %v580
  %v4394 = vunpack.c.l.b16 %v581
  %v4395 = vunpack.c.h.b16 %v581
  %v4396 = vunpack.c.l.b16 %v582
  %v4397 = vunpack.c.h.b16 %v582
  %v4398 = vunpack.c.l.b16 %v583
  %v4399 = vunpack.c.h.b16 %v583
  %v4400 = vunpack.c.l.b16 %v584
  %v4401 = vunpack.c.h.b16 %v584
  %v4402 = vunpack.c.l.b16 %v585
  %v4403 = vunpack.c.h.b16 %v585
  %v4404 = vunpack.c.l.b16 %v586
  %v4405 = vunpack.c.h.b16 %v586
  %v4406 = vunpack.c.l.b16 %v587
  %v4407 = vunpack.c.h.b16 %v587
  %v4408 = vunpack.c.l.b16 %v588
  %v4409 = vunpack.c.h.b16 %v588
  %v4410 = vunpack.c.l.b16 %v589
  %v4411 = vunpack.c.h.b16 %v589
  %v4412 = vunpack.c.l.b16 %v590
  %v4413 = vunpack.c.h.b16 %v590
  %v4414 = vunpack.c.l.b16 %v591
  %v4415 = vunpack.c.h.b16 %v591
  %v4416 = vunpack.c.l.b16 %v592
  %v4417 = vunpack.c.h.b16 %v592
  %v4418 = vunpack.c.l.b16 %v593
  %v4419 = vunpack.c.h.b16 %v593
  %v4420 = vunpack.c.l.b16 %v594
  %v4421 = vunpack.c.h.b16 %v594
  %v4422 = vunpack.c.l.b16 %v595
  %v4423 = vunpack.c.h.b16 %v595
  %v4424 = vunpack.c.l.b16 %v596
  %v4425 = vunpack.c.h.b16 %v596
  %v4426 = vunpack.c.l.b16 %v597
  %v4427 = vunpack.c.h.b16 %v597
  %v4428 = vunpack.c.l.b16 %v598
  %v4429 = vunpack.c.h.b16 %v598
  %v4430 = vunpack.c.l.b16 %v599
  %v4431 = vunpack.c.h.b16 %v599
  %v4432 = vunpack.c.l.b16 %v600
  %v4433 = vunpack.c.h.b16 %v600
  %v4434 = vunpack.c.l.b16 %v601
  %v4435 = vunpack.c.h.b16 %v601
  %v4436 = vunpack.c.l.b16 %v602
  %v4437 = vunpack.c.h.b16 %v602
  %v4438 = vunpack.c.l.b16 %v603
  %v4439 = vunpack.c.h.b16 %v603
  %v4440 = vunpack.c.l.b16 %v604
  %v4441 = vunpack.c.h.b16 %v604
  %v4442 = vunpack.c.l.b16 %v605
  %v4443 = vunpack.c.h.b16 %v605
  %v4444 = vunpack.c.l.b16 %v606
  %v4445 = vunpack.c.h.b16 %v606
  %v4446 = vunpack.c.l.b16 %v607
  %v4447 = vunpack.c.h.b16 %v607
  %v4448 = vunpack.c.l.b16 %v608
  %v4449 = vunpack.c.h.b16 %v608
  %v4450 = vunpack.c.l.b16 %v609
  %v4451 = vunpack.c.h.b16 %v609
  %v4452 = vunpack.c.l.b16 %v610
  %v4453 = vunpack.c.h.b16 %v610
  %v4454 = vunpack.c.l.b16 %v611
  %v4455 = vunpack.c.h.b16 %v611
  %v4456 = vunpack.c.l.b16 %v612
  %v4457 = vunpack.c.h.b16 %v612
  %v4458 = vunpack.c.l.b16 %v613
  %v4459 = vunpack.c.h.b16 %v613
  %v4460 = vunpack.c.l.b16 %v614
  %v4461 = vunpack.c.h.b16 %v614
  %v4462 = vunpack.c.l.b16 %v615
  %v4463 = vunpack.c.h.b16 %v615
  %v4464 = vunpack.c.l.b16 %v616
  %v4465 = vunpack.c.h.b16 %v616
  %v4466 = vunpack.c.l.b16 %v617
  %v4467 = vunpack.c.h.b16 %v617
  %v4468 = vunpack.c.l.b16 %v618
  %v4469 = vunpack.c.h.b16 %v618
  %v4470 = vunpack.c.l.b16 %v619
  %v4471 = vunpack.c.h.b16 %v619
  %v4472 = vunpack.c.l.b16 %v620
  %v4473 = vunpack.c.h.b16 %v620
  %v4474 = vunpack.c.l.b16 %v621
  %v4475 = vunpack.c.h.b16 %v621
  %v4476 = vunpack.c.l.b16 %v622
  %v4477 = vunpack.c.h.b16 %v622
  %v4478 = vunpack.c.l.b16 %v623
  %v4479 = vunpack.c.h.b16 %v623
  %v4480 = vunpack.c.l.b16 %v624
  %v4481 = vunpack.c.h.b16 %v624
  %v4482 = vunpack.c.l.b16 %v625
  %v4483 = vunpack.c.h.b16 %v625
  %v4484 = vunpack.c.l.b16 %v626
  %v4485 = vunpack.c.h.b16 %v626
  %v4486 = vunpack.c.l.b16 %v627
  %v4487 = vunpack.c.h.b16 %v627
  %v4488 = vunpack.c.l.b16 %v628
  %v4489 = vunpack.c.h.b16 %v628
  %v4490 = vunpack.c.l.b16 %v629
  %v4491 = vunpack.c.h.b16 %v629
  %v4492 = vunpack.c.l.b16 %v630
  %v4493 = vunpack.c.h.b16 %v630
  %v4494 = vunpack.c.l.b16 %v631
  %v4495 = vunpack.c.h.b16 %v631
  %v4496 = vunpack.c.l.b16 %v632
  %v4497 = vunpack.c.h.b16 %v632
  %v4498 = vunpack.c.l.b16 %v633
  %v4499 = vunpack.c.h.b16 %v633
  %v4500 = vunpack.c.l.b16 %v634
  %v4501 = vunpack.c.h.b16 %v634
  %v4502 = vunpack.c.l.b16 %v635
  %v4503 = vunpack.c.h.b16 %v635
  %v4504 = vunpack.c.l.b16 %v636
  %v4505 = vunpack.c.h.b16 %v636
  %v4506 = vunpack.c.l.b16 %v637
  %v4507 = vunpack.c.h.b16 %v637
  %v4508 = vunpack.c.l.b16 %v638
  %v4509 = vunpack.c.h.b16 %v638
  %v4510 = vunpack.c.l.b16 %v639
  %v4511 = vunpack.c.h.b16 %v639
  %v4512 = vunpack.c.l.b16 %v640
  %v4513 = vunpack.c.h.b16 %v640
  %v4514 = vunpack.c.l.b16 %v641
  %v4515 = vunpack.c.h.b16 %v641
  %v4516 = vunpack.c.l.b16 %v642
  %v4517 = vunpack.c.h.b16 %v642
  %v4518 = vunpack.c.l.b16 %v643
  %v4519 = vunpack.c.h.b16 %v643
  %v4520 = vunpack.c.l.b16 %v644
  %v4521 = vunpack.c.h.b16 %v644
  %v4522 = vunpack.c.l.b16 %v645
  %v4523 = vunpack.c.h.b16 %v645
  %v4524 = vunpack.c.l.b16 %v646
  %v4525 = vunpack.c.h.b16 %v646
  %v4526 = vunpack.c.l.b16 %v647
  %v4527 = vunpack.c.h.b16 %v647
  %v4528 = vunpack.c.l.b16 %v648
  %v4529 = vunpack.c.h.b16 %v648
  %v4530 = vunpack.c.l.b16 %v649
  %v4531 = vunpack.c.h.b16 %v649
  %v4532 = vunpack.c.l.b16 %v650
  %v4533 = vunpack.c.h.b16 %v650
  %v4534 = vunpack.c.l.b16 %v651
  %v4535 = vunpack.c.h.b16 %v651
  %v4536 = vunpack.c.l.b16 %v652
  %v4537 = vunpack.c.h.b16 %v652
  %v4538 = vunpack.c.l.b16 %v653
  %v4539 = vunpack.c.h.b16 %v653
  %v4540 = vunpack.c.l.b16 %v654
  %v4541 = vunpack.c.h.b16 %v654
  %v4542 = vunpack.c.l.b16 %v655
  %v4543 = vunpack.c.h.b16 %v655
  %v4544 = vunpack.c.l.b16 %v656
  %v4545 = vunpack.c.h.b16 %v656
  %v4546 = vunpack.c.l.b16 %v657
  %v4547 = vunpack.c.h.b16 %v657
  %v4548 = vunpack.c.l.b16 %v658
  %v4549 = vunpack.c.h.b16 %v658
  %v4550 = vunpack.c.l.b16 %v659
  %v4551 = vunpack.c.h.b16 %v659
  %v4552 = vunpack.c.l.b16 %v660
  %v4553 = vunpack.c.h.b16 %v660
  %v4554 = vunpack.c.l.b16 %v661
  %v4555 = vunpack.c.h.b16 %v661
  %v4556 = vunpack.c.l.b16 %v662
  %v4557 = vunpack.c.h.b16 %v662
  %v4558 = vunpack.c.l.b16 %v663
  %v4559 = vunpack.c.h.b16 %v663
  %v4560 = vunpack.c.l.b16 %v664
  %v4561 = vunpack.c.h.b16 %v664
  %v4562 = vunpack.c.l.b16 %v665
  %v4563 = vunpack.c.h.b16 %v665
  %v4564 = vunpack.c.l.b16 %v666
  %v4565 = vunpack.c.h.b16 %v666
  %v4566 = vunpack.c.l.b16 %v667
  %v4567 = vunpack.c.h.b16 %v667
  %v4568 = vunpack.c.l.b16 %v668
  %v4569 = vunpack.c.h.b16 %v668
  %v4570 = vunpack.c.l.b16 %v669
  %v4571 = vunpack.c.h.b16 %v669
  %v4572 = vunpack.c.l.b16 %v670
  %v4573 = vunpack.c.h.b16 %v670
  %v4574 = vunpack.c.l.b16 %v671
  %v4575 = vunpack.c.h.b16 %v671
  %v4576 = vunpack.c.l.b16 %v672
  %v4577 = vunpack.c.h.b16 %v672
  %v4578 = vunpack.c.l.b16 %v673
  %v4579 = vunpack.c.h.b16 %v673
  %v4580 = vunpack.c.l.b16 %v674
  %v4581 = vunpack.c.h.b16 %v674
  %v4582 = vunpack.c.l.b16 %v675
  %v4583 = vunpack.c.h.b16 %v675
  %v4584 = vunpack.c.l.b16 %v676
  %v4585 = vunpack.c.h.b16 %v676
  %v4586 = vunpack.c.l.b16 %v677
  %v4587 = vunpack.c.h.b16 %v677
  %v4588 = vunpack.c.l.b16 %v678
  %v4589 = vunpack.c.h.b16 %v678
  %v4590 = vunpack.c.l.b16 %v679
  %v4591 = vunpack.c.h.b16 %v679
  %v4592 = vunpack.c.l.b16 %v680
  %v4593 = vunpack.c.h.b16 %v680
  %v4594 = vunpack.c.l.b16 %v681
  %v4595 = vunpack.c.h.b16 %v681
  %v4596 = vunpack.c.l.b16 %v682
  %v4597 = vunpack.c.h.b16 %v682
  %v4598 = vunpack.c.l.b16 %v683
  %v4599 = vunpack.c.h.b16 %v683
  %v4600 = vunpack.c.l.b16 %v684
  %v4601 = vunpack.c.h.b16 %v684
  %v4602 = vunpack.c.l.b16 %v685
  %v4603 = vunpack.c.h.b16 %v685
  %v4604 = vunpack.c.l.b16 %v686
  %v4605 = vunpack.c.h.b16 %v686
  %v4606 = vunpack.c.l.b16 %v687
  %v4607 = vunpack.c.h.b16 %v687
  %v4608 = vunpack.c.l.b16 %v688
  %v4609 = vunpack.c.h.b16 %v688
  %v4610 = vunpack.c.l.b16 %v689
  %v4611 = vunpack.c.h.b16 %v689
  %v4612 = vunpack.c.l.b16 %v690
  %v4613 = vunpack.c.h.b16 %v690
  %v4614 = vunpack.c.l.b16 %v691
  %v4615 = vunpack.c.h.b16 %v691
  %v4616 = vunpack.c.l.b16 %v692
  %v4617 = vunpack.c.h.b16 %v692
  %v4618 = vunpack.c.l.b16 %v693
  %v4619 = vunpack.c.h.b16 %v693
  %v4620 = vunpack.c.l.b16 %v694
  %v4621 = vunpack.c.h.b16 %v694
  %v4622 = vunpack.c.l.b16 %v695
  %v4623 = vunpack.c.h.b16 %v695
  %v4624 = vunpack.c.l.b16 %v696
  %v4625 = vunpack.c.h.b16 %v696
  %v4626 = vunpack.c.l.b16 %v697
  %v4627 = vunpack.c.h.b16 %v697
  %v4628 = vunpack.c.l.b16 %v698
  %v4629 = vunpack.c.h.b16 %v698
  %v4630 = vunpack.c.l.b16 %v699
  %v4631 = vunpack.c.h.b16 %v699
  %v4632 = vunpack.c.l.b16 %v700
  %v4633 = vunpack.c.h.b16 %v700
  %v4634 = vunpack.c.l.b16 %v701
  %v4635 = vunpack.c.h.b16 %v701
  %v4636 = vunpack.c.l.b16 %v702
  %v4637 = vunpack.c.h.b16 %v702
  %v4638 = vunpack.c.l.b16 %v703
  %v4639 = vunpack.c.h.b16 %v703
  %v4640 = vunpack.c.l.b16 %v704
  %v4641 = vunpack.c.h.b16 %v704
  %v4642 = vunpack.c.l.b16 %v705
  %v4643 = vunpack.c.h.b16 %v705
  %v4644 = vunpack.c.l.b16 %v706
  %v4645 = vunpack.c.h.b16 %v706
  %v4646 = vunpack.c.l.b16 %v707
  %v4647 = vunpack.c.h.b16 %v707
  %v4648 = vunpack.c.l.b16 %v708
  %v4649 = vunpack.c.h.b16 %v708
  %v4650 = vunpack.c.l.b16 %v709
  %v4651 = vunpack.c.h.b16 %v709
  %v4652 = vunpack.c.l.b16 %v710
  %v4653 = vunpack.c.h.b16 %v710
  %v4654 = vunpack.c.l.b16 %v711
  %v4655 = vunpack.c.h.b16 %v711
  %v4656 = vunpack.c.l.b16 %v712
  %v4657 = vunpack.c.h.b16 %v712
  %v4658 = vunpack.c.l.b16 %v713
  %v4659 = vunpack.c.h.b16 %v713
  %v4660 = vunpack.c.l.b16 %v714
  %v4661 = vunpack.c.h.b16 %v714
  %v4662 = vunpack.c.l.b16 %v715
  %v4663 = vunpack.c.h.b16 %v715
  %v4664 = vunpack.c.l.b16 %v716
  %v4665 = vunpack.c.h.b16 %v716
  %v4666 = vunpack.c.l.b16 %v717
  %v4667 = vunpack.c.h.b16 %v717
  %v4668 = vunpack.c.l.b16 %v718
  %v4669 = vunpack.c.h.b16 %v718
  %v4670 = vunpack.c.l.b16 %v719
  %v4671 = vunpack.c.h.b16 %v719
  %v4672 = vunpack.c.l.b16 %v720
  %v4673 = vunpack.c.h.b16 %v720
  %v4674 = vunpack.c.l.b16 %v721
  %v4675 = vunpack.c.h.b16 %v721
  %v4676 = vunpack.c.l.b16 %v722
  %v4677 = vunpack.c.h.b16 %v722
  %v4678 = vunpack.c.l.b16 %v723
  %v4679 = vunpack.c.h.b16 %v723
  %v4680 = vunpack.c.l.b16 %v724
  %v4681 = vunpack.c.h.b16 %v724
  %v4682 = vunpack.c.l.b16 %v725
  %v4683 = vunpack.c.h.b16 %v725
  %v4684 = vunpack.c.l.b16 %v726
  %v4685 = vunpack.c.h.b16 %v726
  %v4686 = vunpack.c.l.b16 %v727
  %v4687 = vunpack.c.h.b16 %v727
  %v4688 = vunpack.c.l.b16 %v728
  %v4689 = vunpack.c.h.b16 %v728
  %v4690 = vunpack.c.l.b16 %v729
  %v4691 = vunpack.c.h.b16 %v729
  %v4692 = vunpack.c.l.b16 %v730
  %v4693 = vunpack.c.h.b16 %v730
  %v4694 = vunpack.c.l.b16 %v731
  %v4695 = vunpack.c.h.b16 %v731
  %v4696 = vunpack.c.l.b16 %v732
  %v4697 = vunpack.c.h.b16 %v732
  %v4698 = vunpack.c.l.b16 %v733
  %v4699 = vunpack.c.h.b16 %v733
  %v4700 = vunpack.c.l.b16 %v734
  %v4701 = vunpack.c.h.b16 %v734
  %v4702 = vunpack.c.l.b16 %v735
  %v4703 = vunpack.c.h.b16 %v735
  %v4704 = vunpack.c.l.b16 %v736
  %v4705 = vunpack.c.h.b16 %v736
  %v4706 = vunpack.c.l.b16 %v737
  %v4707 = vunpack.c.h.b16 %v737
  %v4708 = vunpack.c.l.b16 %v738
  %v4709 = vunpack.c.h.b16 %v738
  %v4710 = vunpack.c.l.b16 %v739
  %v4711 = vunpack.c.h.b16 %v739
  %v4712 = vunpack.c.l.b16 %v740
  %v4713 = vunpack.c.h.b16 %v740
  %v4714 = vunpack.c.l.b16 %v741
  %v4715 = vunpack.c.h.b16 %v741
  %v4716 = vunpack.c.l.b16 %v742
  %v4717 = vunpack.c.h.b16 %v742
  %v4718 = vunpack.c.l.b16 %v743
  %v4719 = vunpack.c.h.b16 %v743
  %v4720 = vunpack.c.l.b16 %v744
  %v4721 = vunpack.c.h.b16 %v744
  %v4722 = vunpack.c.l.b16 %v745
  %v4723 = vunpack.c.h.b16 %v745
  %v4724 = vunpack.c.l.b16 %v746
  %v4725 = vunpack.c.h.b16 %v746
  %v4726 = vunpack.c.l.b16 %v747
  %v4727 = vunpack.c.h.b16 %v747
  %v4728 = vunpack.c.l.b16 %v748
  %v4729 = vunpack.c.h.b16 %v748
  %v4730 = vunpack.c.l.b16 %v749
  %v4731 = vunpack.c.h.b16 %v749
  %v4732 = vunpack.c.l.b16 %v750
  %v4733 = vunpack.c.h.b16 %v750
  %v4734 = vunpack.c.l.b16 %v751
  %v4735 = vunpack.c.h.b16 %v751
  %v4736 = vunpack.c.l.b16 %v752
  %v4737 = vunpack.c.h.b16 %v752
  %v4738 = vunpack.c.l.b16 %v753
  %v4739 = vunpack.c.h.b16 %v753
  %v4740 = vunpack.c.l.b16 %v754
  %v4741 = vunpack.c.h.b16 %v754
  %v4742 = vunpack.c.l.b16 %v755
  %v4743 = vunpack.c.h.b16 %v755
  %v4744 = vunpack.c.l.b16 %v756
  %v4745 = vunpack.c.h.b16 %v756
  %v4746 = vunpack.c.l.b16 %v757
  %v4747 = vunpack.c.h.b16 %v757
  %v4748 = vunpack.c.l.b16 %v758
  %v4749 = vunpack.c.h.b16 %v758
  %v4750 = vunpack.c.l.b16 %v759
  %v4751 = vunpack.c.h.b16 %v759
  %v4752 = vunpack.c.l.b16 %v760
  %v4753 = vunpack.c.h.b16 %v760
  %v4754 = vunpack.c.l.b16 %v761
  %v4755 = vunpack.c.h.b16 %v761
  %v4756 = vunpack.c.l.b16 %v762
  %v4757 = vunpack.c.h.b16 %v762
  %v4758 = vunpack.c.l.b16 %v763
  %v4759 = vunpack.c.h.b16 %v763
  %v4760 = vunpack.c.l.b16 %v764
  %v4761 = vunpack.c.h.b16 %v764
  %v4762 = vunpack.c.l.b16 %v765
  %v4763 = vunpack.c.h.b16 %v765
  %v4764 = vunpack.c.l.b16 %v766
  %v4765 = vunpack.c.h.b16 %v766
  %v4766 = vunpack.c.l.b16 %v767
  %v4767 = vunpack.c.h.b16 %v767
  %v4768 = vunpack.c.l.b16 %v768
  %v4769 = vunpack.c.h.b16 %v768
  %v4770 = vunpack.c.l.b16 %v769
  %v4771 = vunpack.c.h.b16 %v769
  %v4772 = vunpack.c.l.b16 %v770
  %v4773 = vunpack.c.h.b16 %v770
  %v4774 = vunpack.c.l.b16 %v771
  %v4775 = vunpack.c.h.b16 %v771
  %v4776 = vunpack.c.l.b16 %v772
  %v4777 = vunpack.c.h.b16 %v772
  %v4778 = vunpack.c.l.b16 %v773
  %v4779 = vunpack.c.h.b16 %v773
  %v4780 = vunpack.c.l.b16 %v774
  %v4781 = vunpack.c.h.b16 %v774
  %v4782 = vunpack.c.l.b16 %v775
  %v4783 = vunpack.c.h.b16 %v775
  %v4784 = vunpack.c.l.b16 %v776
  %v4785 = vunpack.c.h.b16 %v776
  %v4786 = vunpack.c.l.b16 %v777
  %v4787 = vunpack.c.h.b16 %v777
  %v4788 = vunpack.c.l.b16 %v778
  %v4789 = vunpack.c.h.b16 %v778
  %v4790 = vunpack.c.l.b16 %v779
  %v4791 = vunpack.c.h.b16 %v779
  %v4792 = vunpack.c.l.b16 %v780
  %v4793 = vunpack.c.h.b16 %v780
  %v4794 = vunpack.c.l.b16 %v781
  %v4795 = vunpack.c.h.b16 %v781
  %v4796 = vunpack.c.l.b16 %v782
  %v4797 = vunpack.c.h.b16 %v782
  %v4798 = vunpack.c.l.b16 %v783
  %v4799 = vunpack.c.h.b16 %v783
  %v4800 = vunpack.c.l.b16 %v784
  %v4801 = vunpack.c.h.b16 %v784
  %v4802 = vunpack.c.l.b16 %v785
  %v4803 = vunpack.c.h.b16 %v785
  %v4804 = vunpack.c.l.b16 %v786
  %v4805 = vunpack.c.h.b16 %v786
  %v4806 = vunpack.c.l.b16 %v787
  %v4807 = vunpack.c.h.b16 %v787
  %v4808 = vunpack.c.l.b16 %v788
  %v4809 = vunpack.c.h.b16 %v788
  %v4810 = vunpack.c.l.b16 %v789
  %v4811 = vunpack.c.h.b16 %v789
  %v4812 = vunpack.c.l.b16 %v790
  %v4813 = vunpack.c.h.b16 %v790
  %v4814 = vunpack.c.l.b16 %v791
  %v4815 = vunpack.c.h.b16 %v791
  %v4816 = vunpack.c.l.b16 %v792
  %v4817 = vunpack.c.h.b16 %v792
  %v4818 = vunpack.c.l.b16 %v793
  %v4819 = vunpack.c.h.b16 %v793
  %v4820 = vunpack.c.l.b16 %v794
  %v4821 = vunpack.c.h.b16 %v794
  %v4822 = vunpack.c.l.b16 %v795
  %v4823 = vunpack.c.h.b16 %v795
  %v4824 = vunpack.c.l.b16 %v796
  %v4825 = vunpack.c.h.b16 %v796
  %v4826 = vunpack.c.l.b16 %v797
  %v4827 = vunpack.c.h.b16 %v797
  %v4828 = vunpack.c.l.b16 %v798
  %v4829 = vunpack.c.h.b16 %v798
  %v4830 = vunpack.c.l.b16 %v799
  %v4831 = vunpack.c.h.b16 %v799
  %v4832 = vunpack.c.l.b16 %v800
  %v4833 = vunpack.c.h.b16 %v800
  %v4834 = vunpack.c.l.b16 %v801
  %v4835 = vunpack.c.h.b16 %v801
  %v4836 = vunpack.c.l.b16 %v802
  %v4837 = vunpack.c.h.b16 %v802
  %v4838 = vunpack.c.l.b16 %v803
  %v4839 = vunpack.c.h.b16 %v803
  %v4840 = vunpack.c.l.b16 %v804
  %v4841 = vunpack.c.h.b16 %v804
  %v4842 = vunpack.c.l.b16 %v805
  %v4843 = vunpack.c.h.b16 %v805
  %v4844 = vunpack.c.l.b16 %v806
  %v4845 = vunpack.c.h.b16 %v806
  %v4846 = vunpack.c.l.b16 %v807
  %v4847 = vunpack.c.h.b16 %v807
  %v4848 = vunpack.c.l.b16 %v808
  %v4849 = vunpack.c.h.b16 %v808
  %v4850 = vunpack.c.l.b16 %v809
  %v4851 = vunpack.c.h.b16 %v809
  %v4852 = vunpack.c.l.b16 %v810
  %v4853 = vunpack.c.h.b16 %v810
  %v4854 = vunpack.c.l.b16 %v811
  %v4855 = vunpack.c.h.b16 %v811
  %v4856 = vunpack.c.l.b16 %v812
  %v4857 = vunpack.c.h.b16 %v812
  %v4858 = vunpack.c.l.b16 %v813
  %v4859 = vunpack.c.h.b16 %v813
  %v4860 = vunpack.c.l.b16 %v814
  %v4861 = vunpack.c.h.b16 %v814
  %v4862 = vunpack.c.l.b16 %v815
  %v4863 = vunpack.c.h.b16 %v815
  %v4864 = vunpack.c.l.b16 %v816
  %v4865 = vunpack.c.h.b16 %v816
  %v4866 = vunpack.c.l.b16 %v817
  %v4867 = vunpack.c.h.b16 %v817
  %v4868 = vunpack.c.l.b16 %v818
  %v4869 = vunpack.c.h.b16 %v818
  %v4870 = vunpack.c.l.b16 %v819
  %v4871 = vunpack.c.h.b16 %v819
  %v4872 = vunpack.c.l.b16 %v820
  %v4873 = vunpack.c.h.b16 %v820
  %v4874 = vunpack.c.l.b16 %v821
  %v4875 = vunpack.c.h.b16 %v821
  %v4876 = vunpack.c.l.b16 %v822
  %v4877 = vunpack.c.h.b16 %v822
  %v4878 = vunpack.c.l.b16 %v823
  %v4879 = vunpack.c.h.b16 %v823
  %v4880 = vunpack.c.l.b16 %v824
  %v4881 = vunpack.c.h.b16 %v824
  %v4882 = vunpack.c.l.b16 %v825
  %v4883 = vunpack.c.h.b16 %v825
  %v4884 = vunpack.c.l.b16 %v826
  %v4885 = vunpack.c.h.b16 %v826
  %v4886 = vunpack.c.l.b16 %v827
  %v4887 = vunpack.c.h.b16 %v827
  %v4888 = vunpack.c.l.b16 %v828
  %v4889 = vunpack.c.h.b16 %v828
  %v4890 = vunpack.c.l.b16 %v829
  %v4891 = vunpack.c.h.b16 %v829
  %v4892 = vunpack.c.l.b16 %v830
  %v4893 = vunpack.c.h.b16 %v830
  %v4894 = vunpack.c.l.b16 %v831
  %v4895 = vunpack.c.h.b16 %v831
  %v4896 = vunpack.c.l.b16 %v832
  %v4897 = vunpack.c.h.b16 %v832
  %v4898 = vunpack.c.l.b16 %v833
  %v4899 = vunpack.c.h.b16 %v833
  %v4900 = vunpack.c.l.b16 %v834
  %v4901 = vunpack.c.h.b16 %v834
  %v4902 = vunpack.c.l.b16 %v835
  %v4903 = vunpack.c.h.b16 %v835
  %v4904 = vunpack.c.l.b16 %v836
  %v4905 = vunpack.c.h.b16 %v836
  %v4906 = vunpack.c.l.b16 %v837
  %v4907 = vunpack.c.h.b16 %v837
  %v4908 = vunpack.c.l.b16 %v838
  %v4909 = vunpack.c.h.b16 %v838
  %v4910 = vunpack.c.l.b16 %v839
  %v4911 = vunpack.c.h.b16 %v839
  %v4912 = vunpack.c.l.b16 %v840
  %v4913 = vunpack.c.h.b16 %v840
  %v4914 = vunpack.c.l.b16 %v841
  %v4915 = vunpack.c.h.b16 %v841
  %v4916 = vunpack.c.l.b16 %v842
  %v4917 = vunpack.c.h.b16 %v842
  %v4918 = vunpack.c.l.b16 %v843
  %v4919 = vunpack.c.h.b16 %v843
  %v4920 = vunpack.c.l.b16 %v844
  %v4921 = vunpack.c.h.b16 %v844
  %v4922 = vunpack.c.l.b16 %v845
  %v4923 = vunpack.c.h.b16 %v845
  %v4924 = vunpack.c.l.b16 %v846
  %v4925 = vunpack.c.h.b16 %v846
  %v4926 = vunpack.c.l.b16 %v847
  %v4927 = vunpack.c.h.b16 %v847
  %v4928 = vunpack.c.l.b16 %v848
  %v4929 = vunpack.c.h.b16 %v848
  %v4930 = vunpack.c.l.b16 %v849
  %v4931 = vunpack.c.h.b16 %v849
  %v4932 = vunpack.c.l.b16 %v850
  %v4933 = vunpack.c.h.b16 %v850
  %v4934 = vunpack.c.l.b16 %v851
  %v4935 = vunpack.c.h.b16 %v851
  %v4936 = vunpack.c.l.b16 %v852
  %v4937 = vunpack.c.h.b16 %v852
  %v4938 = vunpack.c.l.b16 %v853
  %v4939 = vunpack.c.h.b16 %v853
  %v4940 = vunpack.c.l.b16 %v854
  %v4941 = vunpack.c.h.b16 %v854
  %v4942 = vunpack.c.l.b16 %v855
  %v4943 = vunpack.c.h.b16 %v855
  %v4944 = vunpack.c.l.b16 %v856
  %v4945 = vunpack.c.h.b16 %v856
  %v4946 = vunpack.c.l.b16 %v857
  %v4947 = vunpack.c.h.b16 %v857
  %v4948 = vunpack.c.l.b16 %v858
  %v4949 = vunpack.c.h.b16 %v858
  %v4950 = vunpack.c.l.b16 %v859
  %v4951 = vunpack.c.h.b16 %v859
  %v4952 = vunpack.c.l.b16 %v860
  %v4953 = vunpack.c.h.b16 %v860
  %v4954 = vunpack.c.l.b16 %v861
  %v4955 = vunpack.c.h.b16 %v861
  %v4956 = vunpack.c.l.b16 %v862
  %v4957 = vunpack.c.h.b16 %v862
  %v4958 = vunpack.c.l.b16 %v863
  %v4959 = vunpack.c.h.b16 %v863
  %v4960 = vunpack.c.l.b16 %v864
  %v4961 = vunpack.c.h.b16 %v864
  %v4962 = vunpack.c.l.b16 %v865
  %v4963 = vunpack.c.h.b16 %v865
  %v4964 = vunpack.c.l.b16 %v866
  %v4965 = vunpack.c.h.b16 %v866
  %v4966 = vunpack.c.l.b16 %v867
  %v4967 = vunpack.c.h.b16 %v867
  %v4968 = vunpack.c.l.b16 %v868
  %v4969 = vunpack.c.h.b16 %v868
  %v4970 = vunpack.c.l.b16 %v869
  %v4971 = vunpack.c.h.b16 %v869
  %v4972 = vunpack.c.l.b16 %v870
  %v4973 = vunpack.c.h.b16 %v870
  %v4974 = vunpack.c.l.b16 %v871
  %v4975 = vunpack.c.h.b16 %v871
  %v4976 = vunpack.c.l.b16 %v872
  %v4977 = vunpack.c.h.b16 %v872
  %v4978 = vunpack.c.l.b16 %v873
  %v4979 = vunpack.c.h.b16 %v873
  %v4980 = vunpack.c.l.b16 %v874
  %v4981 = vunpack.c.h.b16 %v874
  %v4982 = vunpack.c.l.b16 %v875
  %v4983 = vunpack.c.h.b16 %v875
  %v4984 = vunpack.c.l.b16 %v876
  %v4985 = vunpack.c.h.b16 %v876
  %v4986 = vunpack.c.l.b16 %v877
  %v4987 = vunpack.c.h.b16 %v877
  %v4988 = vunpack.c.l.b16 %v878
  %v4989 = vunpack.c.h.b16 %v878
  %v4990 = vunpack.c.l.b16 %v879
  %v4991 = vunpack.c.h.b16 %v879
  %v4992 = vunpack.c.l.b16 %v880
  %v4993 = vunpack.c.h.b16 %v880
  %v4994 = vunpack.c.l.b16 %v881
  %v4995 = vunpack.c.h.b16 %v881
  %v4996 = vunpack.c.l.b16 %v882
  %v4997 = vunpack.c.h.b16 %v882
  %v4998 = vunpack.c.l.b16 %v883
  %v4999 = vunpack.c.h.b16 %v883
  %v5000 = vunpack.c.l.b16 %v884
  %v5001 = vunpack.c.h.b16 %v884
  %v5002 = vunpack.c.l.b16 %v885
  %v5003 = vunpack.c.h.b16 %v885
  %v5004 = vunpack.c.l.b16 %v886
  %v5005 = vunpack.c.h.b16 %v886
  %v5006 = vunpack.c.l.b16 %v887
  %v5007 = vunpack.c.h.b16 %v887
  %v5008 = vunpack.c.l.b16 %v888
  %v5009 = vunpack.c.h.b16 %v888
  %v5010 = vunpack.c.l.b16 %v889
  %v5011 = vunpack.c.h.b16 %v889
  %v5012 = vunpack.c.l.b16 %v890
  %v5013 = vunpack.c.h.b16 %v890
  %v5014 = vunpack.c.l.b16 %v891
  %v5015 = vunpack.c.h.b16 %v891
  %v5016 = vunpack.c.l.b16 %v892
  %v5017 = vunpack.c.h.b16 %v892
  %v5018 = vunpack.c.l.b16 %v893
  %v5019 = vunpack.c.h.b16 %v893
  %v5020 = vunpack.c.l.b16 %v894
  %v5021 = vunpack.c.h.b16 %v894
  %v5022 = vunpack.c.l.b16 %v895
  %v5023 = vunpack.c.h.b16 %v895
  %v5024 = vunpack.c.l.b16 %v896
  %v5025 = vunpack.c.h.b16 %v896
  %v5026 = vunpack.c.l.b16 %v897
  %v5027 = vunpack.c.h.b16 %v897
  %v5028 = vunpack.c.l.b16 %v898
  %v5029 = vunpack.c.h.b16 %v898
  %v5030 = vunpack.c.l.b16 %v899
  %v5031 = vunpack.c.h.b16 %v899
  %v5032 = vunpack.c.l.b16 %v900
  %v5033 = vunpack.c.h.b16 %v900
  %v5034 = vunpack.c.l.b16 %v901
  %v5035 = vunpack.c.h.b16 %v901
  %v5036 = vunpack.c.l.b16 %v902
  %v5037 = vunpack.c.h.b16 %v902
  %v5038 = vunpack.c.l.b16 %v903
  %v5039 = vunpack.c.h.b16 %v903
  %v5040 = vunpack.c.l.b16 %v904
  %v5041 = vunpack.c.h.b16 %v904
  %v5042 = vunpack.c.l.b16 %v905
  %v5043 = vunpack.c.h.b16 %v905
  %v5044 = vunpack.c.l.b16 %v906
  %v5045 = vunpack.c.h.b16 %v906
  %v5046 = vunpack.c.l.b16 %v907
  %v5047 = vunpack.c.h.b16 %v907
  %v5048 = vunpack.c.l.b16 %v908
  %v5049 = vunpack.c.h.b16 %v908
  %v5050 = vunpack.c.l.b16 %v909
  %v5051 = vunpack.c.h.b16 %v909
  %v5052 = vunpack.c.l.b16 %v910
  %v5053 = vunpack.c.h.b16 %v910
  %v5054 = vunpack.c.l.b16 %v911
  %v5055 = vunpack.c.h.b16 %v911
  %v5056 = vunpack.c.l.b16 %v912
  %v5057 = vunpack.c.h.b16 %v912
  %v5058 = vunpack.c.l.b16 %v913
  %v5059 = vunpack.c.h.b16 %v913
  %v5060 = vunpack.c.l.b16 %v914
  %v5061 = vunpack.c.h.b16 %v914
  %v5062 = vunpack.c.l.b16 %v915
  %v5063 = vunpack.c.h.b16 %v915
  %v5064 = vunpack.c.l.b16 %v916
  %v5065 = vunpack.c.h.b16 %v916
  %v5066 = vunpack.c.l.b16 %v917
  %v5067 = vunpack.c.h.b16 %v917
  %v5068 = vunpack.c.l.b16 %v918
  %v5069 = vunpack.c.h.b16 %v918
  %v5070 = vunpack.c.l.b16 %v919
  %v5071 = vunpack.c.h.b16 %v919
  %v5072 = vunpack.c.l.b16 %v920
  %v5073 = vunpack.c.h.b16 %v920
  %v5074 = vunpack.c.l.b16 %v921
  %v5075 = vunpack.c.h.b16 %v921
  %v5076 = vunpack.c.l.b16 %v922
  %v5077 = vunpack.c.h.b16 %v922
  %v5078 = vunpack.c.l.b16 %v923
  %v5079 = vunpack.c.h.b16 %v923
  %v5080 = vunpack.c.l.b16 %v924
  %v5081 = vunpack.c.h.b16 %v924
  %v5082 = vunpack.c.l.b16 %v925
  %v5083 = vunpack.c.h.b16 %v925
  %v5084 = vunpack.c.l.b16 %v926
  %v5085 = vunpack.c.h.b16 %v926
  %v5086 = vunpack.c.l.b16 %v927
  %v5087 = vunpack.c.h.b16 %v927
  %v5088 = vunpack.c.l.b16 %v928
  %v5089 = vunpack.c.h.b16 %v928
  %v5090 = vunpack.c.l.b16 %v929
  %v5091 = vunpack.c.h.b16 %v929
  %v5092 = vunpack.c.l.b16 %v930
  %v5093 = vunpack.c.h.b16 %v930
  %v5094 = vunpack.c.l.b16 %v931
  %v5095 = vunpack.c.h.b16 %v931
  %v5096 = vunpack.c.l.b16 %v932
  %v5097 = vunpack.c.h.b16 %v932
  %v5098 = vunpack.c.l.b16 %v933
  %v5099 = vunpack.c.h.b16 %v933
  %v5100 = vunpack.c.l.b16 %v934
  %v5101 = vunpack.c.h.b16 %v934
  %v5102 = vunpack.c.l.b16 %v935
  %v5103 = vunpack.c.h.b16 %v935
  %v5104 = vunpack.c.l.b16 %v936
  %v5105 = vunpack.c.h.b16 %v936
  %v5106 = vunpack.c.l.b16 %v937
  %v5107 = vunpack.c.h.b16 %v937
  %v5108 = vunpack.c.l.b16 %v938
  %v5109 = vunpack.c.h.b16 %v938
  %v5110 = vunpack.c.l.b16 %v939
  %v5111 = vunpack.c.h.b16 %v939
  %v5112 = vunpack.c.l.b16 %v940
  %v5113 = vunpack.c.h.b16 %v940
  %v5114 = vunpack.c.l.b16 %v941
  %v5115 = vunpack.c.h.b16 %v941
  %v5116 = vunpack.c.l.b16 %v942
  %v5117 = vunpack.c.h.b16 %v942
  %v5118 = vunpack.c.l.b16 %v943
  %v5119 = vunpack.c.h.b16 %v943
  %v5120 = vunpack.c.l.b16 %v944
  %v5121 = vunpack.c.h.b16 %v944
  %v5122 = vunpack.c.l.b16 %v945
  %v5123 = vunpack.c.h.b16 %v945
  %v5124 = vunpack.c.l.b16 %v946
  %v5125 = vunpack.c.h.b16 %v946
  %v5126 = vunpack.c.l.b16 %v947
  %v5127 = vunpack.c.h.b16 %v947
  %v5128 = vunpack.c.l.b16 %v948
  %v5129 = vunpack.c.h.b16 %v948
  %v5130 = vunpack.c.l.b16 %v949
  %v5131 = vunpack.c.h.b16 %v949
  %v5132 = vunpack.c.l.b16 %v950
  %v5133 = vunpack.c.h.b16 %v950
  %v5134 = vunpack.c.l.b16 %v951
  %v5135 = vunpack.c.h.b16 %v951
  %v5136 = vunpack.c.l.b16 %v952
  %v5137 = vunpack.c.h.b16 %v952
  %v5138 = vunpack.c.l.b16 %v953
  %v5139 = vunpack.c.h.b16 %v953
  %v5140 = vunpack.c.l.b16 %v954
  %v5141 = vunpack.c.h.b16 %v954
  %v5142 = vunpack.c.l.b16 %v955
  %v5143 = vunpack.c.h.b16 %v955
  %v5144 = vunpack.c.l.b16 %v956
  %v5145 = vunpack.c.h.b16 %v956
  %v5146 = vunpack.c.l.b16 %v957
  %v5147 = vunpack.c.h.b16 %v957
  %v5148 = vunpack.c.l.b16 %v958
  %v5149 = vunpack.c.h.b16 %v958
  %v5150 = vunpack.c.l.b16 %v959
  %v5151 = vunpack.c.h.b16 %v959
  %v5152 = vunpack.c.l.b16 %v960
  %v5153 = vunpack.c.h.b16 %v960
  %v5154 = vunpack.c.l.b16 %v961
  %v5155 = vunpack.c.h.b16 %v961
  %v5156 = vunpack.c.l.b16 %v962
  %v5157 = vunpack.c.h.b16 %v962
  %v5158 = vunpack.c.l.b16 %v963
  %v5159 = vunpack.c.h.b16 %v963
  %v5160 = vunpack.c.l.b16 %v964
  %v5161 = vunpack.c.h.b16 %v964
  %v5162 = vunpack.c.l.b16 %v965
  %v5163 = vunpack.c.h.b16 %v965
  %v5164 = vunpack.c.l.b16 %v966
  %v5165 = vunpack.c.h.b16 %v966
  %v5166 = vunpack.c.l.b16 %v967
  %v5167 = vunpack.c.h.b16 %v967
  %v5168 = vunpack.c.l.b16 %v968
  %v5169 = vunpack.c.h.b16 %v968
  %v5170 = vunpack.c.l.b16 %v969
  %v5171 = vunpack.c.h.b16 %v969
  %v5172 = vunpack.c.l.b16 %v970
  %v5173 = vunpack.c.h.b16 %v970
  %v5174 = vunpack.c.l.b16 %v971
  %v5175 = vunpack.c.h.b16 %v971
  %v5176 = vunpack.c.l.b16 %v972
  %v5177 = vunpack.c.h.b16 %v972
  %v5178 = vunpack.c.l.b16 %v973
  %v5179 = vunpack.c.h.b16 %v973
  %v5180 = vunpack.c.l.b16 %v974
  %v5181 = vunpack.c.h.b16 %v974
  %v5182 = vunpack.c.l.b16 %v975
  %v5183 = vunpack.c.h.b16 %v975
  %v5184 = vunpack.c.l.b16 %v976
  %v5185 = vunpack.c.h.b16 %v976
  %v5186 = vunpack.c.l.b16 %v977
  %v5187 = vunpack.c.h.b16 %v977
  %v5188 = vunpack.c.l.b16 %v978
  %v5189 = vunpack.c.h.b16 %v978
  %v5190 = vunpack.c.l.b16 %v979
  %v5191 = vunpack.c.h.b16 %v979
  %v5192 = vunpack.c.l.b16 %v980
  %v5193 = vunpack.c.h.b16 %v980
  %v5194 = vunpack.c.l.b16 %v981
  %v5195 = vunpack.c.h.b16 %v981
  %v5196 = vunpack.c.l.b16 %v982
  %v5197 = vunpack.c.h.b16 %v982
  %v5198 = vunpack.c.l.b16 %v983
  %v5199 = vunpack.c.h.b16 %v983
  %v5200 = vunpack.c.l.b16 %v984
  %v5201 = vunpack.c.h.b16 %v984
  %v5202 = vunpack.c.l.b16 %v985
  %v5203 = vunpack.c.h.b16 %v985
  %v5204 = vunpack.c.l.b16 %v986
  %v5205 = vunpack.c.h.b16 %v986
  %v5206 = vunpack.c.l.b16 %v987
  %v5207 = vunpack.c.h.b16 %v987
  %v5208 = vunpack.c.l.b16 %v988
  %v5209 = vunpack.c.h.b16 %v988
  %v5210 = vunpack.c.l.b16 %v989
  %v5211 = vunpack.c.h.b16 %v989
  %v5212 = vunpack.c.l.b16 %v990
  %v5213 = vunpack.c.h.b16 %v990
  %v5214 = vunpack.c.l.b16 %v991
  %v5215 = vunpack.c.h.b16 %v991
  %v5216 = vunpack.c.l.b16 %v992
  %v5217 = vunpack.c.h.b16 %v992
  %v5218 = vunpack.c.l.b16 %v993
  %v5219 = vunpack.c.h.b16 %v993
  %v5220 = vunpack.c.l.b16 %v994
  %v5221 = vunpack.c.h.b16 %v994
  %v5222 = vunpack.c.l.b16 %v995
  %v5223 = vunpack.c.h.b16 %v995
  %v5224 = vunpack.c.l.b16 %v996
  %v5225 = vunpack.c.h.b16 %v996
  %v5226 = vunpack.c.l.b16 %v997
  %v5227 = vunpack.c.h.b16 %v997
  %v5228 = vunpack.c.l.b16 %v998
  %v5229 = vunpack.c.h.b16 %v998
  %v5230 = vunpack.c.l.b16 %v999
  %v5231 = vunpack.c.h.b16 %v999
  %v5232 = vunpack.c.l.b16 %v1000
  %v5233 = vunpack.c.h.b16 %v1000
  %v5234 = vunpack.c.l.b16 %v1001
  %v5235 = vunpack.c.h.b16 %v1001
  %v5236 = vunpack.c.l.b16 %v1002
  %v5237 = vunpack.c.h.b16 %v1002
  %v5238 = vunpack.c.l.b16 %v1003
  %v5239 = vunpack.c.h.b16 %v1003
  %v5240 = vunpack.c.l.b16 %v1004
  %v5241 = vunpack.c.h.b16 %v1004
  %v5242 = vunpack.c.l.b16 %v1005
  %v5243 = vunpack.c.h.b16 %v1005
  %v5244 = vunpack.c.l.b16 %v1006
  %v5245 = vunpack.c.h.b16 %v1006
  %v5246 = vunpack.c.l.b16 %v1007
  %v5247 = vunpack.c.h.b16 %v1007
  %v5248 = vunpack.c.l.b16 %v1008
  %v5249 = vunpack.c.h.b16 %v1008
  %v5250 = vunpack.c.l.b16 %v1009
  %v5251 = vunpack.c.h.b16 %v1009
  %v5252 = vunpack.c.l.b16 %v1010
  %v5253 = vunpack.c.h.b16 %v1010
  %v5254 = vunpack.c.l.b16 %v1011
  %v5255 = vunpack.c.h.b16 %v1011
  %v5256 = vunpack.c.l.b16 %v1012
  %v5257 = vunpack.c.h.b16 %v1012
  %v5258 = vunpack.c.l.b16 %v1013
  %v5259 = vunpack.c.h.b16 %v1013
  %v5260 = vunpack.c.l.b16 %v1014
  %v5261 = vunpack.c.h.b16 %v1014
  %v5262 = vunpack.c.l.b16 %v1015
  %v5263 = vunpack.c.h.b16 %v1015
  %v5264 = vunpack.c.l.b16 %v1016
  %v5265 = vunpack.c.h.b16 %v1016
  %v5266 = vunpack.c.l.b16 %v1017
  %v5267 = vunpack.c.h.b16 %v1017
  %v5268 = vunpack.c.l.b16 %v1018
  %v5269 = vunpack.c.h.b16 %v1018
  %v5270 = vunpack.c.l.b16 %v1019
  %v5271 = vunpack.c.h.b16 %v1019
  %v5272 = vunpack.c.l.b16 %v1020
  %v5273 = vunpack.c.h.b16 %v1020
  %v5274 = vunpack.c.l.b16 %v1021
  %v5275 = vunpack.c.h.b16 %v1021
  %v5276 = vunpack.c.l.b16 %v1022
  %v5277 = vunpack.c.h.b16 %v1022
  %v5278 = vunpack.c.l.b16 %v1023
  %v5279 = vunpack.c.h.b16 %v1023
  %v5280 = vunpack.c.l.b16 %v1024
  %v5281 = vunpack.c.h.b16 %v1024
  %v5282 = vunpack.c.l.b16 %v1025
  %v5283 = vunpack.c.h.b16 %v1025
  %v5284 = vunpack.c.l.b16 %v1026
  %v5285 = vunpack.c.h.b16 %v1026
  %v5286 = vunpack.c.l.b16 %v1027
  %v5287 = vunpack.c.h.b16 %v1027
  %v5288 = vunpack.c.l.b16 %v1028
  %v5289 = vunpack.c.h.b16 %v1028
  %v5290 = vunpack.c.l.b16 %v1029
  %v5291 = vunpack.c.h.b16 %v1029
  %v5292 = vunpack.c.l.b16 %v1030
  %v5293 = vunpack.c.h.b16 %v1030
  %v5294 = vunpack.c.l.b16 %v1031
  %v5295 = vunpack.c.h.b16 %v1031
  %v5296 = vunpack.c.l.b16 %v1032
  %v5297 = vunpack.c.h.b16 %v1032
  %v5298 = vunpack.c.l.b16 %v1033
  %v5299 = vunpack.c.h.b16 %v1033
  %v5300 = vunpack.c.l.b16 %v1034
  %v5301 = vunpack.c.h.b16 %v1034
  %v5302 = vunpack.c.l.b16 %v1035
  %v5303 = vunpack.c.h.b16 %v1035
  %v5304 = vunpack.c.l.b16 %v1036
  %v5305 = vunpack.c.h.b16 %v1036
  %v5306 = vunpack.c.l.b16 %v1037
  %v5307 = vunpack.c.h.b16 %v1037
  %v5308 = vunpack.c.l.b16 %v1038
  %v5309 = vunpack.c.h.b16 %v1038
  %v5310 = vunpack.c.l.b16 %v1039
  %v5311 = vunpack.c.h.b16 %v1039
  %v5312 = vunpack.c.l.b16 %v1040
  %v5313 = vunpack.c.h.b16 %v1040
  %v5314 = vunpack.c.l.b16 %v1041
  %v5315 = vunpack.c.h.b16 %v1041
  %v5316 = vunpack.c.l.b16 %v1042
  %v5317 = vunpack.c.h.b16 %v1042
  %v5318 = vunpack.c.l.b16 %v1043
  %v5319 = vunpack.c.h.b16 %v1043
  %v5320 = vunpack.c.l.b16 %v1044
  %v5321 = vunpack.c.h.b16 %v1044
  %v5322 = vunpack.c.l.b16 %v1045
  %v5323 = vunpack.c.h.b16 %v1045
  %v5324 = vunpack.c.l.b16 %v1046
  %v5325 = vunpack.c.h.b16 %v1046
  %v5326 = vunpack.c.l.b16 %v1047
  %v5327 = vunpack.c.h.b16 %v1047
  %v5328 = vunpack.c.l.b16 %v1048
  %v5329 = vunpack.c.h.b16 %v1048
  %v5330 = vunpack.c.l.b16 %v1049
  %v5331 = vunpack.c.h.b16 %v1049
  %v5332 = vunpack.c.l.b16 %v1050
  %v5333 = vunpack.c.h.b16 %v1050
  %v5334 = vunpack.c.l.b16 %v1051
  %v5335 = vunpack.c.h.b16 %v1051
  %v5336 = vunpack.c.l.b16 %v1052
  %v5337 = vunpack.c.h.b16 %v1052
  %v5338 = vunpack.c.l.b16 %v1053
  %v5339 = vunpack.c.h.b16 %v1053
  %v5340 = vunpack.c.l.b16 %v1054
  %v5341 = vunpack.c.h.b16 %v1054
  %v5342 = vunpack.c.l.b16 %v1055
  %v5343 = vunpack.c.h.b16 %v1055
  %v5344 = vunpack.c.l.b16 %v1056
  %v5345 = vunpack.c.h.b16 %v1056
  %v5346 = vunpack.c.l.b16 %v1057
  %v5347 = vunpack.c.h.b16 %v1057
  %v5348 = vunpack.c.l.b16 %v1058
  %v5349 = vunpack.c.h.b16 %v1058
  %v5350 = vunpack.c.l.b16 %v1059
  %v5351 = vunpack.c.h.b16 %v1059
  %v5352 = vunpack.c.l.b16 %v1060
  %v5353 = vunpack.c.h.b16 %v1060
  %v5354 = vunpack.c.l.b16 %v1061
  %v5355 = vunpack.c.h.b16 %v1061
  %v5356 = vunpack.c.l.b16 %v1062
  %v5357 = vunpack.c.h.b16 %v1062
  %v5358 = vunpack.c.l.b16 %v1063
  %v5359 = vunpack.c.h.b16 %v1063
  %v5360 = vunpack.c.l.b16 %v1064
  %v5361 = vunpack.c.h.b16 %v1064
  %v5362 = vunpack.c.l.b16 %v1065
  %v5363 = vunpack.c.h.b16 %v1065
  %v5364 = vunpack.c.l.b16 %v1066
  %v5365 = vunpack.c.h.b16 %v1066
  %v5366 = vunpack.c.l.b16 %v1067
  %v5367 = vunpack.c.h.b16 %v1067
  %v5368 = vunpack.c.l.b16 %v1068
  %v5369 = vunpack.c.h.b16 %v1068
  %v5370 = vunpack.c.l.b16 %v1069
  %v5371 = vunpack.c.h.b16 %v1069
  %v5372 = vunpack.c.l.b16 %v1070
  %v5373 = vunpack.c.h.b16 %v1070
  %v5374 = vunpack.c.l.b16 %v1071
  %v5375 = vunpack.c.h.b16 %v1071
  %v5376 = vunpack.c.l.b16 %v1072
  %v5377 = vunpack.c.h.b16 %v1072
  %v5378 = vunpack.c.l.b16 %v1073
  %v5379 = vunpack.c.h.b16 %v1073
  %v5380 = vunpack.c.l.b16 %v1074
  %v5381 = vunpack.c.h.b16 %v1074
  %v5382 = vunpack.c.l.b16 %v1075
  %v5383 = vunpack.c.h.b16 %v1075
  %v5384 = vunpack.c.l.b16 %v1076
  %v5385 = vunpack.c.h.b16 %v1076
  %v5386 = vunpack.c.l.b16 %v1077
  %v5387 = vunpack.c.h.b16 %v1077
  %v5388 = vunpack.c.l.b16 %v1078
  %v5389 = vunpack.c.h.b16 %v1078
  %v5390 = vunpack.c.l.b16 %v1079
  %v5391 = vunpack.c.h.b16 %v1079
  %v5392 = vunpack.c.l.b16 %v1080
  %v5393 = vunpack.c.h.b16 %v1080
  %v5394 = vunpack.c.l.b16 %v1081
  %v5395 = vunpack.c.h.b16 %v1081
  %v5396 = vunpack.c.l.b16 %v1082
  %v5397 = vunpack.c.h.b16 %v1082
  %v5398 = vunpack.c.l.b16 %v1083
  %v5399 = vunpack.c.h.b16 %v1083
  %v5400 = vunpack.c.l.b16 %v1084
  %v5401 = vunpack.c.h.b16 %v1084
  %v5402 = vunpack.c.l.b16 %v1085
  %v5403 = vunpack.c.h.b16 %v1085
  %v5404 = vunpack.c.l.b16 %v1086
  %v5405 = vunpack.c.h.b16 %v1086
  %v5406 = vunpack.c.l.b16 %v1087
  %v5407 = vunpack.c.h.b16 %v1087
  %v5408 = vunpack.c.l.b16 %v1088
  %v5409 = vunpack.c.h.b16 %v1088
  %v5410 = vunpack.c.l.b16 %v1089
  %v5411 = vunpack.c.h.b16 %v1089
  %v5412 = vunpack.c.l.b16 %v1090
  %v5413 = vunpack.c.h.b16 %v1090
  %v5414 = vunpack.c.l.b16 %v1091
  %v5415 = vunpack.c.h.b16 %v1091
  %v5416 = vunpack.c.l.b16 %v1092
  %v5417 = vunpack.c.h.b16 %v1092
  %v5418 = vunpack.c.l.b16 %v1093
  %v5419 = vunpack.c.h.b16 %v1093
  %v5420 = vunpack.c.l.b16 %v1094
  %v5421 = vunpack.c.h.b16 %v1094
  %v5422 = vunpack.c.l.b16 %v1095
  %v5423 = vunpack.c.h.b16 %v1095
  %v5424 = vunpack.c.l.b16 %v1096
  %v5425 = vunpack.c.h.b16 %v1096
  %v5426 = vunpack.c.l.b16 %v1097
  %v5427 = vunpack.c.h.b16 %v1097
  %v5428 = vunpack.c.l.b16 %v1098
  %v5429 = vunpack.c.h.b16 %v1098
  %v5430 = vunpack.c.l.b16 %v1099
  %v5431 = vunpack.c.h.b16 %v1099
  %v5432 = vunpack.c.l.b16 %v1100
  %v5433 = vunpack.c.h.b16 %v1100
  %v5434 = vunpack.c.l.b16 %v1101
  %v5435 = vunpack.c.h.b16 %v1101
  %v5436 = vunpack.c.l.b16 %v1102
  %v5437 = vunpack.c.h.b16 %v1102
  %v5438 = vunpack.c.l.b16 %v1103
  %v5439 = vunpack.c.h.b16 %v1103
  %v5440 = vunpack.c.l.b16 %v1104
  %v5441 = vunpack.c.h.b16 %v1104
  %v5442 = vunpack.c.l.b16 %v1105
  %v5443 = vunpack.c.h.b16 %v1105
  %v5444 = vunpack.c.l.b16 %v1106
  %v5445 = vunpack.c.h.b16 %v1106
  %v5446 = vunpack.c.l.b16 %v1107
  %v5447 = vunpack.c.h.b16 %v1107
  %v5448 = vunpack.c.l.b16 %v1108
  %v5449 = vunpack.c.h.b16 %v1108
  %v5450 = vunpack.c.l.b16 %v1109
  %v5451 = vunpack.c.h.b16 %v1109
  %v5452 = vunpack.c.l.b16 %v1110
  %v5453 = vunpack.c.h.b16 %v1110
  %v5454 = vunpack.c.l.b16 %v1111
  %v5455 = vunpack.c.h.b16 %v1111
  %v5456 = vunpack.c.l.b16 %v1112
  %v5457 = vunpack.c.h.b16 %v1112
  %v5458 = vunpack.c.l.b16 %v1113
  %v5459 = vunpack.c.h.b16 %v1113
  %v5460 = vunpack.c.l.b16 %v1114
  %v5461 = vunpack.c.h.b16 %v1114
  %v5462 = vunpack.c.l.b16 %v1115
  %v5463 = vunpack.c.h.b16 %v1115
  %v5464 = vunpack.c.l.b16 %v1116
  %v5465 = vunpack.c.h.b16 %v1116
  %v5466 = vunpack.c.l.b16 %v1117
  %v5467 = vunpack.c.h.b16 %v1117
  %v5468 = vunpack.c.l.b16 %v1118
  %v5469 = vunpack.c.h.b16 %v1118
  %v5470 = vunpack.c.l.b16 %v1119
  %v5471 = vunpack.c.h.b16 %v1119
  %v5472 = vunpack.c.l.b16 %v1120
  %v5473 = vunpack.c.h.b16 %v1120
  %v5474 = vunpack.c.l.b16 %v1121
  %v5475 = vunpack.c.h.b16 %v1121
  %v5476 = vunpack.c.l.b16 %v1122
  %v5477 = vunpack.c.h.b16 %v1122
  %v5478 = vunpack.c.l.b16 %v1123
  %v5479 = vunpack.c.h.b16 %v1123
  %v5480 = vunpack.c.l.b16 %v1124
  %v5481 = vunpack.c.h.b16 %v1124
  %v5482 = vunpack.c.l.b16 %v1125
  %v5483 = vunpack.c.h.b16 %v1125
  %v5484 = vunpack.c.l.b16 %v1126
  %v5485 = vunpack.c.h.b16 %v1126
  %v5486 = vunpack.c.l.b16 %v1127
  %v5487 = vunpack.c.h.b16 %v1127
  %v5488 = vunpack.c.l.b16 %v1128
  %v5489 = vunpack.c.h.b16 %v1128
  %v5490 = vunpack.c.l.b16 %v1129
  %v5491 = vunpack.c.h.b16 %v1129
  %v5492 = vunpack.c.l.b16 %v1130
  %v5493 = vunpack.c.h.b16 %v1130
  %v5494 = vunpack.c.l.b16 %v1131
  %v5495 = vunpack.c.h.b16 %v1131
  %v5496 = vunpack.c.l.b16 %v1132
  %v5497 = vunpack.c.h.b16 %v1132
  %v5498 = vunpack.c.l.b16 %v1133
  %v5499 = vunpack.c.h.b16 %v1133
  %v5500 = vunpack.c.l.b16 %v1134
  %v5501 = vunpack.c.h.b16 %v1134
  %v5502 = vunpack.c.l.b16 %v1135
  %v5503 = vunpack.c.h.b16 %v1135
  %v5504 = vunpack.c.l.b16 %v1136
  %v5505 = vunpack.c.h.b16 %v1136
  %v5506 = vunpack.c.l.b16 %v1137
  %v5507 = vunpack.c.h.b16 %v1137
  %v5508 = vunpack.c.l.b16 %v1138
  %v5509 = vunpack.c.h.b16 %v1138
  %v5510 = vunpack.c.l.b16 %v1139
  %v5511 = vunpack.c.h.b16 %v1139
  %v5512 = vunpack.c.l.b16 %v1140
  %v5513 = vunpack.c.h.b16 %v1140
  %v5514 = vunpack.c.l.b16 %v1141
  %v5515 = vunpack.c.h.b16 %v1141
  %v5516 = vunpack.c.l.b16 %v1142
  %v5517 = vunpack.c.h.b16 %v1142
  %v5518 = vunpack.c.l.b16 %v1143
  %v5519 = vunpack.c.h.b16 %v1143
  %v5520 = vunpack.c.l.b16 %v1144
  %v5521 = vunpack.c.h.b16 %v1144
  %v5522 = vunpack.c.l.b16 %v1145
  %v5523 = vunpack.c.h.b16 %v1145
  %v5524 = vunpack.c.l.b16 %v1146
  %v5525 = vunpack.c.h.b16 %v1146
  %v5526 = vunpack.c.l.b16 %v1147
  %v5527 = vunpack.c.h.b16 %v1147
  %v5528 = vunpack.c.l.b16 %v1148
  %v5529 = vunpack.c.h.b16 %v1148
  %v5530 = vunpack.c.l.b16 %v1149
  %v5531 = vunpack.c.h.b16 %v1149
  %v5532 = vunpack.c.l.b16 %v1150
  %v5533 = vunpack.c.h.b16 %v1150
  %v5534 = vunpack.c.l.b16 %v1151
  %v5535 = vunpack.c.h.b16 %v1151
  %v5536 = vunpack.c.l.b16 %v1152
  %v5537 = vunpack.c.h.b16 %v1152
  %v5538 = vunpack.c.l.b16 %v1153
  %v5539 = vunpack.c.h.b16 %v1153
  %v5540 = vunpack.c.l.b16 %v1154
  %v5541 = vunpack.c.h.b16 %v1154
  %v5542 = vunpack.c.l.b16 %v1155
  %v5543 = vunpack.c.h.b16 %v1155
  %v5544 = vunpack.c.l.b16 %v1156
  %v5545 = vunpack.c.h.b16 %v1156
  %v5546 = vunpack.c.l.b16 %v1157
  %v5547 = vunpack.c.h.b16 %v1157
  %v5548 = vunpack.c.l.b16 %v1158
  %v5549 = vunpack.c.h.b16 %v1158
  %v5550 = vunpack.c.l.b16 %v1159
  %v5551 = vunpack.c.h.b16 %v1159
  %v5552 = vunpack.c.l.b16 %v1160
  %v5553 = vunpack.c.h.b16 %v1160
  %v5554 = vunpack.c.l.b16 %v1161
  %v5555 = vunpack.c.h.b16 %v1161
  %v5556 = vunpack.c.l.b16 %v1162
  %v5557 = vunpack.c.h.b16 %v1162
  %v5558 = vunpack.c.l.b16 %v1163
  %v5559 = vunpack.c.h.b16 %v1163
  %v5560 = vunpack.c.l.b16 %v1164
  %v5561 = vunpack.c.h.b16 %v1164
  %v5562 = vunpack.c.l.b16 %v1165
  %v5563 = vunpack.c.h.b16 %v1165
  %v5564 = vunpack.c.l.b16 %v1166
  %v5565 = vunpack.c.h.b16 %v1166
  %v5566 = vunpack.c.l.b16 %v1167
  %v5567 = vunpack.c.h.b16 %v1167
  %v5568 = vunpack.c.l.b16 %v1168
  %v5569 = vunpack.c.h.b16 %v1168
  %v5570 = vunpack.c.l.b16 %v1169
  %v5571 = vunpack.c.h.b16 %v1169
  %v5572 = vunpack.c.l.b16 %v1170
  %v5573 = vunpack.c.h.b16 %v1170
  %v5574 = vunpack.c.l.b16 %v1171
  %v5575 = vunpack.c.h.b16 %v1171
  %v5576 = vunpack.c.l.b16 %v1172
  %v5577 = vunpack.c.h.b16 %v1172
  %v5578 = vunpack.c.l.b16 %v1173
  %v5579 = vunpack.c.h.b16 %v1173
  %v5580 = vunpack.c.l.b16 %v1174
  %v5581 = vunpack.c.h.b16 %v1174
  %v5582 = vunpack.c.l.b16 %v1175
  %v5583 = vunpack.c.h.b16 %v1175
  %v5584 = vunpack.c.l.b16 %v1176
  %v5585 = vunpack.c.h.b16 %v1176
  %v5586 = vunpack.c.l.b16 %v1177
  %v5587 = vunpack.c.h.b16 %v1177
  %v5588 = vunpack.c.l.b16 %v1178
  %v5589 = vunpack.c.h.b16 %v1178
  %v5590 = vunpack.c.l.b16 %v1179
  %v5591 = vunpack.c.h.b16 %v1179
  %v5592 = vunpack.c.l.b16 %v1180
  %v5593 = vunpack.c.h.b16 %v1180
  %v5594 = vunpack.c.l.b16 %v1181
  %v5595 = vunpack.c.h.b16 %v1181
  %v5596 = vunpack.c.l.b16 %v1182
  %v5597 = vunpack.c.h.b16 %v1182
  %v5598 = vunpack.c.l.b16 %v1183
  %v5599 = vunpack.c.h.b16 %v1183
  %v5600 = vunpack.c.l.b16 %v1184
  %v5601 = vunpack.c.h.b16 %v1184
  %v5602 = vunpack.c.l.b16 %v1185
  %v5603 = vunpack.c.h.b16 %v1185
  %v5604 = vunpack.c.l.b16 %v1186
  %v5605 = vunpack.c.h.b16 %v1186
  %v5606 = vunpack.c.l.b16 %v1187
  %v5607 = vunpack.c.h.b16 %v1187
  %v5608 = vunpack.c.l.b16 %v1188
  %v5609 = vunpack.c.h.b16 %v1188
  %v5610 = vunpack.c.l.b16 %v1189
  %v5611 = vunpack.c.h.b16 %v1189
  %v5612 = vunpack.c.l.b16 %v1190
  %v5613 = vunpack.c.h.b16 %v1190
  %v5614 = vunpack.c.l.b16 %v1191
  %v5615 = vunpack.c.h.b16 %v1191
  %v5616 = vunpack.c.l.b16 %v1192
  %v5617 = vunpack.c.h.b16 %v1192
  %v5618 = vunpack.c.l.b16 %v1193
  %v5619 = vunpack.c.h.b16 %v1193
  %v5620 = vunpack.c.l.b16 %v1194
  %v5621 = vunpack.c.h.b16 %v1194
  %v5622 = vunpack.c.l.b16 %v1195
  %v5623 = vunpack.c.h.b16 %v1195
  %v5624 = vunpack.c.l.b16 %v1196
  %v5625 = vunpack.c.h.b16 %v1196
  %v5626 = vunpack.c.l.b16 %v1197
  %v5627 = vunpack.c.h.b16 %v1197
  %v5628 = vunpack.c.l.b16 %v1198
  %v5629 = vunpack.c.h.b16 %v1198
  %v5630 = vunpack.c.l.b16 %v1199
  %v5631 = vunpack.c.h.b16 %v1199
  %v5632 = vunpack.c.l.b16 %v1200
  %v5633 = vunpack.c.h.b16 %v1200
  %v5634 = vunpack.c.l.b16 %v1201
  %v5635 = vunpack.c.h.b16 %v1201
  %v5636 = vunpack.c.l.b16 %v1202
  %v5637 = vunpack.c.h.b16 %v1202
  %v5638 = vunpack.c.l.b16 %v1203
  %v5639 = vunpack.c.h.b16 %v1203
  %v5640 = vunpack.c.l.b16 %v1204
  %v5641 = vunpack.c.h.b16 %v1204
  %v5642 = vunpack.c.l.b16 %v1205
  %v5643 = vunpack.c.h.b16 %v1205
  %v5644 = vunpack.c.l.b16 %v1206
  %v5645 = vunpack.c.h.b16 %v1206
  %v5646 = vunpack.c.l.b16 %v1207
  %v5647 = vunpack.c.h.b16 %v1207
  %v5648 = vunpack.c.l.b16 %v1208
  %v5649 = vunpack.c.h.b16 %v1208
  %v5650 = vunpack.c.l.b16 %v1209
  %v5651 = vunpack.c.h.b16 %v1209
  %v5652 = vunpack.c.l.b16 %v1210
  %v5653 = vunpack.c.h.b16 %v1210
  %v5654 = vunpack.c.l.b16 %v1211
  %v5655 = vunpack.c.h.b16 %v1211
  %v5656 = vunpack.c.l.b16 %v1212
  %v5657 = vunpack.c.h.b16 %v1212
  %v5658 = vunpack.c.l.b16 %v1213
  %v5659 = vunpack.c.h.b16 %v1213
  %v5660 = vunpack.c.l.b16 %v1214
  %v5661 = vunpack.c.h.b16 %v1214
  %v5662 = vunpack.c.l.b16 %v1215
  %v5663 = vunpack.c.h.b16 %v1215
  %v5664 = vunpack.c.l.b16 %v1216
  %v5665 = vunpack.c.h.b16 %v1216
  %v5666 = vunpack.c.l.b16 %v1217
  %v5667 = vunpack.c.h.b16 %v1217
  %v5668 = vunpack.c.l.b16 %v1218
  %v5669 = vunpack.c.h.b16 %v1218
  %v5670 = vunpack.c.l.b16 %v1219
  %v5671 = vunpack.c.h.b16 %v1219
  %v5672 = vunpack.c.l.b16 %v1220
  %v5673 = vunpack.c.h.b16 %v1220
  %v5674 = vunpack.c.l.b16 %v1221
  %v5675 = vunpack.c.h.b16 %v1221
  %v5676 = vunpack.c.l.b16 %v1222
  %v5677 = vunpack.c.h.b16 %v1222
  %v5678 = vunpack.c.l.b16 %v1223
  %v5679 = vunpack.c.h.b16 %v1223
  %v5680 = vunpack.c.l.b16 %v1224
  %v5681 = vunpack.c.h.b16 %v1224
  %v5682 = vunpack.c.l.b16 %v1225
  %v5683 = vunpack.c.h.b16 %v1225
  %v5684 = vunpack.c.l.b16 %v1226
  %v5685 = vunpack.c.h.b16 %v1226
  %v5686 = vunpack.c.l.b16 %v1227
  %v5687 = vunpack.c.h.b16 %v1227
  %v5688 = vunpack.c.l.b16 %v1228
  %v5689 = vunpack.c.h.b16 %v1228
  %v5690 = vunpack.c.l.b16 %v1229
  %v5691 = vunpack.c.h.b16 %v1229
  %v5692 = vunpack.c.l.b16 %v1230
  %v5693 = vunpack.c.h.b16 %v1230
  %v5694 = vunpack.c.l.b16 %v1231
  %v5695 = vunpack.c.h.b16 %v1231
  %v5696 = vunpack.c.l.b16 %v1232
  %v5697 = vunpack.c.h.b16 %v1232
  %v5698 = vunpack.c.l.b16 %v1233
  %v5699 = vunpack.c.h.b16 %v1233
  %v5700 = vunpack.c.l.b16 %v1234
  %v5701 = vunpack.c.h.b16 %v1234
  %v5702 = vunpack.c.l.b16 %v1235
  %v5703 = vunpack.c.h.b16 %v1235
  %v5704 = vunpack.c.l.b16 %v1236
  %v5705 = vunpack.c.h.b16 %v1236
  %v5706 = vunpack.c.l.b16 %v1237
  %v5707 = vunpack.c.h.b16 %v1237
  %v5708 = vunpack.c.l.b16 %v1238
  %v5709 = vunpack.c.h.b16 %v1238
  %v5710 = vunpack.c.l.b16 %v1239
  %v5711 = vunpack.c.h.b16 %v1239
  %v5712 = vunpack.c.l.b16 %v1240
  %v5713 = vunpack.c.h.b16 %v1240
  %v5714 = vunpack.c.l.b16 %v1241
  %v5715 = vunpack.c.h.b16 %v1241
  %v5716 = vunpack.c.l.b16 %v1242
  %v5717 = vunpack.c.h.b16 %v1242
  %v5718 = vunpack.c.l.b16 %v1243
  %v5719 = vunpack.c.h.b16 %v1243
  %v5720 = vunpack.c.l.b16 %v1244
  %v5721 = vunpack.c.h.b16 %v1244
  %v5722 = vunpack.c.l.b16 %v1245
  %v5723 = vunpack.c.h.b16 %v1245
  %v5724 = vunpack.c.l.b16 %v1246
  %v5725 = vunpack.c.h.b16 %v1246
  %v5726 = vunpack.c.l.b16 %v1247
  %v5727 = vunpack.c.h.b16 %v1247
  %v5728 = vunpack.c.l.b16 %v1248
  %v5729 = vunpack.c.h.b16 %v1248
  %v5730 = vunpack.c.l.b16 %v1249
  %v5731 = vunpack.c.h.b16 %v1249
  %v5732 = vunpack.c.l.b16 %v1250
  %v5733 = vunpack.c.h.b16 %v1250
  %v5734 = vunpack.c.l.b16 %v1251
  %v5735 = vunpack.c.h.b16 %v1251
  %v5736 = vunpack.c.l.b16 %v1252
  %v5737 = vunpack.c.h.b16 %v1252
  %v5738 = vunpack.c.l.b16 %v1253
  %v5739 = vunpack.c.h.b16 %v1253
  %v5740 = vunpack.c.l.b16 %v1254
  %v5741 = vunpack.c.h.b16 %v1254
  %v5742 = vunpack.c.l.b16 %v1255
  %v5743 = vunpack.c.h.b16 %v1255
  %v5744 = vunpack.c.l.b16 %v1256
  %v5745 = vunpack.c.h.b16 %v1256
  %v5746 = vunpack.c.l.b16 %v1257
  %v5747 = vunpack.c.h.b16 %v1257
  %v5748 = vunpack.c.l.b16 %v1258
  %v5749 = vunpack.c.h.b16 %v1258
  %v5750 = vunpack.c.l.b16 %v1259
  %v5751 = vunpack.c.h.b16 %v1259
  %v5752 = vunpack.c.l.b16 %v1260
  %v5753 = vunpack.c.h.b16 %v1260
  %v5754 = vunpack.c.l.b16 %v1261
  %v5755 = vunpack.c.h.b16 %v1261
  %v5756 = vunpack.c.l.b16 %v1262
  %v5757 = vunpack.c.h.b16 %v1262
  %v5758 = vunpack.c.l.b16 %v1263
  %v5759 = vunpack.c.h.b16 %v1263
  %v5760 = vunpack.c.l.b16 %v1264
  %v5761 = vunpack.c.h.b16 %v1264
  %v5762 = vunpack.c.l.b16 %v1265
  %v5763 = vunpack.c.h.b16 %v1265
  %v5764 = vunpack.c.l.b16 %v1266
  %v5765 = vunpack.c.h.b16 %v1266
  %v5766 = vunpack.c.l.b16 %v1267
  %v5767 = vunpack.c.h.b16 %v1267
  %v5768 = vunpack.c.l.b16 %v1268
  %v5769 = vunpack.c.h.b16 %v1268
  %v5770 = vunpack.c.l.b16 %v1269
  %v5771 = vunpack.c.h.b16 %v1269
  %v5772 = vunpack.c.l.b16 %v1270
  %v5773 = vunpack.c.h.b16 %v1270
  %v5774 = vunpack.c.l.b16 %v1271
  %v5775 = vunpack.c.h.b16 %v1271
  %v5776 = vunpack.c.l.b16 %v1272
  %v5777 = vunpack.c.h.b16 %v1272
  %v5778 = vunpack.c.l.b16 %v1273
  %v5779 = vunpack.c.h.b16 %v1273
  %v5780 = vunpack.c.l.b16 %v1274
  %v5781 = vunpack.c.h.b16 %v1274
  %v5782 = vunpack.c.l.b16 %v1275
  %v5783 = vunpack.c.h.b16 %v1275
  %v5784 = vunpack.c.l.b16 %v1276
  %v5785 = vunpack.c.h.b16 %v1276
  %v5786 = vunpack.c.l.b16 %v1277
  %v5787 = vunpack.c.h.b16 %v1277
  %v5788 = vunpack.c.l.b16 %v1278
  %v5789 = vunpack.c.h.b16 %v1278
  %v5790 = vunpack.c.l.b16 %v1279
  %v5791 = vunpack.c.h.b16 %v1279
  %v5792 = vunpack.c.l.b16 %v1280
  %v5793 = vunpack.c.h.b16 %v1280
  %v5794 = vunpack.c.l.b16 %v1281
  %v5795 = vunpack.c.h.b16 %v1281
  %v5796 = vunpack.c.l.b16 %v1282
  %v5797 = vunpack.c.h.b16 %v1282
  %v5798 = vunpack.c.l.b16 %v1283
  %v5799 = vunpack.c.h.b16 %v1283
  %v5800 = vunpack.c.l.b16 %v1284
  %v5801 = vunpack.c.h.b16 %v1284
  %v5802 = vunpack.c.l.b16 %v1285
  %v5803 = vunpack.c.h.b16 %v1285
  %v5804 = vunpack.c.l.b16 %v1286
  %v5805 = vunpack.c.h.b16 %v1286
  %v5806 = vunpack.c.l.b16 %v1287
  %v5807 = vunpack.c.h.b16 %v1287
  %v5808 = vunpack.c.l.b16 %v1288
  %v5809 = vunpack.c.h.b16 %v1288
  %v5810 = vunpack.c.l.b16 %v1289
  %v5811 = vunpack.c.h.b16 %v1289
  %v5812 = vunpack.c.l.b16 %v1290
  %v5813 = vunpack.c.h.b16 %v1290
  %v5814 = vunpack.c.l.b16 %v1291
  %v5815 = vunpack.c.h.b16 %v1291
  %v5816 = vunpack.c.l.b16 %v1292
  %v5817 = vunpack.c.h.b16 %v1292
  %v5818 = vunpack.c.l.b16 %v1293
  %v5819 = vunpack.c.h.b16 %v1293
  %v5820 = vunpack.c.l.b16 %v1294
  %v5821 = vunpack.c.h.b16 %v1294
  %v5822 = vunpack.c.l.b16 %v1295
  %v5823 = vunpack.c.h.b16 %v1295
  %v5824 = vunpack.c.l.b16 %v1296
  %v5825 = vunpack.c.h.b16 %v1296
  %v5826 = vunpack.c.l.b16 %v1297
  %v5827 = vunpack.c.h.b16 %v1297
  %v5828 = vunpack.c.l.b16 %v1298
  %v5829 = vunpack.c.h.b16 %v1298
  %v5830 = vunpack.c.l.b16 %v1299
  %v5831 = vunpack.c.h.b16 %v1299
  %v5832 = vunpack.c.l.b16 %v1300
  %v5833 = vunpack.c.h.b16 %v1300
  %v5834 = vunpack.c.l.b16 %v1301
  %v5835 = vunpack.c.h.b16 %v1301
  %v5836 = vunpack.c.l.b16 %v1302
  %v5837 = vunpack.c.h.b16 %v1302
  %v5838 = vunpack.c.l.b16 %v1303
  %v5839 = vunpack.c.h.b16 %v1303
  %v5840 = vunpack.c.l.b16 %v1304
  %v5841 = vunpack.c.h.b16 %v1304
  %v5842 = vunpack.c.l.b16 %v1305
  %v5843 = vunpack.c.h.b16 %v1305
  %v5844 = vunpack.c.l.b16 %v1306
  %v5845 = vunpack.c.h.b16 %v1306
  %v5846 = vunpack.c.l.b16 %v1307
  %v5847 = vunpack.c.h.b16 %v1307
  %v5848 = vunpack.c.l.b16 %v1308
  %v5849 = vunpack.c.h.b16 %v1308
  %v5850 = vunpack.c.l.b16 %v1309
  %v5851 = vunpack.c.h.b16 %v1309
  %v5852 = vunpack.c.l.b16 %v1310
  %v5853 = vunpack.c.h.b16 %v1310
  %v5854 = vunpack.c.l.b16 %v1311
  %v5855 = vunpack.c.h.b16 %v1311
  %v5856 = vunpack.c.l.b16 %v1312
  %v5857 = vunpack.c.h.b16 %v1312
  %v5858 = vunpack.c.l.b16 %v1313
  %v5859 = vunpack.c.h.b16 %v1313
  %v5860 = vunpack.c.l.b16 %v1314
  %v5861 = vunpack.c.h.b16 %v1314
  %v5862 = vunpack.c.l.b16 %v1315
  %v5863 = vunpack.c.h.b16 %v1315
  %v5864 = vunpack.c.l.b16 %v1316
  %v5865 = vunpack.c.h.b16 %v1316
  %v5866 = vunpack.c.l.b16 %v1317
  %v5867 = vunpack.c.h.b16 %v1317
  %v5868 = vunpack.c.l.b16 %v1318
  %v5869 = vunpack.c.h.b16 %v1318
  %v5870 = vunpack.c.l.b16 %v1319
  %v5871 = vunpack.c.h.b16 %v1319
  %v5872 = vunpack.c.l.b16 %v1320
  %v5873 = vunpack.c.h.b16 %v1320
  %v5874 = vunpack.c.l.b16 %v1321
  %v5875 = vunpack.c.h.b16 %v1321
  %v5876 = vunpack.c.l.b16 %v1322
  %v5877 = vunpack.c.h.b16 %v1322
  %v5878 = vunpack.c.l.b16 %v1323
  %v5879 = vunpack.c.h.b16 %v1323
  %v5880 = vunpack.c.l.b16 %v1324
  %v5881 = vunpack.c.h.b16 %v1324
  %v5882 = vunpack.c.l.b16 %v1325
  %v5883 = vunpack.c.h.b16 %v1325
  %v5884 = vunpack.c.l.b16 %v1326
  %v5885 = vunpack.c.h.b16 %v1326
  %v5886 = vunpack.c.l.b16 %v1327
  %v5887 = vunpack.c.h.b16 %v1327
  %v5888 = vunpack.c.l.b16 %v1328
  %v5889 = vunpack.c.h.b16 %v1328
  %v5890 = vunpack.c.l.b16 %v1329
  %v5891 = vunpack.c.h.b16 %v1329
  %v5892 = vunpack.c.l.b16 %v1330
  %v5893 = vunpack.c.h.b16 %v1330
  %v5894 = vunpack.c.l.b16 %v1331
  %v5895 = vunpack.c.h.b16 %v1331
  %v5896 = vunpack.c.l.b16 %v1332
  %v5897 = vunpack.c.h.b16 %v1332
  %v5898 = vunpack.c.l.b16 %v1333
  %v5899 = vunpack.c.h.b16 %v1333
  %v5900 = vunpack.c.l.b16 %v1334
  %v5901 = vunpack.c.h.b16 %v1334
  %v5902 = vunpack.c.l.b16 %v1335
  %v5903 = vunpack.c.h.b16 %v1335
  %v5904 = vunpack.c.l.b16 %v1336
  %v5905 = vunpack.c.h.b16 %v1336
  %v5906 = vunpack.c.l.b16 %v1337
  %v5907 = vunpack.c.h.b16 %v1337
  %v5908 = vunpack.c.l.b16 %v1338
  %v5909 = vunpack.c.h.b16 %v1338
  %v5910 = vunpack.c.l.b16 %v1339
  %v5911 = vunpack.c.h.b16 %v1339
  %v5912 = vunpack.c.l.b16 %v1340
  %v5913 = vunpack.c.h.b16 %v1340
  %v5914 = vunpack.c.l.b16 %v1341
  %v5915 = vunpack.c.h.b16 %v1341
  %v5916 = vunpack.c.l.b16 %v1342
  %v5917 = vunpack.c.h.b16 %v1342
  %v5918 = vunpack.c.l.b16 %v1343
  %v5919 = vunpack.c.h.b16 %v1343
  %v5920 = vunpack.c.l.b16 %v1344
  %v5921 = vunpack.c.h.b16 %v1344
  %v5922 = vunpack.c.l.b16 %v1345
  %v5923 = vunpack.c.h.b16 %v1345
  %v5924 = vunpack.c.l.b16 %v1346
  %v5925 = vunpack.c.h.b16 %v1346
  %v5926 = vunpack.c.l.b16 %v1347
  %v5927 = vunpack.c.h.b16 %v1347
  %v5928 = vunpack.c.l.b16 %v1348
  %v5929 = vunpack.c.h.b16 %v1348
  %v5930 = vunpack.c.l.b16 %v1349
  %v5931 = vunpack.c.h.b16 %v1349
  %v5932 = vunpack.c.l.b16 %v1350
  %v5933 = vunpack.c.h.b16 %v1350
  %v5934 = vunpack.c.l.b16 %v1351
  %v5935 = vunpack.c.h.b16 %v1351
  %v5936 = vunpack.c.l.b16 %v1352
  %v5937 = vunpack.c.h.b16 %v1352
  %v5938 = vunpack.c.l.b16 %v1353
  %v5939 = vunpack.c.h.b16 %v1353
  %v5940 = vunpack.c.l.b16 %v1354
  %v5941 = vunpack.c.h.b16 %v1354
  %v5942 = vunpack.c.l.b16 %v1355
  %v5943 = vunpack.c.h.b16 %v1355
  %v5944 = vunpack.c.l.b16 %v1356
  %v5945 = vunpack.c.h.b16 %v1356
  %v5946 = vunpack.c.l.b16 %v1357
  %v5947 = vunpack.c.h.b16 %v1357
  %v5948 = vunpack.c.l.b16 %v1358
  %v5949 = vunpack.c.h.b16 %v1358
  %v5950 = vunpack.c.l.b16 %v1359
  %v5951 = vunpack.c.h.b16 %v1359
  %v5952 = vunpack.c.l.b16 %v1360
  %v5953 = vunpack.c.h.b16 %v1360
  %v5954 = vunpack.c.l.b16 %v1361
  %v5955 = vunpack.c.h.b16 %v1361
  %v5956 = vunpack.c.l.b16 %v1362
  %v5957 = vunpack.c.h.b16 %v1362
  %v5958 = vunpack.c.l.b16 %v1363
  %v5959 = vunpack.c.h.b16 %v1363
  %v5960 = vunpack.c.l.b16 %v1364
  %v5961 = vunpack.c.h.b16 %v1364
  %v5962 = vunpack.c.l.b16 %v1365
  %v5963 = vunpack.c.h.b16 %v1365
  %v5964 = vunpack.c.l.b16 %v1366
  %v5965 = vunpack.c.h.b16 %v1366
  %v5966 = vunpack.c.l.b16 %v1367
  %v5967 = vunpack.c.h.b16 %v1367
  %v5968 = vunpack.c.l.b16 %v1368
  %v5969 = vunpack.c.h.b16 %v1368
  %v5970 = vunpack.c.l.b16 %v1369
  %v5971 = vunpack.c.h.b16 %v1369
  %v5972 = vunpack.c.l.b16 %v1370
  %v5973 = vunpack.c.h.b16 %v1370
  %v5974 = vunpack.c.l.b16 %v1371
  %v5975 = vunpack.c.h.b16 %v1371
  %v5976 = vunpack.c.l.b16 %v1372
  %v5977 = vunpack.c.h.b16 %v1372
  %v5978 = vunpack.c.l.b16 %v1373
  %v5979 = vunpack.c.h.b16 %v1373
  %v5980 = vunpack.c.l.b16 %v1374
  %v5981 = vunpack.c.h.b16 %v1374
  %v5982 = vunpack.c.l.b16 %v1375
  %v5983 = vunpack.c.h.b16 %v1375
  %v5984 = vunpack.c.l.b16 %v1376
  %v5985 = vunpack.c.h.b16 %v1376
  %v5986 = vunpack.c.l.b16 %v1377
  %v5987 = vunpack.c.h.b16 %v1377
  %v5988 = vunpack.c.l.b16 %v1378
  %v5989 = vunpack.c.h.b16 %v1378
  %v5990 = vunpack.c.l.b16 %v1379
  %v5991 = vunpack.c.h.b16 %v1379
  %v5992 = vunpack.c.l.b16 %v1380
  %v5993 = vunpack.c.h.b16 %v1380
  %v5994 = vunpack.c.l.b16 %v1381
  %v5995 = vunpack.c.h.b16 %v1381
  %v5996 = vunpack.c.l.b16 %v1382
  %v5997 = vunpack.c.h.b16 %v1382
  %v5998 = vunpack.c.l.b16 %v1383
  %v5999 = vunpack.c.h.b16 %v1383
  %v6000 = vunpack.c.l.b16 %v1384
  %v6001 = vunpack.c.h.b16 %v1384
  %v6002 = vunpack.c.l.b16 %v1385
  %v6003 = vunpack.c.h.b16 %v1385
  %v6004 = vunpack.c.l.b16 %v1386
  %v6005 = vunpack.c.h.b16 %v1386
  %v6006 = vunpack.c.l.b16 %v1387
  %v6007 = vunpack.c.h.b16 %v1387
  %v6008 = vunpack.c.l.b16 %v1388
  %v6009 = vunpack.c.h.b16 %v1388
  %v6010 = vunpack.c.l.b16 %v1389
  %v6011 = vunpack.c.h.b16 %v1389
  %v6012 = vunpack.c.l.b16 %v1390
  %v6013 = vunpack.c.h.b16 %v1390
  %v6014 = vunpack.c.l.b16 %v1391
  %v6015 = vunpack.c.h.b16 %v1391
  %v6016 = vunpack.c.l.b16 %v1392
  %v6017 = vunpack.c.h.b16 %v1392
  %v6018 = vunpack.c.l.b16 %v1393
  %v6019 = vunpack.c.h.b16 %v1393
  %v6020 = vunpack.c.l.b16 %v1394
  %v6021 = vunpack.c.h.b16 %v1394
  %v6022 = vunpack.c.l.b16 %v1395
  %v6023 = vunpack.c.h.b16 %v1395
  %v6024 = vunpack.c.l.b16 %v1396
  %v6025 = vunpack.c.h.b16 %v1396
  %v6026 = vunpack.c.l.b16 %v1397
  %v6027 = vunpack.c.h.b16 %v1397
  %v6028 = vunpack.c.l.b16 %v1398
  %v6029 = vunpack.c.h.b16 %v1398
  %v6030 = vunpack.c.l.b16 %v1399
  %v6031 = vunpack.c.h.b16 %v1399
  %v6032 = vunpack.c.l.b16 %v1400
  %v6033 = vunpack.c.h.b16 %v1400
  %v6034 = vunpack.c.l.b16 %v1401
  %v6035 = vunpack.c.h.b16 %v1401
  %v6036 = vunpack.c.l.b16 %v1402
  %v6037 = vunpack.c.h.b16 %v1402
  %v6038 = vunpack.c.l.b16 %v1403
  %v6039 = vunpack.c.h.b16 %v1403
  %v6040 = vunpack.c.l.b16 %v1404
  %v6041 = vunpack.c.h.b16 %v1404
  %v6042 = vunpack.c.l.b16 %v1405
  %v6043 = vunpack.c.h.b16 %v1405
  %v6044 = vunpack.c.l.b16 %v1406
  %v6045 = vunpack.c.h.b16 %v1406
  %v6046 = vunpack.c.l.b16 %v1407
  %v6047 = vunpack.c.h.b16 %v1407
  %v6048 = vunpack.c.l.b16 %v1408
  %v6049 = vunpack.c.h.b16 %v1408
  %v6050 = vunpack.c.l.b16 %v1409
  %v6051 = vunpack.c.h.b16 %v1409
  %v6052 = vunpack.c.l.b16 %v1410
  %v6053 = vunpack.c.h.b16 %v1410
  %v6054 = vunpack.c.l.b16 %v1411
  %v6055 = vunpack.c.h.b16 %v1411
  %v6056 = vunpack.c.l.b16 %v1412
  %v6057 = vunpack.c.h.b16 %v1412
  %v6058 = vunpack.c.l.b16 %v1413
  %v6059 = vunpack.c.h.b16 %v1413
  %v6060 = vunpack.c.l.b16 %v1414
  %v6061 = vunpack.c.h.b16 %v1414
  %v6062 = vunpack.c.l.b16 %v1415
  %v6063 = vunpack.c.h.b16 %v1415
  %v6064 = vunpack.c.l.b16 %v1416
  %v6065 = vunpack.c.h.b16 %v1416
  %v6066 = vunpack.c.l.b16 %v1417
  %v6067 = vunpack.c.h.b16 %v1417
  %v6068 = vunpack.c.l.b16 %v1418
  %v6069 = vunpack.c.h.b16 %v1418
  %v6070 = vunpack.c.l.b16 %v1419
  %v6071 = vunpack.c.h.b16 %v1419
  %v6072 = vunpack.c.l.b16 %v1420
  %v6073 = vunpack.c.h.b16 %v1420
  %v6074 = vunpack.c.l.b16 %v1421
  %v6075 = vunpack.c.h.b16 %v1421
  %v6076 = vunpack.c.l.b16 %v1422
  %v6077 = vunpack.c.h.b16 %v1422
  %v6078 = vunpack.c.l.b16 %v1423
  %v6079 = vunpack.c.h.b16 %v1423
  %v6080 = vunpack.c.l.b16 %v1424
  %v6081 = vunpack.c.h.b16 %v1424
  %v6082 = vunpack.c.l.b16 %v1425
  %v6083 = vunpack.c.h.b16 %v1425
  %v6084 = vunpack.c.l.b16 %v1426
  %v6085 = vunpack.c.h.b16 %v1426
  %v6086 = vunpack.c.l.b16 %v1427
  %v6087 = vunpack.c.h.b16 %v1427
  %v6088 = vunpack.c.l.b16 %v1428
  %v6089 = vunpack.c.h.b16 %v1428
  %v6090 = vunpack.c.l.b16 %v1429
  %v6091 = vunpack.c.h.b16 %v1429
  %v6092 = vunpack.c.l.b16 %v1430
  %v6093 = vunpack.c.h.b16 %v1430
  %v6094 = vunpack.c.l.b16 %v1431
  %v6095 = vunpack.c.h.b16 %v1431
  %v6096 = vunpack.c.l.b16 %v1432
  %v6097 = vunpack.c.h.b16 %v1432
  %v6098 = vunpack.c.l.b16 %v1433
  %v6099 = vunpack.c.h.b16 %v1433
  %v6100 = vunpack.c.l.b16 %v1434
  %v6101 = vunpack.c.h.b16 %v1434
  %v6102 = vunpack.c.l.b16 %v1435
  %v6103 = vunpack.c.h.b16 %v1435
  %v6104 = vunpack.c.l.b16 %v1436
  %v6105 = vunpack.c.h.b16 %v1436
  %v6106 = vunpack.c.l.b16 %v1437
  %v6107 = vunpack.c.h.b16 %v1437
  %v6108 = vunpack.c.l.b16 %v1438
  %v6109 = vunpack.c.h.b16 %v1438
  %v6110 = vunpack.c.l.b16 %v1439
  %v6111 = vunpack.c.h.b16 %v1439
  %v6112 = vunpack.c.l.b16 %v1440
  %v6113 = vunpack.c.h.b16 %v1440
  %v6114 = vunpack.c.l.b16 %v1441
  %v6115 = vunpack.c.h.b16 %v1441
  %v6116 = vunpack.c.l.b16 %v1442
  %v6117 = vunpack.c.h.b16 %v1442
  %v6118 = vunpack.c.l.b16 %v1443
  %v6119 = vunpack.c.h.b16 %v1443
  %v6120 = vunpack.c.l.b16 %v1444
  %v6121 = vunpack.c.h.b16 %v1444
  %v6122 = vunpack.c.l.b16 %v1445
  %v6123 = vunpack.c.h.b16 %v1445
  %v6124 = vunpack.c.l.b16 %v1446
  %v6125 = vunpack.c.h.b16 %v1446
  %v6126 = vunpack.c.l.b16 %v1447
  %v6127 = vunpack.c.h.b16 %v1447
  %v6128 = vunpack.c.l.b16 %v1448
  %v6129 = vunpack.c.h.b16 %v1448
  %v6130 = vunpack.c.l.b16 %v1449
  %v6131 = vunpack.c.h.b16 %v1449
  %v6132 = vunpack.c.l.b16 %v1450
  %v6133 = vunpack.c.h.b16 %v1450
  %v6134 = vunpack.c.l.b16 %v1451
  %v6135 = vunpack.c.h.b16 %v1451
  %v6136 = vunpack.c.l.b16 %v1452
  %v6137 = vunpack.c.h.b16 %v1452
  %v6138 = vunpack.c.l.b16 %v1453
  %v6139 = vunpack.c.h.b16 %v1453
  %v6140 = vunpack.c.l.b16 %v1454
  %v6141 = vunpack.c.h.b16 %v1454
  %v6142 = vunpack.c.l.b16 %v1455
  %v6143 = vunpack.c.h.b16 %v1455
  %v6144 = vunpack.c.l.b16 %v1456
  %v6145 = vunpack.c.h.b16 %v1456
  %v6146 = vunpack.c.l.b16 %v1457
  %v6147 = vunpack.c.h.b16 %v1457
  %v6148 = vunpack.c.l.b16 %v1458
  %v6149 = vunpack.c.h.b16 %v1458
  %v6150 = vunpack.c.l.b16 %v1459
  %v6151 = vunpack.c.h.b16 %v1459
  %v6152 = vunpack.c.l.b16 %v1460
  %v6153 = vunpack.c.h.b16 %v1460
  %v6154 = vunpack.c.l.b16 %v1461
  %v6155 = vunpack.c.h.b16 %v1461
  %v6156 = vunpack.c.l.b16 %v1462
  %v6157 = vunpack.c.h.b16 %v1462
  %v6158 = vunpack.c.l.b16 %v1463
  %v6159 = vunpack.c.h.b16 %v1463
  %v6160 = vunpack.c.l.b16 %v1464
  %v6161 = vunpack.c.h.b16 %v1464
  %v6162 = vunpack.c.l.b16 %v1465
  %v6163 = vunpack.c.h.b16 %v1465
  %v6164 = vunpack.c.l.b16 %v1466
  %v6165 = vunpack.c.h.b16 %v1466
  %v6166 = vunpack.c.l.b16 %v1467
  %v6167 = vunpack.c.h.b16 %v1467
  %v6168 = vunpack.c.l.b16 %v1468
  %v6169 = vunpack.c.h.b16 %v1468
  %v6170 = vunpack.c.l.b16 %v1469
  %v6171 = vunpack.c.h.b16 %v1469
  %v6172 = vunpack.c.l.b16 %v1470
  %v6173 = vunpack.c.h.b16 %v1470
  %v6174 = vunpack.c.l.b16 %v1471
  %v6175 = vunpack.c.h.b16 %v1471
  %v6176 = vunpack.c.l.b16 %v1472
  %v6177 = vunpack.c.h.b16 %v1472
  %v6178 = vunpack.c.l.b16 %v1473
  %v6179 = vunpack.c.h.b16 %v1473
  %v6180 = vunpack.c.l.b16 %v1474
  %v6181 = vunpack.c.h.b16 %v1474
  %v6182 = vunpack.c.l.b16 %v1475
  %v6183 = vunpack.c.h.b16 %v1475
  %v6184 = vunpack.c.l.b16 %v1476
  %v6185 = vunpack.c.h.b16 %v1476
  %v6186 = vunpack.c.l.b16 %v1477
  %v6187 = vunpack.c.h.b16 %v1477
  %v6188 = vunpack.c.l.b16 %v1478
  %v6189 = vunpack.c.h.b16 %v1478
  %v6190 = vunpack.c.l.b16 %v1479
  %v6191 = vunpack.c.h.b16 %v1479
  %v6192 = vunpack.c.l.b16 %v1480
  %v6193 = vunpack.c.h.b16 %v1480
  %v6194 = vunpack.c.l.b16 %v1481
  %v6195 = vunpack.c.h.b16 %v1481
  %v6196 = vunpack.c.l.b16 %v1482
  %v6197 = vunpack.c.h.b16 %v1482
  %v6198 = vunpack.c.l.b16 %v1483
  %v6199 = vunpack.c.h.b16 %v1483
  %v6200 = vunpack.c.l.b16 %v1484
  %v6201 = vunpack.c.h.b16 %v1484
  %v6202 = vunpack.c.l.b16 %v1485
  %v6203 = vunpack.c.h.b16 %v1485
  %v6204 = vunpack.c.l.b16 %v1486
  %v6205 = vunpack.c.h.b16 %v1486
  %v6206 = vunpack.c.l.b16 %v1487
  %v6207 = vunpack.c.h.b16 %v1487
  %v6208 = vunpack.c.l.b16 %v1488
  %v6209 = vunpack.c.h.b16 %v1488
  %v6210 = vunpack.c.l.b16 %v1489
  %v6211 = vunpack.c.h.b16 %v1489
  %v6212 = vunpack.c.l.b16 %v1490
  %v6213 = vunpack.c.h.b16 %v1490
  %v6214 = vunpack.c.l.b16 %v1491
  %v6215 = vunpack.c.h.b16 %v1491
  %v6216 = vunpack.c.l.b16 %v1492
  %v6217 = vunpack.c.h.b16 %v1492
  %v6218 = vunpack.c.l.b16 %v1493
  %v6219 = vunpack.c.h.b16 %v1493
  %v6220 = vunpack.c.l.b16 %v1494
  %v6221 = vunpack.c.h.b16 %v1494
  %v6222 = vunpack.c.l.b16 %v1495
  %v6223 = vunpack.c.h.b16 %v1495
  %v6224 = vunpack.c.l.b16 %v1496
  %v6225 = vunpack.c.h.b16 %v1496
  %v6226 = vunpack.c.l.b16 %v1497
  %v6227 = vunpack.c.h.b16 %v1497
  %v6228 = vunpack.c.l.b16 %v1498
  %v6229 = vunpack.c.h.b16 %v1498
  %v6230 = vunpack.c.l.b16 %v1499
  %v6231 = vunpack.c.h.b16 %v1499
  %v6232 = vunpack.c.l.b16 %v1500
  %v6233 = vunpack.c.h.b16 %v1500
  %v6234 = vunpack.c.l.b16 %v1501
  %v6235 = vunpack.c.h.b16 %v1501
  %v6236 = vunpack.c.l.b16 %v1502
  %v6237 = vunpack.c.h.b16 %v1502
  %v6238 = vunpack.c.l.b16 %v1503
  %v6239 = vunpack.c.h.b16 %v1503
  %v6240 = vunpack.c.l.b16 %v1504
  %v6241 = vunpack.c.h.b16 %v1504
  %v6242 = vunpack.c.l.b16 %v1505
  %v6243 = vunpack.c.h.b16 %v1505
  %v6244 = vunpack.c.l.b16 %v1506
  %v6245 = vunpack.c.h.b16 %v1506
  %v6246 = vunpack.c.l.b16 %v1507
  %v6247 = vunpack.c.h.b16 %v1507
  %v6248 = vunpack.c.l.b16 %v1508
  %v6249 = vunpack.c.h.b16 %v1508
  %v6250 = vunpack.c.l.b16 %v1509
  %v6251 = vunpack.c.h.b16 %v1509
  %v6252 = vunpack.c.l.b16 %v1510
  %v6253 = vunpack.c.h.b16 %v1510
  %v6254 = vunpack.c.l.b16 %v1511
  %v6255 = vunpack.c.h.b16 %v1511
  %v6256 = vunpack.c.l.b16 %v1512
  %v6257 = vunpack.c.h.b16 %v1512
  %v6258 = vunpack.c.l.b16 %v1513
  %v6259 = vunpack.c.h.b16 %v1513
  %v6260 = vunpack.c.l.b16 %v1514
  %v6261 = vunpack.c.h.b16 %v1514
  %v6262 = vunpack.c.l.b16 %v1515
  %v6263 = vunpack.c.h.b16 %v1515
  %v6264 = vunpack.c.l.b16 %v1516
  %v6265 = vunpack.c.h.b16 %v1516
  %v6266 = vunpack.c.l.b16 %v1517
  %v6267 = vunpack.c.h.b16 %v1517
  %v6268 = vunpack.c.l.b16 %v1518
  %v6269 = vunpack.c.h.b16 %v1518
  %v6270 = vunpack.c.l.b16 %v1519
  %v6271 = vunpack.c.h.b16 %v1519
  %v6272 = vunpack.c.l.b16 %v1520
  %v6273 = vunpack.c.h.b16 %v1520
  %v6274 = vunpack.c.l.b16 %v1521
  %v6275 = vunpack.c.h.b16 %v1521
  %v6276 = vunpack.c.l.b16 %v1522
  %v6277 = vunpack.c.h.b16 %v1522
  %v6278 = vunpack.c.l.b16 %v1523
  %v6279 = vunpack.c.h.b16 %v1523
  %v6280 = vunpack.c.l.b16 %v1524
  %v6281 = vunpack.c.h.b16 %v1524
  %v6282 = vunpack.c.l.b16 %v1525
  %v6283 = vunpack.c.h.b16 %v1525
  %v6284 = vunpack.c.l.b16 %v1526
  %v6285 = vunpack.c.h.b16 %v1526
  %v6286 = vunpack.c.l.b16 %v1527
  %v6287 = vunpack.c.h.b16 %v1527
  %v6288 = vunpack.c.l.b16 %v1528
  %v6289 = vunpack.c.h.b16 %v1528
  %v6290 = vunpack.c.l.b16 %v1529
  %v6291 = vunpack.c.h.b16 %v1529
  %v6292 = vunpack.c.l.b16 %v1530
  %v6293 = vunpack.c.h.b16 %v1530
  %v6294 = vunpack.c.l.b16 %v1531
  %v6295 = vunpack.c.h.b16 %v1531
  %v6296 = vunpack.c.l.b16 %v1532
  %v6297 = vunpack.c.h.b16 %v1532
  %v6298 = vunpack.c.l.b16 %v1533
  %v6299 = vunpack.c.h.b16 %v1533
  %v6300 = vunpack.c.l.b16 %v1534
  %v6301 = vunpack.c.h.b16 %v1534
  %v6302 = vunpack.c.l.b16 %v1535
  %v6303 = vunpack.c.h.b16 %v1535
  %v6304 = vunpack.c.l.b16 %v1536
  %v6305 = vunpack.c.h.b16 %v1536
  %v6306 = vunpack.c.l.b16 %v1537
  %v6307 = vunpack.c.h.b16 %v1537
  %v6308 = vunpack.c.l.b16 %v1538
  %v6309 = vunpack.c.h.b16 %v1538
  %v6310 = vunpack.c.l.b16 %v1539
  %v6311 = vunpack.c.h.b16 %v1539
  %v6312 = vunpack.c.l.b16 %v1540
  %v6313 = vunpack.c.h.b16 %v1540
  %v6314 = vunpack.c.l.b16 %v1541
  %v6315 = vunpack.c.h.b16 %v1541
  %v6316 = vunpack.c.l.b16 %v1542
  %v6317 = vunpack.c.h.b16 %v1542
  %v6318 = vunpack.c.l.b16 %v1543
  %v6319 = vunpack.c.h.b16 %v1543
  %v6320 = vunpack.c.l.b16 %v1544
  %v6321 = vunpack.c.h.b16 %v1544
  %v6322 = vunpack.c.l.b16 %v1545
  %v6323 = vunpack.c.h.b16 %v1545
  %v6324 = vunpack.c.l.b16 %v1546
  %v6325 = vunpack.c.h.b16 %v1546
  %v6326 = vunpack.c.l.b16 %v1547
  %v6327 = vunpack.c.h.b16 %v1547
  %v6328 = vunpack.c.l.b16 %v1548
  %v6329 = vunpack.c.h.b16 %v1548
  %v6330 = vunpack.c.l.b16 %v1549
  %v6331 = vunpack.c.h.b16 %v1549
  %v6332 = vunpack.c.l.b16 %v1550
  %v6333 = vunpack.c.h.b16 %v1550
  %v6334 = vunpack.c.l.b16 %v1551
  %v6335 = vunpack.c.h.b16 %v1551
  %v6336 = vunpack.c.l.b16 %v1552
  %v6337 = vunpack.c.h.b16 %v1552
  %v6338 = vunpack.c.l.b16 %v1553
  %v6339 = vunpack.c.h.b16 %v1553
  %v6340 = vunpack.c.l.b16 %v1554
  %v6341 = vunpack.c.h.b16 %v1554
  %v6342 = vunpack.c.l.b16 %v1555
  %v6343 = vunpack.c.h.b16 %v1555
  %v6344 = vunpack.c.l.b16 %v1556
  %v6345 = vunpack.c.h.b16 %v1556
  %v6346 = vunpack.c.l.b16 %v1557
  %v6347 = vunpack.c.h.b16 %v1557
  %v6348 = vunpack.c.l.b16 %v1558
  %v6349 = vunpack.c.h.b16 %v1558
  %v6350 = vunpack.c.l.b16 %v1559
  %v6351 = vunpack.c.h.b16 %v1559
  %v6352 = vunpack.c.l.b16 %v1560
  %v6353 = vunpack.c.h.b16 %v1560
  %v6354 = vunpack.c.l.b16 %v1561
  %v6355 = vunpack.c.h.b16 %v1561
  %v6356 = vunpack.c.l.b16 %v1562
  %v6357 = vunpack.c.h.b16 %v1562
  %v6358 = vunpack.c.l.b16 %v1563
  %v6359 = vunpack.c.h.b16 %v1563
  %v6360 = vunpack.c.l.b16 %v1564
  %v6361 = vunpack.c.h.b16 %v1564
  %v6362 = vunpack.c.l.b16 %v1565
  %v6363 = vunpack.c.h.b16 %v1565
  %v6364 = vunpack.c.l.b16 %v1566
  %v6365 = vunpack.c.h.b16 %v1566
  %v6366 = vunpack.c.l.b16 %v1567
  %v6367 = vunpack.c.h.b16 %v1567
  %v6368 = vunpack.c.l.b16 %v1568
  %v6369 = vunpack.c.h.b16 %v1568
  %v6370 = vunpack.c.l.b16 %v1569
  %v6371 = vunpack.c.h.b16 %v1569
  %v6372 = vunpack.c.l.b16 %v1570
  %v6373 = vunpack.c.h.b16 %v1570
  %v6374 = vunpack.c.l.b16 %v1571
  %v6375 = vunpack.c.h.b16 %v1571
  %v6376 = vunpack.c.l.b16 %v1572
  %v6377 = vunpack.c.h.b16 %v1572
  %v6378 = vunpack.c.l.b16 %v1573
  %v6379 = vunpack.c.h.b16 %v1573
  %v6380 = vunpack.c.l.b16 %v1574
  %v6381 = vunpack.c.h.b16 %v1574
  %v6382 = vunpack.c.l.b16 %v1575
  %v6383 = vunpack.c.h.b16 %v1575
  %v6384 = vunpack.c.l.b16 %v1576
  %v6385 = vunpack.c.h.b16 %v1576
  %v6386 = vunpack.c.l.b16 %v1577
  %v6387 = vunpack.c.h.b16 %v1577
  %v6388 = vunpack.c.l.b16 %v1578
  %v6389 = vunpack.c.h.b16 %v1578
  %v6390 = vunpack.c.l.b16 %v1579
  %v6391 = vunpack.c.h.b16 %v1579
  %v6392 = vunpack.c.l.b16 %v1580
  %v6393 = vunpack.c.h.b16 %v1580
  %v6394 = vunpack.c.l.b16 %v1581
  %v6395 = vunpack.c.h.b16 %v1581
  %v6396 = vunpack.c.l.b16 %v1582
  %v6397 = vunpack.c.h.b16 %v1582
  %v6398 = vunpack.c.l.b16 %v1583
  %v6399 = vunpack.c.h.b16 %v1583
  %v6400 = vunpack.c.l.b16 %v1584
  %v6401 = vunpack.c.h.b16 %v1584
  %v6402 = vunpack.c.l.b16 %v1585
  %v6403 = vunpack.c.h.b16 %v1585
  %v6404 = vunpack.c.l.b16 %v1586
  %v6405 = vunpack.c.h.b16 %v1586
  %v6406 = vunpack.c.l.b16 %v1587
  %v6407 = vunpack.c.h.b16 %v1587
  %v6408 = vunpack.c.l.b16 %v1588
  %v6409 = vunpack.c.h.b16 %v1588
  %v6410 = vunpack.c.l.b16 %v1589
  %v6411 = vunpack.c.h.b16 %v1589
  %v6412 = vunpack.c.l.b16 %v1590
  %v6413 = vunpack.c.h.b16 %v1590
  %v6414 = vunpack.c.l.b16 %v1591
  %v6415 = vunpack.c.h.b16 %v1591
  %v6416 = vunpack.c.l.b16 %v1592
  %v6417 = vunpack.c.h.b16 %v1592
  %v6418 = vunpack.c.l.b16 %v1593
  %v6419 = vunpack.c.h.b16 %v1593
  %v6420 = vunpack.c.l.b16 %v1594
  %v6421 = vunpack.c.h.b16 %v1594
  %v6422 = vunpack.c.l.b16 %v1595
  %v6423 = vunpack.c.h.b16 %v1595
  %v6424 = vunpack.c.l.b16 %v1596
  %v6425 = vunpack.c.h.b16 %v1596
  %v6426 = vunpack.c.l.b16 %v1597
  %v6427 = vunpack.c.h.b16 %v1597
  %v6428 = vunpack.c.l.b16 %v1598
  %v6429 = vunpack.c.h.b16 %v1598
  %v6430 = vunpack.c.l.b16 %v1599
  %v6431 = vunpack.c.h.b16 %v1599
  %v6432 = vunpack.c.l.b16 %v1600
  %v6433 = vunpack.c.h.b16 %v1600
  %v6434 = vunpack.c.l.b16 %v1601
  %v6435 = vunpack.c.h.b16 %v1601
  %v6436 = vunpack.c.l.b16 %v1602
  %v6437 = vunpack.c.h.b16 %v1602
  %v6438 = vunpack.c.l.b16 %v1603
  %v6439 = vunpack.c.h.b16 %v1603
  %v6440 = vunpack.c.l.b16 %v1604
  %v6441 = vunpack.c.h.b16 %v1604
  %v6442 = vunpack.c.l.b16 %v1605
  %v6443 = vunpack.c.h.b16 %v1605
  %v6444 = vunpack.c.l.b16 %v1606
  %v6445 = vunpack.c.h.b16 %v1606
  %v6446 = vunpack.c.l.b16 %v1607
  %v6447 = vunpack.c.h.b16 %v1607
  %v6448 = vunpack.c.l.b16 %v1608
  %v6449 = vunpack.c.h.b16 %v1608
  %v6450 = vunpack.c.l.b16 %v1609
  %v6451 = vunpack.c.h.b16 %v1609
  %v6452 = vunpack.c.l.b16 %v1610
  %v6453 = vunpack.c.h.b16 %v1610
  %v6454 = vunpack.c.l.b16 %v1611
  %v6455 = vunpack.c.h.b16 %v1611
  %v6456 = vunpack.c.l.b16 %v1612
  %v6457 = vunpack.c.h.b16 %v1612
  %v6458 = vunpack.c.l.b16 %v1613
  %v6459 = vunpack.c.h.b16 %v1613
  %v6460 = vunpack.c.l.b16 %v1614
  %v6461 = vunpack.c.h.b16 %v1614
  %v6462 = vpack.c.b16 %v3334, %v3326
  %v6463 = vpack.c.b16 %v3335, %v3327
  %v6464 = vpack.c.b16 %v3336, %v3328
  %v6465 = vpack.c.b16 %v3337, %v3329
  %v6466 = vpack.c.b16 %v3338, %v3330
  %v6467 = vpack.c.b16 %v3339, %v3331
  %v6468 = vpack.c.b16 %v3340, %v3332
  %v6469 = vpack.c.b16 %v3341, %v3333
  %v6470 = vpack.c.b16 %v3350, %v3342
  %v6471 = vpack.c.b16 %v3351, %v3343
  %v6472 = vpack.c.b16 %v3352, %v3344
  %v6473 = vpack.c.b16 %v3353, %v3345
  %v6474 = vpack.c.b16 %v3354, %v3346
  %v6475 = vpack.c.b16 %v3355, %v3347
  %v6476 = vpack.c.b16 %v3356, %v3348
  %v6477 = vpack.c.b16 %v3357, %v3349
  %v6478 = vpack.c.b16 %v3366, %v3358
  %v6479 = vpack.c.b16 %v3367, %v3359
  %v6480 = vpack.c.b16 %v3368, %v3360
  %v6481 = vpack.c.b16 %v3369, %v3361
  %v6482 = vpack.c.b16 %v3370, %v3362
  %v6483 = vpack.c.b16 %v3371, %v3363
  %v6484 = vpack.c.b16 %v3372, %v3364
  %v6485 = vpack.c.b16 %v3373, %v3365
  %v6486 = vpack.c.b16 %v3382, %v3374
  %v6487 = vpack.c.b16 %v3383, %v3375
  %v6488 = vpack.c.b16 %v3384, %v3376
  %v6489 = vpack.c.b16 %v3385, %v3377
  %v6490 = vpack.c.b16 %v3386, %v3378
  %v6491 = vpack.c.b16 %v3387, %v3379
  %v6492 = vpack.c.b16 %v3388, %v3380
  %v6493 = vpack.c.b16 %v3389, %v3381
  %v6494 = vpack.c.b16 %v3398, %v3390
  %v6495 = vpack.c.b16 %v3399, %v3391
  %v6496 = vpack.c.b16 %v3400, %v3392
  %v6497 = vpack.c.b16 %v3401, %v3393
  %v6498 = vpack.c.b16 %v3402, %v3394
  %v6499 = vpack.c.b16 %v3403, %v3395
  %v6500 = vpack.c.b16 %v3404, %v3396
  %v6501 = vpack.c.b16 %v3405, %v3397
  %v6502 = vpack.c.b16 %v3414, %v3406
  %v6503 = vpack.c.b16 %v3415, %v3407
  %v6504 = vpack.c.b16 %v3416, %v3408
  %v6505 = vpack.c.b16 %v3417, %v3409
  %v6506 = vpack.c.b16 %v3418, %v3410
  %v6507 = vpack.c.b16 %v3419, %v3411
  %v6508 = vpack.c.b16 %v3420, %v3412
  %v6509 = vpack.c.b16 %v3421, %v3413
  %v6510 = vpack.c.b16 %v3430, %v3422
  %v6511 = vpack.c.b16 %v3431, %v3423
  %v6512 = vpack.c.b16 %v3432, %v3424
  %v6513 = vpack.c.b16 %v3433, %v3425
  %v6514 = vpack.c.b16 %v3434, %v3426
  %v6515 = vpack.c.b16 %v3435, %v3427
  %v6516 = vpack.c.b16 %v3436, %v3428
  %v6517 = vpack.c.b16 %v3437, %v3429
  %v6518 = vpack.c.b16 %v3446, %v3438
  %v6519 = vpack.c.b16 %v3447, %v3439
  %v6520 = vpack.c.b16 %v3448, %v3440
  %v6521 = vpack.c.b16 %v3449, %v3441
  %v6522 = vpack.c.b16 %v3450, %v3442
  %v6523 = vpack.c.b16 %v3451, %v3443
  %v6524 = vpack.c.b16 %v3452, %v3444
  %v6525 = vpack.c.b16 %v3453, %v3445
  %v6526 = vpack.c.b16 %v3462, %v3454
  %v6527 = vpack.c.b16 %v3463, %v3455
  %v6528 = vpack.c.b16 %v3464, %v3456
  %v6529 = vpack.c.b16 %v3465, %v3457
  %v6530 = vpack.c.b16 %v3466, %v3458
  %v6531 = vpack.c.b16 %v3467, %v3459
  %v6532 = vpack.c.b16 %v3468, %v3460
  %v6533 = vpack.c.b16 %v3469, %v3461
  %v6534 = vpack.c.b16 %v3478, %v3470
  %v6535 = vpack.c.b16 %v3479, %v3471
  %v6536 = vpack.c.b16 %v3480, %v3472
  %v6537 = vpack.c.b16 %v3481, %v3473
  %v6538 = vpack.c.b16 %v3482, %v3474
  %v6539 = vpack.c.b16 %v3483, %v3475
  %v6540 = vpack.c.b16 %v3484, %v3476
  %v6541 = vpack.c.b16 %v3485, %v3477
  %v6542 = vpack.c.b16 %v3494, %v3486
  %v6543 = vpack.c.b16 %v3495, %v3487
  %v6544 = vpack.c.b16 %v3496, %v3488
  %v6545 = vpack.c.b16 %v3497, %v3489
  %v6546 = vpack.c.b16 %v3498, %v3490
  %v6547 = vpack.c.b16 %v3499, %v3491
  %v6548 = vpack.c.b16 %v3500, %v3492
  %v6549 = vpack.c.b16 %v3501, %v3493
  %v6550 = vpack.c.b16 %v3510, %v3502
  %v6551 = vpack.c.b16 %v3511, %v3503
  %v6552 = vpack.c.b16 %v3512, %v3504
  %v6553 = vpack.c.b16 %v3513, %v3505
  %v6554 = vpack.c.b16 %v3514, %v3506
  %v6555 = vpack.c.b16 %v3515, %v3507
  %v6556 = vpack.c.b16 %v3516, %v3508
  %v6557 = vpack.c.b16 %v3517, %v3509
  %v6558 = vpack.c.b16 %v3526, %v3518
  %v6559 = vpack.c.b16 %v3527, %v3519
  %v6560 = vpack.c.b16 %v3528, %v3520
  %v6561 = vpack.c.b16 %v3529, %v3521
  %v6562 = vpack.c.b16 %v3530, %v3522
  %v6563 = vpack.c.b16 %v3531, %v3523
  %v6564 = vpack.c.b16 %v3532, %v3524
  %v6565 = vpack.c.b16 %v3533, %v3525
  %v6566 = vpack.c.b16 %v3542, %v3534
  %v6567 = vpack.c.b16 %v3543, %v3535
  %v6568 = vpack.c.b16 %v3544, %v3536
  %v6569 = vpack.c.b16 %v3545, %v3537
  %v6570 = vpack.c.b16 %v3546, %v3538
  %v6571 = vpack.c.b16 %v3547, %v3539
  %v6572 = vpack.c.b16 %v3548, %v3540
  %v6573 = vpack.c.b16 %v3549, %v3541
  %v6574 = vpack.c.b16 %v3558, %v3550
  %v6575 = vpack.c.b16 %v3559, %v3551
  %v6576 = vpack.c.b16 %v3560, %v3552
  %v6577 = vpack.c.b16 %v3561, %v3553
  %v6578 = vpack.c.b16 %v3562, %v3554
  %v6579 = vpack.c.b16 %v3563, %v3555
  %v6580 = vpack.c.b16 %v3564, %v3556
  %v6581 = vpack.c.b16 %v3565, %v3557
  %v6582 = vpack.c.b16 %v3574, %v3566
  %v6583 = vpack.c.b16 %v3575, %v3567
  %v6584 = vpack.c.b16 %v3576, %v3568
  %v6585 = vpack.c.b16 %v3577, %v3569
  %v6586 = vpack.c.b16 %v3578, %v3570
  %v6587 = vpack.c.b16 %v3579, %v3571
  %v6588 = vpack.c.b16 %v3580, %v3572
  %v6589 = vpack.c.b16 %v3581, %v3573
  %v6590 = vpack.c.b16 %v3590, %v3582
  %v6591 = vpack.c.b16 %v3591, %v3583
  %v6592 = vpack.c.b16 %v3592, %v3584
  %v6593 = vpack.c.b16 %v3593, %v3585
  %v6594 = vpack.c.b16 %v3594, %v3586
  %v6595 = vpack.c.b16 %v3595, %v3587
  %v6596 = vpack.c.b16 %v3596, %v3588
  %v6597 = vpack.c.b16 %v3597, %v3589
  %v6598 = vpack.c.b16 %v3606, %v3598
  %v6599 = vpack.c.b16 %v3607, %v3599
  %v6600 = vpack.c.b16 %v3608, %v3600
  %v6601 = vpack.c.b16 %v3609, %v3601
  %v6602 = vpack.c.b16 %v3610, %v3602
  %v6603 = vpack.c.b16 %v3611, %v3603
  %v6604 = vpack.c.b16 %v3612, %v3604
  %v6605 = vpack.c.b16 %v3613, %v3605
  %v6606 = vpack.c.b16 %v3622, %v3614
  %v6607 = vpack.c.b16 %v3623, %v3615
  %v6608 = vpack.c.b16 %v3624, %v3616
  %v6609 = vpack.c.b16 %v3625, %v3617
  %v6610 = vpack.c.b16 %v3626, %v3618
  %v6611 = vpack.c.b16 %v3627, %v3619
  %v6612 = vpack.c.b16 %v3628, %v3620
  %v6613 = vpack.c.b16 %v3629, %v3621
  %v6614 = vpack.c.b16 %v3638, %v3630
  %v6615 = vpack.c.b16 %v3639, %v3631
  %v6616 = vpack.c.b16 %v3640, %v3632
  %v6617 = vpack.c.b16 %v3641, %v3633
  %v6618 = vpack.c.b16 %v3642, %v3634
  %v6619 = vpack.c.b16 %v3643, %v3635
  %v6620 = vpack.c.b16 %v3644, %v3636
  %v6621 = vpack.c.b16 %v3645, %v3637
  %v6622 = vpack.c.b16 %v3654, %v3646
  %v6623 = vpack.c.b16 %v3655, %v3647
  %v6624 = vpack.c.b16 %v3656, %v3648
  %v6625 = vpack.c.b16 %v3657, %v3649
  %v6626 = vpack.c.b16 %v3658, %v3650
  %v6627 = vpack.c.b16 %v3659, %v3651
  %v6628 = vpack.c.b16 %v3660, %v3652
  %v6629 = vpack.c.b16 %v3661, %v3653
  %v6630 = vpack.c.b16 %v3670, %v3662
  %v6631 = vpack.c.b16 %v3671, %v3663
  %v6632 = vpack.c.b16 %v3672, %v3664
  %v6633 = vpack.c.b16 %v3673, %v3665
  %v6634 = vpack.c.b16 %v3674, %v3666
  %v6635 = vpack.c.b16 %v3675, %v3667
  %v6636 = vpack.c.b16 %v3676, %v3668
  %v6637 = vpack.c.b16 %v3677, %v3669
  %v6638 = vpack.c.b16 %v3686, %v3678
  %v6639 = vpack.c.b16 %v3687, %v3679
  %v6640 = vpack.c.b16 %v3688, %v3680
  %v6641 = vpack.c.b16 %v3689, %v3681
  %v6642 = vpack.c.b16 %v3690, %v3682
  %v6643 = vpack.c.b16 %v3691, %v3683
  %v6644 = vpack.c.b16 %v3692, %v3684
  %v6645 = vpack.c.b16 %v3693, %v3685
  %v6646 = vpack.c.b16 %v3702, %v3694
  %v6647 = vpack.c.b16 %v3703, %v3695
  %v6648 = vpack.c.b16 %v3704, %v3696
  %v6649 = vpack.c.b16 %v3705, %v3697
  %v6650 = vpack.c.b16 %v3706, %v3698
  %v6651 = vpack.c.b16 %v3707, %v3699
  %v6652 = vpack.c.b16 %v3708, %v3700
  %v6653 = vpack.c.b16 %v3709, %v3701
  %v6654 = vpack.c.b16 %v3718, %v3710
  %v6655 = vpack.c.b16 %v3719, %v3711
  %v6656 = vpack.c.b16 %v3720, %v3712
  %v6657 = vpack.c.b16 %v3721, %v3713
  %v6658 = vpack.c.b16 %v3722, %v3714
  %v6659 = vpack.c.b16 %v3723, %v3715
  %v6660 = vpack.c.b16 %v3724, %v3716
  %v6661 = vpack.c.b16 %v3725, %v3717
  %v6662 = vpack.c.b16 %v3734, %v3726
  %v6663 = vpack.c.b16 %v3735, %v3727
  %v6664 = vpack.c.b16 %v3736, %v3728
  %v6665 = vpack.c.b16 %v3737, %v3729
  %v6666 = vpack.c.b16 %v3738, %v3730
  %v6667 = vpack.c.b16 %v3739, %v3731
  %v6668 = vpack.c.b16 %v3740, %v3732
  %v6669 = vpack.c.b16 %v3741, %v3733
  %v6670 = vpack.c.b16 %v3750, %v3742
  %v6671 = vpack.c.b16 %v3751, %v3743
  %v6672 = vpack.c.b16 %v3752, %v3744
  %v6673 = vpack.c.b16 %v3753, %v3745
  %v6674 = vpack.c.b16 %v3754, %v3746
  %v6675 = vpack.c.b16 %v3755, %v3747
  %v6676 = vpack.c.b16 %v3756, %v3748
  %v6677 = vpack.c.b16 %v3757, %v3749
  %v6678 = vpack.c.b16 %v3766, %v3758
  %v6679 = vpack.c.b16 %v3767, %v3759
  %v6680 = vpack.c.b16 %v3768, %v3760
  %v6681 = vpack.c.b16 %v3769, %v3761
  %v6682 = vpack.c.b16 %v3770, %v3762
  %v6683 = vpack.c.b16 %v3771, %v3763
  %v6684 = vpack.c.b16 %v3772, %v3764
  %v6685 = vpack.c.b16 %v3773, %v3765
  %v6686 = vpack.c.b16 %v3782, %v3774
  %v6687 = vpack.c.b16 %v3783, %v3775
  %v6688 = vpack.c.b16 %v3784, %v3776
  %v6689 = vpack.c.b16 %v3785, %v3777
  %v6690 = vpack.c.b16 %v3786, %v3778
  %v6691 = vpack.c.b16 %v3787, %v3779
  %v6692 = vpack.c.b16 %v3788, %v3780
  %v6693 = vpack.c.b16 %v3789, %v3781
  %v6694 = vpack.c.b16 %v3798, %v3790
  %v6695 = vpack.c.b16 %v3799, %v3791
  %v6696 = vpack.c.b16 %v3800, %v3792
  %v6697 = vpack.c.b16 %v3801, %v3793
  %v6698 = vpack.c.b16 %v3802, %v3794
  %v6699 = vpack.c.b16 %v3803, %v3795
  %v6700 = vpack.c.b16 %v3804, %v3796
  %v6701 = vpack.c.b16 %v3805, %v3797
  %v6702 = vpack.c.b16 %v3814, %v3806
  %v6703 = vpack.c.b16 %v3815, %v3807
  %v6704 = vpack.c.b16 %v3816, %v3808
  %v6705 = vpack.c.b16 %v3817, %v3809
  %v6706 = vpack.c.b16 %v3818, %v3810
  %v6707 = vpack.c.b16 %v3819, %v3811
  %v6708 = vpack.c.b16 %v3820, %v3812
  %v6709 = vpack.c.b16 %v3821, %v3813
  %v6710 = vpack.c.b16 %v3830, %v3822
  %v6711 = vpack.c.b16 %v3831, %v3823
  %v6712 = vpack.c.b16 %v3832, %v3824
  %v6713 = vpack.c.b16 %v3833, %v3825
  %v6714 = vpack.c.b16 %v3834, %v3826
  %v6715 = vpack.c.b16 %v3835, %v3827
  %v6716 = vpack.c.b16 %v3836, %v3828
  %v6717 = vpack.c.b16 %v3837, %v3829
  %v6718 = vpack.c.b16 %v3846, %v3838
  %v6719 = vpack.c.b16 %v3847, %v3839
  %v6720 = vpack.c.b16 %v3848, %v3840
  %v6721 = vpack.c.b16 %v3849, %v3841
  %v6722 = vpack.c.b16 %v3850, %v3842
  %v6723 = vpack.c.b16 %v3851, %v3843
  %v6724 = vpack.c.b16 %v3852, %v3844
  %v6725 = vpack.c.b16 %v3853, %v3845
  %v6726 = vpack.c.b16 %v3862, %v3854
  %v6727 = vpack.c.b16 %v3863, %v3855
  %v6728 = vpack.c.b16 %v3864, %v3856
  %v6729 = vpack.c.b16 %v3865, %v3857
  %v6730 = vpack.c.b16 %v3866, %v3858
  %v6731 = vpack.c.b16 %v3867, %v3859
  %v6732 = vpack.c.b16 %v3868, %v3860
  %v6733 = vpack.c.b16 %v3869, %v3861
  %v6734 = vpack.c.b16 %v3878, %v3870
  %v6735 = vpack.c.b16 %v3879, %v3871
  %v6736 = vpack.c.b16 %v3880, %v3872
  %v6737 = vpack.c.b16 %v3881, %v3873
  %v6738 = vpack.c.b16 %v3882, %v3874
  %v6739 = vpack.c.b16 %v3883, %v3875
  %v6740 = vpack.c.b16 %v3884, %v3876
  %v6741 = vpack.c.b16 %v3885, %v3877
  %v6742 = vpack.c.b16 %v3894, %v3886
  %v6743 = vpack.c.b16 %v3895, %v3887
  %v6744 = vpack.c.b16 %v3896, %v3888
  %v6745 = vpack.c.b16 %v3897, %v3889
  %v6746 = vpack.c.b16 %v3898, %v3890
  %v6747 = vpack.c.b16 %v3899, %v3891
  %v6748 = vpack.c.b16 %v3900, %v3892
  %v6749 = vpack.c.b16 %v3901, %v3893
  %v6750 = vpack.c.b16 %v3910, %v3902
  %v6751 = vpack.c.b16 %v3911, %v3903
  %v6752 = vpack.c.b16 %v3912, %v3904
  %v6753 = vpack.c.b16 %v3913, %v3905
  %v6754 = vpack.c.b16 %v3914, %v3906
  %v6755 = vpack.c.b16 %v3915, %v3907
  %v6756 = vpack.c.b16 %v3916, %v3908
  %v6757 = vpack.c.b16 %v3917, %v3909
  %v6758 = vpack.c.b16 %v3926, %v3918
  %v6759 = vpack.c.b16 %v3927, %v3919
  %v6760 = vpack.c.b16 %v3928, %v3920
  %v6761 = vpack.c.b16 %v3929, %v3921
  %v6762 = vpack.c.b16 %v3930, %v3922
  %v6763 = vpack.c.b16 %v3931, %v3923
  %v6764 = vpack.c.b16 %v3932, %v3924
  %v6765 = vpack.c.b16 %v3933, %v3925
  %v6766 = vpack.c.b16 %v3942, %v3934
  %v6767 = vpack.c.b16 %v3943, %v3935
  %v6768 = vpack.c.b16 %v3944, %v3936
  %v6769 = vpack.c.b16 %v3945, %v3937
  %v6770 = vpack.c.b16 %v3946, %v3938
  %v6771 = vpack.c.b16 %v3947, %v3939
  %v6772 = vpack.c.b16 %v3948, %v3940
  %v6773 = vpack.c.b16 %v3949, %v3941
  %v6774 = vpack.c.b16 %v3958, %v3950
  %v6775 = vpack.c.b16 %v3959, %v3951
  %v6776 = vpack.c.b16 %v3960, %v3952
  %v6777 = vpack.c.b16 %v3961, %v3953
  %v6778 = vpack.c.b16 %v3962, %v3954
  %v6779 = vpack.c.b16 %v3963, %v3955
  %v6780 = vpack.c.b16 %v3964, %v3956
  %v6781 = vpack.c.b16 %v3965, %v3957
  %v6782 = vpack.c.b16 %v3974, %v3966
  %v6783 = vpack.c.b16 %v3975, %v3967
  %v6784 = vpack.c.b16 %v3976, %v3968
  %v6785 = vpack.c.b16 %v3977, %v3969
  %v6786 = vpack.c.b16 %v3978, %v3970
  %v6787 = vpack.c.b16 %v3979, %v3971
  %v6788 = vpack.c.b16 %v3980, %v3972
  %v6789 = vpack.c.b16 %v3981, %v3973
  %v6790 = vpack.c.b16 %v3990, %v3982
  %v6791 = vpack.c.b16 %v3991, %v3983
  %v6792 = vpack.c.b16 %v3992, %v3984
  %v6793 = vpack.c.b16 %v3993, %v3985
  %v6794 = vpack.c.b16 %v3994, %v3986
  %v6795 = vpack.c.b16 %v3995, %v3987
  %v6796 = vpack.c.b16 %v3996, %v3988
  %v6797 = vpack.c.b16 %v3997, %v3989
  %v6798 = vpack.c.b16 %v4006, %v3998
  %v6799 = vpack.c.b16 %v4007, %v3999
  %v6800 = vpack.c.b16 %v4008, %v4000
  %v6801 = vpack.c.b16 %v4009, %v4001
  %v6802 = vpack.c.b16 %v4010, %v4002
  %v6803 = vpack.c.b16 %v4011, %v4003
  %v6804 = vpack.c.b16 %v4012, %v4004
  %v6805 = vpack.c.b16 %v4013, %v4005
  %v6806 = vpack.c.b16 %v4022, %v4014
  %v6807 = vpack.c.b16 %v4023, %v4015
  %v6808 = vpack.c.b16 %v4024, %v4016
  %v6809 = vpack.c.b16 %v4025, %v4017
  %v6810 = vpack.c.b16 %v4026, %v4018
  %v6811 = vpack.c.b16 %v4027, %v4019
  %v6812 = vpack.c.b16 %v4028, %v4020
  %v6813 = vpack.c.b16 %v4029, %v4021
  %v6814 = vpack.c.b16 %v4038, %v4030
  %v6815 = vpack.c.b16 %v4039, %v4031
  %v6816 = vpack.c.b16 %v4040, %v4032
  %v6817 = vpack.c.b16 %v4041, %v4033
  %v6818 = vpack.c.b16 %v4042, %v4034
  %v6819 = vpack.c.b16 %v4043, %v4035
  %v6820 = vpack.c.b16 %v4044, %v4036
  %v6821 = vpack.c.b16 %v4045, %v4037
  %v6822 = vpack.c.b16 %v4054, %v4046
  %v6823 = vpack.c.b16 %v4055, %v4047
  %v6824 = vpack.c.b16 %v4056, %v4048
  %v6825 = vpack.c.b16 %v4057, %v4049
  %v6826 = vpack.c.b16 %v4058, %v4050
  %v6827 = vpack.c.b16 %v4059, %v4051
  %v6828 = vpack.c.b16 %v4060, %v4052
  %v6829 = vpack.c.b16 %v4061, %v4053
  %v6830 = vpack.c.b16 %v4070, %v4062
  %v6831 = vpack.c.b16 %v4071, %v4063
  %v6832 = vpack.c.b16 %v4072, %v4064
  %v6833 = vpack.c.b16 %v4073, %v4065
  %v6834 = vpack.c.b16 %v4074, %v4066
  %v6835 = vpack.c.b16 %v4075, %v4067
  %v6836 = vpack.c.b16 %v4076, %v4068
  %v6837 = vpack.c.b16 %v4077, %v4069
  %v6838 = vpack.c.b16 %v4086, %v4078
  %v6839 = vpack.c.b16 %v4087, %v4079
  %v6840 = vpack.c.b16 %v4088, %v4080
  %v6841 = vpack.c.b16 %v4089, %v4081
  %v6842 = vpack.c.b16 %v4090, %v4082
  %v6843 = vpack.c.b16 %v4091, %v4083
  %v6844 = vpack.c.b16 %v4092, %v4084
  %v6845 = vpack.c.b16 %v4093, %v4085
  %v6846 = vpack.c.b16 %v4102, %v4094
  %v6847 = vpack.c.b16 %v4103, %v4095
  %v6848 = vpack.c.b16 %v4104, %v4096
  %v6849 = vpack.c.b16 %v4105, %v4097
  %v6850 = vpack.c.b16 %v4106, %v4098
  %v6851 = vpack.c.b16 %v4107, %v4099
  %v6852 = vpack.c.b16 %v4108, %v4100
  %v6853 = vpack.c.b16 %v4109, %v4101
  %v6854 = vpack.c.b16 %v4118, %v4110
  %v6855 = vpack.c.b16 %v4119, %v4111
  %v6856 = vpack.c.b16 %v4120, %v4112
  %v6857 = vpack.c.b16 %v4121, %v4113
  %v6858 = vpack.c.b16 %v4122, %v4114
  %v6859 = vpack.c.b16 %v4123, %v4115
  %v6860 = vpack.c.b16 %v4124, %v4116
  %v6861 = vpack.c.b16 %v4125, %v4117
  %v6862 = vpack.c.b16 %v4134, %v4126
  %v6863 = vpack.c.b16 %v4135, %v4127
  %v6864 = vpack.c.b16 %v4136, %v4128
  %v6865 = vpack.c.b16 %v4137, %v4129
  %v6866 = vpack.c.b16 %v4138, %v4130
  %v6867 = vpack.c.b16 %v4139, %v4131
  %v6868 = vpack.c.b16 %v4140, %v4132
  %v6869 = vpack.c.b16 %v4141, %v4133
  %v6870 = vpack.c.b16 %v4150, %v4142
  %v6871 = vpack.c.b16 %v4151, %v4143
  %v6872 = vpack.c.b16 %v4152, %v4144
  %v6873 = vpack.c.b16 %v4153, %v4145
  %v6874 = vpack.c.b16 %v4154, %v4146
  %v6875 = vpack.c.b16 %v4155, %v4147
  %v6876 = vpack.c.b16 %v4156, %v4148
  %v6877 = vpack.c.b16 %v4157, %v4149
  %v6878 = vpack.c.b16 %v4166, %v4158
  %v6879 = vpack.c.b16 %v4167, %v4159
  %v6880 = vpack.c.b16 %v4168, %v4160
  %v6881 = vpack.c.b16 %v4169, %v4161
  %v6882 = vpack.c.b16 %v4170, %v4162
  %v6883 = vpack.c.b16 %v4171, %v4163
  %v6884 = vpack.c.b16 %v4172, %v4164
  %v6885 = vpack.c.b16 %v4173, %v4165
  %v6886 = vpack.c.b16 %v4182, %v4174
  %v6887 = vpack.c.b16 %v4183, %v4175
  %v6888 = vpack.c.b16 %v4184, %v4176
  %v6889 = vpack.c.b16 %v4185, %v4177
  %v6890 = vpack.c.b16 %v4186, %v4178
  %v6891 = vpack.c.b16 %v4187, %v4179
  %v6892 = vpack.c.b16 %v4188, %v4180
  %v6893 = vpack.c.b16 %v4189, %v4181
  %v6894 = vpack.c.b16 %v4198, %v4190
  %v6895 = vpack.c.b16 %v4199, %v4191
  %v6896 = vpack.c.b16 %v4200, %v4192
  %v6897 = vpack.c.b16 %v4201, %v4193
  %v6898 = vpack.c.b16 %v4202, %v4194
  %v6899 = vpack.c.b16 %v4203, %v4195
  %v6900 = vpack.c.b16 %v4204, %v4196
  %v6901 = vpack.c.b16 %v4205, %v4197
  %v6902 = vpack.c.b16 %v4214, %v4206
  %v6903 = vpack.c.b16 %v4215, %v4207
  %v6904 = vpack.c.b16 %v4216, %v4208
  %v6905 = vpack.c.b16 %v4217, %v4209
  %v6906 = vpack.c.b16 %v4218, %v4210
  %v6907 = vpack.c.b16 %v4219, %v4211
  %v6908 = vpack.c.b16 %v4220, %v4212
  %v6909 = vpack.c.b16 %v4221, %v4213
  %v6910 = vpack.c.b16 %v4230, %v4222
  %v6911 = vpack.c.b16 %v4231, %v4223
  %v6912 = vpack.c.b16 %v4232, %v4224
  %v6913 = vpack.c.b16 %v4233, %v4225
  %v6914 = vpack.c.b16 %v4234, %v4226
  %v6915 = vpack.c.b16 %v4235, %v4227
  %v6916 = vpack.c.b16 %v4236, %v4228
  %v6917 = vpack.c.b16 %v4237, %v4229
  %v6918 = vpack.c.b16 %v4246, %v4238
  %v6919 = vpack.c.b16 %v4247, %v4239
  %v6920 = vpack.c.b16 %v4248, %v4240
  %v6921 = vpack.c.b16 %v4249, %v4241
  %v6922 = vpack.c.b16 %v4250, %v4242
  %v6923 = vpack.c.b16 %v4251, %v4243
  %v6924 = vpack.c.b16 %v4252, %v4244
  %v6925 = vpack.c.b16 %v4253, %v4245
  %v6926 = vpack.c.b16 %v4262, %v4254
  %v6927 = vpack.c.b16 %v4263, %v4255
  %v6928 = vpack.c.b16 %v4264, %v4256
  %v6929 = vpack.c.b16 %v4265, %v4257
  %v6930 = vpack.c.b16 %v4266, %v4258
  %v6931 = vpack.c.b16 %v4267, %v4259
  %v6932 = vpack.c.b16 %v4268, %v4260
  %v6933 = vpack.c.b16 %v4269, %v4261
  %v6934 = vpack.c.b16 %v4278, %v4270
  %v6935 = vpack.c.b16 %v4279, %v4271
  %v6936 = vpack.c.b16 %v4280, %v4272
  %v6937 = vpack.c.b16 %v4281, %v4273
  %v6938 = vpack.c.b16 %v4282, %v4274
  %v6939 = vpack.c.b16 %v4283, %v4275
  %v6940 = vpack.c.b16 %v4284, %v4276
  %v6941 = vpack.c.b16 %v4285, %v4277
  %v6942 = vpack.c.b16 %v4294, %v4286
  %v6943 = vpack.c.b16 %v4295, %v4287
  %v6944 = vpack.c.b16 %v4296, %v4288
  %v6945 = vpack.c.b16 %v4297, %v4289
  %v6946 = vpack.c.b16 %v4298, %v4290
  %v6947 = vpack.c.b16 %v4299, %v4291
  %v6948 = vpack.c.b16 %v4300, %v4292
  %v6949 = vpack.c.b16 %v4301, %v4293
  %v6950 = vpack.c.b16 %v4310, %v4302
  %v6951 = vpack.c.b16 %v4311, %v4303
  %v6952 = vpack.c.b16 %v4312, %v4304
  %v6953 = vpack.c.b16 %v4313, %v4305
  %v6954 = vpack.c.b16 %v4314, %v4306
  %v6955 = vpack.c.b16 %v4315, %v4307
  %v6956 = vpack.c.b16 %v4316, %v4308
  %v6957 = vpack.c.b16 %v4317, %v4309
  %v6958 = vpack.c.b16 %v4326, %v4318
  %v6959 = vpack.c.b16 %v4327, %v4319
  %v6960 = vpack.c.b16 %v4328, %v4320
  %v6961 = vpack.c.b16 %v4329, %v4321
  %v6962 = vpack.c.b16 %v4330, %v4322
  %v6963 = vpack.c.b16 %v4331, %v4323
  %v6964 = vpack.c.b16 %v4332, %v4324
  %v6965 = vpack.c.b16 %v4333, %v4325
  %v6966 = vpack.c.b16 %v4342, %v4334
  %v6967 = vpack.c.b16 %v4343, %v4335
  %v6968 = vpack.c.b16 %v4344, %v4336
  %v6969 = vpack.c.b16 %v4345, %v4337
  %v6970 = vpack.c.b16 %v4346, %v4338
  %v6971 = vpack.c.b16 %v4347, %v4339
  %v6972 = vpack.c.b16 %v4348, %v4340
  %v6973 = vpack.c.b16 %v4349, %v4341
  %v6974 = vpack.c.b16 %v4358, %v4350
  %v6975 = vpack.c.b16 %v4359, %v4351
  %v6976 = vpack.c.b16 %v4360, %v4352
  %v6977 = vpack.c.b16 %v4361, %v4353
  %v6978 = vpack.c.b16 %v4362, %v4354
  %v6979 = vpack.c.b16 %v4363, %v4355
  %v6980 = vpack.c.b16 %v4364, %v4356
  %v6981 = vpack.c.b16 %v4365, %v4357
  %v6982 = vpack.c.b16 %v4374, %v4366
  %v6983 = vpack.c.b16 %v4375, %v4367
  %v6984 = vpack.c.b16 %v4376, %v4368
  %v6985 = vpack.c.b16 %v4377, %v4369
  %v6986 = vpack.c.b16 %v4378, %v4370
  %v6987 = vpack.c.b16 %v4379, %v4371
  %v6988 = vpack.c.b16 %v4380, %v4372
  %v6989 = vpack.c.b16 %v4381, %v4373
  %v6990 = vpack.c.b16 %v4390, %v4382
  %v6991 = vpack.c.b16 %v4391, %v4383
  %v6992 = vpack.c.b16 %v4392, %v4384
  %v6993 = vpack.c.b16 %v4393, %v4385
  %v6994 = vpack.c.b16 %v4394, %v4386
  %v6995 = vpack.c.b16 %v4395, %v4387
  %v6996 = vpack.c.b16 %v4396, %v4388
  %v6997 = vpack.c.b16 %v4397, %v4389
  %v6998 = vpack.c.b16 %v4406, %v4398
  %v6999 = vpack.c.b16 %v4407, %v4399
  %v7000 = vpack.c.b16 %v4408, %v4400
  %v7001 = vpack.c.b16 %v4409, %v4401
  %v7002 = vpack.c.b16 %v4410, %v4402
  %v7003 = vpack.c.b16 %v4411, %v4403
  %v7004 = vpack.c.b16 %v4412, %v4404
  %v7005 = vpack.c.b16 %v4413, %v4405
  %v7006 = vpack.c.b16 %v4422, %v4414
  %v7007 = vpack.c.b16 %v4423, %v4415
  %v7008 = vpack.c.b16 %v4424, %v4416
  %v7009 = vpack.c.b16 %v4425, %v4417
  %v7010 = vpack.c.b16 %v4426, %v4418
  %v7011 = vpack.c.b16 %v4427, %v4419
  %v7012 = vpack.c.b16 %v4428, %v4420
  %v7013 = vpack.c.b16 %v4429, %v4421
  %v7014 = vpack.c.b16 %v4438, %v4430
  %v7015 = vpack.c.b16 %v4439, %v4431
  %v7016 = vpack.c.b16 %v4440, %v4432
  %v7017 = vpack.c.b16 %v4441, %v4433
  %v7018 = vpack.c.b16 %v4442, %v4434
  %v7019 = vpack.c.b16 %v4443, %v4435
  %v7020 = vpack.c.b16 %v4444, %v4436
  %v7021 = vpack.c.b16 %v4445, %v4437
  %v7022 = vpack.c.b16 %v4454, %v4446
  %v7023 = vpack.c.b16 %v4455, %v4447
  %v7024 = vpack.c.b16 %v4456, %v4448
  %v7025 = vpack.c.b16 %v4457, %v4449
  %v7026 = vpack.c.b16 %v4458, %v4450
  %v7027 = vpack.c.b16 %v4459, %v4451
  %v7028 = vpack.c.b16 %v4460, %v4452
  %v7029 = vpack.c.b16 %v4461, %v4453
  %v7030 = vpack.c.b16 %v4470, %v4462
  %v7031 = vpack.c.b16 %v4471, %v4463
  %v7032 = vpack.c.b16 %v4472, %v4464
  %v7033 = vpack.c.b16 %v4473, %v4465
  %v7034 = vpack.c.b16 %v4474, %v4466
  %v7035 = vpack.c.b16 %v4475, %v4467
  %v7036 = vpack.c.b16 %v4476, %v4468
  %v7037 = vpack.c.b16 %v4477, %v4469
  %v7038 = vpack.c.b16 %v4486, %v4478
  %v7039 = vpack.c.b16 %v4487, %v4479
  %v7040 = vpack.c.b16 %v4488, %v4480
  %v7041 = vpack.c.b16 %v4489, %v4481
  %v7042 = vpack.c.b16 %v4490, %v4482
  %v7043 = vpack.c.b16 %v4491, %v4483
  %v7044 = vpack.c.b16 %v4492, %v4484
  %v7045 = vpack.c.b16 %v4493, %v4485
  %v7046 = vpack.c.b16 %v4502, %v4494
  %v7047 = vpack.c.b16 %v4503, %v4495
  %v7048 = vpack.c.b16 %v4504, %v4496
  %v7049 = vpack.c.b16 %v4505, %v4497
  %v7050 = vpack.c.b16 %v4506, %v4498
  %v7051 = vpack.c.b16 %v4507, %v4499
  %v7052 = vpack.c.b16 %v4508, %v4500
  %v7053 = vpack.c.b16 %v4509, %v4501
  %v7054 = vpack.c.b16 %v4518, %v4510
  %v7055 = vpack.c.b16 %v4519, %v4511
  %v7056 = vpack.c.b16 %v4520, %v4512
  %v7057 = vpack.c.b16 %v4521, %v4513
  %v7058 = vpack.c.b16 %v4522, %v4514
  %v7059 = vpack.c.b16 %v4523, %v4515
  %v7060 = vpack.c.b16 %v4524, %v4516
  %v7061 = vpack.c.b16 %v4525, %v4517
  %v7062 = vpack.c.b16 %v4534, %v4526
  %v7063 = vpack.c.b16 %v4535, %v4527
  %v7064 = vpack.c.b16 %v4536, %v4528
  %v7065 = vpack.c.b16 %v4537, %v4529
  %v7066 = vpack.c.b16 %v4538, %v4530
  %v7067 = vpack.c.b16 %v4539, %v4531
  %v7068 = vpack.c.b16 %v4540, %v4532
  %v7069 = vpack.c.b16 %v4541, %v4533
  %v7070 = vpack.c.b16 %v4550, %v4542
  %v7071 = vpack.c.b16 %v4551, %v4543
  %v7072 = vpack.c.b16 %v4552, %v4544
  %v7073 = vpack.c.b16 %v4553, %v4545
  %v7074 = vpack.c.b16 %v4554, %v4546
  %v7075 = vpack.c.b16 %v4555, %v4547
  %v7076 = vpack.c.b16 %v4556, %v4548
  %v7077 = vpack.c.b16 %v4557, %v4549
  %v7078 = vpack.c.b16 %v4566, %v4558
  %v7079 = vpack.c.b16 %v4567, %v4559
  %v7080 = vpack.c.b16 %v4568, %v4560
  %v7081 = vpack.c.b16 %v4569, %v4561
  %v7082 = vpack.c.b16 %v4570, %v4562
  %v7083 = vpack.c.b16 %v4571, %v4563
  %v7084 = vpack.c.b16 %v4572, %v4564
  %v7085 = vpack.c.b16 %v4573, %v4565
  %v7086 = vpack.c.b16 %v4582, %v4574
  %v7087 = vpack.c.b16 %v4583, %v4575
  %v7088 = vpack.c.b16 %v4584, %v4576
  %v7089 = vpack.c.b16 %v4585, %v4577
  %v7090 = vpack.c.b16 %v4586, %v4578
  %v7091 = vpack.c.b16 %v4587, %v4579
  %v7092 = vpack.c.b16 %v4588, %v4580
  %v7093 = vpack.c.b16 %v4589, %v4581
  %v7094 = vpack.c.b16 %v4598, %v4590
  %v7095 = vpack.c.b16 %v4599, %v4591
  %v7096 = vpack.c.b16 %v4600, %v4592
  %v7097 = vpack.c.b16 %v4601, %v4593
  %v7098 = vpack.c.b16 %v4602, %v4594
  %v7099 = vpack.c.b16 %v4603, %v4595
  %v7100 = vpack.c.b16 %v4604, %v4596
  %v7101 = vpack.c.b16 %v4605, %v4597
  %v7102 = vpack.c.b16 %v4614, %v4606
  %v7103 = vpack.c.b16 %v4615, %v4607
  %v7104 = vpack.c.b16 %v4616, %v4608
  %v7105 = vpack.c.b16 %v4617, %v4609
  %v7106 = vpack.c.b16 %v4618, %v4610
  %v7107 = vpack.c.b16 %v4619, %v4611
  %v7108 = vpack.c.b16 %v4620, %v4612
  %v7109 = vpack.c.b16 %v4621, %v4613
  %v7110 = vpack.c.b16 %v4630, %v4622
  %v7111 = vpack.c.b16 %v4631, %v4623
  %v7112 = vpack.c.b16 %v4632, %v4624
  %v7113 = vpack.c.b16 %v4633, %v4625
  %v7114 = vpack.c.b16 %v4634, %v4626
  %v7115 = vpack.c.b16 %v4635, %v4627
  %v7116 = vpack.c.b16 %v4636, %v4628
  %v7117 = vpack.c.b16 %v4637, %v4629
  %v7118 = vpack.c.b16 %v4646, %v4638
  %v7119 = vpack.c.b16 %v4647, %v4639
  %v7120 = vpack.c.b16 %v4648, %v4640
  %v7121 = vpack.c.b16 %v4649, %v4641
  %v7122 = vpack.c.b16 %v4650, %v4642
  %v7123 = vpack.c.b16 %v4651, %v4643
  %v7124 = vpack.c.b16 %v4652, %v4644
  %v7125 = vpack.c.b16 %v4653, %v4645
  %v7126 = vpack.c.b16 %v4662, %v4654
  %v7127 = vpack.c.b16 %v4663, %v4655
  %v7128 = vpack.c.b16 %v4664, %v4656
  %v7129 = vpack.c.b16 %v4665, %v4657
  %v7130 = vpack.c.b16 %v4666, %v4658
  %v7131 = vpack.c.b16 %v4667, %v4659
  %v7132 = vpack.c.b16 %v4668, %v4660
  %v7133 = vpack.c.b16 %v4669, %v4661
  %v7134 = vpack.c.b16 %v4678, %v4670
  %v7135 = vpack.c.b16 %v4679, %v4671
  %v7136 = vpack.c.b16 %v4680, %v4672
  %v7137 = vpack.c.b16 %v4681, %v4673
  %v7138 = vpack.c.b16 %v4682, %v4674
  %v7139 = vpack.c.b16 %v4683, %v4675
  %v7140 = vpack.c.b16 %v4684, %v4676
  %v7141 = vpack.c.b16 %v4685, %v4677
  %v7142 = vpack.c.b16 %v4694, %v4686
  %v7143 = vpack.c.b16 %v4695, %v4687
  %v7144 = vpack.c.b16 %v4696, %v4688
  %v7145 = vpack.c.b16 %v4697, %v4689
  %v7146 = vpack.c.b16 %v4698, %v4690
  %v7147 = vpack.c.b16 %v4699, %v4691
  %v7148 = vpack.c.b16 %v4700, %v4692
  %v7149 = vpack.c.b16 %v4701, %v4693
  %v7150 = vpack.c.b16 %v4710, %v4702
  %v7151 = vpack.c.b16 %v4711, %v4703
  %v7152 = vpack.c.b16 %v4712, %v4704
  %v7153 = vpack.c.b16 %v4713, %v4705
  %v7154 = vpack.c.b16 %v4714, %v4706
  %v7155 = vpack.c.b16 %v4715, %v4707
  %v7156 = vpack.c.b16 %v4716, %v4708
  %v7157 = vpack.c.b16 %v4717, %v4709
  %v7158 = vpack.c.b16 %v4726, %v4718
  %v7159 = vpack.c.b16 %v4727, %v4719
  %v7160 = vpack.c.b16 %v4728, %v4720
  %v7161 = vpack.c.b16 %v4729, %v4721
  %v7162 = vpack.c.b16 %v4730, %v4722
  %v7163 = vpack.c.b16 %v4731, %v4723
  %v7164 = vpack.c.b16 %v4732, %v4724
  %v7165 = vpack.c.b16 %v4733, %v4725
  %v7166 = vpack.c.b16 %v4742, %v4734
  %v7167 = vpack.c.b16 %v4743, %v4735
  %v7168 = vpack.c.b16 %v4744, %v4736
  %v7169 = vpack.c.b16 %v4745, %v4737
  %v7170 = vpack.c.b16 %v4746, %v4738
  %v7171 = vpack.c.b16 %v4747, %v4739
  %v7172 = vpack.c.b16 %v4748, %v4740
  %v7173 = vpack.c.b16 %v4749, %v4741
  %v7174 = vpack.c.b16 %v4758, %v4750
  %v7175 = vpack.c.b16 %v4759, %v4751
  %v7176 = vpack.c.b16 %v4760, %v4752
  %v7177 = vpack.c.b16 %v4761, %v4753
  %v7178 = vpack.c.b16 %v4762, %v4754
  %v7179 = vpack.c.b16 %v4763, %v4755
  %v7180 = vpack.c.b16 %v4764, %v4756
  %v7181 = vpack.c.b16 %v4765, %v4757
  %v7182 = vpack.c.b16 %v4774, %v4766
  %v7183 = vpack.c.b16 %v4775, %v4767
  %v7184 = vpack.c.b16 %v4776, %v4768
  %v7185 = vpack.c.b16 %v4777, %v4769
  %v7186 = vpack.c.b16 %v4778, %v4770
  %v7187 = vpack.c.b16 %v4779, %v4771
  %v7188 = vpack.c.b16 %v4780, %v4772
  %v7189 = vpack.c.b16 %v4781, %v4773
  %v7190 = vpack.c.b16 %v4790, %v4782
  %v7191 = vpack.c.b16 %v4791, %v4783
  %v7192 = vpack.c.b16 %v4792, %v4784
  %v7193 = vpack.c.b16 %v4793, %v4785
  %v7194 = vpack.c.b16 %v4794, %v4786
  %v7195 = vpack.c.b16 %v4795, %v4787
  %v7196 = vpack.c.b16 %v4796, %v4788
  %v7197 = vpack.c.b16 %v4797, %v4789
  %v7198 = vpack.c.b16 %v4806, %v4798
  %v7199 = vpack.c.b16 %v4807, %v4799
  %v7200 = vpack.c.b16 %v4808, %v4800
  %v7201 = vpack.c.b16 %v4809, %v4801
  %v7202 = vpack.c.b16 %v4810, %v4802
  %v7203 = vpack.c.b16 %v4811, %v4803
  %v7204 = vpack.c.b16 %v4812, %v4804
  %v7205 = vpack.c.b16 %v4813, %v4805
  %v7206 = vpack.c.b16 %v4822, %v4814
  %v7207 = vpack.c.b16 %v4823, %v4815
  %v7208 = vpack.c.b16 %v4824, %v4816
  %v7209 = vpack.c.b16 %v4825, %v4817
  %v7210 = vpack.c.b16 %v4826, %v4818
  %v7211 = vpack.c.b16 %v4827, %v4819
  %v7212 = vpack.c.b16 %v4828, %v4820
  %v7213 = vpack.c.b16 %v4829, %v4821
  %v7214 = vpack.c.b16 %v4838, %v4830
  %v7215 = vpack.c.b16 %v4839, %v4831
  %v7216 = vpack.c.b16 %v4840, %v4832
  %v7217 = vpack.c.b16 %v4841, %v4833
  %v7218 = vpack.c.b16 %v4842, %v4834
  %v7219 = vpack.c.b16 %v4843, %v4835
  %v7220 = vpack.c.b16 %v4844, %v4836
  %v7221 = vpack.c.b16 %v4845, %v4837
  %v7222 = vpack.c.b16 %v4854, %v4846
  %v7223 = vpack.c.b16 %v4855, %v4847
  %v7224 = vpack.c.b16 %v4856, %v4848
  %v7225 = vpack.c.b16 %v4857, %v4849
  %v7226 = vpack.c.b16 %v4858, %v4850
  %v7227 = vpack.c.b16 %v4859, %v4851
  %v7228 = vpack.c.b16 %v4860, %v4852
  %v7229 = vpack.c.b16 %v4861, %v4853
  %v7230 = vpack.c.b16 %v4870, %v4862
  %v7231 = vpack.c.b16 %v4871, %v4863
  %v7232 = vpack.c.b16 %v4872, %v4864
  %v7233 = vpack.c.b16 %v4873, %v4865
  %v7234 = vpack.c.b16 %v4874, %v4866
  %v7235 = vpack.c.b16 %v4875, %v4867
  %v7236 = vpack.c.b16 %v4876, %v4868
  %v7237 = vpack.c.b16 %v4877, %v4869
  %v7238 = vpack.c.b16 %v4886, %v4878
  %v7239 = vpack.c.b16 %v4887, %v4879
  %v7240 = vpack.c.b16 %v4888, %v4880
  %v7241 = vpack.c.b16 %v4889, %v4881
  %v7242 = vpack.c.b16 %v4890, %v4882
  %v7243 = vpack.c.b16 %v4891, %v4883
  %v7244 = vpack.c.b16 %v4892, %v4884
  %v7245 = vpack.c.b16 %v4893, %v4885
  %v7246 = vpack.c.b16 %v4902, %v4894
  %v7247 = vpack.c.b16 %v4903, %v4895
  %v7248 = vpack.c.b16 %v4904, %v4896
  %v7249 = vpack.c.b16 %v4905, %v4897
  %v7250 = vpack.c.b16 %v4906, %v4898
  %v7251 = vpack.c.b16 %v4907, %v4899
  %v7252 = vpack.c.b16 %v4908, %v4900
  %v7253 = vpack.c.b16 %v4909, %v4901
  %v7254 = vpack.c.b16 %v4918, %v4910
  %v7255 = vpack.c.b16 %v4919, %v4911
  %v7256 = vpack.c.b16 %v4920, %v4912
  %v7257 = vpack.c.b16 %v4921, %v4913
  %v7258 = vpack.c.b16 %v4922, %v4914
  %v7259 = vpack.c.b16 %v4923, %v4915
  %v7260 = vpack.c.b16 %v4924, %v4916
  %v7261 = vpack.c.b16 %v4925, %v4917
  %v7262 = vpack.c.b16 %v4934, %v4926
  %v7263 = vpack.c.b16 %v4935, %v4927
  %v7264 = vpack.c.b16 %v4936, %v4928
  %v7265 = vpack.c.b16 %v4937, %v4929
  %v7266 = vpack.c.b16 %v4938, %v4930
  %v7267 = vpack.c.b16 %v4939, %v4931
  %v7268 = vpack.c.b16 %v4940, %v4932
  %v7269 = vpack.c.b16 %v4941, %v4933
  %v7270 = vpack.c.b16 %v4950, %v4942
  %v7271 = vpack.c.b16 %v4951, %v4943
  %v7272 = vpack.c.b16 %v4952, %v4944
  %v7273 = vpack.c.b16 %v4953, %v4945
  %v7274 = vpack.c.b16 %v4954, %v4946
  %v7275 = vpack.c.b16 %v4955, %v4947
  %v7276 = vpack.c.b16 %v4956, %v4948
  %v7277 = vpack.c.b16 %v4957, %v4949
  %v7278 = vpack.c.b16 %v4966, %v4958
  %v7279 = vpack.c.b16 %v4967, %v4959
  %v7280 = vpack.c.b16 %v4968, %v4960
  %v7281 = vpack.c.b16 %v4969, %v4961
  %v7282 = vpack.c.b16 %v4970, %v4962
  %v7283 = vpack.c.b16 %v4971, %v4963
  %v7284 = vpack.c.b16 %v4972, %v4964
  %v7285 = vpack.c.b16 %v4973, %v4965
  %v7286 = vpack.c.b16 %v4982, %v4974
  %v7287 = vpack.c.b16 %v4983, %v4975
  %v7288 = vpack.c.b16 %v4984, %v4976
  %v7289 = vpack.c.b16 %v4985, %v4977
  %v7290 = vpack.c.b16 %v4986, %v4978
  %v7291 = vpack.c.b16 %v4987, %v4979
  %v7292 = vpack.c.b16 %v4988, %v4980
  %v7293 = vpack.c.b16 %v4989, %v4981
  %v7294 = vpack.c.b16 %v4998, %v4990
  %v7295 = vpack.c.b16 %v4999, %v4991
  %v7296 = vpack.c.b16 %v5000, %v4992
  %v7297 = vpack.c.b16 %v5001, %v4993
  %v7298 = vpack.c.b16 %v5002, %v4994
  %v7299 = vpack.c.b16 %v5003, %v4995
  %v7300 = vpack.c.b16 %v5004, %v4996
  %v7301 = vpack.c.b16 %v5005, %v4997
  %v7302 = vpack.c.b16 %v5014, %v5006
  %v7303 = vpack.c.b16 %v5015, %v5007
  %v7304 = vpack.c.b16 %v5016, %v5008
  %v7305 = vpack.c.b16 %v5017, %v5009
  %v7306 = vpack.c.b16 %v5018, %v5010
  %v7307 = vpack.c.b16 %v5019, %v5011
  %v7308 = vpack.c.b16 %v5020, %v5012
  %v7309 = vpack.c.b16 %v5021, %v5013
  %v7310 = vpack.c.b16 %v5030, %v5022
  %v7311 = vpack.c.b16 %v5031, %v5023
  %v7312 = vpack.c.b16 %v5032, %v5024
  %v7313 = vpack.c.b16 %v5033, %v5025
  %v7314 = vpack.c.b16 %v5034, %v5026
  %v7315 = vpack.c.b16 %v5035, %v5027
  %v7316 = vpack.c.b16 %v5036, %v5028
  %v7317 = vpack.c.b16 %v5037, %v5029
  %v7318 = vpack.c.b16 %v5046, %v5038
  %v7319 = vpack.c.b16 %v5047, %v5039
  %v7320 = vpack.c.b16 %v5048, %v5040
  %v7321 = vpack.c.b16 %v5049, %v5041
  %v7322 = vpack.c.b16 %v5050, %v5042
  %v7323 = vpack.c.b16 %v5051, %v5043
  %v7324 = vpack.c.b16 %v5052, %v5044
  %v7325 = vpack.c.b16 %v5053, %v5045
  %v7326 = vpack.c.b16 %v5062, %v5054
  %v7327 = vpack.c.b16 %v5063, %v5055
  %v7328 = vpack.c.b16 %v5064, %v5056
  %v7329 = vpack.c.b16 %v5065, %v5057
  %v7330 = vpack.c.b16 %v5066, %v5058
  %v7331 = vpack.c.b16 %v5067, %v5059
  %v7332 = vpack.c.b16 %v5068, %v5060
  %v7333 = vpack.c.b16 %v5069, %v5061
  %v7334 = vpack.c.b16 %v5078, %v5070
  %v7335 = vpack.c.b16 %v5079, %v5071
  %v7336 = vpack.c.b16 %v5080, %v5072
  %v7337 = vpack.c.b16 %v5081, %v5073
  %v7338 = vpack.c.b16 %v5082, %v5074
  %v7339 = vpack.c.b16 %v5083, %v5075
  %v7340 = vpack.c.b16 %v5084, %v5076
  %v7341 = vpack.c.b16 %v5085, %v5077
  %v7342 = vpack.c.b16 %v5094, %v5086
  %v7343 = vpack.c.b16 %v5095, %v5087
  %v7344 = vpack.c.b16 %v5096, %v5088
  %v7345 = vpack.c.b16 %v5097, %v5089
  %v7346 = vpack.c.b16 %v5098, %v5090
  %v7347 = vpack.c.b16 %v5099, %v5091
  %v7348 = vpack.c.b16 %v5100, %v5092
  %v7349 = vpack.c.b16 %v5101, %v5093
  %v7350 = vpack.c.b16 %v5110, %v5102
  %v7351 = vpack.c.b16 %v5111, %v5103
  %v7352 = vpack.c.b16 %v5112, %v5104
  %v7353 = vpack.c.b16 %v5113, %v5105
  %v7354 = vpack.c.b16 %v5114, %v5106
  %v7355 = vpack.c.b16 %v5115, %v5107
  %v7356 = vpack.c.b16 %v5116, %v5108
  %v7357 = vpack.c.b16 %v5117, %v5109
  %v7358 = vpack.c.b16 %v5126, %v5118
  %v7359 = vpack.c.b16 %v5127, %v5119
  %v7360 = vpack.c.b16 %v5128, %v5120
  %v7361 = vpack.c.b16 %v5129, %v5121
  %v7362 = vpack.c.b16 %v5130, %v5122
  %v7363 = vpack.c.b16 %v5131, %v5123
  %v7364 = vpack.c.b16 %v5132, %v5124
  %v7365 = vpack.c.b16 %v5133, %v5125
  %v7366 = vpack.c.b16 %v5142, %v5134
  %v7367 = vpack.c.b16 %v5143, %v5135
  %v7368 = vpack.c.b16 %v5144, %v5136
  %v7369 = vpack.c.b16 %v5145, %v5137
  %v7370 = vpack.c.b16 %v5146, %v5138
  %v7371 = vpack.c.b16 %v5147, %v5139
  %v7372 = vpack.c.b16 %v5148, %v5140
  %v7373 = vpack.c.b16 %v5149, %v5141
  %v7374 = vpack.c.b16 %v5158, %v5150
  %v7375 = vpack.c.b16 %v5159, %v5151
  %v7376 = vpack.c.b16 %v5160, %v5152
  %v7377 = vpack.c.b16 %v5161, %v5153
  %v7378 = vpack.c.b16 %v5162, %v5154
  %v7379 = vpack.c.b16 %v5163, %v5155
  %v7380 = vpack.c.b16 %v5164, %v5156
  %v7381 = vpack.c.b16 %v5165, %v5157
  %v7382 = vpack.c.b16 %v5174, %v5166
  %v7383 = vpack.c.b16 %v5175, %v5167
  %v7384 = vpack.c.b16 %v5176, %v5168
  %v7385 = vpack.c.b16 %v5177, %v5169
  %v7386 = vpack.c.b16 %v5178, %v5170
  %v7387 = vpack.c.b16 %v5179, %v5171
  %v7388 = vpack.c.b16 %v5180, %v5172
  %v7389 = vpack.c.b16 %v5181, %v5173
  %v7390 = vpack.c.b16 %v5190, %v5182
  %v7391 = vpack.c.b16 %v5191, %v5183
  %v7392 = vpack.c.b16 %v5192, %v5184
  %v7393 = vpack.c.b16 %v5193, %v5185
  %v7394 = vpack.c.b16 %v5194, %v5186
  %v7395 = vpack.c.b16 %v5195, %v5187
  %v7396 = vpack.c.b16 %v5196, %v5188
  %v7397 = vpack.c.b16 %v5197, %v5189
  %v7398 = vpack.c.b16 %v5206, %v5198
  %v7399 = vpack.c.b16 %v5207, %v5199
  %v7400 = vpack.c.b16 %v5208, %v5200
  %v7401 = vpack.c.b16 %v5209, %v5201
  %v7402 = vpack.c.b16 %v5210, %v5202
  %v7403 = vpack.c.b16 %v5211, %v5203
  %v7404 = vpack.c.b16 %v5212, %v5204
  %v7405 = vpack.c.b16 %v5213, %v5205
  %v7406 = vpack.c.b16 %v5222, %v5214
  %v7407 = vpack.c.b16 %v5223, %v5215
  %v7408 = vpack.c.b16 %v5224, %v5216
  %v7409 = vpack.c.b16 %v5225, %v5217
  %v7410 = vpack.c.b16 %v5226, %v5218
  %v7411 = vpack.c.b16 %v5227, %v5219
  %v7412 = vpack.c.b16 %v5228, %v5220
  %v7413 = vpack.c.b16 %v5229, %v5221
  %v7414 = vpack.c.b16 %v5238, %v5230
  %v7415 = vpack.c.b16 %v5239, %v5231
  %v7416 = vpack.c.b16 %v5240, %v5232
  %v7417 = vpack.c.b16 %v5241, %v5233
  %v7418 = vpack.c.b16 %v5242, %v5234
  %v7419 = vpack.c.b16 %v5243, %v5235
  %v7420 = vpack.c.b16 %v5244, %v5236
  %v7421 = vpack.c.b16 %v5245, %v5237
  %v7422 = vpack.c.b16 %v5254, %v5246
  %v7423 = vpack.c.b16 %v5255, %v5247
  %v7424 = vpack.c.b16 %v5256, %v5248
  %v7425 = vpack.c.b16 %v5257, %v5249
  %v7426 = vpack.c.b16 %v5258, %v5250
  %v7427 = vpack.c.b16 %v5259, %v5251
  %v7428 = vpack.c.b16 %v5260, %v5252
  %v7429 = vpack.c.b16 %v5261, %v5253
  %v7430 = vpack.c.b16 %v5270, %v5262
  %v7431 = vpack.c.b16 %v5271, %v5263
  %v7432 = vpack.c.b16 %v5272, %v5264
  %v7433 = vpack.c.b16 %v5273, %v5265
  %v7434 = vpack.c.b16 %v5274, %v5266
  %v7435 = vpack.c.b16 %v5275, %v5267
  %v7436 = vpack.c.b16 %v5276, %v5268
  %v7437 = vpack.c.b16 %v5277, %v5269
  %v7438 = vpack.c.b16 %v5286, %v5278
  %v7439 = vpack.c.b16 %v5287, %v5279
  %v7440 = vpack.c.b16 %v5288, %v5280
  %v7441 = vpack.c.b16 %v5289, %v5281
  %v7442 = vpack.c.b16 %v5290, %v5282
  %v7443 = vpack.c.b16 %v5291, %v5283
  %v7444 = vpack.c.b16 %v5292, %v5284
  %v7445 = vpack.c.b16 %v5293, %v5285
  %v7446 = vpack.c.b16 %v5302, %v5294
  %v7447 = vpack.c.b16 %v5303, %v5295
  %v7448 = vpack.c.b16 %v5304, %v5296
  %v7449 = vpack.c.b16 %v5305, %v5297
  %v7450 = vpack.c.b16 %v5306, %v5298
  %v7451 = vpack.c.b16 %v5307, %v5299
  %v7452 = vpack.c.b16 %v5308, %v5300
  %v7453 = vpack.c.b16 %v5309, %v5301
  %v7454 = vpack.c.b16 %v5318, %v5310
  %v7455 = vpack.c.b16 %v5319, %v5311
  %v7456 = vpack.c.b16 %v5320, %v5312
  %v7457 = vpack.c.b16 %v5321, %v5313
  %v7458 = vpack.c.b16 %v5322, %v5314
  %v7459 = vpack.c.b16 %v5323, %v5315
  %v7460 = vpack.c.b16 %v5324, %v5316
  %v7461 = vpack.c.b16 %v5325, %v5317
  %v7462 = vpack.c.b16 %v5334, %v5326
  %v7463 = vpack.c.b16 %v5335, %v5327
  %v7464 = vpack.c.b16 %v5336, %v5328
  %v7465 = vpack.c.b16 %v5337, %v5329
  %v7466 = vpack.c.b16 %v5338, %v5330
  %v7467 = vpack.c.b16 %v5339, %v5331
  %v7468 = vpack.c.b16 %v5340, %v5332
  %v7469 = vpack.c.b16 %v5341, %v5333
  %v7470 = vpack.c.b16 %v5350, %v5342
  %v7471 = vpack.c.b16 %v5351, %v5343
  %v7472 = vpack.c.b16 %v5352, %v5344
  %v7473 = vpack.c.b16 %v5353, %v5345
  %v7474 = vpack.c.b16 %v5354, %v5346
  %v7475 = vpack.c.b16 %v5355, %v5347
  %v7476 = vpack.c.b16 %v5356, %v5348
  %v7477 = vpack.c.b16 %v5357, %v5349
  %v7478 = vpack.c.b16 %v5366, %v5358
  %v7479 = vpack.c.b16 %v5367, %v5359
  %v7480 = vpack.c.b16 %v5368, %v5360
  %v7481 = vpack.c.b16 %v5369, %v5361
  %v7482 = vpack.c.b16 %v5370, %v5362
  %v7483 = vpack.c.b16 %v5371, %v5363
  %v7484 = vpack.c.b16 %v5372, %v5364
  %v7485 = vpack.c.b16 %v5373, %v5365
  %v7486 = vpack.c.b16 %v5382, %v5374
  %v7487 = vpack.c.b16 %v5383, %v5375
  %v7488 = vpack.c.b16 %v5384, %v5376
  %v7489 = vpack.c.b16 %v5385, %v5377
  %v7490 = vpack.c.b16 %v5386, %v5378
  %v7491 = vpack.c.b16 %v5387, %v5379
  %v7492 = vpack.c.b16 %v5388, %v5380
  %v7493 = vpack.c.b16 %v5389, %v5381
  %v7494 = vpack.c.b16 %v5398, %v5390
  %v7495 = vpack.c.b16 %v5399, %v5391
  %v7496 = vpack.c.b16 %v5400, %v5392
  %v7497 = vpack.c.b16 %v5401, %v5393
  %v7498 = vpack.c.b16 %v5402, %v5394
  %v7499 = vpack.c.b16 %v5403, %v5395
  %v7500 = vpack.c.b16 %v5404, %v5396
  %v7501 = vpack.c.b16 %v5405, %v5397
  %v7502 = vpack.c.b16 %v5414, %v5406
  %v7503 = vpack.c.b16 %v5415, %v5407
  %v7504 = vpack.c.b16 %v5416, %v5408
  %v7505 = vpack.c.b16 %v5417, %v5409
  %v7506 = vpack.c.b16 %v5418, %v5410
  %v7507 = vpack.c.b16 %v5419, %v5411
  %v7508 = vpack.c.b16 %v5420, %v5412
  %v7509 = vpack.c.b16 %v5421, %v5413
  %v7510 = vpack.c.b16 %v5430, %v5422
  %v7511 = vpack.c.b16 %v5431, %v5423
  %v7512 = vpack.c.b16 %v5432, %v5424
  %v7513 = vpack.c.b16 %v5433, %v5425
  %v7514 = vpack.c.b16 %v5434, %v5426
  %v7515 = vpack.c.b16 %v5435, %v5427
  %v7516 = vpack.c.b16 %v5436, %v5428
  %v7517 = vpack.c.b16 %v5437, %v5429
  %v7518 = vpack.c.b16 %v5446, %v5438
  %v7519 = vpack.c.b16 %v5447, %v5439
  %v7520 = vpack.c.b16 %v5448, %v5440
  %v7521 = vpack.c.b16 %v5449, %v5441
  %v7522 = vpack.c.b16 %v5450, %v5442
  %v7523 = vpack.c.b16 %v5451, %v5443
  %v7524 = vpack.c.b16 %v5452, %v5444
  %v7525 = vpack.c.b16 %v5453, %v5445
  %v7526 = vpack.c.b16 %v5462, %v5454
  %v7527 = vpack.c.b16 %v5463, %v5455
  %v7528 = vpack.c.b16 %v5464, %v5456
  %v7529 = vpack.c.b16 %v5465, %v5457
  %v7530 = vpack.c.b16 %v5466, %v5458
  %v7531 = vpack.c.b16 %v5467, %v5459
  %v7532 = vpack.c.b16 %v5468, %v5460
  %v7533 = vpack.c.b16 %v5469, %v5461
  %v7534 = vpack.c.b16 %v5478, %v5470
  %v7535 = vpack.c.b16 %v5479, %v5471
  %v7536 = vpack.c.b16 %v5480, %v5472
  %v7537 = vpack.c.b16 %v5481, %v5473
  %v7538 = vpack.c.b16 %v5482, %v5474
  %v7539 = vpack.c.b16 %v5483, %v5475
  %v7540 = vpack.c.b16 %v5484, %v5476
  %v7541 = vpack.c.b16 %v5485, %v5477
  %v7542 = vpack.c.b16 %v5494, %v5486
  %v7543 = vpack.c.b16 %v5495, %v5487
  %v7544 = vpack.c.b16 %v5496, %v5488
  %v7545 = vpack.c.b16 %v5497, %v5489
  %v7546 = vpack.c.b16 %v5498, %v5490
  %v7547 = vpack.c.b16 %v5499, %v5491
  %v7548 = vpack.c.b16 %v5500, %v5492
  %v7549 = vpack.c.b16 %v5501, %v5493
  %v7550 = vpack.c.b16 %v5510, %v5502
  %v7551 = vpack.c.b16 %v5511, %v5503
  %v7552 = vpack.c.b16 %v5512, %v5504
  %v7553 = vpack.c.b16 %v5513, %v5505
  %v7554 = vpack.c.b16 %v5514, %v5506
  %v7555 = vpack.c.b16 %v5515, %v5507
  %v7556 = vpack.c.b16 %v5516, %v5508
  %v7557 = vpack.c.b16 %v5517, %v5509
  %v7558 = vpack.c.b16 %v5526, %v5518
  %v7559 = vpack.c.b16 %v5527, %v5519
  %v7560 = vpack.c.b16 %v5528, %v5520
  %v7561 = vpack.c.b16 %v5529, %v5521
  %v7562 = vpack.c.b16 %v5530, %v5522
  %v7563 = vpack.c.b16 %v5531, %v5523
  %v7564 = vpack.c.b16 %v5532, %v5524
  %v7565 = vpack.c.b16 %v5533, %v5525
  %v7566 = vpack.c.b16 %v5542, %v5534
  %v7567 = vpack.c.b16 %v5543, %v5535
  %v7568 = vpack.c.b16 %v5544, %v5536
  %v7569 = vpack.c.b16 %v5545, %v5537
  %v7570 = vpack.c.b16 %v5546, %v5538
  %v7571 = vpack.c.b16 %v5547, %v5539
  %v7572 = vpack.c.b16 %v5548, %v5540
  %v7573 = vpack.c.b16 %v5549, %v5541
  %v7574 = vpack.c.b16 %v5558, %v5550
  %v7575 = vpack.c.b16 %v5559, %v5551
  %v7576 = vpack.c.b16 %v5560, %v5552
  %v7577 = vpack.c.b16 %v5561, %v5553
  %v7578 = vpack.c.b16 %v5562, %v5554
  %v7579 = vpack.c.b16 %v5563, %v5555
  %v7580 = vpack.c.b16 %v5564, %v5556
  %v7581 = vpack.c.b16 %v5565, %v5557
  %v7582 = vpack.c.b16 %v5574, %v5566
  %v7583 = vpack.c.b16 %v5575, %v5567
  %v7584 = vpack.c.b16 %v5576, %v5568
  %v7585 = vpack.c.b16 %v5577, %v5569
  %v7586 = vpack.c.b16 %v5578, %v5570
  %v7587 = vpack.c.b16 %v5579, %v5571
  %v7588 = vpack.c.b16 %v5580, %v5572
  %v7589 = vpack.c.b16 %v5581, %v5573
  %v7590 = vpack.c.b16 %v5590, %v5582
  %v7591 = vpack.c.b16 %v5591, %v5583
  %v7592 = vpack.c.b16 %v5592, %v5584
  %v7593 = vpack.c.b16 %v5593, %v5585
  %v7594 = vpack.c.b16 %v5594, %v5586
  %v7595 = vpack.c.b16 %v5595, %v5587
  %v7596 = vpack.c.b16 %v5596, %v5588
  %v7597 = vpack.c.b16 %v5597, %v5589
  %v7598 = vpack.c.b16 %v5606, %v5598
  %v7599 = vpack.c.b16 %v5607, %v5599
  %v7600 = vpack.c.b16 %v5608, %v5600
  %v7601 = vpack.c.b16 %v5609, %v5601
  %v7602 = vpack.c.b16 %v5610, %v5602
  %v7603 = vpack.c.b16 %v5611, %v5603
  %v7604 = vpack.c.b16 %v5612, %v5604
  %v7605 = vpack.c.b16 %v5613, %v5605
  %v7606 = vpack.c.b16 %v5622, %v5614
  %v7607 = vpack.c.b16 %v5623, %v5615
  %v7608 = vpack.c.b16 %v5624, %v5616
  %v7609 = vpack.c.b16 %v5625, %v5617
  %v7610 = vpack.c.b16 %v5626, %v5618
  %v7611 = vpack.c.b16 %v5627, %v5619
  %v7612 = vpack.c.b16 %v5628, %v5620
  %v7613 = vpack.c.b16 %v5629, %v5621
  %v7614 = vpack.c.b16 %v5638, %v5630
  %v7615 = vpack.c.b16 %v5639, %v5631
  %v7616 = vpack.c.b16 %v5640, %v5632
  %v7617 = vpack.c.b16 %v5641, %v5633
  %v7618 = vpack.c.b16 %v5642, %v5634
  %v7619 = vpack.c.b16 %v5643, %v5635
  %v7620 = vpack.c.b16 %v5644, %v5636
  %v7621 = vpack.c.b16 %v5645, %v5637
  %v7622 = vpack.c.b16 %v5654, %v5646
  %v7623 = vpack.c.b16 %v5655, %v5647
  %v7624 = vpack.c.b16 %v5656, %v5648
  %v7625 = vpack.c.b16 %v5657, %v5649
  %v7626 = vpack.c.b16 %v5658, %v5650
  %v7627 = vpack.c.b16 %v5659, %v5651
  %v7628 = vpack.c.b16 %v5660, %v5652
  %v7629 = vpack.c.b16 %v5661, %v5653
  %v7630 = vpack.c.b16 %v5670, %v5662
  %v7631 = vpack.c.b16 %v5671, %v5663
  %v7632 = vpack.c.b16 %v5672, %v5664
  %v7633 = vpack.c.b16 %v5673, %v5665
  %v7634 = vpack.c.b16 %v5674, %v5666
  %v7635 = vpack.c.b16 %v5675, %v5667
  %v7636 = vpack.c.b16 %v5676, %v5668
  %v7637 = vpack.c.b16 %v5677, %v5669
  %v7638 = vpack.c.b16 %v5686, %v5678
  %v7639 = vpack.c.b16 %v5687, %v5679
  %v7640 = vpack.c.b16 %v5688, %v5680
  %v7641 = vpack.c.b16 %v5689, %v5681
  %v7642 = vpack.c.b16 %v5690, %v5682
  %v7643 = vpack.c.b16 %v5691, %v5683
  %v7644 = vpack.c.b16 %v5692, %v5684
  %v7645 = vpack.c.b16 %v5693, %v5685
  %v7646 = vpack.c.b16 %v5702, %v5694
  %v7647 = vpack.c.b16 %v5703, %v5695
  %v7648 = vpack.c.b16 %v5704, %v5696
  %v7649 = vpack.c.b16 %v5705, %v5697
  %v7650 = vpack.c.b16 %v5706, %v5698
  %v7651 = vpack.c.b16 %v5707, %v5699
  %v7652 = vpack.c.b16 %v5708, %v5700
  %v7653 = vpack.c.b16 %v5709, %v5701
  %v7654 = vpack.c.b16 %v5718, %v5710
  %v7655 = vpack.c.b16 %v5719, %v5711
  %v7656 = vpack.c.b16 %v5720, %v5712
  %v7657 = vpack.c.b16 %v5721, %v5713
  %v7658 = vpack.c.b16 %v5722, %v5714
  %v7659 = vpack.c.b16 %v5723, %v5715
  %v7660 = vpack.c.b16 %v5724, %v5716
  %v7661 = vpack.c.b16 %v5725, %v5717
  %v7662 = vpack.c.b16 %v5734, %v5726
  %v7663 = vpack.c.b16 %v5735, %v5727
  %v7664 = vpack.c.b16 %v5736, %v5728
  %v7665 = vpack.c.b16 %v5737, %v5729
  %v7666 = vpack.c.b16 %v5738, %v5730
  %v7667 = vpack.c.b16 %v5739, %v5731
  %v7668 = vpack.c.b16 %v5740, %v5732
  %v7669 = vpack.c.b16 %v5741, %v5733
  %v7670 = vpack.c.b16 %v5750, %v5742
  %v7671 = vpack.c.b16 %v5751, %v5743
  %v7672 = vpack.c.b16 %v5752, %v5744
  %v7673 = vpack.c.b16 %v5753, %v5745
  %v7674 = vpack.c.b16 %v5754, %v5746
  %v7675 = vpack.c.b16 %v5755, %v5747
  %v7676 = vpack.c.b16 %v5756, %v5748
  %v7677 = vpack.c.b16 %v5757, %v5749
  %v7678 = vpack.c.b16 %v5766, %v5758
  %v7679 = vpack.c.b16 %v5767, %v5759
  %v7680 = vpack.c.b16 %v5768, %v5760
  %v7681 = vpack.c.b16 %v5769, %v5761
  %v7682 = vpack.c.b16 %v5770, %v5762
  %v7683 = vpack.c.b16 %v5771, %v5763
  %v7684 = vpack.c.b16 %v5772, %v5764
  %v7685 = vpack.c.b16 %v5773, %v5765
  %v7686 = vpack.c.b16 %v5782, %v5774
  %v7687 = vpack.c.b16 %v5783, %v5775
  %v7688 = vpack.c.b16 %v5784, %v5776
  %v7689 = vpack.c.b16 %v5785, %v5777
  %v7690 = vpack.c.b16 %v5786, %v5778
  %v7691 = vpack.c.b16 %v5787, %v5779
  %v7692 = vpack.c.b16 %v5788, %v5780
  %v7693 = vpack.c.b16 %v5789, %v5781
  %v7694 = vpack.c.b16 %v5798, %v5790
  %v7695 = vpack.c.b16 %v5799, %v5791
  %v7696 = vpack.c.b16 %v5800, %v5792
  %v7697 = vpack.c.b16 %v5801, %v5793
  %v7698 = vpack.c.b16 %v5802, %v5794
  %v7699 = vpack.c.b16 %v5803, %v5795
  %v7700 = vpack.c.b16 %v5804, %v5796
  %v7701 = vpack.c.b16 %v5805, %v5797
  %v7702 = vpack.c.b16 %v5814, %v5806
  %v7703 = vpack.c.b16 %v5815, %v5807
  %v7704 = vpack.c.b16 %v5816, %v5808
  %v7705 = vpack.c.b16 %v5817, %v5809
  %v7706 = vpack.c.b16 %v5818, %v5810
  %v7707 = vpack.c.b16 %v5819, %v5811
  %v7708 = vpack.c.b16 %v5820, %v5812
  %v7709 = vpack.c.b16 %v5821, %v5813
  %v7710 = vpack.c.b16 %v5830, %v5822
  %v7711 = vpack.c.b16 %v5831, %v5823
  %v7712 = vpack.c.b16 %v5832, %v5824
  %v7713 = vpack.c.b16 %v5833, %v5825
  %v7714 = vpack.c.b16 %v5834, %v5826
  %v7715 = vpack.c.b16 %v5835, %v5827
  %v7716 = vpack.c.b16 %v5836, %v5828
  %v7717 = vpack.c.b16 %v5837, %v5829
  %v7718 = vpack.c.b16 %v5846, %v5838
  %v7719 = vpack.c.b16 %v5847, %v5839
  %v7720 = vpack.c.b16 %v5848, %v5840
  %v7721 = vpack.c.b16 %v5849, %v5841
  %v7722 = vpack.c.b16 %v5850, %v5842
  %v7723 = vpack.c.b16 %v5851, %v5843
  %v7724 = vpack.c.b16 %v5852, %v5844
  %v7725 = vpack.c.b16 %v5853, %v5845
  %v7726 = vpack.c.b16 %v5862, %v5854
  %v7727 = vpack.c.b16 %v5863, %v5855
  %v7728 = vpack.c.b16 %v5864, %v5856
  %v7729 = vpack.c.b16 %v5865, %v5857
  %v7730 = vpack.c.b16 %v5866, %v5858
  %v7731 = vpack.c.b16 %v5867, %v5859
  %v7732 = vpack.c.b16 %v5868, %v5860
  %v7733 = vpack.c.b16 %v5869, %v5861
  %v7734 = vpack.c.b16 %v5878, %v5870
  %v7735 = vpack.c.b16 %v5879, %v5871
  %v7736 = vpack.c.b16 %v5880, %v5872
  %v7737 = vpack.c.b16 %v5881, %v5873
  %v7738 = vpack.c.b16 %v5882, %v5874
  %v7739 = vpack.c.b16 %v5883, %v5875
  %v7740 = vpack.c.b16 %v5884, %v5876
  %v7741 = vpack.c.b16 %v5885, %v5877
  %v7742 = vpack.c.b16 %v5894, %v5886
  %v7743 = vpack.c.b16 %v5895, %v5887
  %v7744 = vpack.c.b16 %v5896, %v5888
  %v7745 = vpack.c.b16 %v5897, %v5889
  %v7746 = vpack.c.b16 %v5898, %v5890
  %v7747 = vpack.c.b16 %v5899, %v5891
  %v7748 = vpack.c.b16 %v5900, %v5892
  %v7749 = vpack.c.b16 %v5901, %v5893
  %v7750 = vpack.c.b16 %v5910, %v5902
  %v7751 = vpack.c.b16 %v5911, %v5903
  %v7752 = vpack.c.b16 %v5912, %v5904
  %v7753 = vpack.c.b16 %v5913, %v5905
  %v7754 = vpack.c.b16 %v5914, %v5906
  %v7755 = vpack.c.b16 %v5915, %v5907
  %v7756 = vpack.c.b16 %v5916, %v5908
  %v7757 = vpack.c.b16 %v5917, %v5909
  %v7758 = vpack.c.b16 %v5926, %v5918
  %v7759 = vpack.c.b16 %v5927, %v5919
  %v7760 = vpack.c.b16 %v5928, %v5920
  %v7761 = vpack.c.b16 %v5929, %v5921
  %v7762 = vpack.c.b16 %v5930, %v5922
  %v7763 = vpack.c.b16 %v5931, %v5923
  %v7764 = vpack.c.b16 %v5932, %v5924
  %v7765 = vpack.c.b16 %v5933, %v5925
  %v7766 = vpack.c.b16 %v5942, %v5934
  %v7767 = vpack.c.b16 %v5943, %v5935
  %v7768 = vpack.c.b16 %v5944, %v5936
  %v7769 = vpack.c.b16 %v5945, %v5937
  %v7770 = vpack.c.b16 %v5946, %v5938
  %v7771 = vpack.c.b16 %v5947, %v5939
  %v7772 = vpack.c.b16 %v5948, %v5940
  %v7773 = vpack.c.b16 %v5949, %v5941
  %v7774 = vpack.c.b16 %v5958, %v5950
  %v7775 = vpack.c.b16 %v5959, %v5951
  %v7776 = vpack.c.b16 %v5960, %v5952
  %v7777 = vpack.c.b16 %v5961, %v5953
  %v7778 = vpack.c.b16 %v5962, %v5954
  %v7779 = vpack.c.b16 %v5963, %v5955
  %v7780 = vpack.c.b16 %v5964, %v5956
  %v7781 = vpack.c.b16 %v5965, %v5957
  %v7782 = vpack.c.b16 %v5974, %v5966
  %v7783 = vpack.c.b16 %v5975, %v5967
  %v7784 = vpack.c.b16 %v5976, %v5968
  %v7785 = vpack.c.b16 %v5977, %v5969
  %v7786 = vpack.c.b16 %v5978, %v5970
  %v7787 = vpack.c.b16 %v5979, %v5971
  %v7788 = vpack.c.b16 %v5980, %v5972
  %v7789 = vpack.c.b16 %v5981, %v5973
  %v7790 = vpack.c.b16 %v5990, %v5982
  %v7791 = vpack.c.b16 %v5991, %v5983
  %v7792 = vpack.c.b16 %v5992, %v5984
  %v7793 = vpack.c.b16 %v5993, %v5985
  %v7794 = vpack.c.b16 %v5994, %v5986
  %v7795 = vpack.c.b16 %v5995, %v5987
  %v7796 = vpack.c.b16 %v5996, %v5988
  %v7797 = vpack.c.b16 %v5997, %v5989
  %v7798 = vpack.c.b16 %v6006, %v5998
  %v7799 = vpack.c.b16 %v6007, %v5999
  %v7800 = vpack.c.b16 %v6008, %v6000
  %v7801 = vpack.c.b16 %v6009, %v6001
  %v7802 = vpack.c.b16 %v6010, %v6002
  %v7803 = vpack.c.b16 %v6011, %v6003
  %v7804 = vpack.c.b16 %v6012, %v6004
  %v7805 = vpack.c.b16 %v6013, %v6005
  %v7806 = vpack.c.b16 %v6022, %v6014
  %v7807 = vpack.c.b16 %v6023, %v6015
  %v7808 = vpack.c.b16 %v6024, %v6016
  %v7809 = vpack.c.b16 %v6025, %v6017
  %v7810 = vpack.c.b16 %v6026, %v6018
  %v7811 = vpack.c.b16 %v6027, %v6019
  %v7812 = vpack.c.b16 %v6028, %v6020
  %v7813 = vpack.c.b16 %v6029, %v6021
  %v7814 = vpack.c.b16 %v6038, %v6030
  %v7815 = vpack.c.b16 %v6039, %v6031
  %v7816 = vpack.c.b16 %v6040, %v6032
  %v7817 = vpack.c.b16 %v6041, %v6033
  %v7818 = vpack.c.b16 %v6042, %v6034
  %v7819 = vpack.c.b16 %v6043, %v6035
  %v7820 = vpack.c.b16 %v6044, %v6036
  %v7821 = vpack.c.b16 %v6045, %v6037
  %v7822 = vpack.c.b16 %v6054, %v6046
  %v7823 = vpack.c.b16 %v6055, %v6047
  %v7824 = vpack.c.b16 %v6056, %v6048
  %v7825 = vpack.c.b16 %v6057, %v6049
  %v7826 = vpack.c.b16 %v6058, %v6050
  %v7827 = vpack.c.b16 %v6059, %v6051
  %v7828 = vpack.c.b16 %v6060, %v6052
  %v7829 = vpack.c.b16 %v6061, %v6053
  %v7830 = vpack.c.b16 %v6070, %v6062
  %v7831 = vpack.c.b16 %v6071, %v6063
  %v7832 = vpack.c.b16 %v6072, %v6064
  %v7833 = vpack.c.b16 %v6073, %v6065
  %v7834 = vpack.c.b16 %v6074, %v6066
  %v7835 = vpack.c.b16 %v6075, %v6067
  %v7836 = vpack.c.b16 %v6076, %v6068
  %v7837 = vpack.c.b16 %v6077, %v6069
  %v7838 = vpack.c.b16 %v6086, %v6078
  %v7839 = vpack.c.b16 %v6087, %v6079
  %v7840 = vpack.c.b16 %v6088, %v6080
  %v7841 = vpack.c.b16 %v6089, %v6081
  %v7842 = vpack.c.b16 %v6090, %v6082
  %v7843 = vpack.c.b16 %v6091, %v6083
  %v7844 = vpack.c.b16 %v6092, %v6084
  %v7845 = vpack.c.b16 %v6093, %v6085
  %v7846 = vpack.c.b16 %v6102, %v6094
  %v7847 = vpack.c.b16 %v6103, %v6095
  %v7848 = vpack.c.b16 %v6104, %v6096
  %v7849 = vpack.c.b16 %v6105, %v6097
  %v7850 = vpack.c.b16 %v6106, %v6098
  %v7851 = vpack.c.b16 %v6107, %v6099
  %v7852 = vpack.c.b16 %v6108, %v6100
  %v7853 = vpack.c.b16 %v6109, %v6101
  %v7854 = vpack.c.b16 %v6118, %v6110
  %v7855 = vpack.c.b16 %v6119, %v6111
  %v7856 = vpack.c.b16 %v6120, %v6112
  %v7857 = vpack.c.b16 %v6121, %v6113
  %v7858 = vpack.c.b16 %v6122, %v6114
  %v7859 = vpack.c.b16 %v6123, %v6115
  %v7860 = vpack.c.b16 %v6124, %v6116
  %v7861 = vpack.c.b16 %v6125, %v6117
  %v7862 = vpack.c.b16 %v6134, %v6126
  %v7863 = vpack.c.b16 %v6135, %v6127
  %v7864 = vpack.c.b16 %v6136, %v6128
  %v7865 = vpack.c.b16 %v6137, %v6129
  %v7866 = vpack.c.b16 %v6138, %v6130
  %v7867 = vpack.c.b16 %v6139, %v6131
  %v7868 = vpack.c.b16 %v6140, %v6132
  %v7869 = vpack.c.b16 %v6141, %v6133
  %v7870 = vpack.c.b16 %v6150, %v6142
  %v7871 = vpack.c.b16 %v6151, %v6143
  %v7872 = vpack.c.b16 %v6152, %v6144
  %v7873 = vpack.c.b16 %v6153, %v6145
  %v7874 = vpack.c.b16 %v6154, %v6146
  %v7875 = vpack.c.b16 %v6155, %v6147
  %v7876 = vpack.c.b16 %v6156, %v6148
  %v7877 = vpack.c.b16 %v6157, %v6149
  %v7878 = vpack.c.b16 %v6166, %v6158
  %v7879 = vpack.c.b16 %v6167, %v6159
  %v7880 = vpack.c.b16 %v6168, %v6160
  %v7881 = vpack.c.b16 %v6169, %v6161
  %v7882 = vpack.c.b16 %v6170, %v6162
  %v7883 = vpack.c.b16 %v6171, %v6163
  %v7884 = vpack.c.b16 %v6172, %v6164
  %v7885 = vpack.c.b16 %v6173, %v6165
  %v7886 = vpack.c.b16 %v6182, %v6174
  %v7887 = vpack.c.b16 %v6183, %v6175
  %v7888 = vpack.c.b16 %v6184, %v6176
  %v7889 = vpack.c.b16 %v6185, %v6177
  %v7890 = vpack.c.b16 %v6186, %v6178
  %v7891 = vpack.c.b16 %v6187, %v6179
  %v7892 = vpack.c.b16 %v6188, %v6180
  %v7893 = vpack.c.b16 %v6189, %v6181
  %v7894 = vpack.c.b16 %v6198, %v6190
  %v7895 = vpack.c.b16 %v6199, %v6191
  %v7896 = vpack.c.b16 %v6200, %v6192
  %v7897 = vpack.c.b16 %v6201, %v6193
  %v7898 = vpack.c.b16 %v6202, %v6194
  %v7899 = vpack.c.b16 %v6203, %v6195
  %v7900 = vpack.c.b16 %v6204, %v6196
  %v7901 = vpack.c.b16 %v6205, %v6197
  %v7902 = vpack.c.b16 %v6214, %v6206
  %v7903 = vpack.c.b16 %v6215, %v6207
  %v7904 = vpack.c.b16 %v6216, %v6208
  %v7905 = vpack.c.b16 %v6217, %v6209
  %v7906 = vpack.c.b16 %v6218, %v6210
  %v7907 = vpack.c.b16 %v6219, %v6211
  %v7908 = vpack.c.b16 %v6220, %v6212
  %v7909 = vpack.c.b16 %v6221, %v6213
  %v7910 = vpack.c.b16 %v6230, %v6222
  %v7911 = vpack.c.b16 %v6231, %v6223
  %v7912 = vpack.c.b16 %v6232, %v6224
  %v7913 = vpack.c.b16 %v6233, %v6225
  %v7914 = vpack.c.b16 %v6234, %v6226
  %v7915 = vpack.c.b16 %v6235, %v6227
  %v7916 = vpack.c.b16 %v6236, %v6228
  %v7917 = vpack.c.b16 %v6237, %v6229
  %v7918 = vpack.c.b16 %v6246, %v6238
  %v7919 = vpack.c.b16 %v6247, %v6239
  %v7920 = vpack.c.b16 %v6248, %v6240
  %v7921 = vpack.c.b16 %v6249, %v6241
  %v7922 = vpack.c.b16 %v6250, %v6242
  %v7923 = vpack.c.b16 %v6251, %v6243
  %v7924 = vpack.c.b16 %v6252, %v6244
  %v7925 = vpack.c.b16 %v6253, %v6245
  %v7926 = vpack.c.b16 %v6262, %v6254
  %v7927 = vpack.c.b16 %v6263, %v6255
  %v7928 = vpack.c.b16 %v6264, %v6256
  %v7929 = vpack.c.b16 %v6265, %v6257
  %v7930 = vpack.c.b16 %v6266, %v6258
  %v7931 = vpack.c.b16 %v6267, %v6259
  %v7932 = vpack.c.b16 %v6268, %v6260
  %v7933 = vpack.c.b16 %v6269, %v6261
  %v7934 = vpack.c.b16 %v6278, %v6270
  %v7935 = vpack.c.b16 %v6279, %v6271
  %v7936 = vpack.c.b16 %v6280, %v6272
  %v7937 = vpack.c.b16 %v6281, %v6273
  %v7938 = vpack.c.b16 %v6282, %v6274
  %v7939 = vpack.c.b16 %v6283, %v6275
  %v7940 = vpack.c.b16 %v6284, %v6276
  %v7941 = vpack.c.b16 %v6285, %v6277
  %v7942 = vpack.c.b16 %v6294, %v6286
  %v7943 = vpack.c.b16 %v6295, %v6287
  %v7944 = vpack.c.b16 %v6296, %v6288
  %v7945 = vpack.c.b16 %v6297, %v6289
  %v7946 = vpack.c.b16 %v6298, %v6290
  %v7947 = vpack.c.b16 %v6299, %v6291
  %v7948 = vpack.c.b16 %v6300, %v6292
  %v7949 = vpack.c.b16 %v6301, %v6293
  %v7950 = vpack.c.b16 %v6310, %v6302
  %v7951 = vpack.c.b16 %v6311, %v6303
  %v7952 = vpack.c.b16 %v6312, %v6304
  %v7953 = vpack.c.b16 %v6313, %v6305
  %v7954 = vpack.c.b16 %v6314, %v6306
  %v7955 = vpack.c.b16 %v6315, %v6307
  %v7956 = vpack.c.b16 %v6316, %v6308
  %v7957 = vpack.c.b16 %v6317, %v6309
  %v7958 = vpack.c.b16 %v6326, %v6318
  %v7959 = vpack.c.b16 %v6327, %v6319
  %v7960 = vpack.c.b16 %v6328, %v6320
  %v7961 = vpack.c.b16 %v6329, %v6321
  %v7962 = vpack.c.b16 %v6330, %v6322
  %v7963 = vpack.c.b16 %v6331, %v6323
  %v7964 = vpack.c.b16 %v6332, %v6324
  %v7965 = vpack.c.b16 %v6333, %v6325
  %v7966 = vpack.c.b16 %v6342, %v6334
  %v7967 = vpack.c.b16 %v6343, %v6335
  %v7968 = vpack.c.b16 %v6344, %v6336
  %v7969 = vpack.c.b16 %v6345, %v6337
  %v7970 = vpack.c.b16 %v6346, %v6338
  %v7971 = vpack.c.b16 %v6347, %v6339
  %v7972 = vpack.c.b16 %v6348, %v6340
  %v7973 = vpack.c.b16 %v6349, %v6341
  %v7974 = vpack.c.b16 %v6358, %v6350
  %v7975 = vpack.c.b16 %v6359, %v6351
  %v7976 = vpack.c.b16 %v6360, %v6352
  %v7977 = vpack.c.b16 %v6361, %v6353
  %v7978 = vpack.c.b16 %v6362, %v6354
  %v7979 = vpack.c.b16 %v6363, %v6355
  %v7980 = vpack.c.b16 %v6364, %v6356
  %v7981 = vpack.c.b16 %v6365, %v6357
  %v7982 = vpack.c.b16 %v6374, %v6366
  %v7983 = vpack.c.b16 %v6375, %v6367
  %v7984 = vpack.c.b16 %v6376, %v6368
  %v7985 = vpack.c.b16 %v6377, %v6369
  %v7986 = vpack.c.b16 %v6378, %v6370
  %v7987 = vpack.c.b16 %v6379, %v6371
  %v7988 = vpack.c.b16 %v6380, %v6372
  %v7989 = vpack.c.b16 %v6381, %v6373
  %v7990 = vpack.c.b16 %v6390, %v6382
  %v7991 = vpack.c.b16 %v6391, %v6383
  %v7992 = vpack.c.b16 %v6392, %v6384
  %v7993 = vpack.c.b16 %v6393, %v6385
  %v7994 = vpack.c.b16 %v6394, %v6386
  %v7995 = vpack.c.b16 %v6395, %v6387
  %v7996 = vpack.c.b16 %v6396, %v6388
  %v7997 = vpack.c.b16 %v6397, %v6389
  %v7998 = vpack.c.b16 %v6406, %v6398
  %v7999 = vpack.c.b16 %v6407, %v6399
  %v8000 = vpack.c.b16 %v6408, %v6400
  %v8001 = vpack.c.b16 %v6409, %v6401
  %v8002 = vpack.c.b16 %v6410, %v6402
  %v8003 = vpack.c.b16 %v6411, %v6403
  %v8004 = vpack.c.b16 %v6412, %v6404
  %v8005 = vpack.c.b16 %v6413, %v6405
  %v8006 = vpack.c.b16 %v6422, %v6414
  %v8007 = vpack.c.b16 %v6423, %v6415
  %v8008 = vpack.c.b16 %v6424, %v6416
  %v8009 = vpack.c.b16 %v6425, %v6417
  %v8010 = vpack.c.b16 %v6426, %v6418
  %v8011 = vpack.c.b16 %v6427, %v6419
  %v8012 = vpack.c.b16 %v6428, %v6420
  %v8013 = vpack.c.b16 %v6429, %v6421
  %v8014 = vpack.c.b16 %v6438, %v6430
  %v8015 = vpack.c.b16 %v6439, %v6431
  %v8016 = vpack.c.b16 %v6440, %v6432
  %v8017 = vpack.c.b16 %v6441, %v6433
  %v8018 = vpack.c.b16 %v6442, %v6434
  %v8019 = vpack.c.b16 %v6443, %v6435
  %v8020 = vpack.c.b16 %v6444, %v6436
  %v8021 = vpack.c.b16 %v6445, %v6437
  %v8022 = vpack.c.b16 %v6454, %v6446
  %v8023 = vpack.c.b16 %v6455, %v6447
  %v8024 = vpack.c.b16 %v6456, %v6448
  %v8025 = vpack.c.b16 %v6457, %v6449
  %v8026 = vpack.c.b16 %v6458, %v6450
  %v8027 = vpack.c.b16 %v6459, %v6451
  %v8028 = vpack.c.b16 %v6460, %v6452
  %v8029 = vpack.c.b16 %v6461, %v6453
  %vm9598 = vcmask 523264
  %v9600 = vsel %vm9598, %v1733, 0
  %9602 = vmatpush.bf16.msra.mxu0 %v6518
  %9603 = vmatpush.bf16.msra.mxu0 %v6510
  %9604 = vmatpush.bf16.msra.mxu0 %v6502
  %9605 = vmatpush.bf16.msra.mxu0 %v6494
  %9606 = vmatpush.bf16.msra.mxu0 %v6486
  %9607 = vmatpush.bf16.msra.mxu0 %v6478
  %9608 = vmatpush.bf16.msra.mxu0 %v6470
  %9609 = vmatpush.bf16.msra.mxu0 %v6462
  %9610 = vmatmul.bf16.gmra.mxu0 %v1709
  %v9611 = vpop.f32.mrf.mxu0
  %v9612 = vadd.f32 %v1617, %v9611
  %v9613 = vpop.f32.mrf.mxu0
  %v9614 = vadd.f32 %v1617, %v9613
  %9615 = vdwg.mxu0
  %9616 = vmatpush.bf16.msra.mxu0 %v6582
  %9617 = vmatpush.bf16.msra.mxu0 %v6574
  %9618 = vmatpush.bf16.msra.mxu0 %v6566
  %9619 = vmatpush.bf16.msra.mxu0 %v6558
  %9620 = vmatpush.bf16.msra.mxu0 %v6550
  %9621 = vmatpush.bf16.msra.mxu0 %v6542
  %9622 = vmatpush.bf16.msra.mxu0 %v6534
  %9623 = vmatpush.bf16.msra.mxu0 %v6526
  %9624 = vmatmul.bf16.gmra.mxu0 %v1710
  %v9625 = vpop.f32.mrf.mxu0
  %v9626 = vadd.f32 %v9612, %v9625
  %v9627 = vpop.f32.mrf.mxu0
  %v9628 = vadd.f32 %v9614, %v9627
  %9629 = vdwg.mxu0
  %9630 = vmatpush.bf16.msra.mxu0 %v6646
  %9631 = vmatpush.bf16.msra.mxu0 %v6638
  %9632 = vmatpush.bf16.msra.mxu0 %v6630
  %9633 = vmatpush.bf16.msra.mxu0 %v6622
  %9634 = vmatpush.bf16.msra.mxu0 %v6614
  %9635 = vmatpush.bf16.msra.mxu0 %v6606
  %9636 = vmatpush.bf16.msra.mxu0 %v6598
  %9637 = vmatpush.bf16.msra.mxu0 %v6590
  %9638 = vmatmul.bf16.gmra.mxu0 %v1711
  %v9639 = vpop.f32.mrf.mxu0
  %v9640 = vadd.f32 %v9626, %v9639
  %v9641 = vpop.f32.mrf.mxu0
  %v9642 = vadd.f32 %v9628, %v9641
  %9643 = vdwg.mxu0
  %9644 = vmatpush.bf16.msra.mxu0 %v6710
  %9645 = vmatpush.bf16.msra.mxu0 %v6702
  %9646 = vmatpush.bf16.msra.mxu0 %v6694
  %9647 = vmatpush.bf16.msra.mxu0 %v6686
  %9648 = vmatpush.bf16.msra.mxu0 %v6678
  %9649 = vmatpush.bf16.msra.mxu0 %v6670
  %9650 = vmatpush.bf16.msra.mxu0 %v6662
  %9651 = vmatpush.bf16.msra.mxu0 %v6654
  %9652 = vmatmul.bf16.gmra.mxu0 %v1712
  %v9653 = vpop.f32.mrf.mxu0
  %v9654 = vadd.f32 %v9640, %v9653
  %v9655 = vpop.f32.mrf.mxu0
  %v9656 = vadd.f32 %v9642, %v9655
  %9657 = vdwg.mxu0
  %9658 = vmatpush.bf16.msra.mxu0 %v6774
  %9659 = vmatpush.bf16.msra.mxu0 %v6766
  %9660 = vmatpush.bf16.msra.mxu0 %v6758
  %9661 = vmatpush.bf16.msra.mxu0 %v6750
  %9662 = vmatpush.bf16.msra.mxu0 %v6742
  %9663 = vmatpush.bf16.msra.mxu0 %v6734
  %9664 = vmatpush.bf16.msra.mxu0 %v6726
  %9665 = vmatpush.bf16.msra.mxu0 %v6718
  %9666 = vmatmul.bf16.gmra.mxu0 %v1713
  %v9667 = vpop.f32.mrf.mxu0
  %v9668 = vadd.f32 %v9654, %v9667
  %v9669 = vpop.f32.mrf.mxu0
  %v9670 = vadd.f32 %v9656, %v9669
  %9671 = vdwg.mxu0
  %9672 = vmatpush.bf16.msra.mxu0 %v6838
  %9673 = vmatpush.bf16.msra.mxu0 %v6830
  %9674 = vmatpush.bf16.msra.mxu0 %v6822
  %9675 = vmatpush.bf16.msra.mxu0 %v6814
  %9676 = vmatpush.bf16.msra.mxu0 %v6806
  %9677 = vmatpush.bf16.msra.mxu0 %v6798
  %9678 = vmatpush.bf16.msra.mxu0 %v6790
  %9679 = vmatpush.bf16.msra.mxu0 %v6782
  %9680 = vmatmul.bf16.gmra.mxu0 %v1714
  %v9681 = vpop.f32.mrf.mxu0
  %v9682 = vadd.f32 %v9668, %v9681
  %v9683 = vpop.f32.mrf.mxu0
  %v9684 = vadd.f32 %v9670, %v9683
  %9685 = vdwg.mxu0
  %9686 = vmatpush.bf16.msra.mxu0 %v6902
  %9687 = vmatpush.bf16.msra.mxu0 %v6894
  %9688 = vmatpush.bf16.msra.mxu0 %v6886
  %9689 = vmatpush.bf16.msra.mxu0 %v6878
  %9690 = vmatpush.bf16.msra.mxu0 %v6870
  %9691 = vmatpush.bf16.msra.mxu0 %v6862
  %9692 = vmatpush.bf16.msra.mxu0 %v6854
  %9693 = vmatpush.bf16.msra.mxu0 %v6846
  %9694 = vmatmul.bf16.gmra.mxu0 %v1715
  %v9695 = vpop.f32.mrf.mxu0
  %v9696 = vadd.f32 %v9682, %v9695
  %v9697 = vpop.f32.mrf.mxu0
  %v9698 = vadd.f32 %v9684, %v9697
  %9699 = vdwg.mxu0
  %9700 = vmatpush.bf16.msra.mxu0 %v6966
  %9701 = vmatpush.bf16.msra.mxu0 %v6958
  %9702 = vmatpush.bf16.msra.mxu0 %v6950
  %9703 = vmatpush.bf16.msra.mxu0 %v6942
  %9704 = vmatpush.bf16.msra.mxu0 %v6934
  %9705 = vmatpush.bf16.msra.mxu0 %v6926
  %9706 = vmatpush.bf16.msra.mxu0 %v6918
  %9707 = vmatpush.bf16.msra.mxu0 %v6910
  %9708 = vmatmul.bf16.gmra.mxu0 %v1716
  %v9709 = vpop.f32.mrf.mxu0
  %v9710 = vadd.f32 %v9696, %v9709
  %v9711 = vpop.f32.mrf.mxu0
  %v9712 = vadd.f32 %v9698, %v9711
  %9713 = vdwg.mxu0
  %9714 = vmatpush.bf16.msra.mxu0 %v7030
  %9715 = vmatpush.bf16.msra.mxu0 %v7022
  %9716 = vmatpush.bf16.msra.mxu0 %v7014
  %9717 = vmatpush.bf16.msra.mxu0 %v7006
  %9718 = vmatpush.bf16.msra.mxu0 %v6998
  %9719 = vmatpush.bf16.msra.mxu0 %v6990
  %9720 = vmatpush.bf16.msra.mxu0 %v6982
  %9721 = vmatpush.bf16.msra.mxu0 %v6974
  %9722 = vmatmul.bf16.gmra.mxu0 %v1717
  %v9723 = vpop.f32.mrf.mxu0
  %v9724 = vadd.f32 %v9710, %v9723
  %v9725 = vpop.f32.mrf.mxu0
  %v9726 = vadd.f32 %v9712, %v9725
  %9727 = vdwg.mxu0
  %9728 = vmatpush.bf16.msra.mxu0 %v7094
  %9729 = vmatpush.bf16.msra.mxu0 %v7086
  %9730 = vmatpush.bf16.msra.mxu0 %v7078
  %9731 = vmatpush.bf16.msra.mxu0 %v7070
  %9732 = vmatpush.bf16.msra.mxu0 %v7062
  %9733 = vmatpush.bf16.msra.mxu0 %v7054
  %9734 = vmatpush.bf16.msra.mxu0 %v7046
  %9735 = vmatpush.bf16.msra.mxu0 %v7038
  %9736 = vmatmul.bf16.gmra.mxu0 %v1718
  %v9737 = vpop.f32.mrf.mxu0
  %v9738 = vadd.f32 %v9724, %v9737
  %v9739 = vpop.f32.mrf.mxu0
  %v9740 = vadd.f32 %v9726, %v9739
  %9741 = vdwg.mxu0
  %9742 = vmatpush.bf16.msra.mxu0 %v7158
  %9743 = vmatpush.bf16.msra.mxu0 %v7150
  %9744 = vmatpush.bf16.msra.mxu0 %v7142
  %9745 = vmatpush.bf16.msra.mxu0 %v7134
  %9746 = vmatpush.bf16.msra.mxu0 %v7126
  %9747 = vmatpush.bf16.msra.mxu0 %v7118
  %9748 = vmatpush.bf16.msra.mxu0 %v7110
  %9749 = vmatpush.bf16.msra.mxu0 %v7102
  %9750 = vmatmul.bf16.gmra.mxu0 %v1719
  %v9751 = vpop.f32.mrf.mxu0
  %v9752 = vadd.f32 %v9738, %v9751
  %v9753 = vpop.f32.mrf.mxu0
  %v9754 = vadd.f32 %v9740, %v9753
  %9755 = vdwg.mxu0
  %9756 = vmatpush.bf16.msra.mxu0 %v7222
  %9757 = vmatpush.bf16.msra.mxu0 %v7214
  %9758 = vmatpush.bf16.msra.mxu0 %v7206
  %9759 = vmatpush.bf16.msra.mxu0 %v7198
  %9760 = vmatpush.bf16.msra.mxu0 %v7190
  %9761 = vmatpush.bf16.msra.mxu0 %v7182
  %9762 = vmatpush.bf16.msra.mxu0 %v7174
  %9763 = vmatpush.bf16.msra.mxu0 %v7166
  %9764 = vmatmul.bf16.gmra.mxu0 %v1720
  %v9765 = vpop.f32.mrf.mxu0
  %v9766 = vadd.f32 %v9752, %v9765
  %v9767 = vpop.f32.mrf.mxu0
  %v9768 = vadd.f32 %v9754, %v9767
  %9769 = vdwg.mxu0
  %9770 = vmatpush.bf16.msra.mxu0 %v7286
  %9771 = vmatpush.bf16.msra.mxu0 %v7278
  %9772 = vmatpush.bf16.msra.mxu0 %v7270
  %9773 = vmatpush.bf16.msra.mxu0 %v7262
  %9774 = vmatpush.bf16.msra.mxu0 %v7254
  %9775 = vmatpush.bf16.msra.mxu0 %v7246
  %9776 = vmatpush.bf16.msra.mxu0 %v7238
  %9777 = vmatpush.bf16.msra.mxu0 %v7230
  %9778 = vmatmul.bf16.gmra.mxu0 %v1721
  %v9779 = vpop.f32.mrf.mxu0
  %v9780 = vadd.f32 %v9766, %v9779
  %v9781 = vpop.f32.mrf.mxu0
  %v9782 = vadd.f32 %v9768, %v9781
  %9783 = vdwg.mxu0
  %9784 = vmatpush.bf16.msra.mxu0 %v7350
  %9785 = vmatpush.bf16.msra.mxu0 %v7342
  %9786 = vmatpush.bf16.msra.mxu0 %v7334
  %9787 = vmatpush.bf16.msra.mxu0 %v7326
  %9788 = vmatpush.bf16.msra.mxu0 %v7318
  %9789 = vmatpush.bf16.msra.mxu0 %v7310
  %9790 = vmatpush.bf16.msra.mxu0 %v7302
  %9791 = vmatpush.bf16.msra.mxu0 %v7294
  %9792 = vmatmul.bf16.gmra.mxu0 %v1722
  %v9793 = vpop.f32.mrf.mxu0
  %v9794 = vadd.f32 %v9780, %v9793
  %v9795 = vpop.f32.mrf.mxu0
  %v9796 = vadd.f32 %v9782, %v9795
  %9797 = vdwg.mxu0
  %9798 = vmatpush.bf16.msra.mxu0 %v7414
  %9799 = vmatpush.bf16.msra.mxu0 %v7406
  %9800 = vmatpush.bf16.msra.mxu0 %v7398
  %9801 = vmatpush.bf16.msra.mxu0 %v7390
  %9802 = vmatpush.bf16.msra.mxu0 %v7382
  %9803 = vmatpush.bf16.msra.mxu0 %v7374
  %9804 = vmatpush.bf16.msra.mxu0 %v7366
  %9805 = vmatpush.bf16.msra.mxu0 %v7358
  %9806 = vmatmul.bf16.gmra.mxu0 %v1723
  %v9807 = vpop.f32.mrf.mxu0
  %v9808 = vadd.f32 %v9794, %v9807
  %v9809 = vpop.f32.mrf.mxu0
  %v9810 = vadd.f32 %v9796, %v9809
  %9811 = vdwg.mxu0
  %9812 = vmatpush.bf16.msra.mxu0 %v7478
  %9813 = vmatpush.bf16.msra.mxu0 %v7470
  %9814 = vmatpush.bf16.msra.mxu0 %v7462
  %9815 = vmatpush.bf16.msra.mxu0 %v7454
  %9816 = vmatpush.bf16.msra.mxu0 %v7446
  %9817 = vmatpush.bf16.msra.mxu0 %v7438
  %9818 = vmatpush.bf16.msra.mxu0 %v7430
  %9819 = vmatpush.bf16.msra.mxu0 %v7422
  %9820 = vmatmul.bf16.gmra.mxu0 %v1724
  %v9821 = vpop.f32.mrf.mxu0
  %v9822 = vadd.f32 %v9808, %v9821
  %v9823 = vpop.f32.mrf.mxu0
  %v9824 = vadd.f32 %v9810, %v9823
  %9825 = vdwg.mxu0
  %9826 = vmatpush.bf16.msra.mxu0 %v7542
  %9827 = vmatpush.bf16.msra.mxu0 %v7534
  %9828 = vmatpush.bf16.msra.mxu0 %v7526
  %9829 = vmatpush.bf16.msra.mxu0 %v7518
  %9830 = vmatpush.bf16.msra.mxu0 %v7510
  %9831 = vmatpush.bf16.msra.mxu0 %v7502
  %9832 = vmatpush.bf16.msra.mxu0 %v7494
  %9833 = vmatpush.bf16.msra.mxu0 %v7486
  %9834 = vmatmul.bf16.gmra.mxu0 %v1725
  %v9835 = vpop.f32.mrf.mxu0
  %v9836 = vadd.f32 %v9822, %v9835
  %v9837 = vpop.f32.mrf.mxu0
  %v9838 = vadd.f32 %v9824, %v9837
  %9839 = vdwg.mxu0
  %9840 = vmatpush.bf16.msra.mxu0 %v7606
  %9841 = vmatpush.bf16.msra.mxu0 %v7598
  %9842 = vmatpush.bf16.msra.mxu0 %v7590
  %9843 = vmatpush.bf16.msra.mxu0 %v7582
  %9844 = vmatpush.bf16.msra.mxu0 %v7574
  %9845 = vmatpush.bf16.msra.mxu0 %v7566
  %9846 = vmatpush.bf16.msra.mxu0 %v7558
  %9847 = vmatpush.bf16.msra.mxu0 %v7550
  %9848 = vmatmul.bf16.gmra.mxu0 %v1726
  %v9849 = vpop.f32.mrf.mxu0
  %v9850 = vadd.f32 %v9836, %v9849
  %v9851 = vpop.f32.mrf.mxu0
  %v9852 = vadd.f32 %v9838, %v9851
  %9853 = vdwg.mxu0
  %9854 = vmatpush.bf16.msra.mxu0 %v7670
  %9855 = vmatpush.bf16.msra.mxu0 %v7662
  %9856 = vmatpush.bf16.msra.mxu0 %v7654
  %9857 = vmatpush.bf16.msra.mxu0 %v7646
  %9858 = vmatpush.bf16.msra.mxu0 %v7638
  %9859 = vmatpush.bf16.msra.mxu0 %v7630
  %9860 = vmatpush.bf16.msra.mxu0 %v7622
  %9861 = vmatpush.bf16.msra.mxu0 %v7614
  %9862 = vmatmul.bf16.gmra.mxu0 %v1727
  %v9863 = vpop.f32.mrf.mxu0
  %v9864 = vadd.f32 %v9850, %v9863
  %v9865 = vpop.f32.mrf.mxu0
  %v9866 = vadd.f32 %v9852, %v9865
  %9867 = vdwg.mxu0
  %9868 = vmatpush.bf16.msra.mxu0 %v7734
  %9869 = vmatpush.bf16.msra.mxu0 %v7726
  %9870 = vmatpush.bf16.msra.mxu0 %v7718
  %9871 = vmatpush.bf16.msra.mxu0 %v7710
  %9872 = vmatpush.bf16.msra.mxu0 %v7702
  %9873 = vmatpush.bf16.msra.mxu0 %v7694
  %9874 = vmatpush.bf16.msra.mxu0 %v7686
  %9875 = vmatpush.bf16.msra.mxu0 %v7678
  %9876 = vmatmul.bf16.gmra.mxu0 %v1728
  %v9877 = vpop.f32.mrf.mxu0
  %v9878 = vadd.f32 %v9864, %v9877
  %v9879 = vpop.f32.mrf.mxu0
  %v9880 = vadd.f32 %v9866, %v9879
  %9881 = vdwg.mxu0
  %9882 = vmatpush.bf16.msra.mxu0 %v7798
  %9883 = vmatpush.bf16.msra.mxu0 %v7790
  %9884 = vmatpush.bf16.msra.mxu0 %v7782
  %9885 = vmatpush.bf16.msra.mxu0 %v7774
  %9886 = vmatpush.bf16.msra.mxu0 %v7766
  %9887 = vmatpush.bf16.msra.mxu0 %v7758
  %9888 = vmatpush.bf16.msra.mxu0 %v7750
  %9889 = vmatpush.bf16.msra.mxu0 %v7742
  %9890 = vmatmul.bf16.gmra.mxu0 %v1729
  %v9891 = vpop.f32.mrf.mxu0
  %v9892 = vadd.f32 %v9878, %v9891
  %v9893 = vpop.f32.mrf.mxu0
  %v9894 = vadd.f32 %v9880, %v9893
  %9895 = vdwg.mxu0
  %9896 = vmatpush.bf16.msra.mxu0 %v7862
  %9897 = vmatpush.bf16.msra.mxu0 %v7854
  %9898 = vmatpush.bf16.msra.mxu0 %v7846
  %9899 = vmatpush.bf16.msra.mxu0 %v7838
  %9900 = vmatpush.bf16.msra.mxu0 %v7830
  %9901 = vmatpush.bf16.msra.mxu0 %v7822
  %9902 = vmatpush.bf16.msra.mxu0 %v7814
  %9903 = vmatpush.bf16.msra.mxu0 %v7806
  %9904 = vmatmul.bf16.gmra.mxu0 %v1730
  %v9905 = vpop.f32.mrf.mxu0
  %v9906 = vadd.f32 %v9892, %v9905
  %v9907 = vpop.f32.mrf.mxu0
  %v9908 = vadd.f32 %v9894, %v9907
  %9909 = vdwg.mxu0
  %9910 = vmatpush.bf16.msra.mxu0 %v7926
  %9911 = vmatpush.bf16.msra.mxu0 %v7918
  %9912 = vmatpush.bf16.msra.mxu0 %v7910
  %9913 = vmatpush.bf16.msra.mxu0 %v7902
  %9914 = vmatpush.bf16.msra.mxu0 %v7894
  %9915 = vmatpush.bf16.msra.mxu0 %v7886
  %9916 = vmatpush.bf16.msra.mxu0 %v7878
  %9917 = vmatpush.bf16.msra.mxu0 %v7870
  %9918 = vmatmul.bf16.gmra.mxu0 %v1731
  %v9919 = vpop.f32.mrf.mxu0
  %v9920 = vadd.f32 %v9906, %v9919
  %v9921 = vpop.f32.mrf.mxu0
  %v9922 = vadd.f32 %v9908, %v9921
  %9923 = vdwg.mxu0
  %9924 = vmatpush.bf16.msra.mxu0 %v7990
  %9925 = vmatpush.bf16.msra.mxu0 %v7982
  %9926 = vmatpush.bf16.msra.mxu0 %v7974
  %9927 = vmatpush.bf16.msra.mxu0 %v7966
  %9928 = vmatpush.bf16.msra.mxu0 %v7958
  %9929 = vmatpush.bf16.msra.mxu0 %v7950
  %9930 = vmatpush.bf16.msra.mxu0 %v7942
  %9931 = vmatpush.bf16.msra.mxu0 %v7934
  %9932 = vmatmul.bf16.gmra.mxu0 %v1732
  %v9933 = vpop.f32.mrf.mxu0
  %v9934 = vadd.f32 %v9920, %v9933
  %v9935 = vpop.f32.mrf.mxu0
  %v9936 = vadd.f32 %v9922, %v9935
  %9937 = vdwg.mxu0
  %9938 = vmatpush.bf16.msra.mxu0 0
  %9939 = vmatpush.bf16.msra.mxu0 0
  %9940 = vmatpush.bf16.msra.mxu0 0
  %9941 = vmatpush.bf16.msra.mxu0 0
  %9942 = vmatpush.bf16.msra.mxu0 %v8022
  %9943 = vmatpush.bf16.msra.mxu0 %v8014
  %9944 = vmatpush.bf16.msra.mxu0 %v8006
  %9945 = vmatpush.bf16.msra.mxu0 %v7998
  %9946 = vmatmul.bf16.gmra.mxu0 %v9600
  %v9947 = vpop.f32.mrf.mxu0
  %v9948 = vadd.f32 %v9934, %v9947
  %v9949 = vpop.f32.mrf.mxu0
  %v9950 = vadd.f32 %v9936, %v9949
  %9951 = vdwg.mxu0
  %9952 = vmatpush.bf16.msra.mxu0 %v6519
  %9953 = vmatpush.bf16.msra.mxu0 %v6511
  %9954 = vmatpush.bf16.msra.mxu0 %v6503
  %9955 = vmatpush.bf16.msra.mxu0 %v6495
  %9956 = vmatpush.bf16.msra.mxu0 %v6487
  %9957 = vmatpush.bf16.msra.mxu0 %v6479
  %9958 = vmatpush.bf16.msra.mxu0 %v6471
  %9959 = vmatpush.bf16.msra.mxu0 %v6463
  %9960 = vmatmul.bf16.gmra.mxu0 %v1709
  %v9961 = vpop.f32.mrf.mxu0
  %v9962 = vadd.f32 %v1618, %v9961
  %v9963 = vpop.f32.mrf.mxu0
  %v9964 = vadd.f32 %v1618, %v9963
  %9965 = vdwg.mxu0
  %9966 = vmatpush.bf16.msra.mxu0 %v6583
  %9967 = vmatpush.bf16.msra.mxu0 %v6575
  %9968 = vmatpush.bf16.msra.mxu0 %v6567
  %9969 = vmatpush.bf16.msra.mxu0 %v6559
  %9970 = vmatpush.bf16.msra.mxu0 %v6551
  %9971 = vmatpush.bf16.msra.mxu0 %v6543
  %9972 = vmatpush.bf16.msra.mxu0 %v6535
  %9973 = vmatpush.bf16.msra.mxu0 %v6527
  %9974 = vmatmul.bf16.gmra.mxu0 %v1710
  %v9975 = vpop.f32.mrf.mxu0
  %v9976 = vadd.f32 %v9962, %v9975
  %v9977 = vpop.f32.mrf.mxu0
  %v9978 = vadd.f32 %v9964, %v9977
  %9979 = vdwg.mxu0
  %9980 = vmatpush.bf16.msra.mxu0 %v6647
  %9981 = vmatpush.bf16.msra.mxu0 %v6639
  %9982 = vmatpush.bf16.msra.mxu0 %v6631
  %9983 = vmatpush.bf16.msra.mxu0 %v6623
  %9984 = vmatpush.bf16.msra.mxu0 %v6615
  %9985 = vmatpush.bf16.msra.mxu0 %v6607
  %9986 = vmatpush.bf16.msra.mxu0 %v6599
  %9987 = vmatpush.bf16.msra.mxu0 %v6591
  %9988 = vmatmul.bf16.gmra.mxu0 %v1711
  %v9989 = vpop.f32.mrf.mxu0
  %v9990 = vadd.f32 %v9976, %v9989
  %v9991 = vpop.f32.mrf.mxu0
  %v9992 = vadd.f32 %v9978, %v9991
  %9993 = vdwg.mxu0
  %9994 = vmatpush.bf16.msra.mxu0 %v6711
  %9995 = vmatpush.bf16.msra.mxu0 %v6703
  %9996 = vmatpush.bf16.msra.mxu0 %v6695
  %9997 = vmatpush.bf16.msra.mxu0 %v6687
  %9998 = vmatpush.bf16.msra.mxu0 %v6679
  %9999 = vmatpush.bf16.msra.mxu0 %v6671
  %10000 = vmatpush.bf16.msra.mxu0 %v6663
  %10001 = vmatpush.bf16.msra.mxu0 %v6655
  %10002 = vmatmul.bf16.gmra.mxu0 %v1712
  %v10003 = vpop.f32.mrf.mxu0
  %v10004 = vadd.f32 %v9990, %v10003
  %v10005 = vpop.f32.mrf.mxu0
  %v10006 = vadd.f32 %v9992, %v10005
  %10007 = vdwg.mxu0
  %10008 = vmatpush.bf16.msra.mxu0 %v6775
  %10009 = vmatpush.bf16.msra.mxu0 %v6767
  %10010 = vmatpush.bf16.msra.mxu0 %v6759
  %10011 = vmatpush.bf16.msra.mxu0 %v6751
  %10012 = vmatpush.bf16.msra.mxu0 %v6743
  %10013 = vmatpush.bf16.msra.mxu0 %v6735
  %10014 = vmatpush.bf16.msra.mxu0 %v6727
  %10015 = vmatpush.bf16.msra.mxu0 %v6719
  %10016 = vmatmul.bf16.gmra.mxu0 %v1713
  %v10017 = vpop.f32.mrf.mxu0
  %v10018 = vadd.f32 %v10004, %v10017
  %v10019 = vpop.f32.mrf.mxu0
  %v10020 = vadd.f32 %v10006, %v10019
  %10021 = vdwg.mxu0
  %10022 = vmatpush.bf16.msra.mxu0 %v6839
  %10023 = vmatpush.bf16.msra.mxu0 %v6831
  %10024 = vmatpush.bf16.msra.mxu0 %v6823
  %10025 = vmatpush.bf16.msra.mxu0 %v6815
  %10026 = vmatpush.bf16.msra.mxu0 %v6807
  %10027 = vmatpush.bf16.msra.mxu0 %v6799
  %10028 = vmatpush.bf16.msra.mxu0 %v6791
  %10029 = vmatpush.bf16.msra.mxu0 %v6783
  %10030 = vmatmul.bf16.gmra.mxu0 %v1714
  %v10031 = vpop.f32.mrf.mxu0
  %v10032 = vadd.f32 %v10018, %v10031
  %v10033 = vpop.f32.mrf.mxu0
  %v10034 = vadd.f32 %v10020, %v10033
  %10035 = vdwg.mxu0
  %10036 = vmatpush.bf16.msra.mxu0 %v6903
  %10037 = vmatpush.bf16.msra.mxu0 %v6895
  %10038 = vmatpush.bf16.msra.mxu0 %v6887
  %10039 = vmatpush.bf16.msra.mxu0 %v6879
  %10040 = vmatpush.bf16.msra.mxu0 %v6871
  %10041 = vmatpush.bf16.msra.mxu0 %v6863
  %10042 = vmatpush.bf16.msra.mxu0 %v6855
  %10043 = vmatpush.bf16.msra.mxu0 %v6847
  %10044 = vmatmul.bf16.gmra.mxu0 %v1715
  %v10045 = vpop.f32.mrf.mxu0
  %v10046 = vadd.f32 %v10032, %v10045
  %v10047 = vpop.f32.mrf.mxu0
  %v10048 = vadd.f32 %v10034, %v10047
  %10049 = vdwg.mxu0
  %10050 = vmatpush.bf16.msra.mxu0 %v6967
  %10051 = vmatpush.bf16.msra.mxu0 %v6959
  %10052 = vmatpush.bf16.msra.mxu0 %v6951
  %10053 = vmatpush.bf16.msra.mxu0 %v6943
  %10054 = vmatpush.bf16.msra.mxu0 %v6935
  %10055 = vmatpush.bf16.msra.mxu0 %v6927
  %10056 = vmatpush.bf16.msra.mxu0 %v6919
  %10057 = vmatpush.bf16.msra.mxu0 %v6911
  %10058 = vmatmul.bf16.gmra.mxu0 %v1716
  %v10059 = vpop.f32.mrf.mxu0
  %v10060 = vadd.f32 %v10046, %v10059
  %v10061 = vpop.f32.mrf.mxu0
  %v10062 = vadd.f32 %v10048, %v10061
  %10063 = vdwg.mxu0
  %10064 = vmatpush.bf16.msra.mxu0 %v7031
  %10065 = vmatpush.bf16.msra.mxu0 %v7023
  %10066 = vmatpush.bf16.msra.mxu0 %v7015
  %10067 = vmatpush.bf16.msra.mxu0 %v7007
  %10068 = vmatpush.bf16.msra.mxu0 %v6999
  %10069 = vmatpush.bf16.msra.mxu0 %v6991
  %10070 = vmatpush.bf16.msra.mxu0 %v6983
  %10071 = vmatpush.bf16.msra.mxu0 %v6975
  %10072 = vmatmul.bf16.gmra.mxu0 %v1717
  %v10073 = vpop.f32.mrf.mxu0
  %v10074 = vadd.f32 %v10060, %v10073
  %v10075 = vpop.f32.mrf.mxu0
  %v10076 = vadd.f32 %v10062, %v10075
  %10077 = vdwg.mxu0
  %10078 = vmatpush.bf16.msra.mxu0 %v7095
  %10079 = vmatpush.bf16.msra.mxu0 %v7087
  %10080 = vmatpush.bf16.msra.mxu0 %v7079
  %10081 = vmatpush.bf16.msra.mxu0 %v7071
  %10082 = vmatpush.bf16.msra.mxu0 %v7063
  %10083 = vmatpush.bf16.msra.mxu0 %v7055
  %10084 = vmatpush.bf16.msra.mxu0 %v7047
  %10085 = vmatpush.bf16.msra.mxu0 %v7039
  %10086 = vmatmul.bf16.gmra.mxu0 %v1718
  %v10087 = vpop.f32.mrf.mxu0
  %v10088 = vadd.f32 %v10074, %v10087
  %v10089 = vpop.f32.mrf.mxu0
  %v10090 = vadd.f32 %v10076, %v10089
  %10091 = vdwg.mxu0
  %10092 = vmatpush.bf16.msra.mxu0 %v7159
  %10093 = vmatpush.bf16.msra.mxu0 %v7151
  %10094 = vmatpush.bf16.msra.mxu0 %v7143
  %10095 = vmatpush.bf16.msra.mxu0 %v7135
  %10096 = vmatpush.bf16.msra.mxu0 %v7127
  %10097 = vmatpush.bf16.msra.mxu0 %v7119
  %10098 = vmatpush.bf16.msra.mxu0 %v7111
  %10099 = vmatpush.bf16.msra.mxu0 %v7103
  %10100 = vmatmul.bf16.gmra.mxu0 %v1719
  %v10101 = vpop.f32.mrf.mxu0
  %v10102 = vadd.f32 %v10088, %v10101
  %v10103 = vpop.f32.mrf.mxu0
  %v10104 = vadd.f32 %v10090, %v10103
  %10105 = vdwg.mxu0
  %10106 = vmatpush.bf16.msra.mxu0 %v7223
  %10107 = vmatpush.bf16.msra.mxu0 %v7215
  %10108 = vmatpush.bf16.msra.mxu0 %v7207
  %10109 = vmatpush.bf16.msra.mxu0 %v7199
  %10110 = vmatpush.bf16.msra.mxu0 %v7191
  %10111 = vmatpush.bf16.msra.mxu0 %v7183
  %10112 = vmatpush.bf16.msra.mxu0 %v7175
  %10113 = vmatpush.bf16.msra.mxu0 %v7167
  %10114 = vmatmul.bf16.gmra.mxu0 %v1720
  %v10115 = vpop.f32.mrf.mxu0
  %v10116 = vadd.f32 %v10102, %v10115
  %v10117 = vpop.f32.mrf.mxu0
  %v10118 = vadd.f32 %v10104, %v10117
  %10119 = vdwg.mxu0
  %10120 = vmatpush.bf16.msra.mxu0 %v7287
  %10121 = vmatpush.bf16.msra.mxu0 %v7279
  %10122 = vmatpush.bf16.msra.mxu0 %v7271
  %10123 = vmatpush.bf16.msra.mxu0 %v7263
  %10124 = vmatpush.bf16.msra.mxu0 %v7255
  %10125 = vmatpush.bf16.msra.mxu0 %v7247
  %10126 = vmatpush.bf16.msra.mxu0 %v7239
  %10127 = vmatpush.bf16.msra.mxu0 %v7231
  %10128 = vmatmul.bf16.gmra.mxu0 %v1721
  %v10129 = vpop.f32.mrf.mxu0
  %v10130 = vadd.f32 %v10116, %v10129
  %v10131 = vpop.f32.mrf.mxu0
  %v10132 = vadd.f32 %v10118, %v10131
  %10133 = vdwg.mxu0
  %10134 = vmatpush.bf16.msra.mxu0 %v7351
  %10135 = vmatpush.bf16.msra.mxu0 %v7343
  %10136 = vmatpush.bf16.msra.mxu0 %v7335
  %10137 = vmatpush.bf16.msra.mxu0 %v7327
  %10138 = vmatpush.bf16.msra.mxu0 %v7319
  %10139 = vmatpush.bf16.msra.mxu0 %v7311
  %10140 = vmatpush.bf16.msra.mxu0 %v7303
  %10141 = vmatpush.bf16.msra.mxu0 %v7295
  %10142 = vmatmul.bf16.gmra.mxu0 %v1722
  %v10143 = vpop.f32.mrf.mxu0
  %v10144 = vadd.f32 %v10130, %v10143
  %v10145 = vpop.f32.mrf.mxu0
  %v10146 = vadd.f32 %v10132, %v10145
  %10147 = vdwg.mxu0
  %10148 = vmatpush.bf16.msra.mxu0 %v7415
  %10149 = vmatpush.bf16.msra.mxu0 %v7407
  %10150 = vmatpush.bf16.msra.mxu0 %v7399
  %10151 = vmatpush.bf16.msra.mxu0 %v7391
  %10152 = vmatpush.bf16.msra.mxu0 %v7383
  %10153 = vmatpush.bf16.msra.mxu0 %v7375
  %10154 = vmatpush.bf16.msra.mxu0 %v7367
  %10155 = vmatpush.bf16.msra.mxu0 %v7359
  %10156 = vmatmul.bf16.gmra.mxu0 %v1723
  %v10157 = vpop.f32.mrf.mxu0
  %v10158 = vadd.f32 %v10144, %v10157
  %v10159 = vpop.f32.mrf.mxu0
  %v10160 = vadd.f32 %v10146, %v10159
  %10161 = vdwg.mxu0
  %10162 = vmatpush.bf16.msra.mxu0 %v7479
  %10163 = vmatpush.bf16.msra.mxu0 %v7471
  %10164 = vmatpush.bf16.msra.mxu0 %v7463
  %10165 = vmatpush.bf16.msra.mxu0 %v7455
  %10166 = vmatpush.bf16.msra.mxu0 %v7447
  %10167 = vmatpush.bf16.msra.mxu0 %v7439
  %10168 = vmatpush.bf16.msra.mxu0 %v7431
  %10169 = vmatpush.bf16.msra.mxu0 %v7423
  %10170 = vmatmul.bf16.gmra.mxu0 %v1724
  %v10171 = vpop.f32.mrf.mxu0
  %v10172 = vadd.f32 %v10158, %v10171
  %v10173 = vpop.f32.mrf.mxu0
  %v10174 = vadd.f32 %v10160, %v10173
  %10175 = vdwg.mxu0
  %10176 = vmatpush.bf16.msra.mxu0 %v7543
  %10177 = vmatpush.bf16.msra.mxu0 %v7535
  %10178 = vmatpush.bf16.msra.mxu0 %v7527
  %10179 = vmatpush.bf16.msra.mxu0 %v7519
  %10180 = vmatpush.bf16.msra.mxu0 %v7511
  %10181 = vmatpush.bf16.msra.mxu0 %v7503
  %10182 = vmatpush.bf16.msra.mxu0 %v7495
  %10183 = vmatpush.bf16.msra.mxu0 %v7487
  %10184 = vmatmul.bf16.gmra.mxu0 %v1725
  %v10185 = vpop.f32.mrf.mxu0
  %v10186 = vadd.f32 %v10172, %v10185
  %v10187 = vpop.f32.mrf.mxu0
  %v10188 = vadd.f32 %v10174, %v10187
  %10189 = vdwg.mxu0
  %10190 = vmatpush.bf16.msra.mxu0 %v7607
  %10191 = vmatpush.bf16.msra.mxu0 %v7599
  %10192 = vmatpush.bf16.msra.mxu0 %v7591
  %10193 = vmatpush.bf16.msra.mxu0 %v7583
  %10194 = vmatpush.bf16.msra.mxu0 %v7575
  %10195 = vmatpush.bf16.msra.mxu0 %v7567
  %10196 = vmatpush.bf16.msra.mxu0 %v7559
  %10197 = vmatpush.bf16.msra.mxu0 %v7551
  %10198 = vmatmul.bf16.gmra.mxu0 %v1726
  %v10199 = vpop.f32.mrf.mxu0
  %v10200 = vadd.f32 %v10186, %v10199
  %v10201 = vpop.f32.mrf.mxu0
  %v10202 = vadd.f32 %v10188, %v10201
  %10203 = vdwg.mxu0
  %10204 = vmatpush.bf16.msra.mxu0 %v7671
  %10205 = vmatpush.bf16.msra.mxu0 %v7663
  %10206 = vmatpush.bf16.msra.mxu0 %v7655
  %10207 = vmatpush.bf16.msra.mxu0 %v7647
  %10208 = vmatpush.bf16.msra.mxu0 %v7639
  %10209 = vmatpush.bf16.msra.mxu0 %v7631
  %10210 = vmatpush.bf16.msra.mxu0 %v7623
  %10211 = vmatpush.bf16.msra.mxu0 %v7615
  %10212 = vmatmul.bf16.gmra.mxu0 %v1727
  %v10213 = vpop.f32.mrf.mxu0
  %v10214 = vadd.f32 %v10200, %v10213
  %v10215 = vpop.f32.mrf.mxu0
  %v10216 = vadd.f32 %v10202, %v10215
  %10217 = vdwg.mxu0
  %10218 = vmatpush.bf16.msra.mxu0 %v7735
  %10219 = vmatpush.bf16.msra.mxu0 %v7727
  %10220 = vmatpush.bf16.msra.mxu0 %v7719
  %10221 = vmatpush.bf16.msra.mxu0 %v7711
  %10222 = vmatpush.bf16.msra.mxu0 %v7703
  %10223 = vmatpush.bf16.msra.mxu0 %v7695
  %10224 = vmatpush.bf16.msra.mxu0 %v7687
  %10225 = vmatpush.bf16.msra.mxu0 %v7679
  %10226 = vmatmul.bf16.gmra.mxu0 %v1728
  %v10227 = vpop.f32.mrf.mxu0
  %v10228 = vadd.f32 %v10214, %v10227
  %v10229 = vpop.f32.mrf.mxu0
  %v10230 = vadd.f32 %v10216, %v10229
  %10231 = vdwg.mxu0
  %10232 = vmatpush.bf16.msra.mxu0 %v7799
  %10233 = vmatpush.bf16.msra.mxu0 %v7791
  %10234 = vmatpush.bf16.msra.mxu0 %v7783
  %10235 = vmatpush.bf16.msra.mxu0 %v7775
  %10236 = vmatpush.bf16.msra.mxu0 %v7767
  %10237 = vmatpush.bf16.msra.mxu0 %v7759
  %10238 = vmatpush.bf16.msra.mxu0 %v7751
  %10239 = vmatpush.bf16.msra.mxu0 %v7743
  %10240 = vmatmul.bf16.gmra.mxu0 %v1729
  %v10241 = vpop.f32.mrf.mxu0
  %v10242 = vadd.f32 %v10228, %v10241
  %v10243 = vpop.f32.mrf.mxu0
  %v10244 = vadd.f32 %v10230, %v10243
  %10245 = vdwg.mxu0
  %10246 = vmatpush.bf16.msra.mxu0 %v7863
  %10247 = vmatpush.bf16.msra.mxu0 %v7855
  %10248 = vmatpush.bf16.msra.mxu0 %v7847
  %10249 = vmatpush.bf16.msra.mxu0 %v7839
  %10250 = vmatpush.bf16.msra.mxu0 %v7831
  %10251 = vmatpush.bf16.msra.mxu0 %v7823
  %10252 = vmatpush.bf16.msra.mxu0 %v7815
  %10253 = vmatpush.bf16.msra.mxu0 %v7807
  %10254 = vmatmul.bf16.gmra.mxu0 %v1730
  %v10255 = vpop.f32.mrf.mxu0
  %v10256 = vadd.f32 %v10242, %v10255
  %v10257 = vpop.f32.mrf.mxu0
  %v10258 = vadd.f32 %v10244, %v10257
  %10259 = vdwg.mxu0
  %10260 = vmatpush.bf16.msra.mxu0 %v7927
  %10261 = vmatpush.bf16.msra.mxu0 %v7919
  %10262 = vmatpush.bf16.msra.mxu0 %v7911
  %10263 = vmatpush.bf16.msra.mxu0 %v7903
  %10264 = vmatpush.bf16.msra.mxu0 %v7895
  %10265 = vmatpush.bf16.msra.mxu0 %v7887
  %10266 = vmatpush.bf16.msra.mxu0 %v7879
  %10267 = vmatpush.bf16.msra.mxu0 %v7871
  %10268 = vmatmul.bf16.gmra.mxu0 %v1731
  %v10269 = vpop.f32.mrf.mxu0
  %v10270 = vadd.f32 %v10256, %v10269
  %v10271 = vpop.f32.mrf.mxu0
  %v10272 = vadd.f32 %v10258, %v10271
  %10273 = vdwg.mxu0
  %10274 = vmatpush.bf16.msra.mxu0 %v7991
  %10275 = vmatpush.bf16.msra.mxu0 %v7983
  %10276 = vmatpush.bf16.msra.mxu0 %v7975
  %10277 = vmatpush.bf16.msra.mxu0 %v7967
  %10278 = vmatpush.bf16.msra.mxu0 %v7959
  %10279 = vmatpush.bf16.msra.mxu0 %v7951
  %10280 = vmatpush.bf16.msra.mxu0 %v7943
  %10281 = vmatpush.bf16.msra.mxu0 %v7935
  %10282 = vmatmul.bf16.gmra.mxu0 %v1732
  %v10283 = vpop.f32.mrf.mxu0
  %v10284 = vadd.f32 %v10270, %v10283
  %v10285 = vpop.f32.mrf.mxu0
  %v10286 = vadd.f32 %v10272, %v10285
  %10287 = vdwg.mxu0
  %10288 = vmatpush.bf16.msra.mxu0 0
  %10289 = vmatpush.bf16.msra.mxu0 0
  %10290 = vmatpush.bf16.msra.mxu0 0
  %10291 = vmatpush.bf16.msra.mxu0 0
  %10292 = vmatpush.bf16.msra.mxu0 %v8023
  %10293 = vmatpush.bf16.msra.mxu0 %v8015
  %10294 = vmatpush.bf16.msra.mxu0 %v8007
  %10295 = vmatpush.bf16.msra.mxu0 %v7999
  %10296 = vmatmul.bf16.gmra.mxu0 %v9600
  %v10297 = vpop.f32.mrf.mxu0
  %v10298 = vadd.f32 %v10284, %v10297
  %v10299 = vpop.f32.mrf.mxu0
  %v10300 = vadd.f32 %v10286, %v10299
  %10301 = vdwg.mxu0
  %10302 = vmatpush.bf16.msra.mxu0 %v6520
  %10303 = vmatpush.bf16.msra.mxu0 %v6512
  %10304 = vmatpush.bf16.msra.mxu0 %v6504
  %10305 = vmatpush.bf16.msra.mxu0 %v6496
  %10306 = vmatpush.bf16.msra.mxu0 %v6488
  %10307 = vmatpush.bf16.msra.mxu0 %v6480
  %10308 = vmatpush.bf16.msra.mxu0 %v6472
  %10309 = vmatpush.bf16.msra.mxu0 %v6464
  %10310 = vmatmul.bf16.gmra.mxu0 %v1709
  %v10311 = vpop.f32.mrf.mxu0
  %v10312 = vadd.f32 %v1619, %v10311
  %v10313 = vpop.f32.mrf.mxu0
  %v10314 = vadd.f32 %v1619, %v10313
  %10315 = vdwg.mxu0
  %10316 = vmatpush.bf16.msra.mxu0 %v6584
  %10317 = vmatpush.bf16.msra.mxu0 %v6576
  %10318 = vmatpush.bf16.msra.mxu0 %v6568
  %10319 = vmatpush.bf16.msra.mxu0 %v6560
  %10320 = vmatpush.bf16.msra.mxu0 %v6552
  %10321 = vmatpush.bf16.msra.mxu0 %v6544
  %10322 = vmatpush.bf16.msra.mxu0 %v6536
  %10323 = vmatpush.bf16.msra.mxu0 %v6528
  %10324 = vmatmul.bf16.gmra.mxu0 %v1710
  %v10325 = vpop.f32.mrf.mxu0
  %v10326 = vadd.f32 %v10312, %v10325
  %v10327 = vpop.f32.mrf.mxu0
  %v10328 = vadd.f32 %v10314, %v10327
  %10329 = vdwg.mxu0
  %10330 = vmatpush.bf16.msra.mxu0 %v6648
  %10331 = vmatpush.bf16.msra.mxu0 %v6640
  %10332 = vmatpush.bf16.msra.mxu0 %v6632
  %10333 = vmatpush.bf16.msra.mxu0 %v6624
  %10334 = vmatpush.bf16.msra.mxu0 %v6616
  %10335 = vmatpush.bf16.msra.mxu0 %v6608
  %10336 = vmatpush.bf16.msra.mxu0 %v6600
  %10337 = vmatpush.bf16.msra.mxu0 %v6592
  %10338 = vmatmul.bf16.gmra.mxu0 %v1711
  %v10339 = vpop.f32.mrf.mxu0
  %v10340 = vadd.f32 %v10326, %v10339
  %v10341 = vpop.f32.mrf.mxu0
  %v10342 = vadd.f32 %v10328, %v10341
  %10343 = vdwg.mxu0
  %10344 = vmatpush.bf16.msra.mxu0 %v6712
  %10345 = vmatpush.bf16.msra.mxu0 %v6704
  %10346 = vmatpush.bf16.msra.mxu0 %v6696
  %10347 = vmatpush.bf16.msra.mxu0 %v6688
  %10348 = vmatpush.bf16.msra.mxu0 %v6680
  %10349 = vmatpush.bf16.msra.mxu0 %v6672
  %10350 = vmatpush.bf16.msra.mxu0 %v6664
  %10351 = vmatpush.bf16.msra.mxu0 %v6656
  %10352 = vmatmul.bf16.gmra.mxu0 %v1712
  %v10353 = vpop.f32.mrf.mxu0
  %v10354 = vadd.f32 %v10340, %v10353
  %v10355 = vpop.f32.mrf.mxu0
  %v10356 = vadd.f32 %v10342, %v10355
  %10357 = vdwg.mxu0
  %10358 = vmatpush.bf16.msra.mxu0 %v6776
  %10359 = vmatpush.bf16.msra.mxu0 %v6768
  %10360 = vmatpush.bf16.msra.mxu0 %v6760
  %10361 = vmatpush.bf16.msra.mxu0 %v6752
  %10362 = vmatpush.bf16.msra.mxu0 %v6744
  %10363 = vmatpush.bf16.msra.mxu0 %v6736
  %10364 = vmatpush.bf16.msra.mxu0 %v6728
  %10365 = vmatpush.bf16.msra.mxu0 %v6720
  %10366 = vmatmul.bf16.gmra.mxu0 %v1713
  %v10367 = vpop.f32.mrf.mxu0
  %v10368 = vadd.f32 %v10354, %v10367
  %v10369 = vpop.f32.mrf.mxu0
  %v10370 = vadd.f32 %v10356, %v10369
  %10371 = vdwg.mxu0
  %10372 = vmatpush.bf16.msra.mxu0 %v6840
  %10373 = vmatpush.bf16.msra.mxu0 %v6832
  %10374 = vmatpush.bf16.msra.mxu0 %v6824
  %10375 = vmatpush.bf16.msra.mxu0 %v6816
  %10376 = vmatpush.bf16.msra.mxu0 %v6808
  %10377 = vmatpush.bf16.msra.mxu0 %v6800
  %10378 = vmatpush.bf16.msra.mxu0 %v6792
  %10379 = vmatpush.bf16.msra.mxu0 %v6784
  %10380 = vmatmul.bf16.gmra.mxu0 %v1714
  %v10381 = vpop.f32.mrf.mxu0
  %v10382 = vadd.f32 %v10368, %v10381
  %v10383 = vpop.f32.mrf.mxu0
  %v10384 = vadd.f32 %v10370, %v10383
  %10385 = vdwg.mxu0
  %10386 = vmatpush.bf16.msra.mxu0 %v6904
  %10387 = vmatpush.bf16.msra.mxu0 %v6896
  %10388 = vmatpush.bf16.msra.mxu0 %v6888
  %10389 = vmatpush.bf16.msra.mxu0 %v6880
  %10390 = vmatpush.bf16.msra.mxu0 %v6872
  %10391 = vmatpush.bf16.msra.mxu0 %v6864
  %10392 = vmatpush.bf16.msra.mxu0 %v6856
  %10393 = vmatpush.bf16.msra.mxu0 %v6848
  %10394 = vmatmul.bf16.gmra.mxu0 %v1715
  %v10395 = vpop.f32.mrf.mxu0
  %v10396 = vadd.f32 %v10382, %v10395
  %v10397 = vpop.f32.mrf.mxu0
  %v10398 = vadd.f32 %v10384, %v10397
  %10399 = vdwg.mxu0
  %10400 = vmatpush.bf16.msra.mxu0 %v6968
  %10401 = vmatpush.bf16.msra.mxu0 %v6960
  %10402 = vmatpush.bf16.msra.mxu0 %v6952
  %10403 = vmatpush.bf16.msra.mxu0 %v6944
  %10404 = vmatpush.bf16.msra.mxu0 %v6936
  %10405 = vmatpush.bf16.msra.mxu0 %v6928
  %10406 = vmatpush.bf16.msra.mxu0 %v6920
  %10407 = vmatpush.bf16.msra.mxu0 %v6912
  %10408 = vmatmul.bf16.gmra.mxu0 %v1716
  %v10409 = vpop.f32.mrf.mxu0
  %v10410 = vadd.f32 %v10396, %v10409
  %v10411 = vpop.f32.mrf.mxu0
  %v10412 = vadd.f32 %v10398, %v10411
  %10413 = vdwg.mxu0
  %10414 = vmatpush.bf16.msra.mxu0 %v7032
  %10415 = vmatpush.bf16.msra.mxu0 %v7024
  %10416 = vmatpush.bf16.msra.mxu0 %v7016
  %10417 = vmatpush.bf16.msra.mxu0 %v7008
  %10418 = vmatpush.bf16.msra.mxu0 %v7000
  %10419 = vmatpush.bf16.msra.mxu0 %v6992
  %10420 = vmatpush.bf16.msra.mxu0 %v6984
  %10421 = vmatpush.bf16.msra.mxu0 %v6976
  %10422 = vmatmul.bf16.gmra.mxu0 %v1717
  %v10423 = vpop.f32.mrf.mxu0
  %v10424 = vadd.f32 %v10410, %v10423
  %v10425 = vpop.f32.mrf.mxu0
  %v10426 = vadd.f32 %v10412, %v10425
  %10427 = vdwg.mxu0
  %10428 = vmatpush.bf16.msra.mxu0 %v7096
  %10429 = vmatpush.bf16.msra.mxu0 %v7088
  %10430 = vmatpush.bf16.msra.mxu0 %v7080
  %10431 = vmatpush.bf16.msra.mxu0 %v7072
  %10432 = vmatpush.bf16.msra.mxu0 %v7064
  %10433 = vmatpush.bf16.msra.mxu0 %v7056
  %10434 = vmatpush.bf16.msra.mxu0 %v7048
  %10435 = vmatpush.bf16.msra.mxu0 %v7040
  %10436 = vmatmul.bf16.gmra.mxu0 %v1718
  %v10437 = vpop.f32.mrf.mxu0
  %v10438 = vadd.f32 %v10424, %v10437
  %v10439 = vpop.f32.mrf.mxu0
  %v10440 = vadd.f32 %v10426, %v10439
  %10441 = vdwg.mxu0
  %10442 = vmatpush.bf16.msra.mxu0 %v7160
  %10443 = vmatpush.bf16.msra.mxu0 %v7152
  %10444 = vmatpush.bf16.msra.mxu0 %v7144
  %10445 = vmatpush.bf16.msra.mxu0 %v7136
  %10446 = vmatpush.bf16.msra.mxu0 %v7128
  %10447 = vmatpush.bf16.msra.mxu0 %v7120
  %10448 = vmatpush.bf16.msra.mxu0 %v7112
  %10449 = vmatpush.bf16.msra.mxu0 %v7104
  %10450 = vmatmul.bf16.gmra.mxu0 %v1719
  %v10451 = vpop.f32.mrf.mxu0
  %v10452 = vadd.f32 %v10438, %v10451
  %v10453 = vpop.f32.mrf.mxu0
  %v10454 = vadd.f32 %v10440, %v10453
  %10455 = vdwg.mxu0
  %10456 = vmatpush.bf16.msra.mxu0 %v7224
  %10457 = vmatpush.bf16.msra.mxu0 %v7216
  %10458 = vmatpush.bf16.msra.mxu0 %v7208
  %10459 = vmatpush.bf16.msra.mxu0 %v7200
  %10460 = vmatpush.bf16.msra.mxu0 %v7192
  %10461 = vmatpush.bf16.msra.mxu0 %v7184
  %10462 = vmatpush.bf16.msra.mxu0 %v7176
  %10463 = vmatpush.bf16.msra.mxu0 %v7168
  %10464 = vmatmul.bf16.gmra.mxu0 %v1720
  %v10465 = vpop.f32.mrf.mxu0
  %v10466 = vadd.f32 %v10452, %v10465
  %v10467 = vpop.f32.mrf.mxu0
  %v10468 = vadd.f32 %v10454, %v10467
  %10469 = vdwg.mxu0
  %10470 = vmatpush.bf16.msra.mxu0 %v7288
  %10471 = vmatpush.bf16.msra.mxu0 %v7280
  %10472 = vmatpush.bf16.msra.mxu0 %v7272
  %10473 = vmatpush.bf16.msra.mxu0 %v7264
  %10474 = vmatpush.bf16.msra.mxu0 %v7256
  %10475 = vmatpush.bf16.msra.mxu0 %v7248
  %10476 = vmatpush.bf16.msra.mxu0 %v7240
  %10477 = vmatpush.bf16.msra.mxu0 %v7232
  %10478 = vmatmul.bf16.gmra.mxu0 %v1721
  %v10479 = vpop.f32.mrf.mxu0
  %v10480 = vadd.f32 %v10466, %v10479
  %v10481 = vpop.f32.mrf.mxu0
  %v10482 = vadd.f32 %v10468, %v10481
  %10483 = vdwg.mxu0
  %10484 = vmatpush.bf16.msra.mxu0 %v7352
  %10485 = vmatpush.bf16.msra.mxu0 %v7344
  %10486 = vmatpush.bf16.msra.mxu0 %v7336
  %10487 = vmatpush.bf16.msra.mxu0 %v7328
  %10488 = vmatpush.bf16.msra.mxu0 %v7320
  %10489 = vmatpush.bf16.msra.mxu0 %v7312
  %10490 = vmatpush.bf16.msra.mxu0 %v7304
  %10491 = vmatpush.bf16.msra.mxu0 %v7296
  %10492 = vmatmul.bf16.gmra.mxu0 %v1722
  %v10493 = vpop.f32.mrf.mxu0
  %v10494 = vadd.f32 %v10480, %v10493
  %v10495 = vpop.f32.mrf.mxu0
  %v10496 = vadd.f32 %v10482, %v10495
  %10497 = vdwg.mxu0
  %10498 = vmatpush.bf16.msra.mxu0 %v7416
  %10499 = vmatpush.bf16.msra.mxu0 %v7408
  %10500 = vmatpush.bf16.msra.mxu0 %v7400
  %10501 = vmatpush.bf16.msra.mxu0 %v7392
  %10502 = vmatpush.bf16.msra.mxu0 %v7384
  %10503 = vmatpush.bf16.msra.mxu0 %v7376
  %10504 = vmatpush.bf16.msra.mxu0 %v7368
  %10505 = vmatpush.bf16.msra.mxu0 %v7360
  %10506 = vmatmul.bf16.gmra.mxu0 %v1723
  %v10507 = vpop.f32.mrf.mxu0
  %v10508 = vadd.f32 %v10494, %v10507
  %v10509 = vpop.f32.mrf.mxu0
  %v10510 = vadd.f32 %v10496, %v10509
  %10511 = vdwg.mxu0
  %10512 = vmatpush.bf16.msra.mxu0 %v7480
  %10513 = vmatpush.bf16.msra.mxu0 %v7472
  %10514 = vmatpush.bf16.msra.mxu0 %v7464
  %10515 = vmatpush.bf16.msra.mxu0 %v7456
  %10516 = vmatpush.bf16.msra.mxu0 %v7448
  %10517 = vmatpush.bf16.msra.mxu0 %v7440
  %10518 = vmatpush.bf16.msra.mxu0 %v7432
  %10519 = vmatpush.bf16.msra.mxu0 %v7424
  %10520 = vmatmul.bf16.gmra.mxu0 %v1724
  %v10521 = vpop.f32.mrf.mxu0
  %v10522 = vadd.f32 %v10508, %v10521
  %v10523 = vpop.f32.mrf.mxu0
  %v10524 = vadd.f32 %v10510, %v10523
  %10525 = vdwg.mxu0
  %10526 = vmatpush.bf16.msra.mxu0 %v7544
  %10527 = vmatpush.bf16.msra.mxu0 %v7536
  %10528 = vmatpush.bf16.msra.mxu0 %v7528
  %10529 = vmatpush.bf16.msra.mxu0 %v7520
  %10530 = vmatpush.bf16.msra.mxu0 %v7512
  %10531 = vmatpush.bf16.msra.mxu0 %v7504
  %10532 = vmatpush.bf16.msra.mxu0 %v7496
  %10533 = vmatpush.bf16.msra.mxu0 %v7488
  %10534 = vmatmul.bf16.gmra.mxu0 %v1725
  %v10535 = vpop.f32.mrf.mxu0
  %v10536 = vadd.f32 %v10522, %v10535
  %v10537 = vpop.f32.mrf.mxu0
  %v10538 = vadd.f32 %v10524, %v10537
  %10539 = vdwg.mxu0
  %10540 = vmatpush.bf16.msra.mxu0 %v7608
  %10541 = vmatpush.bf16.msra.mxu0 %v7600
  %10542 = vmatpush.bf16.msra.mxu0 %v7592
  %10543 = vmatpush.bf16.msra.mxu0 %v7584
  %10544 = vmatpush.bf16.msra.mxu0 %v7576
  %10545 = vmatpush.bf16.msra.mxu0 %v7568
  %10546 = vmatpush.bf16.msra.mxu0 %v7560
  %10547 = vmatpush.bf16.msra.mxu0 %v7552
  %10548 = vmatmul.bf16.gmra.mxu0 %v1726
  %v10549 = vpop.f32.mrf.mxu0
  %v10550 = vadd.f32 %v10536, %v10549
  %v10551 = vpop.f32.mrf.mxu0
  %v10552 = vadd.f32 %v10538, %v10551
  %10553 = vdwg.mxu0
  %10554 = vmatpush.bf16.msra.mxu0 %v7672
  %10555 = vmatpush.bf16.msra.mxu0 %v7664
  %10556 = vmatpush.bf16.msra.mxu0 %v7656
  %10557 = vmatpush.bf16.msra.mxu0 %v7648
  %10558 = vmatpush.bf16.msra.mxu0 %v7640
  %10559 = vmatpush.bf16.msra.mxu0 %v7632
  %10560 = vmatpush.bf16.msra.mxu0 %v7624
  %10561 = vmatpush.bf16.msra.mxu0 %v7616
  %10562 = vmatmul.bf16.gmra.mxu0 %v1727
  %v10563 = vpop.f32.mrf.mxu0
  %v10564 = vadd.f32 %v10550, %v10563
  %v10565 = vpop.f32.mrf.mxu0
  %v10566 = vadd.f32 %v10552, %v10565
  %10567 = vdwg.mxu0
  %10568 = vmatpush.bf16.msra.mxu0 %v7736
  %10569 = vmatpush.bf16.msra.mxu0 %v7728
  %10570 = vmatpush.bf16.msra.mxu0 %v7720
  %10571 = vmatpush.bf16.msra.mxu0 %v7712
  %10572 = vmatpush.bf16.msra.mxu0 %v7704
  %10573 = vmatpush.bf16.msra.mxu0 %v7696
  %10574 = vmatpush.bf16.msra.mxu0 %v7688
  %10575 = vmatpush.bf16.msra.mxu0 %v7680
  %10576 = vmatmul.bf16.gmra.mxu0 %v1728
  %v10577 = vpop.f32.mrf.mxu0
  %v10578 = vadd.f32 %v10564, %v10577
  %v10579 = vpop.f32.mrf.mxu0
  %v10580 = vadd.f32 %v10566, %v10579
  %10581 = vdwg.mxu0
  %10582 = vmatpush.bf16.msra.mxu0 %v7800
  %10583 = vmatpush.bf16.msra.mxu0 %v7792
  %10584 = vmatpush.bf16.msra.mxu0 %v7784
  %10585 = vmatpush.bf16.msra.mxu0 %v7776
  %10586 = vmatpush.bf16.msra.mxu0 %v7768
  %10587 = vmatpush.bf16.msra.mxu0 %v7760
  %10588 = vmatpush.bf16.msra.mxu0 %v7752
  %10589 = vmatpush.bf16.msra.mxu0 %v7744
  %10590 = vmatmul.bf16.gmra.mxu0 %v1729
  %v10591 = vpop.f32.mrf.mxu0
  %v10592 = vadd.f32 %v10578, %v10591
  %v10593 = vpop.f32.mrf.mxu0
  %v10594 = vadd.f32 %v10580, %v10593
  %10595 = vdwg.mxu0
  %10596 = vmatpush.bf16.msra.mxu0 %v7864
  %10597 = vmatpush.bf16.msra.mxu0 %v7856
  %10598 = vmatpush.bf16.msra.mxu0 %v7848
  %10599 = vmatpush.bf16.msra.mxu0 %v7840
  %10600 = vmatpush.bf16.msra.mxu0 %v7832
  %10601 = vmatpush.bf16.msra.mxu0 %v7824
  %10602 = vmatpush.bf16.msra.mxu0 %v7816
  %10603 = vmatpush.bf16.msra.mxu0 %v7808
  %10604 = vmatmul.bf16.gmra.mxu0 %v1730
  %v10605 = vpop.f32.mrf.mxu0
  %v10606 = vadd.f32 %v10592, %v10605
  %v10607 = vpop.f32.mrf.mxu0
  %v10608 = vadd.f32 %v10594, %v10607
  %10609 = vdwg.mxu0
  %10610 = vmatpush.bf16.msra.mxu0 %v7928
  %10611 = vmatpush.bf16.msra.mxu0 %v7920
  %10612 = vmatpush.bf16.msra.mxu0 %v7912
  %10613 = vmatpush.bf16.msra.mxu0 %v7904
  %10614 = vmatpush.bf16.msra.mxu0 %v7896
  %10615 = vmatpush.bf16.msra.mxu0 %v7888
  %10616 = vmatpush.bf16.msra.mxu0 %v7880
  %10617 = vmatpush.bf16.msra.mxu0 %v7872
  %10618 = vmatmul.bf16.gmra.mxu0 %v1731
  %v10619 = vpop.f32.mrf.mxu0
  %v10620 = vadd.f32 %v10606, %v10619
  %v10621 = vpop.f32.mrf.mxu0
  %v10622 = vadd.f32 %v10608, %v10621
  %10623 = vdwg.mxu0
  %10624 = vmatpush.bf16.msra.mxu0 %v7992
  %10625 = vmatpush.bf16.msra.mxu0 %v7984
  %10626 = vmatpush.bf16.msra.mxu0 %v7976
  %10627 = vmatpush.bf16.msra.mxu0 %v7968
  %10628 = vmatpush.bf16.msra.mxu0 %v7960
  %10629 = vmatpush.bf16.msra.mxu0 %v7952
  %10630 = vmatpush.bf16.msra.mxu0 %v7944
  %10631 = vmatpush.bf16.msra.mxu0 %v7936
  %10632 = vmatmul.bf16.gmra.mxu0 %v1732
  %v10633 = vpop.f32.mrf.mxu0
  %v10634 = vadd.f32 %v10620, %v10633
  %v10635 = vpop.f32.mrf.mxu0
  %v10636 = vadd.f32 %v10622, %v10635
  %10637 = vdwg.mxu0
  %10638 = vmatpush.bf16.msra.mxu0 0
  %10639 = vmatpush.bf16.msra.mxu0 0
  %10640 = vmatpush.bf16.msra.mxu0 0
  %10641 = vmatpush.bf16.msra.mxu0 0
  %10642 = vmatpush.bf16.msra.mxu0 %v8024
  %10643 = vmatpush.bf16.msra.mxu0 %v8016
  %10644 = vmatpush.bf16.msra.mxu0 %v8008
  %10645 = vmatpush.bf16.msra.mxu0 %v8000
  %10646 = vmatmul.bf16.gmra.mxu0 %v9600
  %v10647 = vpop.f32.mrf.mxu0
  %v10648 = vadd.f32 %v10634, %v10647
  %v10649 = vpop.f32.mrf.mxu0
  %v10650 = vadd.f32 %v10636, %v10649
  %10651 = vdwg.mxu0
  %10652 = vmatpush.bf16.msra.mxu0 %v6521
  %10653 = vmatpush.bf16.msra.mxu0 %v6513
  %10654 = vmatpush.bf16.msra.mxu0 %v6505
  %10655 = vmatpush.bf16.msra.mxu0 %v6497
  %10656 = vmatpush.bf16.msra.mxu0 %v6489
  %10657 = vmatpush.bf16.msra.mxu0 %v6481
  %10658 = vmatpush.bf16.msra.mxu0 %v6473
  %10659 = vmatpush.bf16.msra.mxu0 %v6465
  %10660 = vmatmul.bf16.gmra.mxu0 %v1709
  %v10661 = vpop.f32.mrf.mxu0
  %v10662 = vadd.f32 %v1620, %v10661
  %v10663 = vpop.f32.mrf.mxu0
  %v10664 = vadd.f32 %v1620, %v10663
  %10665 = vdwg.mxu0
  %10666 = vmatpush.bf16.msra.mxu0 %v6585
  %10667 = vmatpush.bf16.msra.mxu0 %v6577
  %10668 = vmatpush.bf16.msra.mxu0 %v6569
  %10669 = vmatpush.bf16.msra.mxu0 %v6561
  %10670 = vmatpush.bf16.msra.mxu0 %v6553
  %10671 = vmatpush.bf16.msra.mxu0 %v6545
  %10672 = vmatpush.bf16.msra.mxu0 %v6537
  %10673 = vmatpush.bf16.msra.mxu0 %v6529
  %10674 = vmatmul.bf16.gmra.mxu0 %v1710
  %v10675 = vpop.f32.mrf.mxu0
  %v10676 = vadd.f32 %v10662, %v10675
  %v10677 = vpop.f32.mrf.mxu0
  %v10678 = vadd.f32 %v10664, %v10677
  %10679 = vdwg.mxu0
  %10680 = vmatpush.bf16.msra.mxu0 %v6649
  %10681 = vmatpush.bf16.msra.mxu0 %v6641
  %10682 = vmatpush.bf16.msra.mxu0 %v6633
  %10683 = vmatpush.bf16.msra.mxu0 %v6625
  %10684 = vmatpush.bf16.msra.mxu0 %v6617
  %10685 = vmatpush.bf16.msra.mxu0 %v6609
  %10686 = vmatpush.bf16.msra.mxu0 %v6601
  %10687 = vmatpush.bf16.msra.mxu0 %v6593
  %10688 = vmatmul.bf16.gmra.mxu0 %v1711
  %v10689 = vpop.f32.mrf.mxu0
  %v10690 = vadd.f32 %v10676, %v10689
  %v10691 = vpop.f32.mrf.mxu0
  %v10692 = vadd.f32 %v10678, %v10691
  %10693 = vdwg.mxu0
  %10694 = vmatpush.bf16.msra.mxu0 %v6713
  %10695 = vmatpush.bf16.msra.mxu0 %v6705
  %10696 = vmatpush.bf16.msra.mxu0 %v6697
  %10697 = vmatpush.bf16.msra.mxu0 %v6689
  %10698 = vmatpush.bf16.msra.mxu0 %v6681
  %10699 = vmatpush.bf16.msra.mxu0 %v6673
  %10700 = vmatpush.bf16.msra.mxu0 %v6665
  %10701 = vmatpush.bf16.msra.mxu0 %v6657
  %10702 = vmatmul.bf16.gmra.mxu0 %v1712
  %v10703 = vpop.f32.mrf.mxu0
  %v10704 = vadd.f32 %v10690, %v10703
  %v10705 = vpop.f32.mrf.mxu0
  %v10706 = vadd.f32 %v10692, %v10705
  %10707 = vdwg.mxu0
  %10708 = vmatpush.bf16.msra.mxu0 %v6777
  %10709 = vmatpush.bf16.msra.mxu0 %v6769
  %10710 = vmatpush.bf16.msra.mxu0 %v6761
  %10711 = vmatpush.bf16.msra.mxu0 %v6753
  %10712 = vmatpush.bf16.msra.mxu0 %v6745
  %10713 = vmatpush.bf16.msra.mxu0 %v6737
  %10714 = vmatpush.bf16.msra.mxu0 %v6729
  %10715 = vmatpush.bf16.msra.mxu0 %v6721
  %10716 = vmatmul.bf16.gmra.mxu0 %v1713
  %v10717 = vpop.f32.mrf.mxu0
  %v10718 = vadd.f32 %v10704, %v10717
  %v10719 = vpop.f32.mrf.mxu0
  %v10720 = vadd.f32 %v10706, %v10719
  %10721 = vdwg.mxu0
  %10722 = vmatpush.bf16.msra.mxu0 %v6841
  %10723 = vmatpush.bf16.msra.mxu0 %v6833
  %10724 = vmatpush.bf16.msra.mxu0 %v6825
  %10725 = vmatpush.bf16.msra.mxu0 %v6817
  %10726 = vmatpush.bf16.msra.mxu0 %v6809
  %10727 = vmatpush.bf16.msra.mxu0 %v6801
  %10728 = vmatpush.bf16.msra.mxu0 %v6793
  %10729 = vmatpush.bf16.msra.mxu0 %v6785
  %10730 = vmatmul.bf16.gmra.mxu0 %v1714
  %v10731 = vpop.f32.mrf.mxu0
  %v10732 = vadd.f32 %v10718, %v10731
  %v10733 = vpop.f32.mrf.mxu0
  %v10734 = vadd.f32 %v10720, %v10733
  %10735 = vdwg.mxu0
  %10736 = vmatpush.bf16.msra.mxu0 %v6905
  %10737 = vmatpush.bf16.msra.mxu0 %v6897
  %10738 = vmatpush.bf16.msra.mxu0 %v6889
  %10739 = vmatpush.bf16.msra.mxu0 %v6881
  %10740 = vmatpush.bf16.msra.mxu0 %v6873
  %10741 = vmatpush.bf16.msra.mxu0 %v6865
  %10742 = vmatpush.bf16.msra.mxu0 %v6857
  %10743 = vmatpush.bf16.msra.mxu0 %v6849
  %10744 = vmatmul.bf16.gmra.mxu0 %v1715
  %v10745 = vpop.f32.mrf.mxu0
  %v10746 = vadd.f32 %v10732, %v10745
  %v10747 = vpop.f32.mrf.mxu0
  %v10748 = vadd.f32 %v10734, %v10747
  %10749 = vdwg.mxu0
  %10750 = vmatpush.bf16.msra.mxu0 %v6969
  %10751 = vmatpush.bf16.msra.mxu0 %v6961
  %10752 = vmatpush.bf16.msra.mxu0 %v6953
  %10753 = vmatpush.bf16.msra.mxu0 %v6945
  %10754 = vmatpush.bf16.msra.mxu0 %v6937
  %10755 = vmatpush.bf16.msra.mxu0 %v6929
  %10756 = vmatpush.bf16.msra.mxu0 %v6921
  %10757 = vmatpush.bf16.msra.mxu0 %v6913
  %10758 = vmatmul.bf16.gmra.mxu0 %v1716
  %v10759 = vpop.f32.mrf.mxu0
  %v10760 = vadd.f32 %v10746, %v10759
  %v10761 = vpop.f32.mrf.mxu0
  %v10762 = vadd.f32 %v10748, %v10761
  %10763 = vdwg.mxu0
  %10764 = vmatpush.bf16.msra.mxu0 %v7033
  %10765 = vmatpush.bf16.msra.mxu0 %v7025
  %10766 = vmatpush.bf16.msra.mxu0 %v7017
  %10767 = vmatpush.bf16.msra.mxu0 %v7009
  %10768 = vmatpush.bf16.msra.mxu0 %v7001
  %10769 = vmatpush.bf16.msra.mxu0 %v6993
  %10770 = vmatpush.bf16.msra.mxu0 %v6985
  %10771 = vmatpush.bf16.msra.mxu0 %v6977
  %10772 = vmatmul.bf16.gmra.mxu0 %v1717
  %v10773 = vpop.f32.mrf.mxu0
  %v10774 = vadd.f32 %v10760, %v10773
  %v10775 = vpop.f32.mrf.mxu0
  %v10776 = vadd.f32 %v10762, %v10775
  %10777 = vdwg.mxu0
  %10778 = vmatpush.bf16.msra.mxu0 %v7097
  %10779 = vmatpush.bf16.msra.mxu0 %v7089
  %10780 = vmatpush.bf16.msra.mxu0 %v7081
  %10781 = vmatpush.bf16.msra.mxu0 %v7073
  %10782 = vmatpush.bf16.msra.mxu0 %v7065
  %10783 = vmatpush.bf16.msra.mxu0 %v7057
  %10784 = vmatpush.bf16.msra.mxu0 %v7049
  %10785 = vmatpush.bf16.msra.mxu0 %v7041
  %10786 = vmatmul.bf16.gmra.mxu0 %v1718
  %v10787 = vpop.f32.mrf.mxu0
  %v10788 = vadd.f32 %v10774, %v10787
  %v10789 = vpop.f32.mrf.mxu0
  %v10790 = vadd.f32 %v10776, %v10789
  %10791 = vdwg.mxu0
  %10792 = vmatpush.bf16.msra.mxu0 %v7161
  %10793 = vmatpush.bf16.msra.mxu0 %v7153
  %10794 = vmatpush.bf16.msra.mxu0 %v7145
  %10795 = vmatpush.bf16.msra.mxu0 %v7137
  %10796 = vmatpush.bf16.msra.mxu0 %v7129
  %10797 = vmatpush.bf16.msra.mxu0 %v7121
  %10798 = vmatpush.bf16.msra.mxu0 %v7113
  %10799 = vmatpush.bf16.msra.mxu0 %v7105
  %10800 = vmatmul.bf16.gmra.mxu0 %v1719
  %v10801 = vpop.f32.mrf.mxu0
  %v10802 = vadd.f32 %v10788, %v10801
  %v10803 = vpop.f32.mrf.mxu0
  %v10804 = vadd.f32 %v10790, %v10803
  %10805 = vdwg.mxu0
  %10806 = vmatpush.bf16.msra.mxu0 %v7225
  %10807 = vmatpush.bf16.msra.mxu0 %v7217
  %10808 = vmatpush.bf16.msra.mxu0 %v7209
  %10809 = vmatpush.bf16.msra.mxu0 %v7201
  %10810 = vmatpush.bf16.msra.mxu0 %v7193
  %10811 = vmatpush.bf16.msra.mxu0 %v7185
  %10812 = vmatpush.bf16.msra.mxu0 %v7177
  %10813 = vmatpush.bf16.msra.mxu0 %v7169
  %10814 = vmatmul.bf16.gmra.mxu0 %v1720
  %v10815 = vpop.f32.mrf.mxu0
  %v10816 = vadd.f32 %v10802, %v10815
  %v10817 = vpop.f32.mrf.mxu0
  %v10818 = vadd.f32 %v10804, %v10817
  %10819 = vdwg.mxu0
  %10820 = vmatpush.bf16.msra.mxu0 %v7289
  %10821 = vmatpush.bf16.msra.mxu0 %v7281
  %10822 = vmatpush.bf16.msra.mxu0 %v7273
  %10823 = vmatpush.bf16.msra.mxu0 %v7265
  %10824 = vmatpush.bf16.msra.mxu0 %v7257
  %10825 = vmatpush.bf16.msra.mxu0 %v7249
  %10826 = vmatpush.bf16.msra.mxu0 %v7241
  %10827 = vmatpush.bf16.msra.mxu0 %v7233
  %10828 = vmatmul.bf16.gmra.mxu0 %v1721
  %v10829 = vpop.f32.mrf.mxu0
  %v10830 = vadd.f32 %v10816, %v10829
  %v10831 = vpop.f32.mrf.mxu0
  %v10832 = vadd.f32 %v10818, %v10831
  %10833 = vdwg.mxu0
  %10834 = vmatpush.bf16.msra.mxu0 %v7353
  %10835 = vmatpush.bf16.msra.mxu0 %v7345
  %10836 = vmatpush.bf16.msra.mxu0 %v7337
  %10837 = vmatpush.bf16.msra.mxu0 %v7329
  %10838 = vmatpush.bf16.msra.mxu0 %v7321
  %10839 = vmatpush.bf16.msra.mxu0 %v7313
  %10840 = vmatpush.bf16.msra.mxu0 %v7305
  %10841 = vmatpush.bf16.msra.mxu0 %v7297
  %10842 = vmatmul.bf16.gmra.mxu0 %v1722
  %v10843 = vpop.f32.mrf.mxu0
  %v10844 = vadd.f32 %v10830, %v10843
  %v10845 = vpop.f32.mrf.mxu0
  %v10846 = vadd.f32 %v10832, %v10845
  %10847 = vdwg.mxu0
  %10848 = vmatpush.bf16.msra.mxu0 %v7417
  %10849 = vmatpush.bf16.msra.mxu0 %v7409
  %10850 = vmatpush.bf16.msra.mxu0 %v7401
  %10851 = vmatpush.bf16.msra.mxu0 %v7393
  %10852 = vmatpush.bf16.msra.mxu0 %v7385
  %10853 = vmatpush.bf16.msra.mxu0 %v7377
  %10854 = vmatpush.bf16.msra.mxu0 %v7369
  %10855 = vmatpush.bf16.msra.mxu0 %v7361
  %10856 = vmatmul.bf16.gmra.mxu0 %v1723
  %v10857 = vpop.f32.mrf.mxu0
  %v10858 = vadd.f32 %v10844, %v10857
  %v10859 = vpop.f32.mrf.mxu0
  %v10860 = vadd.f32 %v10846, %v10859
  %10861 = vdwg.mxu0
  %10862 = vmatpush.bf16.msra.mxu0 %v7481
  %10863 = vmatpush.bf16.msra.mxu0 %v7473
  %10864 = vmatpush.bf16.msra.mxu0 %v7465
  %10865 = vmatpush.bf16.msra.mxu0 %v7457
  %10866 = vmatpush.bf16.msra.mxu0 %v7449
  %10867 = vmatpush.bf16.msra.mxu0 %v7441
  %10868 = vmatpush.bf16.msra.mxu0 %v7433
  %10869 = vmatpush.bf16.msra.mxu0 %v7425
  %10870 = vmatmul.bf16.gmra.mxu0 %v1724
  %v10871 = vpop.f32.mrf.mxu0
  %v10872 = vadd.f32 %v10858, %v10871
  %v10873 = vpop.f32.mrf.mxu0
  %v10874 = vadd.f32 %v10860, %v10873
  %10875 = vdwg.mxu0
  %10876 = vmatpush.bf16.msra.mxu0 %v7545
  %10877 = vmatpush.bf16.msra.mxu0 %v7537
  %10878 = vmatpush.bf16.msra.mxu0 %v7529
  %10879 = vmatpush.bf16.msra.mxu0 %v7521
  %10880 = vmatpush.bf16.msra.mxu0 %v7513
  %10881 = vmatpush.bf16.msra.mxu0 %v7505
  %10882 = vmatpush.bf16.msra.mxu0 %v7497
  %10883 = vmatpush.bf16.msra.mxu0 %v7489
  %10884 = vmatmul.bf16.gmra.mxu0 %v1725
  %v10885 = vpop.f32.mrf.mxu0
  %v10886 = vadd.f32 %v10872, %v10885
  %v10887 = vpop.f32.mrf.mxu0
  %v10888 = vadd.f32 %v10874, %v10887
  %10889 = vdwg.mxu0
  %10890 = vmatpush.bf16.msra.mxu0 %v7609
  %10891 = vmatpush.bf16.msra.mxu0 %v7601
  %10892 = vmatpush.bf16.msra.mxu0 %v7593
  %10893 = vmatpush.bf16.msra.mxu0 %v7585
  %10894 = vmatpush.bf16.msra.mxu0 %v7577
  %10895 = vmatpush.bf16.msra.mxu0 %v7569
  %10896 = vmatpush.bf16.msra.mxu0 %v7561
  %10897 = vmatpush.bf16.msra.mxu0 %v7553
  %10898 = vmatmul.bf16.gmra.mxu0 %v1726
  %v10899 = vpop.f32.mrf.mxu0
  %v10900 = vadd.f32 %v10886, %v10899
  %v10901 = vpop.f32.mrf.mxu0
  %v10902 = vadd.f32 %v10888, %v10901
  %10903 = vdwg.mxu0
  %10904 = vmatpush.bf16.msra.mxu0 %v7673
  %10905 = vmatpush.bf16.msra.mxu0 %v7665
  %10906 = vmatpush.bf16.msra.mxu0 %v7657
  %10907 = vmatpush.bf16.msra.mxu0 %v7649
  %10908 = vmatpush.bf16.msra.mxu0 %v7641
  %10909 = vmatpush.bf16.msra.mxu0 %v7633
  %10910 = vmatpush.bf16.msra.mxu0 %v7625
  %10911 = vmatpush.bf16.msra.mxu0 %v7617
  %10912 = vmatmul.bf16.gmra.mxu0 %v1727
  %v10913 = vpop.f32.mrf.mxu0
  %v10914 = vadd.f32 %v10900, %v10913
  %v10915 = vpop.f32.mrf.mxu0
  %v10916 = vadd.f32 %v10902, %v10915
  %10917 = vdwg.mxu0
  %10918 = vmatpush.bf16.msra.mxu0 %v7737
  %10919 = vmatpush.bf16.msra.mxu0 %v7729
  %10920 = vmatpush.bf16.msra.mxu0 %v7721
  %10921 = vmatpush.bf16.msra.mxu0 %v7713
  %10922 = vmatpush.bf16.msra.mxu0 %v7705
  %10923 = vmatpush.bf16.msra.mxu0 %v7697
  %10924 = vmatpush.bf16.msra.mxu0 %v7689
  %10925 = vmatpush.bf16.msra.mxu0 %v7681
  %10926 = vmatmul.bf16.gmra.mxu0 %v1728
  %v10927 = vpop.f32.mrf.mxu0
  %v10928 = vadd.f32 %v10914, %v10927
  %v10929 = vpop.f32.mrf.mxu0
  %v10930 = vadd.f32 %v10916, %v10929
  %10931 = vdwg.mxu0
  %10932 = vmatpush.bf16.msra.mxu0 %v7801
  %10933 = vmatpush.bf16.msra.mxu0 %v7793
  %10934 = vmatpush.bf16.msra.mxu0 %v7785
  %10935 = vmatpush.bf16.msra.mxu0 %v7777
  %10936 = vmatpush.bf16.msra.mxu0 %v7769
  %10937 = vmatpush.bf16.msra.mxu0 %v7761
  %10938 = vmatpush.bf16.msra.mxu0 %v7753
  %10939 = vmatpush.bf16.msra.mxu0 %v7745
  %10940 = vmatmul.bf16.gmra.mxu0 %v1729
  %v10941 = vpop.f32.mrf.mxu0
  %v10942 = vadd.f32 %v10928, %v10941
  %v10943 = vpop.f32.mrf.mxu0
  %v10944 = vadd.f32 %v10930, %v10943
  %10945 = vdwg.mxu0
  %10946 = vmatpush.bf16.msra.mxu0 %v7865
  %10947 = vmatpush.bf16.msra.mxu0 %v7857
  %10948 = vmatpush.bf16.msra.mxu0 %v7849
  %10949 = vmatpush.bf16.msra.mxu0 %v7841
  %10950 = vmatpush.bf16.msra.mxu0 %v7833
  %10951 = vmatpush.bf16.msra.mxu0 %v7825
  %10952 = vmatpush.bf16.msra.mxu0 %v7817
  %10953 = vmatpush.bf16.msra.mxu0 %v7809
  %10954 = vmatmul.bf16.gmra.mxu0 %v1730
  %v10955 = vpop.f32.mrf.mxu0
  %v10956 = vadd.f32 %v10942, %v10955
  %v10957 = vpop.f32.mrf.mxu0
  %v10958 = vadd.f32 %v10944, %v10957
  %10959 = vdwg.mxu0
  %10960 = vmatpush.bf16.msra.mxu0 %v7929
  %10961 = vmatpush.bf16.msra.mxu0 %v7921
  %10962 = vmatpush.bf16.msra.mxu0 %v7913
  %10963 = vmatpush.bf16.msra.mxu0 %v7905
  %10964 = vmatpush.bf16.msra.mxu0 %v7897
  %10965 = vmatpush.bf16.msra.mxu0 %v7889
  %10966 = vmatpush.bf16.msra.mxu0 %v7881
  %10967 = vmatpush.bf16.msra.mxu0 %v7873
  %10968 = vmatmul.bf16.gmra.mxu0 %v1731
  %v10969 = vpop.f32.mrf.mxu0
  %v10970 = vadd.f32 %v10956, %v10969
  %v10971 = vpop.f32.mrf.mxu0
  %v10972 = vadd.f32 %v10958, %v10971
  %10973 = vdwg.mxu0
  %10974 = vmatpush.bf16.msra.mxu0 %v7993
  %10975 = vmatpush.bf16.msra.mxu0 %v7985
  %10976 = vmatpush.bf16.msra.mxu0 %v7977
  %10977 = vmatpush.bf16.msra.mxu0 %v7969
  %10978 = vmatpush.bf16.msra.mxu0 %v7961
  %10979 = vmatpush.bf16.msra.mxu0 %v7953
  %10980 = vmatpush.bf16.msra.mxu0 %v7945
  %10981 = vmatpush.bf16.msra.mxu0 %v7937
  %10982 = vmatmul.bf16.gmra.mxu0 %v1732
  %v10983 = vpop.f32.mrf.mxu0
  %v10984 = vadd.f32 %v10970, %v10983
  %v10985 = vpop.f32.mrf.mxu0
  %v10986 = vadd.f32 %v10972, %v10985
  %10987 = vdwg.mxu0
  %10988 = vmatpush.bf16.msra.mxu0 0
  %10989 = vmatpush.bf16.msra.mxu0 0
  %10990 = vmatpush.bf16.msra.mxu0 0
  %10991 = vmatpush.bf16.msra.mxu0 0
  %10992 = vmatpush.bf16.msra.mxu0 %v8025
  %10993 = vmatpush.bf16.msra.mxu0 %v8017
  %10994 = vmatpush.bf16.msra.mxu0 %v8009
  %10995 = vmatpush.bf16.msra.mxu0 %v8001
  %10996 = vmatmul.bf16.gmra.mxu0 %v9600
  %v10997 = vpop.f32.mrf.mxu0
  %v10998 = vadd.f32 %v10984, %v10997
  %v10999 = vpop.f32.mrf.mxu0
  %v11000 = vadd.f32 %v10986, %v10999
  %11001 = vdwg.mxu0
  %11002 = vmatpush.bf16.msra.mxu0 %v6522
  %11003 = vmatpush.bf16.msra.mxu0 %v6514
  %11004 = vmatpush.bf16.msra.mxu0 %v6506
  %11005 = vmatpush.bf16.msra.mxu0 %v6498
  %11006 = vmatpush.bf16.msra.mxu0 %v6490
  %11007 = vmatpush.bf16.msra.mxu0 %v6482
  %11008 = vmatpush.bf16.msra.mxu0 %v6474
  %11009 = vmatpush.bf16.msra.mxu0 %v6466
  %11010 = vmatmul.bf16.gmra.mxu0 %v1709
  %v11011 = vpop.f32.mrf.mxu0
  %v11012 = vadd.f32 %v1621, %v11011
  %v11013 = vpop.f32.mrf.mxu0
  %v11014 = vadd.f32 %v1621, %v11013
  %11015 = vdwg.mxu0
  %11016 = vmatpush.bf16.msra.mxu0 %v6586
  %11017 = vmatpush.bf16.msra.mxu0 %v6578
  %11018 = vmatpush.bf16.msra.mxu0 %v6570
  %11019 = vmatpush.bf16.msra.mxu0 %v6562
  %11020 = vmatpush.bf16.msra.mxu0 %v6554
  %11021 = vmatpush.bf16.msra.mxu0 %v6546
  %11022 = vmatpush.bf16.msra.mxu0 %v6538
  %11023 = vmatpush.bf16.msra.mxu0 %v6530
  %11024 = vmatmul.bf16.gmra.mxu0 %v1710
  %v11025 = vpop.f32.mrf.mxu0
  %v11026 = vadd.f32 %v11012, %v11025
  %v11027 = vpop.f32.mrf.mxu0
  %v11028 = vadd.f32 %v11014, %v11027
  %11029 = vdwg.mxu0
  %11030 = vmatpush.bf16.msra.mxu0 %v6650
  %11031 = vmatpush.bf16.msra.mxu0 %v6642
  %11032 = vmatpush.bf16.msra.mxu0 %v6634
  %11033 = vmatpush.bf16.msra.mxu0 %v6626
  %11034 = vmatpush.bf16.msra.mxu0 %v6618
  %11035 = vmatpush.bf16.msra.mxu0 %v6610
  %11036 = vmatpush.bf16.msra.mxu0 %v6602
  %11037 = vmatpush.bf16.msra.mxu0 %v6594
  %11038 = vmatmul.bf16.gmra.mxu0 %v1711
  %v11039 = vpop.f32.mrf.mxu0
  %v11040 = vadd.f32 %v11026, %v11039
  %v11041 = vpop.f32.mrf.mxu0
  %v11042 = vadd.f32 %v11028, %v11041
  %11043 = vdwg.mxu0
  %11044 = vmatpush.bf16.msra.mxu0 %v6714
  %11045 = vmatpush.bf16.msra.mxu0 %v6706
  %11046 = vmatpush.bf16.msra.mxu0 %v6698
  %11047 = vmatpush.bf16.msra.mxu0 %v6690
  %11048 = vmatpush.bf16.msra.mxu0 %v6682
  %11049 = vmatpush.bf16.msra.mxu0 %v6674
  %11050 = vmatpush.bf16.msra.mxu0 %v6666
  %11051 = vmatpush.bf16.msra.mxu0 %v6658
  %11052 = vmatmul.bf16.gmra.mxu0 %v1712
  %v11053 = vpop.f32.mrf.mxu0
  %v11054 = vadd.f32 %v11040, %v11053
  %v11055 = vpop.f32.mrf.mxu0
  %v11056 = vadd.f32 %v11042, %v11055
  %11057 = vdwg.mxu0
  %11058 = vmatpush.bf16.msra.mxu0 %v6778
  %11059 = vmatpush.bf16.msra.mxu0 %v6770
  %11060 = vmatpush.bf16.msra.mxu0 %v6762
  %11061 = vmatpush.bf16.msra.mxu0 %v6754
  %11062 = vmatpush.bf16.msra.mxu0 %v6746
  %11063 = vmatpush.bf16.msra.mxu0 %v6738
  %11064 = vmatpush.bf16.msra.mxu0 %v6730
  %11065 = vmatpush.bf16.msra.mxu0 %v6722
  %11066 = vmatmul.bf16.gmra.mxu0 %v1713
  %v11067 = vpop.f32.mrf.mxu0
  %v11068 = vadd.f32 %v11054, %v11067
  %v11069 = vpop.f32.mrf.mxu0
  %v11070 = vadd.f32 %v11056, %v11069
  %11071 = vdwg.mxu0
  %11072 = vmatpush.bf16.msra.mxu0 %v6842
  %11073 = vmatpush.bf16.msra.mxu0 %v6834
  %11074 = vmatpush.bf16.msra.mxu0 %v6826
  %11075 = vmatpush.bf16.msra.mxu0 %v6818
  %11076 = vmatpush.bf16.msra.mxu0 %v6810
  %11077 = vmatpush.bf16.msra.mxu0 %v6802
  %11078 = vmatpush.bf16.msra.mxu0 %v6794
  %11079 = vmatpush.bf16.msra.mxu0 %v6786
  %11080 = vmatmul.bf16.gmra.mxu0 %v1714
  %v11081 = vpop.f32.mrf.mxu0
  %v11082 = vadd.f32 %v11068, %v11081
  %v11083 = vpop.f32.mrf.mxu0
  %v11084 = vadd.f32 %v11070, %v11083
  %11085 = vdwg.mxu0
  %11086 = vmatpush.bf16.msra.mxu0 %v6906
  %11087 = vmatpush.bf16.msra.mxu0 %v6898
  %11088 = vmatpush.bf16.msra.mxu0 %v6890
  %11089 = vmatpush.bf16.msra.mxu0 %v6882
  %11090 = vmatpush.bf16.msra.mxu0 %v6874
  %11091 = vmatpush.bf16.msra.mxu0 %v6866
  %11092 = vmatpush.bf16.msra.mxu0 %v6858
  %11093 = vmatpush.bf16.msra.mxu0 %v6850
  %11094 = vmatmul.bf16.gmra.mxu0 %v1715
  %v11095 = vpop.f32.mrf.mxu0
  %v11096 = vadd.f32 %v11082, %v11095
  %v11097 = vpop.f32.mrf.mxu0
  %v11098 = vadd.f32 %v11084, %v11097
  %11099 = vdwg.mxu0
  %11100 = vmatpush.bf16.msra.mxu0 %v6970
  %11101 = vmatpush.bf16.msra.mxu0 %v6962
  %11102 = vmatpush.bf16.msra.mxu0 %v6954
  %11103 = vmatpush.bf16.msra.mxu0 %v6946
  %11104 = vmatpush.bf16.msra.mxu0 %v6938
  %11105 = vmatpush.bf16.msra.mxu0 %v6930
  %11106 = vmatpush.bf16.msra.mxu0 %v6922
  %11107 = vmatpush.bf16.msra.mxu0 %v6914
  %11108 = vmatmul.bf16.gmra.mxu0 %v1716
  %v11109 = vpop.f32.mrf.mxu0
  %v11110 = vadd.f32 %v11096, %v11109
  %v11111 = vpop.f32.mrf.mxu0
  %v11112 = vadd.f32 %v11098, %v11111
  %11113 = vdwg.mxu0
  %11114 = vmatpush.bf16.msra.mxu0 %v7034
  %11115 = vmatpush.bf16.msra.mxu0 %v7026
  %11116 = vmatpush.bf16.msra.mxu0 %v7018
  %11117 = vmatpush.bf16.msra.mxu0 %v7010
  %11118 = vmatpush.bf16.msra.mxu0 %v7002
  %11119 = vmatpush.bf16.msra.mxu0 %v6994
  %11120 = vmatpush.bf16.msra.mxu0 %v6986
  %11121 = vmatpush.bf16.msra.mxu0 %v6978
  %11122 = vmatmul.bf16.gmra.mxu0 %v1717
  %v11123 = vpop.f32.mrf.mxu0
  %v11124 = vadd.f32 %v11110, %v11123
  %v11125 = vpop.f32.mrf.mxu0
  %v11126 = vadd.f32 %v11112, %v11125
  %11127 = vdwg.mxu0
  %11128 = vmatpush.bf16.msra.mxu0 %v7098
  %11129 = vmatpush.bf16.msra.mxu0 %v7090
  %11130 = vmatpush.bf16.msra.mxu0 %v7082
  %11131 = vmatpush.bf16.msra.mxu0 %v7074
  %11132 = vmatpush.bf16.msra.mxu0 %v7066
  %11133 = vmatpush.bf16.msra.mxu0 %v7058
  %11134 = vmatpush.bf16.msra.mxu0 %v7050
  %11135 = vmatpush.bf16.msra.mxu0 %v7042
  %11136 = vmatmul.bf16.gmra.mxu0 %v1718
  %v11137 = vpop.f32.mrf.mxu0
  %v11138 = vadd.f32 %v11124, %v11137
  %v11139 = vpop.f32.mrf.mxu0
  %v11140 = vadd.f32 %v11126, %v11139
  %11141 = vdwg.mxu0
  %11142 = vmatpush.bf16.msra.mxu0 %v7162
  %11143 = vmatpush.bf16.msra.mxu0 %v7154
  %11144 = vmatpush.bf16.msra.mxu0 %v7146
  %11145 = vmatpush.bf16.msra.mxu0 %v7138
  %11146 = vmatpush.bf16.msra.mxu0 %v7130
  %11147 = vmatpush.bf16.msra.mxu0 %v7122
  %11148 = vmatpush.bf16.msra.mxu0 %v7114
  %11149 = vmatpush.bf16.msra.mxu0 %v7106
  %11150 = vmatmul.bf16.gmra.mxu0 %v1719
  %v11151 = vpop.f32.mrf.mxu0
  %v11152 = vadd.f32 %v11138, %v11151
  %v11153 = vpop.f32.mrf.mxu0
  %v11154 = vadd.f32 %v11140, %v11153
  %11155 = vdwg.mxu0
  %11156 = vmatpush.bf16.msra.mxu0 %v7226
  %11157 = vmatpush.bf16.msra.mxu0 %v7218
  %11158 = vmatpush.bf16.msra.mxu0 %v7210
  %11159 = vmatpush.bf16.msra.mxu0 %v7202
  %11160 = vmatpush.bf16.msra.mxu0 %v7194
  %11161 = vmatpush.bf16.msra.mxu0 %v7186
  %11162 = vmatpush.bf16.msra.mxu0 %v7178
  %11163 = vmatpush.bf16.msra.mxu0 %v7170
  %11164 = vmatmul.bf16.gmra.mxu0 %v1720
  %v11165 = vpop.f32.mrf.mxu0
  %v11166 = vadd.f32 %v11152, %v11165
  %v11167 = vpop.f32.mrf.mxu0
  %v11168 = vadd.f32 %v11154, %v11167
  %11169 = vdwg.mxu0
  %11170 = vmatpush.bf16.msra.mxu0 %v7290
  %11171 = vmatpush.bf16.msra.mxu0 %v7282
  %11172 = vmatpush.bf16.msra.mxu0 %v7274
  %11173 = vmatpush.bf16.msra.mxu0 %v7266
  %11174 = vmatpush.bf16.msra.mxu0 %v7258
  %11175 = vmatpush.bf16.msra.mxu0 %v7250
  %11176 = vmatpush.bf16.msra.mxu0 %v7242
  %11177 = vmatpush.bf16.msra.mxu0 %v7234
  %11178 = vmatmul.bf16.gmra.mxu0 %v1721
  %v11179 = vpop.f32.mrf.mxu0
  %v11180 = vadd.f32 %v11166, %v11179
  %v11181 = vpop.f32.mrf.mxu0
  %v11182 = vadd.f32 %v11168, %v11181
  %11183 = vdwg.mxu0
  %11184 = vmatpush.bf16.msra.mxu0 %v7354
  %11185 = vmatpush.bf16.msra.mxu0 %v7346
  %11186 = vmatpush.bf16.msra.mxu0 %v7338
  %11187 = vmatpush.bf16.msra.mxu0 %v7330
  %11188 = vmatpush.bf16.msra.mxu0 %v7322
  %11189 = vmatpush.bf16.msra.mxu0 %v7314
  %11190 = vmatpush.bf16.msra.mxu0 %v7306
  %11191 = vmatpush.bf16.msra.mxu0 %v7298
  %11192 = vmatmul.bf16.gmra.mxu0 %v1722
  %v11193 = vpop.f32.mrf.mxu0
  %v11194 = vadd.f32 %v11180, %v11193
  %v11195 = vpop.f32.mrf.mxu0
  %v11196 = vadd.f32 %v11182, %v11195
  %11197 = vdwg.mxu0
  %11198 = vmatpush.bf16.msra.mxu0 %v7418
  %11199 = vmatpush.bf16.msra.mxu0 %v7410
  %11200 = vmatpush.bf16.msra.mxu0 %v7402
  %11201 = vmatpush.bf16.msra.mxu0 %v7394
  %11202 = vmatpush.bf16.msra.mxu0 %v7386
  %11203 = vmatpush.bf16.msra.mxu0 %v7378
  %11204 = vmatpush.bf16.msra.mxu0 %v7370
  %11205 = vmatpush.bf16.msra.mxu0 %v7362
  %11206 = vmatmul.bf16.gmra.mxu0 %v1723
  %v11207 = vpop.f32.mrf.mxu0
  %v11208 = vadd.f32 %v11194, %v11207
  %v11209 = vpop.f32.mrf.mxu0
  %v11210 = vadd.f32 %v11196, %v11209
  %11211 = vdwg.mxu0
  %11212 = vmatpush.bf16.msra.mxu0 %v7482
  %11213 = vmatpush.bf16.msra.mxu0 %v7474
  %11214 = vmatpush.bf16.msra.mxu0 %v7466
  %11215 = vmatpush.bf16.msra.mxu0 %v7458
  %11216 = vmatpush.bf16.msra.mxu0 %v7450
  %11217 = vmatpush.bf16.msra.mxu0 %v7442
  %11218 = vmatpush.bf16.msra.mxu0 %v7434
  %11219 = vmatpush.bf16.msra.mxu0 %v7426
  %11220 = vmatmul.bf16.gmra.mxu0 %v1724
  %v11221 = vpop.f32.mrf.mxu0
  %v11222 = vadd.f32 %v11208, %v11221
  %v11223 = vpop.f32.mrf.mxu0
  %v11224 = vadd.f32 %v11210, %v11223
  %11225 = vdwg.mxu0
  %11226 = vmatpush.bf16.msra.mxu0 %v7546
  %11227 = vmatpush.bf16.msra.mxu0 %v7538
  %11228 = vmatpush.bf16.msra.mxu0 %v7530
  %11229 = vmatpush.bf16.msra.mxu0 %v7522
  %11230 = vmatpush.bf16.msra.mxu0 %v7514
  %11231 = vmatpush.bf16.msra.mxu0 %v7506
  %11232 = vmatpush.bf16.msra.mxu0 %v7498
  %11233 = vmatpush.bf16.msra.mxu0 %v7490
  %11234 = vmatmul.bf16.gmra.mxu0 %v1725
  %v11235 = vpop.f32.mrf.mxu0
  %v11236 = vadd.f32 %v11222, %v11235
  %v11237 = vpop.f32.mrf.mxu0
  %v11238 = vadd.f32 %v11224, %v11237
  %11239 = vdwg.mxu0
  %11240 = vmatpush.bf16.msra.mxu0 %v7610
  %11241 = vmatpush.bf16.msra.mxu0 %v7602
  %11242 = vmatpush.bf16.msra.mxu0 %v7594
  %11243 = vmatpush.bf16.msra.mxu0 %v7586
  %11244 = vmatpush.bf16.msra.mxu0 %v7578
  %11245 = vmatpush.bf16.msra.mxu0 %v7570
  %11246 = vmatpush.bf16.msra.mxu0 %v7562
  %11247 = vmatpush.bf16.msra.mxu0 %v7554
  %11248 = vmatmul.bf16.gmra.mxu0 %v1726
  %v11249 = vpop.f32.mrf.mxu0
  %v11250 = vadd.f32 %v11236, %v11249
  %v11251 = vpop.f32.mrf.mxu0
  %v11252 = vadd.f32 %v11238, %v11251
  %11253 = vdwg.mxu0
  %11254 = vmatpush.bf16.msra.mxu0 %v7674
  %11255 = vmatpush.bf16.msra.mxu0 %v7666
  %11256 = vmatpush.bf16.msra.mxu0 %v7658
  %11257 = vmatpush.bf16.msra.mxu0 %v7650
  %11258 = vmatpush.bf16.msra.mxu0 %v7642
  %11259 = vmatpush.bf16.msra.mxu0 %v7634
  %11260 = vmatpush.bf16.msra.mxu0 %v7626
  %11261 = vmatpush.bf16.msra.mxu0 %v7618
  %11262 = vmatmul.bf16.gmra.mxu0 %v1727
  %v11263 = vpop.f32.mrf.mxu0
  %v11264 = vadd.f32 %v11250, %v11263
  %v11265 = vpop.f32.mrf.mxu0
  %v11266 = vadd.f32 %v11252, %v11265
  %11267 = vdwg.mxu0
  %11268 = vmatpush.bf16.msra.mxu0 %v7738
  %11269 = vmatpush.bf16.msra.mxu0 %v7730
  %11270 = vmatpush.bf16.msra.mxu0 %v7722
  %11271 = vmatpush.bf16.msra.mxu0 %v7714
  %11272 = vmatpush.bf16.msra.mxu0 %v7706
  %11273 = vmatpush.bf16.msra.mxu0 %v7698
  %11274 = vmatpush.bf16.msra.mxu0 %v7690
  %11275 = vmatpush.bf16.msra.mxu0 %v7682
  %11276 = vmatmul.bf16.gmra.mxu0 %v1728
  %v11277 = vpop.f32.mrf.mxu0
  %v11278 = vadd.f32 %v11264, %v11277
  %v11279 = vpop.f32.mrf.mxu0
  %v11280 = vadd.f32 %v11266, %v11279
  %11281 = vdwg.mxu0
  %11282 = vmatpush.bf16.msra.mxu0 %v7802
  %11283 = vmatpush.bf16.msra.mxu0 %v7794
  %11284 = vmatpush.bf16.msra.mxu0 %v7786
  %11285 = vmatpush.bf16.msra.mxu0 %v7778
  %11286 = vmatpush.bf16.msra.mxu0 %v7770
  %11287 = vmatpush.bf16.msra.mxu0 %v7762
  %11288 = vmatpush.bf16.msra.mxu0 %v7754
  %11289 = vmatpush.bf16.msra.mxu0 %v7746
  %11290 = vmatmul.bf16.gmra.mxu0 %v1729
  %v11291 = vpop.f32.mrf.mxu0
  %v11292 = vadd.f32 %v11278, %v11291
  %v11293 = vpop.f32.mrf.mxu0
  %v11294 = vadd.f32 %v11280, %v11293
  %11295 = vdwg.mxu0
  %11296 = vmatpush.bf16.msra.mxu0 %v7866
  %11297 = vmatpush.bf16.msra.mxu0 %v7858
  %11298 = vmatpush.bf16.msra.mxu0 %v7850
  %11299 = vmatpush.bf16.msra.mxu0 %v7842
  %11300 = vmatpush.bf16.msra.mxu0 %v7834
  %11301 = vmatpush.bf16.msra.mxu0 %v7826
  %11302 = vmatpush.bf16.msra.mxu0 %v7818
  %11303 = vmatpush.bf16.msra.mxu0 %v7810
  %11304 = vmatmul.bf16.gmra.mxu0 %v1730
  %v11305 = vpop.f32.mrf.mxu0
  %v11306 = vadd.f32 %v11292, %v11305
  %v11307 = vpop.f32.mrf.mxu0
  %v11308 = vadd.f32 %v11294, %v11307
  %11309 = vdwg.mxu0
  %11310 = vmatpush.bf16.msra.mxu0 %v7930
  %11311 = vmatpush.bf16.msra.mxu0 %v7922
  %11312 = vmatpush.bf16.msra.mxu0 %v7914
  %11313 = vmatpush.bf16.msra.mxu0 %v7906
  %11314 = vmatpush.bf16.msra.mxu0 %v7898
  %11315 = vmatpush.bf16.msra.mxu0 %v7890
  %11316 = vmatpush.bf16.msra.mxu0 %v7882
  %11317 = vmatpush.bf16.msra.mxu0 %v7874
  %11318 = vmatmul.bf16.gmra.mxu0 %v1731
  %v11319 = vpop.f32.mrf.mxu0
  %v11320 = vadd.f32 %v11306, %v11319
  %v11321 = vpop.f32.mrf.mxu0
  %v11322 = vadd.f32 %v11308, %v11321
  %11323 = vdwg.mxu0
  %11324 = vmatpush.bf16.msra.mxu0 %v7994
  %11325 = vmatpush.bf16.msra.mxu0 %v7986
  %11326 = vmatpush.bf16.msra.mxu0 %v7978
  %11327 = vmatpush.bf16.msra.mxu0 %v7970
  %11328 = vmatpush.bf16.msra.mxu0 %v7962
  %11329 = vmatpush.bf16.msra.mxu0 %v7954
  %11330 = vmatpush.bf16.msra.mxu0 %v7946
  %11331 = vmatpush.bf16.msra.mxu0 %v7938
  %11332 = vmatmul.bf16.gmra.mxu0 %v1732
  %v11333 = vpop.f32.mrf.mxu0
  %v11334 = vadd.f32 %v11320, %v11333
  %v11335 = vpop.f32.mrf.mxu0
  %v11336 = vadd.f32 %v11322, %v11335
  %11337 = vdwg.mxu0
  %11338 = vmatpush.bf16.msra.mxu0 0
  %11339 = vmatpush.bf16.msra.mxu0 0
  %11340 = vmatpush.bf16.msra.mxu0 0
  %11341 = vmatpush.bf16.msra.mxu0 0
  %11342 = vmatpush.bf16.msra.mxu0 %v8026
  %11343 = vmatpush.bf16.msra.mxu0 %v8018
  %11344 = vmatpush.bf16.msra.mxu0 %v8010
  %11345 = vmatpush.bf16.msra.mxu0 %v8002
  %11346 = vmatmul.bf16.gmra.mxu0 %v9600
  %v11347 = vpop.f32.mrf.mxu0
  %v11348 = vadd.f32 %v11334, %v11347
  %v11349 = vpop.f32.mrf.mxu0
  %v11350 = vadd.f32 %v11336, %v11349
  %11351 = vdwg.mxu0
  %11352 = vmatpush.bf16.msra.mxu0 %v6523
  %11353 = vmatpush.bf16.msra.mxu0 %v6515
  %11354 = vmatpush.bf16.msra.mxu0 %v6507
  %11355 = vmatpush.bf16.msra.mxu0 %v6499
  %11356 = vmatpush.bf16.msra.mxu0 %v6491
  %11357 = vmatpush.bf16.msra.mxu0 %v6483
  %11358 = vmatpush.bf16.msra.mxu0 %v6475
  %11359 = vmatpush.bf16.msra.mxu0 %v6467
  %11360 = vmatmul.bf16.gmra.mxu0 %v1709
  %v11361 = vpop.f32.mrf.mxu0
  %v11362 = vadd.f32 %v1622, %v11361
  %v11363 = vpop.f32.mrf.mxu0
  %v11364 = vadd.f32 %v1622, %v11363
  %11365 = vdwg.mxu0
  %11366 = vmatpush.bf16.msra.mxu0 %v6587
  %11367 = vmatpush.bf16.msra.mxu0 %v6579
  %11368 = vmatpush.bf16.msra.mxu0 %v6571
  %11369 = vmatpush.bf16.msra.mxu0 %v6563
  %11370 = vmatpush.bf16.msra.mxu0 %v6555
  %11371 = vmatpush.bf16.msra.mxu0 %v6547
  %11372 = vmatpush.bf16.msra.mxu0 %v6539
  %11373 = vmatpush.bf16.msra.mxu0 %v6531
  %11374 = vmatmul.bf16.gmra.mxu0 %v1710
  %v11375 = vpop.f32.mrf.mxu0
  %v11376 = vadd.f32 %v11362, %v11375
  %v11377 = vpop.f32.mrf.mxu0
  %v11378 = vadd.f32 %v11364, %v11377
  %11379 = vdwg.mxu0
  %11380 = vmatpush.bf16.msra.mxu0 %v6651
  %11381 = vmatpush.bf16.msra.mxu0 %v6643
  %11382 = vmatpush.bf16.msra.mxu0 %v6635
  %11383 = vmatpush.bf16.msra.mxu0 %v6627
  %11384 = vmatpush.bf16.msra.mxu0 %v6619
  %11385 = vmatpush.bf16.msra.mxu0 %v6611
  %11386 = vmatpush.bf16.msra.mxu0 %v6603
  %11387 = vmatpush.bf16.msra.mxu0 %v6595
  %11388 = vmatmul.bf16.gmra.mxu0 %v1711
  %v11389 = vpop.f32.mrf.mxu0
  %v11390 = vadd.f32 %v11376, %v11389
  %v11391 = vpop.f32.mrf.mxu0
  %v11392 = vadd.f32 %v11378, %v11391
  %11393 = vdwg.mxu0
  %11394 = vmatpush.bf16.msra.mxu0 %v6715
  %11395 = vmatpush.bf16.msra.mxu0 %v6707
  %11396 = vmatpush.bf16.msra.mxu0 %v6699
  %11397 = vmatpush.bf16.msra.mxu0 %v6691
  %11398 = vmatpush.bf16.msra.mxu0 %v6683
  %11399 = vmatpush.bf16.msra.mxu0 %v6675
  %11400 = vmatpush.bf16.msra.mxu0 %v6667
  %11401 = vmatpush.bf16.msra.mxu0 %v6659
  %11402 = vmatmul.bf16.gmra.mxu0 %v1712
  %v11403 = vpop.f32.mrf.mxu0
  %v11404 = vadd.f32 %v11390, %v11403
  %v11405 = vpop.f32.mrf.mxu0
  %v11406 = vadd.f32 %v11392, %v11405
  %11407 = vdwg.mxu0
  %11408 = vmatpush.bf16.msra.mxu0 %v6779
  %11409 = vmatpush.bf16.msra.mxu0 %v6771
  %11410 = vmatpush.bf16.msra.mxu0 %v6763
  %11411 = vmatpush.bf16.msra.mxu0 %v6755
  %11412 = vmatpush.bf16.msra.mxu0 %v6747
  %11413 = vmatpush.bf16.msra.mxu0 %v6739
  %11414 = vmatpush.bf16.msra.mxu0 %v6731
  %11415 = vmatpush.bf16.msra.mxu0 %v6723
  %11416 = vmatmul.bf16.gmra.mxu0 %v1713
  %v11417 = vpop.f32.mrf.mxu0
  %v11418 = vadd.f32 %v11404, %v11417
  %v11419 = vpop.f32.mrf.mxu0
  %v11420 = vadd.f32 %v11406, %v11419
  %11421 = vdwg.mxu0
  %11422 = vmatpush.bf16.msra.mxu0 %v6843
  %11423 = vmatpush.bf16.msra.mxu0 %v6835
  %11424 = vmatpush.bf16.msra.mxu0 %v6827
  %11425 = vmatpush.bf16.msra.mxu0 %v6819
  %11426 = vmatpush.bf16.msra.mxu0 %v6811
  %11427 = vmatpush.bf16.msra.mxu0 %v6803
  %11428 = vmatpush.bf16.msra.mxu0 %v6795
  %11429 = vmatpush.bf16.msra.mxu0 %v6787
  %11430 = vmatmul.bf16.gmra.mxu0 %v1714
  %v11431 = vpop.f32.mrf.mxu0
  %v11432 = vadd.f32 %v11418, %v11431
  %v11433 = vpop.f32.mrf.mxu0
  %v11434 = vadd.f32 %v11420, %v11433
  %11435 = vdwg.mxu0
  %11436 = vmatpush.bf16.msra.mxu0 %v6907
  %11437 = vmatpush.bf16.msra.mxu0 %v6899
  %11438 = vmatpush.bf16.msra.mxu0 %v6891
  %11439 = vmatpush.bf16.msra.mxu0 %v6883
  %11440 = vmatpush.bf16.msra.mxu0 %v6875
  %11441 = vmatpush.bf16.msra.mxu0 %v6867
  %11442 = vmatpush.bf16.msra.mxu0 %v6859
  %11443 = vmatpush.bf16.msra.mxu0 %v6851
  %11444 = vmatmul.bf16.gmra.mxu0 %v1715
  %v11445 = vpop.f32.mrf.mxu0
  %v11446 = vadd.f32 %v11432, %v11445
  %v11447 = vpop.f32.mrf.mxu0
  %v11448 = vadd.f32 %v11434, %v11447
  %11449 = vdwg.mxu0
  %11450 = vmatpush.bf16.msra.mxu0 %v6971
  %11451 = vmatpush.bf16.msra.mxu0 %v6963
  %11452 = vmatpush.bf16.msra.mxu0 %v6955
  %11453 = vmatpush.bf16.msra.mxu0 %v6947
  %11454 = vmatpush.bf16.msra.mxu0 %v6939
  %11455 = vmatpush.bf16.msra.mxu0 %v6931
  %11456 = vmatpush.bf16.msra.mxu0 %v6923
  %11457 = vmatpush.bf16.msra.mxu0 %v6915
  %11458 = vmatmul.bf16.gmra.mxu0 %v1716
  %v11459 = vpop.f32.mrf.mxu0
  %v11460 = vadd.f32 %v11446, %v11459
  %v11461 = vpop.f32.mrf.mxu0
  %v11462 = vadd.f32 %v11448, %v11461
  %11463 = vdwg.mxu0
  %11464 = vmatpush.bf16.msra.mxu0 %v7035
  %11465 = vmatpush.bf16.msra.mxu0 %v7027
  %11466 = vmatpush.bf16.msra.mxu0 %v7019
  %11467 = vmatpush.bf16.msra.mxu0 %v7011
  %11468 = vmatpush.bf16.msra.mxu0 %v7003
  %11469 = vmatpush.bf16.msra.mxu0 %v6995
  %11470 = vmatpush.bf16.msra.mxu0 %v6987
  %11471 = vmatpush.bf16.msra.mxu0 %v6979
  %11472 = vmatmul.bf16.gmra.mxu0 %v1717
  %v11473 = vpop.f32.mrf.mxu0
  %v11474 = vadd.f32 %v11460, %v11473
  %v11475 = vpop.f32.mrf.mxu0
  %v11476 = vadd.f32 %v11462, %v11475
  %11477 = vdwg.mxu0
  %11478 = vmatpush.bf16.msra.mxu0 %v7099
  %11479 = vmatpush.bf16.msra.mxu0 %v7091
  %11480 = vmatpush.bf16.msra.mxu0 %v7083
  %11481 = vmatpush.bf16.msra.mxu0 %v7075
  %11482 = vmatpush.bf16.msra.mxu0 %v7067
  %11483 = vmatpush.bf16.msra.mxu0 %v7059
  %11484 = vmatpush.bf16.msra.mxu0 %v7051
  %11485 = vmatpush.bf16.msra.mxu0 %v7043
  %11486 = vmatmul.bf16.gmra.mxu0 %v1718
  %v11487 = vpop.f32.mrf.mxu0
  %v11488 = vadd.f32 %v11474, %v11487
  %v11489 = vpop.f32.mrf.mxu0
  %v11490 = vadd.f32 %v11476, %v11489
  %11491 = vdwg.mxu0
  %11492 = vmatpush.bf16.msra.mxu0 %v7163
  %11493 = vmatpush.bf16.msra.mxu0 %v7155
  %11494 = vmatpush.bf16.msra.mxu0 %v7147
  %11495 = vmatpush.bf16.msra.mxu0 %v7139
  %11496 = vmatpush.bf16.msra.mxu0 %v7131
  %11497 = vmatpush.bf16.msra.mxu0 %v7123
  %11498 = vmatpush.bf16.msra.mxu0 %v7115
  %11499 = vmatpush.bf16.msra.mxu0 %v7107
  %11500 = vmatmul.bf16.gmra.mxu0 %v1719
  %v11501 = vpop.f32.mrf.mxu0
  %v11502 = vadd.f32 %v11488, %v11501
  %v11503 = vpop.f32.mrf.mxu0
  %v11504 = vadd.f32 %v11490, %v11503
  %11505 = vdwg.mxu0
  %11506 = vmatpush.bf16.msra.mxu0 %v7227
  %11507 = vmatpush.bf16.msra.mxu0 %v7219
  %11508 = vmatpush.bf16.msra.mxu0 %v7211
  %11509 = vmatpush.bf16.msra.mxu0 %v7203
  %11510 = vmatpush.bf16.msra.mxu0 %v7195
  %11511 = vmatpush.bf16.msra.mxu0 %v7187
  %11512 = vmatpush.bf16.msra.mxu0 %v7179
  %11513 = vmatpush.bf16.msra.mxu0 %v7171
  %11514 = vmatmul.bf16.gmra.mxu0 %v1720
  %v11515 = vpop.f32.mrf.mxu0
  %v11516 = vadd.f32 %v11502, %v11515
  %v11517 = vpop.f32.mrf.mxu0
  %v11518 = vadd.f32 %v11504, %v11517
  %11519 = vdwg.mxu0
  %11520 = vmatpush.bf16.msra.mxu0 %v7291
  %11521 = vmatpush.bf16.msra.mxu0 %v7283
  %11522 = vmatpush.bf16.msra.mxu0 %v7275
  %11523 = vmatpush.bf16.msra.mxu0 %v7267
  %11524 = vmatpush.bf16.msra.mxu0 %v7259
  %11525 = vmatpush.bf16.msra.mxu0 %v7251
  %11526 = vmatpush.bf16.msra.mxu0 %v7243
  %11527 = vmatpush.bf16.msra.mxu0 %v7235
  %11528 = vmatmul.bf16.gmra.mxu0 %v1721
  %v11529 = vpop.f32.mrf.mxu0
  %v11530 = vadd.f32 %v11516, %v11529
  %v11531 = vpop.f32.mrf.mxu0
  %v11532 = vadd.f32 %v11518, %v11531
  %11533 = vdwg.mxu0
  %11534 = vmatpush.bf16.msra.mxu0 %v7355
  %11535 = vmatpush.bf16.msra.mxu0 %v7347
  %11536 = vmatpush.bf16.msra.mxu0 %v7339
  %11537 = vmatpush.bf16.msra.mxu0 %v7331
  %11538 = vmatpush.bf16.msra.mxu0 %v7323
  %11539 = vmatpush.bf16.msra.mxu0 %v7315
  %11540 = vmatpush.bf16.msra.mxu0 %v7307
  %11541 = vmatpush.bf16.msra.mxu0 %v7299
  %11542 = vmatmul.bf16.gmra.mxu0 %v1722
  %v11543 = vpop.f32.mrf.mxu0
  %v11544 = vadd.f32 %v11530, %v11543
  %v11545 = vpop.f32.mrf.mxu0
  %v11546 = vadd.f32 %v11532, %v11545
  %11547 = vdwg.mxu0
  %11548 = vmatpush.bf16.msra.mxu0 %v7419
  %11549 = vmatpush.bf16.msra.mxu0 %v7411
  %11550 = vmatpush.bf16.msra.mxu0 %v7403
  %11551 = vmatpush.bf16.msra.mxu0 %v7395
  %11552 = vmatpush.bf16.msra.mxu0 %v7387
  %11553 = vmatpush.bf16.msra.mxu0 %v7379
  %11554 = vmatpush.bf16.msra.mxu0 %v7371
  %11555 = vmatpush.bf16.msra.mxu0 %v7363
  %11556 = vmatmul.bf16.gmra.mxu0 %v1723
  %v11557 = vpop.f32.mrf.mxu0
  %v11558 = vadd.f32 %v11544, %v11557
  %v11559 = vpop.f32.mrf.mxu0
  %v11560 = vadd.f32 %v11546, %v11559
  %11561 = vdwg.mxu0
  %11562 = vmatpush.bf16.msra.mxu0 %v7483
  %11563 = vmatpush.bf16.msra.mxu0 %v7475
  %11564 = vmatpush.bf16.msra.mxu0 %v7467
  %11565 = vmatpush.bf16.msra.mxu0 %v7459
  %11566 = vmatpush.bf16.msra.mxu0 %v7451
  %11567 = vmatpush.bf16.msra.mxu0 %v7443
  %11568 = vmatpush.bf16.msra.mxu0 %v7435
  %11569 = vmatpush.bf16.msra.mxu0 %v7427
  %11570 = vmatmul.bf16.gmra.mxu0 %v1724
  %v11571 = vpop.f32.mrf.mxu0
  %v11572 = vadd.f32 %v11558, %v11571
  %v11573 = vpop.f32.mrf.mxu0
  %v11574 = vadd.f32 %v11560, %v11573
  %11575 = vdwg.mxu0
  %11576 = vmatpush.bf16.msra.mxu0 %v7547
  %11577 = vmatpush.bf16.msra.mxu0 %v7539
  %11578 = vmatpush.bf16.msra.mxu0 %v7531
  %11579 = vmatpush.bf16.msra.mxu0 %v7523
  %11580 = vmatpush.bf16.msra.mxu0 %v7515
  %11581 = vmatpush.bf16.msra.mxu0 %v7507
  %11582 = vmatpush.bf16.msra.mxu0 %v7499
  %11583 = vmatpush.bf16.msra.mxu0 %v7491
  %11584 = vmatmul.bf16.gmra.mxu0 %v1725
  %v11585 = vpop.f32.mrf.mxu0
  %v11586 = vadd.f32 %v11572, %v11585
  %v11587 = vpop.f32.mrf.mxu0
  %v11588 = vadd.f32 %v11574, %v11587
  %11589 = vdwg.mxu0
  %11590 = vmatpush.bf16.msra.mxu0 %v7611
  %11591 = vmatpush.bf16.msra.mxu0 %v7603
  %11592 = vmatpush.bf16.msra.mxu0 %v7595
  %11593 = vmatpush.bf16.msra.mxu0 %v7587
  %11594 = vmatpush.bf16.msra.mxu0 %v7579
  %11595 = vmatpush.bf16.msra.mxu0 %v7571
  %11596 = vmatpush.bf16.msra.mxu0 %v7563
  %11597 = vmatpush.bf16.msra.mxu0 %v7555
  %11598 = vmatmul.bf16.gmra.mxu0 %v1726
  %v11599 = vpop.f32.mrf.mxu0
  %v11600 = vadd.f32 %v11586, %v11599
  %v11601 = vpop.f32.mrf.mxu0
  %v11602 = vadd.f32 %v11588, %v11601
  %11603 = vdwg.mxu0
  %11604 = vmatpush.bf16.msra.mxu0 %v7675
  %11605 = vmatpush.bf16.msra.mxu0 %v7667
  %11606 = vmatpush.bf16.msra.mxu0 %v7659
  %11607 = vmatpush.bf16.msra.mxu0 %v7651
  %11608 = vmatpush.bf16.msra.mxu0 %v7643
  %11609 = vmatpush.bf16.msra.mxu0 %v7635
  %11610 = vmatpush.bf16.msra.mxu0 %v7627
  %11611 = vmatpush.bf16.msra.mxu0 %v7619
  %11612 = vmatmul.bf16.gmra.mxu0 %v1727
  %v11613 = vpop.f32.mrf.mxu0
  %v11614 = vadd.f32 %v11600, %v11613
  %v11615 = vpop.f32.mrf.mxu0
  %v11616 = vadd.f32 %v11602, %v11615
  %11617 = vdwg.mxu0
  %11618 = vmatpush.bf16.msra.mxu0 %v7739
  %11619 = vmatpush.bf16.msra.mxu0 %v7731
  %11620 = vmatpush.bf16.msra.mxu0 %v7723
  %11621 = vmatpush.bf16.msra.mxu0 %v7715
  %11622 = vmatpush.bf16.msra.mxu0 %v7707
  %11623 = vmatpush.bf16.msra.mxu0 %v7699
  %11624 = vmatpush.bf16.msra.mxu0 %v7691
  %11625 = vmatpush.bf16.msra.mxu0 %v7683
  %11626 = vmatmul.bf16.gmra.mxu0 %v1728
  %v11627 = vpop.f32.mrf.mxu0
  %v11628 = vadd.f32 %v11614, %v11627
  %v11629 = vpop.f32.mrf.mxu0
  %v11630 = vadd.f32 %v11616, %v11629
  %11631 = vdwg.mxu0
  %11632 = vmatpush.bf16.msra.mxu0 %v7803
  %11633 = vmatpush.bf16.msra.mxu0 %v7795
  %11634 = vmatpush.bf16.msra.mxu0 %v7787
  %11635 = vmatpush.bf16.msra.mxu0 %v7779
  %11636 = vmatpush.bf16.msra.mxu0 %v7771
  %11637 = vmatpush.bf16.msra.mxu0 %v7763
  %11638 = vmatpush.bf16.msra.mxu0 %v7755
  %11639 = vmatpush.bf16.msra.mxu0 %v7747
  %11640 = vmatmul.bf16.gmra.mxu0 %v1729
  %v11641 = vpop.f32.mrf.mxu0
  %v11642 = vadd.f32 %v11628, %v11641
  %v11643 = vpop.f32.mrf.mxu0
  %v11644 = vadd.f32 %v11630, %v11643
  %11645 = vdwg.mxu0
  %11646 = vmatpush.bf16.msra.mxu0 %v7867
  %11647 = vmatpush.bf16.msra.mxu0 %v7859
  %11648 = vmatpush.bf16.msra.mxu0 %v7851
  %11649 = vmatpush.bf16.msra.mxu0 %v7843
  %11650 = vmatpush.bf16.msra.mxu0 %v7835
  %11651 = vmatpush.bf16.msra.mxu0 %v7827
  %11652 = vmatpush.bf16.msra.mxu0 %v7819
  %11653 = vmatpush.bf16.msra.mxu0 %v7811
  %11654 = vmatmul.bf16.gmra.mxu0 %v1730
  %v11655 = vpop.f32.mrf.mxu0
  %v11656 = vadd.f32 %v11642, %v11655
  %v11657 = vpop.f32.mrf.mxu0
  %v11658 = vadd.f32 %v11644, %v11657
  %11659 = vdwg.mxu0
  %11660 = vmatpush.bf16.msra.mxu0 %v7931
  %11661 = vmatpush.bf16.msra.mxu0 %v7923
  %11662 = vmatpush.bf16.msra.mxu0 %v7915
  %11663 = vmatpush.bf16.msra.mxu0 %v7907
  %11664 = vmatpush.bf16.msra.mxu0 %v7899
  %11665 = vmatpush.bf16.msra.mxu0 %v7891
  %11666 = vmatpush.bf16.msra.mxu0 %v7883
  %11667 = vmatpush.bf16.msra.mxu0 %v7875
  %11668 = vmatmul.bf16.gmra.mxu0 %v1731
  %v11669 = vpop.f32.mrf.mxu0
  %v11670 = vadd.f32 %v11656, %v11669
  %v11671 = vpop.f32.mrf.mxu0
  %v11672 = vadd.f32 %v11658, %v11671
  %11673 = vdwg.mxu0
  %11674 = vmatpush.bf16.msra.mxu0 %v7995
  %11675 = vmatpush.bf16.msra.mxu0 %v7987
  %11676 = vmatpush.bf16.msra.mxu0 %v7979
  %11677 = vmatpush.bf16.msra.mxu0 %v7971
  %11678 = vmatpush.bf16.msra.mxu0 %v7963
  %11679 = vmatpush.bf16.msra.mxu0 %v7955
  %11680 = vmatpush.bf16.msra.mxu0 %v7947
  %11681 = vmatpush.bf16.msra.mxu0 %v7939
  %11682 = vmatmul.bf16.gmra.mxu0 %v1732
  %v11683 = vpop.f32.mrf.mxu0
  %v11684 = vadd.f32 %v11670, %v11683
  %v11685 = vpop.f32.mrf.mxu0
  %v11686 = vadd.f32 %v11672, %v11685
  %11687 = vdwg.mxu0
  %11688 = vmatpush.bf16.msra.mxu0 0
  %11689 = vmatpush.bf16.msra.mxu0 0
  %11690 = vmatpush.bf16.msra.mxu0 0
  %11691 = vmatpush.bf16.msra.mxu0 0
  %11692 = vmatpush.bf16.msra.mxu0 %v8027
  %11693 = vmatpush.bf16.msra.mxu0 %v8019
  %11694 = vmatpush.bf16.msra.mxu0 %v8011
  %11695 = vmatpush.bf16.msra.mxu0 %v8003
  %11696 = vmatmul.bf16.gmra.mxu0 %v9600
  %v11697 = vpop.f32.mrf.mxu0
  %v11698 = vadd.f32 %v11684, %v11697
  %v11699 = vpop.f32.mrf.mxu0
  %v11700 = vadd.f32 %v11686, %v11699
  %11701 = vdwg.mxu0
  %11702 = vmatpush.bf16.msra.mxu0 %v6524
  %11703 = vmatpush.bf16.msra.mxu0 %v6516
  %11704 = vmatpush.bf16.msra.mxu0 %v6508
  %11705 = vmatpush.bf16.msra.mxu0 %v6500
  %11706 = vmatpush.bf16.msra.mxu0 %v6492
  %11707 = vmatpush.bf16.msra.mxu0 %v6484
  %11708 = vmatpush.bf16.msra.mxu0 %v6476
  %11709 = vmatpush.bf16.msra.mxu0 %v6468
  %11710 = vmatmul.bf16.gmra.mxu0 %v1709
  %v11711 = vpop.f32.mrf.mxu0
  %v11712 = vadd.f32 %v1623, %v11711
  %v11713 = vpop.f32.mrf.mxu0
  %v11714 = vadd.f32 %v1623, %v11713
  %11715 = vdwg.mxu0
  %11716 = vmatpush.bf16.msra.mxu0 %v6588
  %11717 = vmatpush.bf16.msra.mxu0 %v6580
  %11718 = vmatpush.bf16.msra.mxu0 %v6572
  %11719 = vmatpush.bf16.msra.mxu0 %v6564
  %11720 = vmatpush.bf16.msra.mxu0 %v6556
  %11721 = vmatpush.bf16.msra.mxu0 %v6548
  %11722 = vmatpush.bf16.msra.mxu0 %v6540
  %11723 = vmatpush.bf16.msra.mxu0 %v6532
  %11724 = vmatmul.bf16.gmra.mxu0 %v1710
  %v11725 = vpop.f32.mrf.mxu0
  %v11726 = vadd.f32 %v11712, %v11725
  %v11727 = vpop.f32.mrf.mxu0
  %v11728 = vadd.f32 %v11714, %v11727
  %11729 = vdwg.mxu0
  %11730 = vmatpush.bf16.msra.mxu0 %v6652
  %11731 = vmatpush.bf16.msra.mxu0 %v6644
  %11732 = vmatpush.bf16.msra.mxu0 %v6636
  %11733 = vmatpush.bf16.msra.mxu0 %v6628
  %11734 = vmatpush.bf16.msra.mxu0 %v6620
  %11735 = vmatpush.bf16.msra.mxu0 %v6612
  %11736 = vmatpush.bf16.msra.mxu0 %v6604
  %11737 = vmatpush.bf16.msra.mxu0 %v6596
  %11738 = vmatmul.bf16.gmra.mxu0 %v1711
  %v11739 = vpop.f32.mrf.mxu0
  %v11740 = vadd.f32 %v11726, %v11739
  %v11741 = vpop.f32.mrf.mxu0
  %v11742 = vadd.f32 %v11728, %v11741
  %11743 = vdwg.mxu0
  %11744 = vmatpush.bf16.msra.mxu0 %v6716
  %11745 = vmatpush.bf16.msra.mxu0 %v6708
  %11746 = vmatpush.bf16.msra.mxu0 %v6700
  %11747 = vmatpush.bf16.msra.mxu0 %v6692
  %11748 = vmatpush.bf16.msra.mxu0 %v6684
  %11749 = vmatpush.bf16.msra.mxu0 %v6676
  %11750 = vmatpush.bf16.msra.mxu0 %v6668
  %11751 = vmatpush.bf16.msra.mxu0 %v6660
  %11752 = vmatmul.bf16.gmra.mxu0 %v1712
  %v11753 = vpop.f32.mrf.mxu0
  %v11754 = vadd.f32 %v11740, %v11753
  %v11755 = vpop.f32.mrf.mxu0
  %v11756 = vadd.f32 %v11742, %v11755
  %11757 = vdwg.mxu0
  %11758 = vmatpush.bf16.msra.mxu0 %v6780
  %11759 = vmatpush.bf16.msra.mxu0 %v6772
  %11760 = vmatpush.bf16.msra.mxu0 %v6764
  %11761 = vmatpush.bf16.msra.mxu0 %v6756
  %11762 = vmatpush.bf16.msra.mxu0 %v6748
  %11763 = vmatpush.bf16.msra.mxu0 %v6740
  %11764 = vmatpush.bf16.msra.mxu0 %v6732
  %11765 = vmatpush.bf16.msra.mxu0 %v6724
  %11766 = vmatmul.bf16.gmra.mxu0 %v1713
  %v11767 = vpop.f32.mrf.mxu0
  %v11768 = vadd.f32 %v11754, %v11767
  %v11769 = vpop.f32.mrf.mxu0
  %v11770 = vadd.f32 %v11756, %v11769
  %11771 = vdwg.mxu0
  %11772 = vmatpush.bf16.msra.mxu0 %v6844
  %11773 = vmatpush.bf16.msra.mxu0 %v6836
  %11774 = vmatpush.bf16.msra.mxu0 %v6828
  %11775 = vmatpush.bf16.msra.mxu0 %v6820
  %11776 = vmatpush.bf16.msra.mxu0 %v6812
  %11777 = vmatpush.bf16.msra.mxu0 %v6804
  %11778 = vmatpush.bf16.msra.mxu0 %v6796
  %11779 = vmatpush.bf16.msra.mxu0 %v6788
  %11780 = vmatmul.bf16.gmra.mxu0 %v1714
  %v11781 = vpop.f32.mrf.mxu0
  %v11782 = vadd.f32 %v11768, %v11781
  %v11783 = vpop.f32.mrf.mxu0
  %v11784 = vadd.f32 %v11770, %v11783
  %11785 = vdwg.mxu0
  %11786 = vmatpush.bf16.msra.mxu0 %v6908
  %11787 = vmatpush.bf16.msra.mxu0 %v6900
  %11788 = vmatpush.bf16.msra.mxu0 %v6892
  %11789 = vmatpush.bf16.msra.mxu0 %v6884
  %11790 = vmatpush.bf16.msra.mxu0 %v6876
  %11791 = vmatpush.bf16.msra.mxu0 %v6868
  %11792 = vmatpush.bf16.msra.mxu0 %v6860
  %11793 = vmatpush.bf16.msra.mxu0 %v6852
  %11794 = vmatmul.bf16.gmra.mxu0 %v1715
  %v11795 = vpop.f32.mrf.mxu0
  %v11796 = vadd.f32 %v11782, %v11795
  %v11797 = vpop.f32.mrf.mxu0
  %v11798 = vadd.f32 %v11784, %v11797
  %11799 = vdwg.mxu0
  %11800 = vmatpush.bf16.msra.mxu0 %v6972
  %11801 = vmatpush.bf16.msra.mxu0 %v6964
  %11802 = vmatpush.bf16.msra.mxu0 %v6956
  %11803 = vmatpush.bf16.msra.mxu0 %v6948
  %11804 = vmatpush.bf16.msra.mxu0 %v6940
  %11805 = vmatpush.bf16.msra.mxu0 %v6932
  %11806 = vmatpush.bf16.msra.mxu0 %v6924
  %11807 = vmatpush.bf16.msra.mxu0 %v6916
  %11808 = vmatmul.bf16.gmra.mxu0 %v1716
  %v11809 = vpop.f32.mrf.mxu0
  %v11810 = vadd.f32 %v11796, %v11809
  %v11811 = vpop.f32.mrf.mxu0
  %v11812 = vadd.f32 %v11798, %v11811
  %11813 = vdwg.mxu0
  %11814 = vmatpush.bf16.msra.mxu0 %v7036
  %11815 = vmatpush.bf16.msra.mxu0 %v7028
  %11816 = vmatpush.bf16.msra.mxu0 %v7020
  %11817 = vmatpush.bf16.msra.mxu0 %v7012
  %11818 = vmatpush.bf16.msra.mxu0 %v7004
  %11819 = vmatpush.bf16.msra.mxu0 %v6996
  %11820 = vmatpush.bf16.msra.mxu0 %v6988
  %11821 = vmatpush.bf16.msra.mxu0 %v6980
  %11822 = vmatmul.bf16.gmra.mxu0 %v1717
  %v11823 = vpop.f32.mrf.mxu0
  %v11824 = vadd.f32 %v11810, %v11823
  %v11825 = vpop.f32.mrf.mxu0
  %v11826 = vadd.f32 %v11812, %v11825
  %11827 = vdwg.mxu0
  %11828 = vmatpush.bf16.msra.mxu0 %v7100
  %11829 = vmatpush.bf16.msra.mxu0 %v7092
  %11830 = vmatpush.bf16.msra.mxu0 %v7084
  %11831 = vmatpush.bf16.msra.mxu0 %v7076
  %11832 = vmatpush.bf16.msra.mxu0 %v7068
  %11833 = vmatpush.bf16.msra.mxu0 %v7060
  %11834 = vmatpush.bf16.msra.mxu0 %v7052
  %11835 = vmatpush.bf16.msra.mxu0 %v7044
  %11836 = vmatmul.bf16.gmra.mxu0 %v1718
  %v11837 = vpop.f32.mrf.mxu0
  %v11838 = vadd.f32 %v11824, %v11837
  %v11839 = vpop.f32.mrf.mxu0
  %v11840 = vadd.f32 %v11826, %v11839
  %11841 = vdwg.mxu0
  %11842 = vmatpush.bf16.msra.mxu0 %v7164
  %11843 = vmatpush.bf16.msra.mxu0 %v7156
  %11844 = vmatpush.bf16.msra.mxu0 %v7148
  %11845 = vmatpush.bf16.msra.mxu0 %v7140
  %11846 = vmatpush.bf16.msra.mxu0 %v7132
  %11847 = vmatpush.bf16.msra.mxu0 %v7124
  %11848 = vmatpush.bf16.msra.mxu0 %v7116
  %11849 = vmatpush.bf16.msra.mxu0 %v7108
  %11850 = vmatmul.bf16.gmra.mxu0 %v1719
  %v11851 = vpop.f32.mrf.mxu0
  %v11852 = vadd.f32 %v11838, %v11851
  %v11853 = vpop.f32.mrf.mxu0
  %v11854 = vadd.f32 %v11840, %v11853
  %11855 = vdwg.mxu0
  %11856 = vmatpush.bf16.msra.mxu0 %v7228
  %11857 = vmatpush.bf16.msra.mxu0 %v7220
  %11858 = vmatpush.bf16.msra.mxu0 %v7212
  %11859 = vmatpush.bf16.msra.mxu0 %v7204
  %11860 = vmatpush.bf16.msra.mxu0 %v7196
  %11861 = vmatpush.bf16.msra.mxu0 %v7188
  %11862 = vmatpush.bf16.msra.mxu0 %v7180
  %11863 = vmatpush.bf16.msra.mxu0 %v7172
  %11864 = vmatmul.bf16.gmra.mxu0 %v1720
  %v11865 = vpop.f32.mrf.mxu0
  %v11866 = vadd.f32 %v11852, %v11865
  %v11867 = vpop.f32.mrf.mxu0
  %v11868 = vadd.f32 %v11854, %v11867
  %11869 = vdwg.mxu0
  %11870 = vmatpush.bf16.msra.mxu0 %v7292
  %11871 = vmatpush.bf16.msra.mxu0 %v7284
  %11872 = vmatpush.bf16.msra.mxu0 %v7276
  %11873 = vmatpush.bf16.msra.mxu0 %v7268
  %11874 = vmatpush.bf16.msra.mxu0 %v7260
  %11875 = vmatpush.bf16.msra.mxu0 %v7252
  %11876 = vmatpush.bf16.msra.mxu0 %v7244
  %11877 = vmatpush.bf16.msra.mxu0 %v7236
  %11878 = vmatmul.bf16.gmra.mxu0 %v1721
  %v11879 = vpop.f32.mrf.mxu0
  %v11880 = vadd.f32 %v11866, %v11879
  %v11881 = vpop.f32.mrf.mxu0
  %v11882 = vadd.f32 %v11868, %v11881
  %11883 = vdwg.mxu0
  %11884 = vmatpush.bf16.msra.mxu0 %v7356
  %11885 = vmatpush.bf16.msra.mxu0 %v7348
  %11886 = vmatpush.bf16.msra.mxu0 %v7340
  %11887 = vmatpush.bf16.msra.mxu0 %v7332
  %11888 = vmatpush.bf16.msra.mxu0 %v7324
  %11889 = vmatpush.bf16.msra.mxu0 %v7316
  %11890 = vmatpush.bf16.msra.mxu0 %v7308
  %11891 = vmatpush.bf16.msra.mxu0 %v7300
  %11892 = vmatmul.bf16.gmra.mxu0 %v1722
  %v11893 = vpop.f32.mrf.mxu0
  %v11894 = vadd.f32 %v11880, %v11893
  %v11895 = vpop.f32.mrf.mxu0
  %v11896 = vadd.f32 %v11882, %v11895
  %11897 = vdwg.mxu0
  %11898 = vmatpush.bf16.msra.mxu0 %v7420
  %11899 = vmatpush.bf16.msra.mxu0 %v7412
  %11900 = vmatpush.bf16.msra.mxu0 %v7404
  %11901 = vmatpush.bf16.msra.mxu0 %v7396
  %11902 = vmatpush.bf16.msra.mxu0 %v7388
  %11903 = vmatpush.bf16.msra.mxu0 %v7380
  %11904 = vmatpush.bf16.msra.mxu0 %v7372
  %11905 = vmatpush.bf16.msra.mxu0 %v7364
  %11906 = vmatmul.bf16.gmra.mxu0 %v1723
  %v11907 = vpop.f32.mrf.mxu0
  %v11908 = vadd.f32 %v11894, %v11907
  %v11909 = vpop.f32.mrf.mxu0
  %v11910 = vadd.f32 %v11896, %v11909
  %11911 = vdwg.mxu0
  %11912 = vmatpush.bf16.msra.mxu0 %v7484
  %11913 = vmatpush.bf16.msra.mxu0 %v7476
  %11914 = vmatpush.bf16.msra.mxu0 %v7468
  %11915 = vmatpush.bf16.msra.mxu0 %v7460
  %11916 = vmatpush.bf16.msra.mxu0 %v7452
  %11917 = vmatpush.bf16.msra.mxu0 %v7444
  %11918 = vmatpush.bf16.msra.mxu0 %v7436
  %11919 = vmatpush.bf16.msra.mxu0 %v7428
  %11920 = vmatmul.bf16.gmra.mxu0 %v1724
  %v11921 = vpop.f32.mrf.mxu0
  %v11922 = vadd.f32 %v11908, %v11921
  %v11923 = vpop.f32.mrf.mxu0
  %v11924 = vadd.f32 %v11910, %v11923
  %11925 = vdwg.mxu0
  %11926 = vmatpush.bf16.msra.mxu0 %v7548
  %11927 = vmatpush.bf16.msra.mxu0 %v7540
  %11928 = vmatpush.bf16.msra.mxu0 %v7532
  %11929 = vmatpush.bf16.msra.mxu0 %v7524
  %11930 = vmatpush.bf16.msra.mxu0 %v7516
  %11931 = vmatpush.bf16.msra.mxu0 %v7508
  %11932 = vmatpush.bf16.msra.mxu0 %v7500
  %11933 = vmatpush.bf16.msra.mxu0 %v7492
  %11934 = vmatmul.bf16.gmra.mxu0 %v1725
  %v11935 = vpop.f32.mrf.mxu0
  %v11936 = vadd.f32 %v11922, %v11935
  %v11937 = vpop.f32.mrf.mxu0
  %v11938 = vadd.f32 %v11924, %v11937
  %11939 = vdwg.mxu0
  %11940 = vmatpush.bf16.msra.mxu0 %v7612
  %11941 = vmatpush.bf16.msra.mxu0 %v7604
  %11942 = vmatpush.bf16.msra.mxu0 %v7596
  %11943 = vmatpush.bf16.msra.mxu0 %v7588
  %11944 = vmatpush.bf16.msra.mxu0 %v7580
  %11945 = vmatpush.bf16.msra.mxu0 %v7572
  %11946 = vmatpush.bf16.msra.mxu0 %v7564
  %11947 = vmatpush.bf16.msra.mxu0 %v7556
  %11948 = vmatmul.bf16.gmra.mxu0 %v1726
  %v11949 = vpop.f32.mrf.mxu0
  %v11950 = vadd.f32 %v11936, %v11949
  %v11951 = vpop.f32.mrf.mxu0
  %v11952 = vadd.f32 %v11938, %v11951
  %11953 = vdwg.mxu0
  %11954 = vmatpush.bf16.msra.mxu0 %v7676
  %11955 = vmatpush.bf16.msra.mxu0 %v7668
  %11956 = vmatpush.bf16.msra.mxu0 %v7660
  %11957 = vmatpush.bf16.msra.mxu0 %v7652
  %11958 = vmatpush.bf16.msra.mxu0 %v7644
  %11959 = vmatpush.bf16.msra.mxu0 %v7636
  %11960 = vmatpush.bf16.msra.mxu0 %v7628
  %11961 = vmatpush.bf16.msra.mxu0 %v7620
  %11962 = vmatmul.bf16.gmra.mxu0 %v1727
  %v11963 = vpop.f32.mrf.mxu0
  %v11964 = vadd.f32 %v11950, %v11963
  %v11965 = vpop.f32.mrf.mxu0
  %v11966 = vadd.f32 %v11952, %v11965
  %11967 = vdwg.mxu0
  %11968 = vmatpush.bf16.msra.mxu0 %v7740
  %11969 = vmatpush.bf16.msra.mxu0 %v7732
  %11970 = vmatpush.bf16.msra.mxu0 %v7724
  %11971 = vmatpush.bf16.msra.mxu0 %v7716
  %11972 = vmatpush.bf16.msra.mxu0 %v7708
  %11973 = vmatpush.bf16.msra.mxu0 %v7700
  %11974 = vmatpush.bf16.msra.mxu0 %v7692
  %11975 = vmatpush.bf16.msra.mxu0 %v7684
  %11976 = vmatmul.bf16.gmra.mxu0 %v1728
  %v11977 = vpop.f32.mrf.mxu0
  %v11978 = vadd.f32 %v11964, %v11977
  %v11979 = vpop.f32.mrf.mxu0
  %v11980 = vadd.f32 %v11966, %v11979
  %11981 = vdwg.mxu0
  %11982 = vmatpush.bf16.msra.mxu0 %v7804
  %11983 = vmatpush.bf16.msra.mxu0 %v7796
  %11984 = vmatpush.bf16.msra.mxu0 %v7788
  %11985 = vmatpush.bf16.msra.mxu0 %v7780
  %11986 = vmatpush.bf16.msra.mxu0 %v7772
  %11987 = vmatpush.bf16.msra.mxu0 %v7764
  %11988 = vmatpush.bf16.msra.mxu0 %v7756
  %11989 = vmatpush.bf16.msra.mxu0 %v7748
  %11990 = vmatmul.bf16.gmra.mxu0 %v1729
  %v11991 = vpop.f32.mrf.mxu0
  %v11992 = vadd.f32 %v11978, %v11991
  %v11993 = vpop.f32.mrf.mxu0
  %v11994 = vadd.f32 %v11980, %v11993
  %11995 = vdwg.mxu0
  %11996 = vmatpush.bf16.msra.mxu0 %v7868
  %11997 = vmatpush.bf16.msra.mxu0 %v7860
  %11998 = vmatpush.bf16.msra.mxu0 %v7852
  %11999 = vmatpush.bf16.msra.mxu0 %v7844
  %12000 = vmatpush.bf16.msra.mxu0 %v7836
  %12001 = vmatpush.bf16.msra.mxu0 %v7828
  %12002 = vmatpush.bf16.msra.mxu0 %v7820
  %12003 = vmatpush.bf16.msra.mxu0 %v7812
  %12004 = vmatmul.bf16.gmra.mxu0 %v1730
  %v12005 = vpop.f32.mrf.mxu0
  %v12006 = vadd.f32 %v11992, %v12005
  %v12007 = vpop.f32.mrf.mxu0
  %v12008 = vadd.f32 %v11994, %v12007
  %12009 = vdwg.mxu0
  %12010 = vmatpush.bf16.msra.mxu0 %v7932
  %12011 = vmatpush.bf16.msra.mxu0 %v7924
  %12012 = vmatpush.bf16.msra.mxu0 %v7916
  %12013 = vmatpush.bf16.msra.mxu0 %v7908
  %12014 = vmatpush.bf16.msra.mxu0 %v7900
  %12015 = vmatpush.bf16.msra.mxu0 %v7892
  %12016 = vmatpush.bf16.msra.mxu0 %v7884
  %12017 = vmatpush.bf16.msra.mxu0 %v7876
  %12018 = vmatmul.bf16.gmra.mxu0 %v1731
  %v12019 = vpop.f32.mrf.mxu0
  %v12020 = vadd.f32 %v12006, %v12019
  %v12021 = vpop.f32.mrf.mxu0
  %v12022 = vadd.f32 %v12008, %v12021
  %12023 = vdwg.mxu0
  %12024 = vmatpush.bf16.msra.mxu0 %v7996
  %12025 = vmatpush.bf16.msra.mxu0 %v7988
  %12026 = vmatpush.bf16.msra.mxu0 %v7980
  %12027 = vmatpush.bf16.msra.mxu0 %v7972
  %12028 = vmatpush.bf16.msra.mxu0 %v7964
  %12029 = vmatpush.bf16.msra.mxu0 %v7956
  %12030 = vmatpush.bf16.msra.mxu0 %v7948
  %12031 = vmatpush.bf16.msra.mxu0 %v7940
  %12032 = vmatmul.bf16.gmra.mxu0 %v1732
  %v12033 = vpop.f32.mrf.mxu0
  %v12034 = vadd.f32 %v12020, %v12033
  %v12035 = vpop.f32.mrf.mxu0
  %v12036 = vadd.f32 %v12022, %v12035
  %12037 = vdwg.mxu0
  %12038 = vmatpush.bf16.msra.mxu0 0
  %12039 = vmatpush.bf16.msra.mxu0 0
  %12040 = vmatpush.bf16.msra.mxu0 0
  %12041 = vmatpush.bf16.msra.mxu0 0
  %12042 = vmatpush.bf16.msra.mxu0 %v8028
  %12043 = vmatpush.bf16.msra.mxu0 %v8020
  %12044 = vmatpush.bf16.msra.mxu0 %v8012
  %12045 = vmatpush.bf16.msra.mxu0 %v8004
  %12046 = vmatmul.bf16.gmra.mxu0 %v9600
  %v12047 = vpop.f32.mrf.mxu0
  %v12048 = vadd.f32 %v12034, %v12047
  %v12049 = vpop.f32.mrf.mxu0
  %v12050 = vadd.f32 %v12036, %v12049
  %12051 = vdwg.mxu0
  %12052 = vmatpush.bf16.msra.mxu0 %v6525
  %12053 = vmatpush.bf16.msra.mxu0 %v6517
  %12054 = vmatpush.bf16.msra.mxu0 %v6509
  %12055 = vmatpush.bf16.msra.mxu0 %v6501
  %12056 = vmatpush.bf16.msra.mxu0 %v6493
  %12057 = vmatpush.bf16.msra.mxu0 %v6485
  %12058 = vmatpush.bf16.msra.mxu0 %v6477
  %12059 = vmatpush.bf16.msra.mxu0 %v6469
  %12060 = vmatmul.bf16.gmra.mxu0 %v1709
  %v12061 = vpop.f32.mrf.mxu0
  %v12062 = vadd.f32 %v1624, %v12061
  %v12063 = vpop.f32.mrf.mxu0
  %v12064 = vadd.f32 %v1624, %v12063
  %12065 = vdwg.mxu0
  %12066 = vmatpush.bf16.msra.mxu0 %v6589
  %12067 = vmatpush.bf16.msra.mxu0 %v6581
  %12068 = vmatpush.bf16.msra.mxu0 %v6573
  %12069 = vmatpush.bf16.msra.mxu0 %v6565
  %12070 = vmatpush.bf16.msra.mxu0 %v6557
  %12071 = vmatpush.bf16.msra.mxu0 %v6549
  %12072 = vmatpush.bf16.msra.mxu0 %v6541
  %12073 = vmatpush.bf16.msra.mxu0 %v6533
  %12074 = vmatmul.bf16.gmra.mxu0 %v1710
  %v12075 = vpop.f32.mrf.mxu0
  %v12076 = vadd.f32 %v12062, %v12075
  %v12077 = vpop.f32.mrf.mxu0
  %v12078 = vadd.f32 %v12064, %v12077
  %12079 = vdwg.mxu0
  %12080 = vmatpush.bf16.msra.mxu0 %v6653
  %12081 = vmatpush.bf16.msra.mxu0 %v6645
  %12082 = vmatpush.bf16.msra.mxu0 %v6637
  %12083 = vmatpush.bf16.msra.mxu0 %v6629
  %12084 = vmatpush.bf16.msra.mxu0 %v6621
  %12085 = vmatpush.bf16.msra.mxu0 %v6613
  %12086 = vmatpush.bf16.msra.mxu0 %v6605
  %12087 = vmatpush.bf16.msra.mxu0 %v6597
  %12088 = vmatmul.bf16.gmra.mxu0 %v1711
  %v12089 = vpop.f32.mrf.mxu0
  %v12090 = vadd.f32 %v12076, %v12089
  %v12091 = vpop.f32.mrf.mxu0
  %v12092 = vadd.f32 %v12078, %v12091
  %12093 = vdwg.mxu0
  %12094 = vmatpush.bf16.msra.mxu0 %v6717
  %12095 = vmatpush.bf16.msra.mxu0 %v6709
  %12096 = vmatpush.bf16.msra.mxu0 %v6701
  %12097 = vmatpush.bf16.msra.mxu0 %v6693
  %12098 = vmatpush.bf16.msra.mxu0 %v6685
  %12099 = vmatpush.bf16.msra.mxu0 %v6677
  %12100 = vmatpush.bf16.msra.mxu0 %v6669
  %12101 = vmatpush.bf16.msra.mxu0 %v6661
  %12102 = vmatmul.bf16.gmra.mxu0 %v1712
  %v12103 = vpop.f32.mrf.mxu0
  %v12104 = vadd.f32 %v12090, %v12103
  %v12105 = vpop.f32.mrf.mxu0
  %v12106 = vadd.f32 %v12092, %v12105
  %12107 = vdwg.mxu0
  %12108 = vmatpush.bf16.msra.mxu0 %v6781
  %12109 = vmatpush.bf16.msra.mxu0 %v6773
  %12110 = vmatpush.bf16.msra.mxu0 %v6765
  %12111 = vmatpush.bf16.msra.mxu0 %v6757
  %12112 = vmatpush.bf16.msra.mxu0 %v6749
  %12113 = vmatpush.bf16.msra.mxu0 %v6741
  %12114 = vmatpush.bf16.msra.mxu0 %v6733
  %12115 = vmatpush.bf16.msra.mxu0 %v6725
  %12116 = vmatmul.bf16.gmra.mxu0 %v1713
  %v12117 = vpop.f32.mrf.mxu0
  %v12118 = vadd.f32 %v12104, %v12117
  %v12119 = vpop.f32.mrf.mxu0
  %v12120 = vadd.f32 %v12106, %v12119
  %12121 = vdwg.mxu0
  %12122 = vmatpush.bf16.msra.mxu0 %v6845
  %12123 = vmatpush.bf16.msra.mxu0 %v6837
  %12124 = vmatpush.bf16.msra.mxu0 %v6829
  %12125 = vmatpush.bf16.msra.mxu0 %v6821
  %12126 = vmatpush.bf16.msra.mxu0 %v6813
  %12127 = vmatpush.bf16.msra.mxu0 %v6805
  %12128 = vmatpush.bf16.msra.mxu0 %v6797
  %12129 = vmatpush.bf16.msra.mxu0 %v6789
  %12130 = vmatmul.bf16.gmra.mxu0 %v1714
  %v12131 = vpop.f32.mrf.mxu0
  %v12132 = vadd.f32 %v12118, %v12131
  %v12133 = vpop.f32.mrf.mxu0
  %v12134 = vadd.f32 %v12120, %v12133
  %12135 = vdwg.mxu0
  %12136 = vmatpush.bf16.msra.mxu0 %v6909
  %12137 = vmatpush.bf16.msra.mxu0 %v6901
  %12138 = vmatpush.bf16.msra.mxu0 %v6893
  %12139 = vmatpush.bf16.msra.mxu0 %v6885
  %12140 = vmatpush.bf16.msra.mxu0 %v6877
  %12141 = vmatpush.bf16.msra.mxu0 %v6869
  %12142 = vmatpush.bf16.msra.mxu0 %v6861
  %12143 = vmatpush.bf16.msra.mxu0 %v6853
  %12144 = vmatmul.bf16.gmra.mxu0 %v1715
  %v12145 = vpop.f32.mrf.mxu0
  %v12146 = vadd.f32 %v12132, %v12145
  %v12147 = vpop.f32.mrf.mxu0
  %v12148 = vadd.f32 %v12134, %v12147
  %12149 = vdwg.mxu0
  %12150 = vmatpush.bf16.msra.mxu0 %v6973
  %12151 = vmatpush.bf16.msra.mxu0 %v6965
  %12152 = vmatpush.bf16.msra.mxu0 %v6957
  %12153 = vmatpush.bf16.msra.mxu0 %v6949
  %12154 = vmatpush.bf16.msra.mxu0 %v6941
  %12155 = vmatpush.bf16.msra.mxu0 %v6933
  %12156 = vmatpush.bf16.msra.mxu0 %v6925
  %12157 = vmatpush.bf16.msra.mxu0 %v6917
  %12158 = vmatmul.bf16.gmra.mxu0 %v1716
  %v12159 = vpop.f32.mrf.mxu0
  %v12160 = vadd.f32 %v12146, %v12159
  %v12161 = vpop.f32.mrf.mxu0
  %v12162 = vadd.f32 %v12148, %v12161
  %12163 = vdwg.mxu0
  %12164 = vmatpush.bf16.msra.mxu0 %v7037
  %12165 = vmatpush.bf16.msra.mxu0 %v7029
  %12166 = vmatpush.bf16.msra.mxu0 %v7021
  %12167 = vmatpush.bf16.msra.mxu0 %v7013
  %12168 = vmatpush.bf16.msra.mxu0 %v7005
  %12169 = vmatpush.bf16.msra.mxu0 %v6997
  %12170 = vmatpush.bf16.msra.mxu0 %v6989
  %12171 = vmatpush.bf16.msra.mxu0 %v6981
  %12172 = vmatmul.bf16.gmra.mxu0 %v1717
  %v12173 = vpop.f32.mrf.mxu0
  %v12174 = vadd.f32 %v12160, %v12173
  %v12175 = vpop.f32.mrf.mxu0
  %v12176 = vadd.f32 %v12162, %v12175
  %12177 = vdwg.mxu0
  %12178 = vmatpush.bf16.msra.mxu0 %v7101
  %12179 = vmatpush.bf16.msra.mxu0 %v7093
  %12180 = vmatpush.bf16.msra.mxu0 %v7085
  %12181 = vmatpush.bf16.msra.mxu0 %v7077
  %12182 = vmatpush.bf16.msra.mxu0 %v7069
  %12183 = vmatpush.bf16.msra.mxu0 %v7061
  %12184 = vmatpush.bf16.msra.mxu0 %v7053
  %12185 = vmatpush.bf16.msra.mxu0 %v7045
  %12186 = vmatmul.bf16.gmra.mxu0 %v1718
  %v12187 = vpop.f32.mrf.mxu0
  %v12188 = vadd.f32 %v12174, %v12187
  %v12189 = vpop.f32.mrf.mxu0
  %v12190 = vadd.f32 %v12176, %v12189
  %12191 = vdwg.mxu0
  %12192 = vmatpush.bf16.msra.mxu0 %v7165
  %12193 = vmatpush.bf16.msra.mxu0 %v7157
  %12194 = vmatpush.bf16.msra.mxu0 %v7149
  %12195 = vmatpush.bf16.msra.mxu0 %v7141
  %12196 = vmatpush.bf16.msra.mxu0 %v7133
  %12197 = vmatpush.bf16.msra.mxu0 %v7125
  %12198 = vmatpush.bf16.msra.mxu0 %v7117
  %12199 = vmatpush.bf16.msra.mxu0 %v7109
  %12200 = vmatmul.bf16.gmra.mxu0 %v1719
  %v12201 = vpop.f32.mrf.mxu0
  %v12202 = vadd.f32 %v12188, %v12201
  %v12203 = vpop.f32.mrf.mxu0
  %v12204 = vadd.f32 %v12190, %v12203
  %12205 = vdwg.mxu0
  %12206 = vmatpush.bf16.msra.mxu0 %v7229
  %12207 = vmatpush.bf16.msra.mxu0 %v7221
  %12208 = vmatpush.bf16.msra.mxu0 %v7213
  %12209 = vmatpush.bf16.msra.mxu0 %v7205
  %12210 = vmatpush.bf16.msra.mxu0 %v7197
  %12211 = vmatpush.bf16.msra.mxu0 %v7189
  %12212 = vmatpush.bf16.msra.mxu0 %v7181
  %12213 = vmatpush.bf16.msra.mxu0 %v7173
  %12214 = vmatmul.bf16.gmra.mxu0 %v1720
  %v12215 = vpop.f32.mrf.mxu0
  %v12216 = vadd.f32 %v12202, %v12215
  %v12217 = vpop.f32.mrf.mxu0
  %v12218 = vadd.f32 %v12204, %v12217
  %12219 = vdwg.mxu0
  %12220 = vmatpush.bf16.msra.mxu0 %v7293
  %12221 = vmatpush.bf16.msra.mxu0 %v7285
  %12222 = vmatpush.bf16.msra.mxu0 %v7277
  %12223 = vmatpush.bf16.msra.mxu0 %v7269
  %12224 = vmatpush.bf16.msra.mxu0 %v7261
  %12225 = vmatpush.bf16.msra.mxu0 %v7253
  %12226 = vmatpush.bf16.msra.mxu0 %v7245
  %12227 = vmatpush.bf16.msra.mxu0 %v7237
  %12228 = vmatmul.bf16.gmra.mxu0 %v1721
  %v12229 = vpop.f32.mrf.mxu0
  %v12230 = vadd.f32 %v12216, %v12229
  %v12231 = vpop.f32.mrf.mxu0
  %v12232 = vadd.f32 %v12218, %v12231
  %12233 = vdwg.mxu0
  %12234 = vmatpush.bf16.msra.mxu0 %v7357
  %12235 = vmatpush.bf16.msra.mxu0 %v7349
  %12236 = vmatpush.bf16.msra.mxu0 %v7341
  %12237 = vmatpush.bf16.msra.mxu0 %v7333
  %12238 = vmatpush.bf16.msra.mxu0 %v7325
  %12239 = vmatpush.bf16.msra.mxu0 %v7317
  %12240 = vmatpush.bf16.msra.mxu0 %v7309
  %12241 = vmatpush.bf16.msra.mxu0 %v7301
  %12242 = vmatmul.bf16.gmra.mxu0 %v1722
  %v12243 = vpop.f32.mrf.mxu0
  %v12244 = vadd.f32 %v12230, %v12243
  %v12245 = vpop.f32.mrf.mxu0
  %v12246 = vadd.f32 %v12232, %v12245
  %12247 = vdwg.mxu0
  %12248 = vmatpush.bf16.msra.mxu0 %v7421
  %12249 = vmatpush.bf16.msra.mxu0 %v7413
  %12250 = vmatpush.bf16.msra.mxu0 %v7405
  %12251 = vmatpush.bf16.msra.mxu0 %v7397
  %12252 = vmatpush.bf16.msra.mxu0 %v7389
  %12253 = vmatpush.bf16.msra.mxu0 %v7381
  %12254 = vmatpush.bf16.msra.mxu0 %v7373
  %12255 = vmatpush.bf16.msra.mxu0 %v7365
  %12256 = vmatmul.bf16.gmra.mxu0 %v1723
  %v12257 = vpop.f32.mrf.mxu0
  %v12258 = vadd.f32 %v12244, %v12257
  %v12259 = vpop.f32.mrf.mxu0
  %v12260 = vadd.f32 %v12246, %v12259
  %12261 = vdwg.mxu0
  %12262 = vmatpush.bf16.msra.mxu0 %v7485
  %12263 = vmatpush.bf16.msra.mxu0 %v7477
  %12264 = vmatpush.bf16.msra.mxu0 %v7469
  %12265 = vmatpush.bf16.msra.mxu0 %v7461
  %12266 = vmatpush.bf16.msra.mxu0 %v7453
  %12267 = vmatpush.bf16.msra.mxu0 %v7445
  %12268 = vmatpush.bf16.msra.mxu0 %v7437
  %12269 = vmatpush.bf16.msra.mxu0 %v7429
  %12270 = vmatmul.bf16.gmra.mxu0 %v1724
  %v12271 = vpop.f32.mrf.mxu0
  %v12272 = vadd.f32 %v12258, %v12271
  %v12273 = vpop.f32.mrf.mxu0
  %v12274 = vadd.f32 %v12260, %v12273
  %12275 = vdwg.mxu0
  %12276 = vmatpush.bf16.msra.mxu0 %v7549
  %12277 = vmatpush.bf16.msra.mxu0 %v7541
  %12278 = vmatpush.bf16.msra.mxu0 %v7533
  %12279 = vmatpush.bf16.msra.mxu0 %v7525
  %12280 = vmatpush.bf16.msra.mxu0 %v7517
  %12281 = vmatpush.bf16.msra.mxu0 %v7509
  %12282 = vmatpush.bf16.msra.mxu0 %v7501
  %12283 = vmatpush.bf16.msra.mxu0 %v7493
  %12284 = vmatmul.bf16.gmra.mxu0 %v1725
  %v12285 = vpop.f32.mrf.mxu0
  %v12286 = vadd.f32 %v12272, %v12285
  %v12287 = vpop.f32.mrf.mxu0
  %v12288 = vadd.f32 %v12274, %v12287
  %12289 = vdwg.mxu0
  %12290 = vmatpush.bf16.msra.mxu0 %v7613
  %12291 = vmatpush.bf16.msra.mxu0 %v7605
  %12292 = vmatpush.bf16.msra.mxu0 %v7597
  %12293 = vmatpush.bf16.msra.mxu0 %v7589
  %12294 = vmatpush.bf16.msra.mxu0 %v7581
  %12295 = vmatpush.bf16.msra.mxu0 %v7573
  %12296 = vmatpush.bf16.msra.mxu0 %v7565
  %12297 = vmatpush.bf16.msra.mxu0 %v7557
  %12298 = vmatmul.bf16.gmra.mxu0 %v1726
  %v12299 = vpop.f32.mrf.mxu0
  %v12300 = vadd.f32 %v12286, %v12299
  %v12301 = vpop.f32.mrf.mxu0
  %v12302 = vadd.f32 %v12288, %v12301
  %12303 = vdwg.mxu0
  %12304 = vmatpush.bf16.msra.mxu0 %v7677
  %12305 = vmatpush.bf16.msra.mxu0 %v7669
  %12306 = vmatpush.bf16.msra.mxu0 %v7661
  %12307 = vmatpush.bf16.msra.mxu0 %v7653
  %12308 = vmatpush.bf16.msra.mxu0 %v7645
  %12309 = vmatpush.bf16.msra.mxu0 %v7637
  %12310 = vmatpush.bf16.msra.mxu0 %v7629
  %12311 = vmatpush.bf16.msra.mxu0 %v7621
  %12312 = vmatmul.bf16.gmra.mxu0 %v1727
  %v12313 = vpop.f32.mrf.mxu0
  %v12314 = vadd.f32 %v12300, %v12313
  %v12315 = vpop.f32.mrf.mxu0
  %v12316 = vadd.f32 %v12302, %v12315
  %12317 = vdwg.mxu0
  %12318 = vmatpush.bf16.msra.mxu0 %v7741
  %12319 = vmatpush.bf16.msra.mxu0 %v7733
  %12320 = vmatpush.bf16.msra.mxu0 %v7725
  %12321 = vmatpush.bf16.msra.mxu0 %v7717
  %12322 = vmatpush.bf16.msra.mxu0 %v7709
  %12323 = vmatpush.bf16.msra.mxu0 %v7701
  %12324 = vmatpush.bf16.msra.mxu0 %v7693
  %12325 = vmatpush.bf16.msra.mxu0 %v7685
  %12326 = vmatmul.bf16.gmra.mxu0 %v1728
  %v12327 = vpop.f32.mrf.mxu0
  %v12328 = vadd.f32 %v12314, %v12327
  %v12329 = vpop.f32.mrf.mxu0
  %v12330 = vadd.f32 %v12316, %v12329
  %12331 = vdwg.mxu0
  %12332 = vmatpush.bf16.msra.mxu0 %v7805
  %12333 = vmatpush.bf16.msra.mxu0 %v7797
  %12334 = vmatpush.bf16.msra.mxu0 %v7789
  %12335 = vmatpush.bf16.msra.mxu0 %v7781
  %12336 = vmatpush.bf16.msra.mxu0 %v7773
  %12337 = vmatpush.bf16.msra.mxu0 %v7765
  %12338 = vmatpush.bf16.msra.mxu0 %v7757
  %12339 = vmatpush.bf16.msra.mxu0 %v7749
  %12340 = vmatmul.bf16.gmra.mxu0 %v1729
  %v12341 = vpop.f32.mrf.mxu0
  %v12342 = vadd.f32 %v12328, %v12341
  %v12343 = vpop.f32.mrf.mxu0
  %v12344 = vadd.f32 %v12330, %v12343
  %12345 = vdwg.mxu0
  %12346 = vmatpush.bf16.msra.mxu0 %v7869
  %12347 = vmatpush.bf16.msra.mxu0 %v7861
  %12348 = vmatpush.bf16.msra.mxu0 %v7853
  %12349 = vmatpush.bf16.msra.mxu0 %v7845
  %12350 = vmatpush.bf16.msra.mxu0 %v7837
  %12351 = vmatpush.bf16.msra.mxu0 %v7829
  %12352 = vmatpush.bf16.msra.mxu0 %v7821
  %12353 = vmatpush.bf16.msra.mxu0 %v7813
  %12354 = vmatmul.bf16.gmra.mxu0 %v1730
  %v12355 = vpop.f32.mrf.mxu0
  %v12356 = vadd.f32 %v12342, %v12355
  %v12357 = vpop.f32.mrf.mxu0
  %v12358 = vadd.f32 %v12344, %v12357
  %12359 = vdwg.mxu0
  %12360 = vmatpush.bf16.msra.mxu0 %v7933
  %12361 = vmatpush.bf16.msra.mxu0 %v7925
  %12362 = vmatpush.bf16.msra.mxu0 %v7917
  %12363 = vmatpush.bf16.msra.mxu0 %v7909
  %12364 = vmatpush.bf16.msra.mxu0 %v7901
  %12365 = vmatpush.bf16.msra.mxu0 %v7893
  %12366 = vmatpush.bf16.msra.mxu0 %v7885
  %12367 = vmatpush.bf16.msra.mxu0 %v7877
  %12368 = vmatmul.bf16.gmra.mxu0 %v1731
  %v12369 = vpop.f32.mrf.mxu0
  %v12370 = vadd.f32 %v12356, %v12369
  %v12371 = vpop.f32.mrf.mxu0
  %v12372 = vadd.f32 %v12358, %v12371
  %12373 = vdwg.mxu0
  %12374 = vmatpush.bf16.msra.mxu0 %v7997
  %12375 = vmatpush.bf16.msra.mxu0 %v7989
  %12376 = vmatpush.bf16.msra.mxu0 %v7981
  %12377 = vmatpush.bf16.msra.mxu0 %v7973
  %12378 = vmatpush.bf16.msra.mxu0 %v7965
  %12379 = vmatpush.bf16.msra.mxu0 %v7957
  %12380 = vmatpush.bf16.msra.mxu0 %v7949
  %12381 = vmatpush.bf16.msra.mxu0 %v7941
  %12382 = vmatmul.bf16.gmra.mxu0 %v1732
  %v12383 = vpop.f32.mrf.mxu0
  %v12384 = vadd.f32 %v12370, %v12383
  %v12385 = vpop.f32.mrf.mxu0
  %v12386 = vadd.f32 %v12372, %v12385
  %12387 = vdwg.mxu0
  %12388 = vmatpush.bf16.msra.mxu0 0
  %12389 = vmatpush.bf16.msra.mxu0 0
  %12390 = vmatpush.bf16.msra.mxu0 0
  %12391 = vmatpush.bf16.msra.mxu0 0
  %12392 = vmatpush.bf16.msra.mxu0 %v8029
  %12393 = vmatpush.bf16.msra.mxu0 %v8021
  %12394 = vmatpush.bf16.msra.mxu0 %v8013
  %12395 = vmatpush.bf16.msra.mxu0 %v8005
  %12396 = vmatmul.bf16.gmra.mxu0 %v9600
  %v12397 = vpop.f32.mrf.mxu0
  %v12398 = vadd.f32 %v12384, %v12397
  %v12399 = vpop.f32.mrf.mxu0
  %v12400 = vadd.f32 %v12386, %v12399
  %12401 = vdwg.mxu0
  %v12402 = vmax.f32 %v9948, 0.0
  %v12403 = vmax.f32 %v10298, 0.0
  %v12404 = vmax.f32 %v10648, 0.0
  %v12405 = vmax.f32 %v10998, 0.0
  %v12406 = vmax.f32 %v11348, 0.0
  %v12407 = vmax.f32 %v11698, 0.0
  %v12408 = vmax.f32 %v12048, 0.0
  %v12409 = vmax.f32 %v12398, 0.0
  %v12410 = vmax.f32 %v9950, 0.0
  %v12411 = vmax.f32 %v10300, 0.0
  %v12412 = vmax.f32 %v10650, 0.0
  %v12413 = vmax.f32 %v11000, 0.0
  %v12414 = vmax.f32 %v11350, 0.0
  %v12415 = vmax.f32 %v11700, 0.0
  %v12416 = vmax.f32 %v12050, 0.0
  %v12417 = vmax.f32 %v12400, 0.0
  %v12418 = vld [vmem:[%s3] sm:$0xff]
  %v12419 = vld [vmem:[%s3 + $0x8] sm:$0xff]
  %v12420 = vld [vmem:[%s3 + $0x10] sm:$0xff]
  %v12421 = vld [vmem:[%s3 + $0x18] sm:$0xff]
  %v12422 = vld [vmem:[%s3 + $0x20] sm:$0xff]
  %v12423 = vld [vmem:[%s3 + $0x28] sm:$0xff]
  %v12424 = vld [vmem:[%s3 + $0x30] sm:$0xff]
  %v12425 = vld [vmem:[%s3 + $0x38] sm:$0xff]
  %v12426 = vld [vmem:[%s3 + $0x40] sm:$0xff]
  %v12427 = vld [vmem:[%s3 + $0x48] sm:$0xff]
  %v12428 = vld [vmem:[%s3 + $0x50] sm:$0xff]
  %v12429 = vld [vmem:[%s3 + $0x58] sm:$0xff]
  %v12430 = vld [vmem:[%s3 + $0x60] sm:$0xff]
  %v12431 = vld [vmem:[%s3 + $0x68] sm:$0xff]
  %v12432 = vld [vmem:[%s3 + $0x70] sm:$0xff]
  %v12433 = vld [vmem:[%s3 + $0x78] sm:$0xff]
  %v12434 = vld [vmem:[%s3 + $0x80] sm:$0xff]
  %v12435 = vld [vmem:[%s3 + $0x88] sm:$0xff]
  %v12436 = vld [vmem:[%s3 + $0x90] sm:$0xff]
  %v12437 = vld [vmem:[%s3 + $0x98] sm:$0xff]
  %v12438 = vld [vmem:[%s3 + $0xa0] sm:$0xff]
  %v12439 = vld [vmem:[%s3 + $0xa8] sm:$0xff]
  %v12440 = vld [vmem:[%s3 + $0xb0] sm:$0xff]
  %v12441 = vld [vmem:[%s3 + $0xb8] sm:$0xff]
  %v12442 = vld [vmem:[%s3 + $0xc0] sm:$0xff]
  %v12443 = vld [vmem:[%s3 + $0xc8] sm:$0xff]
  %v12444 = vld [vmem:[%s3 + $0xd0] sm:$0xff]
  %v12445 = vld [vmem:[%s3 + $0xd8] sm:$0xff]
  %v12446 = vld [vmem:[%s3 + $0xe0] sm:$0xff]
  %v12447 = vld [vmem:[%s3 + $0xe8] sm:$0xff]
  %v12448 = vld [vmem:[%s3 + $0xf0] sm:$0xff]
  %v12449 = vld [vmem:[%s3 + $0xf8] sm:$0xff]
  %v12450 = vld [vmem:[%s3 + $0x100] sm:$0xff]
  %v12451 = vld [vmem:[%s3 + $0x108] sm:$0xff]
  %v12452 = vld [vmem:[%s3 + $0x110] sm:$0xff]
  %v12453 = vld [vmem:[%s3 + $0x118] sm:$0xff]
  %v12454 = vld [vmem:[%s3 + $0x120] sm:$0xff]
  %v12455 = vld [vmem:[%s3 + $0x128] sm:$0xff]
  %v12456 = vld [vmem:[%s3 + $0x130] sm:$0xff]
  %v12457 = vld [vmem:[%s3 + $0x138] sm:$0xff]
  %v12458 = vld [vmem:[%s3 + $0x140] sm:$0xff]
  %v12459 = vld [vmem:[%s3 + $0x148] sm:$0xff]
  %v12460 = vld [vmem:[%s3 + $0x150] sm:$0xff]
  %v12461 = vld [vmem:[%s3 + $0x158] sm:$0xff]
  %v12462 = vld [vmem:[%s3 + $0x160] sm:$0xff]
  %v12463 = vld [vmem:[%s3 + $0x168] sm:$0xff]
  %v12464 = vld [vmem:[%s3 + $0x170] sm:$0xff]
  %v12465 = vld [vmem:[%s3 + $0x178] sm:$0xff]
  %v12466 = vld [vmem:[%s3 + $0x180] sm:$0xff]
  %v12467 = vld [vmem:[%s3 + $0x188] sm:$0xff]
  %v12468 = vld [vmem:[%s3 + $0x190] sm:$0xff]
  %v12469 = vld [vmem:[%s3 + $0x198] sm:$0xff]
  %v12470 = vld [vmem:[%s3 + $0x1a0] sm:$0xff]
  %v12471 = vld [vmem:[%s3 + $0x1a8] sm:$0xff]
  %v12472 = vld [vmem:[%s3 + $0x1b0] sm:$0xff]
  %v12473 = vld [vmem:[%s3 + $0x1b8] sm:$0xff]
  %v12474 = vld [vmem:[%s3 + $0x1c0] sm:$0xff]
  %v12475 = vld [vmem:[%s3 + $0x1c8] sm:$0xff]
  %v12476 = vld [vmem:[%s3 + $0x1d0] sm:$0xff]
  %v12477 = vld [vmem:[%s3 + $0x1d8] sm:$0xff]
  %v12478 = vld [vmem:[%s3 + $0x1e0] sm:$0xff]
  %v12479 = vld [vmem:[%s3 + $0x1e8] sm:$0xff]
  %v12480 = vld [vmem:[%s3 + $0x1f0] sm:$0xff]
  %v12481 = vld [vmem:[%s3 + $0x1f8] sm:$0xff]
  %v12482 = vld [vmem:[%s3 + $0x200] sm:$0xff]
  %v12483 = vld [vmem:[%s3 + $0x208] sm:$0xff]
  %v12484 = vld [vmem:[%s3 + $0x210] sm:$0xff]
  %v12485 = vld [vmem:[%s3 + $0x218] sm:$0xff]
  %v12486 = vld [vmem:[%s3 + $0x220] sm:$0xff]
  %v12487 = vld [vmem:[%s3 + $0x228] sm:$0xff]
  %v12488 = vld [vmem:[%s3 + $0x230] sm:$0xff]
  %v12489 = vld [vmem:[%s3 + $0x238] sm:$0xff]
  %v12490 = vld [vmem:[%s3 + $0x240] sm:$0xff]
  %v12491 = vld [vmem:[%s3 + $0x248] sm:$0xff]
  %v12492 = vld [vmem:[%s3 + $0x250] sm:$0xff]
  %v12493 = vld [vmem:[%s3 + $0x258] sm:$0xff]
  %v12494 = vld [vmem:[%s3 + $0x260] sm:$0xff]
  %v12495 = vld [vmem:[%s3 + $0x268] sm:$0xff]
  %v12496 = vld [vmem:[%s3 + $0x270] sm:$0xff]
  %v12497 = vld [vmem:[%s3 + $0x278] sm:$0xff]
  %v12498 = vld [vmem:[%s3 + $0x280] sm:$0xff]
  %v12499 = vld [vmem:[%s3 + $0x288] sm:$0xff]
  %v12500 = vld [vmem:[%s3 + $0x290] sm:$0xff]
  %v12501 = vld [vmem:[%s3 + $0x298] sm:$0xff]
  %v12502 = vld [vmem:[%s3 + $0x2a0] sm:$0xff]
  %v12503 = vld [vmem:[%s3 + $0x2a8] sm:$0xff]
  %v12504 = vld [vmem:[%s3 + $0x2b0] sm:$0xff]
  %v12505 = vld [vmem:[%s3 + $0x2b8] sm:$0xff]
  %v12506 = vld [vmem:[%s3 + $0x2c0] sm:$0xff]
  %v12507 = vld [vmem:[%s3 + $0x2c8] sm:$0xff]
  %v12508 = vld [vmem:[%s3 + $0x2d0] sm:$0xff]
  %v12509 = vld [vmem:[%s3 + $0x2d8] sm:$0xff]
  %v12510 = vld [vmem:[%s3 + $0x2e0] sm:$0xff]
  %v12511 = vld [vmem:[%s3 + $0x2e8] sm:$0xff]
  %v12512 = vld [vmem:[%s3 + $0x2f0] sm:$0xff]
  %v12513 = vld [vmem:[%s3 + $0x2f8] sm:$0xff]
  %v12514 = vld [vmem:[%s3 + $0x300] sm:$0xff]
  %v12515 = vld [vmem:[%s3 + $0x308] sm:$0xff]
  %v12516 = vld [vmem:[%s3 + $0x310] sm:$0xff]
  %v12517 = vld [vmem:[%s3 + $0x318] sm:$0xff]
  %v12518 = vld [vmem:[%s3 + $0x320] sm:$0xff]
  %v12519 = vld [vmem:[%s3 + $0x328] sm:$0xff]
  %v12520 = vld [vmem:[%s3 + $0x330] sm:$0xff]
  %v12521 = vld [vmem:[%s3 + $0x338] sm:$0xff]
  %v12522 = vld [vmem:[%s3 + $0x340] sm:$0xff]
  %v12523 = vld [vmem:[%s3 + $0x348] sm:$0xff]
  %v12524 = vld [vmem:[%s3 + $0x350] sm:$0xff]
  %v12525 = vld [vmem:[%s3 + $0x358] sm:$0xff]
  %v12526 = vld [vmem:[%s3 + $0x360] sm:$0xff]
  %v12527 = vld [vmem:[%s3 + $0x368] sm:$0xff]
  %v12528 = vld [vmem:[%s3 + $0x370] sm:$0xff]
  %v12529 = vld [vmem:[%s3 + $0x378] sm:$0xff]
  %v12530 = vld [vmem:[%s3 + $0x380] sm:$0xff]
  %v12531 = vld [vmem:[%s3 + $0x388] sm:$0xff]
  %v12532 = vld [vmem:[%s3 + $0x390] sm:$0xff]
  %v12533 = vld [vmem:[%s3 + $0x398] sm:$0xff]
  %v12534 = vld [vmem:[%s3 + $0x3a0] sm:$0xff]
  %v12535 = vld [vmem:[%s3 + $0x3a8] sm:$0xff]
  %v12536 = vld [vmem:[%s3 + $0x3b0] sm:$0xff]
  %v12537 = vld [vmem:[%s3 + $0x3b8] sm:$0xff]
  %v12538 = vld [vmem:[%s3 + $0x3c0] sm:$0xff]
  %v12539 = vld [vmem:[%s3 + $0x3c8] sm:$0xff]
  %v12540 = vld [vmem:[%s3 + $0x3d0] sm:$0xff]
  %v12541 = vld [vmem:[%s3 + $0x3d8] sm:$0xff]
  %v12542 = vld [vmem:[%s3 + $0x3e0] sm:$0xff]
  %v12543 = vld [vmem:[%s3 + $0x3e8] sm:$0xff]
  %v12544 = vld [vmem:[%s3 + $0x3f0] sm:$0xff]
  %v12545 = vld [vmem:[%s3 + $0x3f8] sm:$0xff]
  %v12546 = vld [vmem:[%s4] sm:$0x1]
  %v12548 = vperm.slane %v12546, 0
  %12550 = vmatpush.msra.mxu0 %v12433
  %12551 = vmatpush.msra.mxu0 %v12432
  %12552 = vmatpush.msra.mxu0 %v12431
  %12553 = vmatpush.msra.mxu0 %v12430
  %12554 = vmatpush.msra.mxu0 %v12429
  %12555 = vmatpush.msra.mxu0 %v12428
  %12556 = vmatpush.msra.mxu0 %v12427
  %12557 = vmatpush.msra.mxu0 %v12426
  %12558 = vmatpush.msra.mxu0 %v12425
  %12559 = vmatpush.msra.mxu0 %v12424
  %12560 = vmatpush.msra.mxu0 %v12423
  %12561 = vmatpush.msra.mxu0 %v12422
  %12562 = vmatpush.msra.mxu0 %v12421
  %12563 = vmatpush.msra.mxu0 %v12420
  %12564 = vmatpush.msra.mxu0 %v12419
  %12565 = vmatpush.msra.mxu0 %v12418
  %12566 = vmatmul.f32.gmra.mxu0 %v12402
  %v12567 = vpop.f32.mrf.mxu0
  %v12568 = vadd.f32 %v12548, %v12567
  %12569 = vmatmul.f32.gmra.mxu0 %v12410
  %v12570 = vpop.f32.mrf.mxu0
  %v12571 = vadd.f32 %v12548, %v12570
  %12572 = vdwg.mxu0
  %12573 = vmatpush.msra.mxu0 %v12449
  %12574 = vmatpush.msra.mxu0 %v12448
  %12575 = vmatpush.msra.mxu0 %v12447
  %12576 = vmatpush.msra.mxu0 %v12446
  %12577 = vmatpush.msra.mxu0 %v12445
  %12578 = vmatpush.msra.mxu0 %v12444
  %12579 = vmatpush.msra.mxu0 %v12443
  %12580 = vmatpush.msra.mxu0 %v12442
  %12581 = vmatpush.msra.mxu0 %v12441
  %12582 = vmatpush.msra.mxu0 %v12440
  %12583 = vmatpush.msra.mxu0 %v12439
  %12584 = vmatpush.msra.mxu0 %v12438
  %12585 = vmatpush.msra.mxu0 %v12437
  %12586 = vmatpush.msra.mxu0 %v12436
  %12587 = vmatpush.msra.mxu0 %v12435
  %12588 = vmatpush.msra.mxu0 %v12434
  %12589 = vmatmul.f32.gmra.mxu0 %v12403
  %v12590 = vpop.f32.mrf.mxu0
  %v12591 = vadd.f32 %v12568, %v12590
  %12592 = vmatmul.f32.gmra.mxu0 %v12411
  %v12593 = vpop.f32.mrf.mxu0
  %v12594 = vadd.f32 %v12571, %v12593
  %12595 = vdwg.mxu0
  %12596 = vmatpush.msra.mxu0 %v12465
  %12597 = vmatpush.msra.mxu0 %v12464
  %12598 = vmatpush.msra.mxu0 %v12463
  %12599 = vmatpush.msra.mxu0 %v12462
  %12600 = vmatpush.msra.mxu0 %v12461
  %12601 = vmatpush.msra.mxu0 %v12460
  %12602 = vmatpush.msra.mxu0 %v12459
  %12603 = vmatpush.msra.mxu0 %v12458
  %12604 = vmatpush.msra.mxu0 %v12457
  %12605 = vmatpush.msra.mxu0 %v12456
  %12606 = vmatpush.msra.mxu0 %v12455
  %12607 = vmatpush.msra.mxu0 %v12454
  %12608 = vmatpush.msra.mxu0 %v12453
  %12609 = vmatpush.msra.mxu0 %v12452
  %12610 = vmatpush.msra.mxu0 %v12451
  %12611 = vmatpush.msra.mxu0 %v12450
  %12612 = vmatmul.f32.gmra.mxu0 %v12404
  %v12613 = vpop.f32.mrf.mxu0
  %v12614 = vadd.f32 %v12591, %v12613
  %12615 = vmatmul.f32.gmra.mxu0 %v12412
  %v12616 = vpop.f32.mrf.mxu0
  %v12617 = vadd.f32 %v12594, %v12616
  %12618 = vdwg.mxu0
  %12619 = vmatpush.msra.mxu0 %v12481
  %12620 = vmatpush.msra.mxu0 %v12480
  %12621 = vmatpush.msra.mxu0 %v12479
  %12622 = vmatpush.msra.mxu0 %v12478
  %12623 = vmatpush.msra.mxu0 %v12477
  %12624 = vmatpush.msra.mxu0 %v12476
  %12625 = vmatpush.msra.mxu0 %v12475
  %12626 = vmatpush.msra.mxu0 %v12474
  %12627 = vmatpush.msra.mxu0 %v12473
  %12628 = vmatpush.msra.mxu0 %v12472
  %12629 = vmatpush.msra.mxu0 %v12471
  %12630 = vmatpush.msra.mxu0 %v12470
  %12631 = vmatpush.msra.mxu0 %v12469
  %12632 = vmatpush.msra.mxu0 %v12468
  %12633 = vmatpush.msra.mxu0 %v12467
  %12634 = vmatpush.msra.mxu0 %v12466
  %12635 = vmatmul.f32.gmra.mxu0 %v12405
  %v12636 = vpop.f32.mrf.mxu0
  %v12637 = vadd.f32 %v12614, %v12636
  %12638 = vmatmul.f32.gmra.mxu0 %v12413
  %v12639 = vpop.f32.mrf.mxu0
  %v12640 = vadd.f32 %v12617, %v12639
  %12641 = vdwg.mxu0
  %12642 = vmatpush.msra.mxu0 %v12497
  %12643 = vmatpush.msra.mxu0 %v12496
  %12644 = vmatpush.msra.mxu0 %v12495
  %12645 = vmatpush.msra.mxu0 %v12494
  %12646 = vmatpush.msra.mxu0 %v12493
  %12647 = vmatpush.msra.mxu0 %v12492
  %12648 = vmatpush.msra.mxu0 %v12491
  %12649 = vmatpush.msra.mxu0 %v12490
  %12650 = vmatpush.msra.mxu0 %v12489
  %12651 = vmatpush.msra.mxu0 %v12488
  %12652 = vmatpush.msra.mxu0 %v12487
  %12653 = vmatpush.msra.mxu0 %v12486
  %12654 = vmatpush.msra.mxu0 %v12485
  %12655 = vmatpush.msra.mxu0 %v12484
  %12656 = vmatpush.msra.mxu0 %v12483
  %12657 = vmatpush.msra.mxu0 %v12482
  %12658 = vmatmul.f32.gmra.mxu0 %v12406
  %v12659 = vpop.f32.mrf.mxu0
  %v12660 = vadd.f32 %v12637, %v12659
  %12661 = vmatmul.f32.gmra.mxu0 %v12414
  %v12662 = vpop.f32.mrf.mxu0
  %v12663 = vadd.f32 %v12640, %v12662
  %12664 = vdwg.mxu0
  %12665 = vmatpush.msra.mxu0 %v12513
  %12666 = vmatpush.msra.mxu0 %v12512
  %12667 = vmatpush.msra.mxu0 %v12511
  %12668 = vmatpush.msra.mxu0 %v12510
  %12669 = vmatpush.msra.mxu0 %v12509
  %12670 = vmatpush.msra.mxu0 %v12508
  %12671 = vmatpush.msra.mxu0 %v12507
  %12672 = vmatpush.msra.mxu0 %v12506
  %12673 = vmatpush.msra.mxu0 %v12505
  %12674 = vmatpush.msra.mxu0 %v12504
  %12675 = vmatpush.msra.mxu0 %v12503
  %12676 = vmatpush.msra.mxu0 %v12502
  %12677 = vmatpush.msra.mxu0 %v12501
  %12678 = vmatpush.msra.mxu0 %v12500
  %12679 = vmatpush.msra.mxu0 %v12499
  %12680 = vmatpush.msra.mxu0 %v12498
  %12681 = vmatmul.f32.gmra.mxu0 %v12407
  %v12682 = vpop.f32.mrf.mxu0
  %v12683 = vadd.f32 %v12660, %v12682
  %12684 = vmatmul.f32.gmra.mxu0 %v12415
  %v12685 = vpop.f32.mrf.mxu0
  %v12686 = vadd.f32 %v12663, %v12685
  %12687 = vdwg.mxu0
  %12688 = vmatpush.msra.mxu0 %v12529
  %12689 = vmatpush.msra.mxu0 %v12528
  %12690 = vmatpush.msra.mxu0 %v12527
  %12691 = vmatpush.msra.mxu0 %v12526
  %12692 = vmatpush.msra.mxu0 %v12525
  %12693 = vmatpush.msra.mxu0 %v12524
  %12694 = vmatpush.msra.mxu0 %v12523
  %12695 = vmatpush.msra.mxu0 %v12522
  %12696 = vmatpush.msra.mxu0 %v12521
  %12697 = vmatpush.msra.mxu0 %v12520
  %12698 = vmatpush.msra.mxu0 %v12519
  %12699 = vmatpush.msra.mxu0 %v12518
  %12700 = vmatpush.msra.mxu0 %v12517
  %12701 = vmatpush.msra.mxu0 %v12516
  %12702 = vmatpush.msra.mxu0 %v12515
  %12703 = vmatpush.msra.mxu0 %v12514
  %12704 = vmatmul.f32.gmra.mxu0 %v12408
  %v12705 = vpop.f32.mrf.mxu0
  %v12706 = vadd.f32 %v12683, %v12705
  %12707 = vmatmul.f32.gmra.mxu0 %v12416
  %v12708 = vpop.f32.mrf.mxu0
  %v12709 = vadd.f32 %v12686, %v12708
  %12710 = vdwg.mxu0
  %12711 = vmatpush.msra.mxu0 %v12545
  %12712 = vmatpush.msra.mxu0 %v12544
  %12713 = vmatpush.msra.mxu0 %v12543
  %12714 = vmatpush.msra.mxu0 %v12542
  %12715 = vmatpush.msra.mxu0 %v12541
  %12716 = vmatpush.msra.mxu0 %v12540
  %12717 = vmatpush.msra.mxu0 %v12539
  %12718 = vmatpush.msra.mxu0 %v12538
  %12719 = vmatpush.msra.mxu0 %v12537
  %12720 = vmatpush.msra.mxu0 %v12536
  %12721 = vmatpush.msra.mxu0 %v12535
  %12722 = vmatpush.msra.mxu0 %v12534
  %12723 = vmatpush.msra.mxu0 %v12533
  %12724 = vmatpush.msra.mxu0 %v12532
  %12725 = vmatpush.msra.mxu0 %v12531
  %12726 = vmatpush.msra.mxu0 %v12530
  %12727 = vmatmul.f32.gmra.mxu0 %v12409
  %v12728 = vpop.f32.mrf.mxu0
  %v12729 = vadd.f32 %v12706, %v12728
  %12730 = vmatmul.f32.gmra.mxu0 %v12417
  %v12731 = vpop.f32.mrf.mxu0
  %v12732 = vadd.f32 %v12709, %v12731
  %12733 = vdwg.mxu0
  %12735 = vset.pattern.permute.xlu0 6
  %12736 = vperm.xlu0 %12735, %v12729
  %v12737 = vpop.permute.xlu0 %12736
  %12740 = vset.pattern.permute.xlu0 6
  %12741 = vperm.xlu0 %12740, %v12732
  %v12742 = vpop.permute.xlu0 %12741
  %v12744 = vadd.f32 %v12737, %v12729
  %v12745 = vadd.f32 %v12742, %v12732
  %vm12746 = vcmask 48128
  %v12747 = vsel %vm12746, %v12729, 0.0
  %12748 = vadd.xlane.f32.xlu0 %v12747
  %v12749 = vpop.xlane.xlu0 %12748
  %v12750 = vsel %vm12746, %v12732, 0.0
  %12751 = vadd.xlane.f32.xlu0 %v12750
  %v12752 = vpop.xlane.xlu0 %12751
  %v12753 = vrcp.pop 6.0
  %v12754 = vmul.f32 6.0, %v12753
  %v12755 = vsub.f32 1.0, %v12754
  %v12756 = vmul.f32 %v12753, %v12755
  %v12757 = vadd.f32 %v12753, %v12756
  %vm12758 = vweird.f32 %v12753
  %v12759 = vsel %vm12758, %v12753, %v12757
  %v12760 = vmul.f32 %v12749, %v12759
  %v12761 = vmul.f32 %v12752, %v12759
  %v12762 = vsub.f32 %v12744, %v12760
  %v12763 = vsub.f32 %v12745, %v12761
  %12764 = vst.msk [vmem:[%s5] sm:$0xff] %vm12746, %v12762
  %12765 = vst.msk [vmem:[%s5 + $0x8] sm:$0xff] %vm12746, %v12763
  // Predicated region
  $region22: #{forward.7} parent=0 // pred_check
    _
  $region23: #{forward.7} parent=0 // pred_check_branch
    %12767 = sbr.rel (0) target = $region25
  $region24: #{forward.7} parent=0 // pred_region
    _
  $region25: #{forward.7} parent=0 // pred_fallthru
    _
  // Predicated region
  $region26: #{forward.7} parent=0 // pred_check
    _
  $region27: #{forward.7} parent=0 // pred_check_branch
    %12769 = sbr.rel (0) target = $region29
  $region28: #{forward.7} parent=0 // pred_region
    _
  $region29: #{forward.7} parent=0 // pred_fallthru
    _

</llo_original>
